<compile_context>
chip_gen: v6e
topology: v6e:2x2x1
jax: 0.10.0
libtpu: 0.0.40
codegen_flags: <defaults>
</compile_context>

<pallas_src>
import math

import numpy as np

import jax
import jax.numpy as jnp
from jax.experimental import pallas as pl
from jax.experimental.pallas import tpu as pltpu


# ----------------------------------------------------------------------------
# Fused kernel: 1x1 conv (z, x) -> depthwise xcorr -> per-channel affine
# ----------------------------------------------------------------------------
def _siamfc_fused_kernel(z_ref, x_ref, w_ref, b_ref, g_ref, be_ref, o_ref):
    N, Hz, Wz, Cin = z_ref.shape
    _, Hx, Wx, _ = x_ref.shape
    _, Hr, Wr, Cf = o_ref.shape

    w = w_ref[...]           # (Cin, Cf)
    bias = b_ref[0, :]       # (Cf,)
    gamma = g_ref[0, :]      # (Cf,)
    beta = be_ref[0, :]      # (Cf,)

    def conv1x1(v):
        # Pointwise conv as Cin (=4) VPU broadcast-FMAs; MXU stays idle on
        # purpose (a (M,4)x(4,32) matmul would waste the systolic array).
        acc = v[..., 0:1] * w[0, :]
        for k in range(1, Cin):
            acc = acc + v[..., k:k + 1] * w[k, :]
        return acc + bias

    for n in range(N):                            # N tiny & static -> unrolled
        zv = conv1x1(z_ref[n])                    # (Hz, Wz, Cf), stays in vregs/VMEM
        xv = conv1x1(x_ref[n])                    # (Hx, Wx, Cf)

        acc = jnp.zeros((Hr, Wr, Cf), jnp.float32)
        for dx in range(Wz):
            # One sublane-offset slice per dx; the dy offset below only slices
            # the (untiled) major axis, which is a free vreg selection.
            x_dx = xv[:, dx:dx + Wr, :]           # (Hx, Wr, Cf)
            for dy in range(Hz):
                acc = acc + x_dx[dy:dy + Hr, :, :] * zv[dy, dx, :]

        o_ref[n] = acc * gamma + beta


def siamfc_response(z_nhwc, x_nhwc, w, b, gamma, beta):
    N, Hz, Wz, Cin = z_nhwc.shape
    _, Hx, Wx, _ = x_nhwc.shape
    Cf = w.shape[1]
    Hr, Wr = Hx - Hz + 1, Wx - Wz + 1
    return pl.pallas_call(
        _siamfc_fused_kernel,
        out_shape=jax.ShapeDtypeStruct((N, Hr, Wr, Cf), jnp.float32),
        grid=(1,),
        in_specs=[
            pl.BlockSpec((N, Hz, Wz, Cin), lambda i: (0, 0, 0, 0)),
            pl.BlockSpec((N, Hx, Wx, Cin), lambda i: (0, 0, 0, 0)),
            pl.BlockSpec((Cin, Cf), lambda i: (0, 0)),
            pl.BlockSpec((1, Cf), lambda i: (0, 0)),
            pl.BlockSpec((1, Cf), lambda i: (0, 0)),
            pl.BlockSpec((1, Cf), lambda i: (0, 0)),
        ],
        out_specs=pl.BlockSpec((N, Hr, Wr, Cf), lambda i: (0, 0, 0, 0)),
        compiler_params=pltpu.CompilerParams(dimension_semantics=("arbitrary",)),
    )(z_nhwc, x_nhwc, w, b, gamma, beta)


# ----------------------------------------------------------------------------
# DETR PositionEmbeddingSine evaluated at trace time (mask is all-False)
# ----------------------------------------------------------------------------
def _position_embedding_sine_const(h, w, num_pos_feats, temperature=10000.0):
    # Matches DETR PositionEmbeddingSine(normalize=True, scale=2*pi) for the
    # all-False mask that DETRSiamFCWrapper._generate_mask_position_enc builds.
    # TODO(synk): this constant-folding is only valid for an all-False mask; a
    # non-trivial mask would require the per-batch cumsum path.
    eps = 1e-6
    scale = 2.0 * math.pi
    not_mask = np.ones((h, w), np.float64)
    y_embed = not_mask.cumsum(0)
    x_embed = not_mask.cumsum(1)
    y_embed = y_embed / (y_embed[-1:, :] + eps) * scale
    x_embed = x_embed / (x_embed[:, -1:] + eps) * scale
    dim_t = np.arange(num_pos_feats, dtype=np.float64)
    dim_t = temperature ** (2.0 * (dim_t // 2) / num_pos_feats)
    pos_x = x_embed[:, :, None] / dim_t
    pos_y = y_embed[:, :, None] / dim_t
    pos_x = np.stack([np.sin(pos_x[:, :, 0::2]), np.cos(pos_x[:, :, 1::2])],
                     axis=3).reshape(h, w, -1)
    pos_y = np.stack([np.sin(pos_y[:, :, 0::2]), np.cos(pos_y[:, :, 1::2])],
                     axis=3).reshape(h, w, -1)
    pos = np.concatenate([pos_y, pos_x], axis=2)             # (h, w, 2*npf)
    return np.transpose(pos, (2, 0, 1)).astype(np.float32)    # (C, h, w)


# ----------------------------------------------------------------------------
# Wrapper == DETRSiamFCWrapper.forward
# ----------------------------------------------------------------------------
def detr_siamfc_wrapper(z, x, params):
    """z, x: NCHW float32. Returns (response NCHW, mask (N,H,W) bool, pos NCHW)."""
    N, Cin, Hz, Wz = z.shape
    _, _, Hx, Wx = x.shape
    w, b, gamma, beta = params["w"], params["b"], params["gamma"], params["beta"]
    Cf = w.shape[1]
    Hr, Wr = Hx - Hz + 1, Wx - Wz + 1

    z_nhwc = jnp.transpose(z, (0, 2, 3, 1))
    x_nhwc = jnp.transpose(x, (0, 2, 3, 1))

    resp_nhwc = siamfc_response(z_nhwc, x_nhwc, w, b, gamma, beta)   # (N,Hr,Wr,Cf)
    response = jnp.transpose(resp_nhwc, (0, 3, 1, 2))                # NCHW like torch

    # torch.zeros((n, h, w), dtype=torch.bool) — trivially all-False.
    mask = jnp.zeros((N, Hr, Wr), dtype=jnp.bool_)

    # Batch-invariant (all-False mask) -> compile-time constant, broadcast over N.
    pos_chw = jnp.asarray(_position_embedding_sine_const(Hr, Wr, Cf // 2))
    pos = jnp.broadcast_to(pos_chw[None], (N, Cf, Hr, Wr))
    return response, mask, pos


def make_params(key, c_in, c_feat):
    k_w, k_b, k_g, k_be = jax.random.split(key, 4)
    w = 0.1 * jax.random.normal(k_w, (c_in, c_feat), jnp.float32)
    b = 0.1 * jax.random.normal(k_b, (1, c_feat), jnp.float32)
    gamma = 0.5 + jnp.abs(jax.random.normal(k_g, (1, c_feat), jnp.float32))
    beta = 0.1 * jax.random.normal(k_be, (1, c_feat), jnp.float32)
    return {"w": w, "b": b, "gamma": gamma, "beta": beta}


# Pure-JAX reference (exact f32 elementwise path) for a correctness check.
def _reference_response(z, x, params):
    w = params["w"]
    b = params["b"].reshape(1, -1, 1, 1)
    gamma = params["gamma"].reshape(1, -1, 1, 1)
    beta = params["beta"].reshape(1, -1, 1, 1)

    def conv(v):  # NCHW pointwise conv without MXU (keeps f32 exactness)
        return (v[:, :, None] * w[None, :, :, None, None]).sum(axis=1) + b

    zf, xf = conv(z), conv(x)
    _, _, Hz, Wz = zf.shape
    _, _, Hx, Wx = xf.shape
    Hr, Wr = Hx - Hz + 1, Wx - Wz + 1
    out = jnp.zeros(zf.shape[:2] + (Hr, Wr), jnp.float32)
    for dy in range(Hz):
        for dx in range(Wz):
            out = out + xf[:, :, dy:dy + Hr, dx:dx + Wr] * zf[:, :, dy:dy + 1, dx:dx + 1]
    return out * gamma + beta


if __name__ == "__main__":
    key = jax.random.PRNGKey(0)
    k_p, k_z, k_x = jax.random.split(key, 3)

    N, Cin, Cf = 2, 4, 32          # Cf == siamfc.num_channels_output == DETR hidden
    Hz = Wz = 6                    # exemplar spatial
    Hx = Wx = 14                   # search spatial -> 9x9 response

    params = make_params(k_p, Cin, Cf)
    z = jax.random.normal(k_z, (N, Cin, Hz, Wz), jnp.float32)
    x = jax.random.normal(k_x, (N, Cin, Hx, Wx), jnp.float32)

    response, mask, pos = jax.jit(detr_siamfc_wrapper)(z, x, params)
    jax.block_until_ready((response, mask, pos))

    Hr, Wr = Hx - Hz + 1, Wx - Wz + 1
    assert response.shape == (N, Cf, Hr, Wr)
    assert mask.shape == (N, Hr, Wr) and mask.dtype == jnp.bool_
    assert pos.shape == (N, Cf, Hr, Wr)

    ref = _reference_response(z, x, params)
    np.testing.assert_allclose(np.asarray(response), np.asarray(ref),
                               rtol=1e-4, atol=1e-4)
    print("KERNEL_OK")
</pallas_src>

<mosaic_0001>
module attributes {stable_mosaic.version = 11 : i64} {
  func.func @_siamfc_fused_kernel(%arg0: i32, %arg1: memref<2x6x6x4xf32, #tpu.memory_space<vmem>>, %arg2: memref<2x14x14x4xf32, #tpu.memory_space<vmem>>, %arg3: memref<4x32xf32, #tpu.memory_space<vmem>>, %arg4: memref<1x32xf32, #tpu.memory_space<vmem>>, %arg5: memref<1x32xf32, #tpu.memory_space<vmem>>, %arg6: memref<1x32xf32, #tpu.memory_space<vmem>>, %arg7: memref<2x9x9x32xf32, #tpu.memory_space<vmem>>) attributes {dimension_semantics = [#tpu.dimension_semantics<arbitrary>], iteration_bounds = array<i64: 1>, scalar_prefetch = 0 : i64, scratch_operands = 0 : i64, tpu.core_type = #tpu.core_type<tc>, window_params = [{pipeline_mode = #tpu.pipeline_mode<synchronous>, transform_indices = @transform_0, window_bounds = array<i64: 2, 6, 6, 4>}, {pipeline_mode = #tpu.pipeline_mode<synchronous>, transform_indices = @transform_1, window_bounds = array<i64: 2, 14, 14, 4>}, {pipeline_mode = #tpu.pipeline_mode<synchronous>, transform_indices = @transform_2, window_bounds = array<i64: 4, 32>}, {pipeline_mode = #tpu.pipeline_mode<synchronous>, transform_indices = @transform_3, window_bounds = array<i64: 1, 32>}, {pipeline_mode = #tpu.pipeline_mode<synchronous>, transform_indices = @transform_4, window_bounds = array<i64: 1, 32>}, {pipeline_mode = #tpu.pipeline_mode<synchronous>, transform_indices = @transform_5, window_bounds = array<i64: 1, 32>}, {pipeline_mode = #tpu.pipeline_mode<synchronous>, transform_indices = @transform_6, window_bounds = array<i64: 2, 9, 9, 32>}]} {
    %c0 = arith.constant 0 : index
    %c0_0 = arith.constant 0 : index
    %0 = vector.load %arg3[%c0, %c0_0] : memref<4x32xf32, #tpu.memory_space<vmem>>, vector<4x32xf32>
    %c0_1 = arith.constant 0 : index
    %c0_2 = arith.constant 0 : index
    %1 = vector.load %arg4[%c0_1, %c0_2] : memref<1x32xf32, #tpu.memory_space<vmem>>, vector<1x32xf32>
    %2 = vector.shape_cast %1 : vector<1x32xf32> to vector<32xf32>
    %c0_3 = arith.constant 0 : index
    %c0_4 = arith.constant 0 : index
    %3 = vector.load %arg5[%c0_3, %c0_4] : memref<1x32xf32, #tpu.memory_space<vmem>>, vector<1x32xf32>
    %4 = vector.shape_cast %3 : vector<1x32xf32> to vector<32xf32>
    %c0_5 = arith.constant 0 : index
    %c0_6 = arith.constant 0 : index
    %5 = vector.load %arg6[%c0_5, %c0_6] : memref<1x32xf32, #tpu.memory_space<vmem>>, vector<1x32xf32>
    %6 = vector.shape_cast %5 : vector<1x32xf32> to vector<32xf32>
    %c0_7 = arith.constant 0 : index
    %c0_8 = arith.constant 0 : index
    %c0_9 = arith.constant 0 : index
    %c0_10 = arith.constant 0 : index
    %7 = vector.load %arg1[%c0_7, %c0_8, %c0_9, %c0_10] : memref<2x6x6x4xf32, #tpu.memory_space<vmem>>, vector<1x6x6x4xf32>
    %8 = vector.shape_cast %7 : vector<1x6x6x4xf32> to vector<6x6x4xf32>
    %9 = vector.extract_strided_slice %8 {offsets = [0, 0, 0], sizes = [6, 6, 1], strides = [1, 1, 1]} : vector<6x6x4xf32> to vector<6x6x1xf32>
    %10 = vector.extract_strided_slice %0 {offsets = [0, 0], sizes = [1, 32], strides = [1, 1]} : vector<4x32xf32> to vector<1x32xf32>
    %11 = vector.shape_cast %10 : vector<1x32xf32> to vector<32xf32>
    %12 = vector.shape_cast %11 : vector<32xf32> to vector<1x1x32xf32>
    %13 = vector.broadcast %9 : vector<6x6x1xf32> to vector<6x6x32xf32>
    %14 = vector.broadcast %12 : vector<1x1x32xf32> to vector<6x6x32xf32>
    %15 = arith.mulf %13, %14 : vector<6x6x32xf32>
    %16 = vector.extract_strided_slice %8 {offsets = [0, 0, 1], sizes = [6, 6, 1], strides = [1, 1, 1]} : vector<6x6x4xf32> to vector<6x6x1xf32>
    %17 = vector.extract_strided_slice %0 {offsets = [1, 0], sizes = [1, 32], strides = [1, 1]} : vector<4x32xf32> to vector<1x32xf32>
    %18 = vector.shape_cast %17 : vector<1x32xf32> to vector<32xf32>
    %19 = vector.shape_cast %18 : vector<32xf32> to vector<1x1x32xf32>
    %20 = vector.broadcast %16 : vector<6x6x1xf32> to vector<6x6x32xf32>
    %21 = vector.broadcast %19 : vector<1x1x32xf32> to vector<6x6x32xf32>
    %22 = arith.mulf %20, %21 : vector<6x6x32xf32>
    %23 = arith.addf %15, %22 : vector<6x6x32xf32>
    %24 = vector.extract_strided_slice %8 {offsets = [0, 0, 2], sizes = [6, 6, 1], strides = [1, 1, 1]} : vector<6x6x4xf32> to vector<6x6x1xf32>
    %25 = vector.extract_strided_slice %0 {offsets = [2, 0], sizes = [1, 32], strides = [1, 1]} : vector<4x32xf32> to vector<1x32xf32>
    %26 = vector.shape_cast %25 : vector<1x32xf32> to vector<32xf32>
    %27 = vector.shape_cast %26 : vector<32xf32> to vector<1x1x32xf32>
    %28 = vector.broadcast %24 : vector<6x6x1xf32> to vector<6x6x32xf32>
    %29 = vector.broadcast %27 : vector<1x1x32xf32> to vector<6x6x32xf32>
    %30 = arith.mulf %28, %29 : vector<6x6x32xf32>
    %31 = arith.addf %23, %30 : vector<6x6x32xf32>
    %32 = vector.extract_strided_slice %8 {offsets = [0, 0, 3], sizes = [6, 6, 1], strides = [1, 1, 1]} : vector<6x6x4xf32> to vector<6x6x1xf32>
    %33 = vector.extract_strided_slice %0 {offsets = [3, 0], sizes = [1, 32], strides = [1, 1]} : vector<4x32xf32> to vector<1x32xf32>
    %34 = vector.shape_cast %33 : vector<1x32xf32> to vector<32xf32>
    %35 = vector.shape_cast %34 : vector<32xf32> to vector<1x1x32xf32>
    %36 = vector.broadcast %32 : vector<6x6x1xf32> to vector<6x6x32xf32>
    %37 = vector.broadcast %35 : vector<1x1x32xf32> to vector<6x6x32xf32>
    %38 = arith.mulf %36, %37 : vector<6x6x32xf32>
    %39 = arith.addf %31, %38 : vector<6x6x32xf32>
    %40 = vector.shape_cast %2 : vector<32xf32> to vector<1x1x32xf32>
    %41 = vector.broadcast %40 : vector<1x1x32xf32> to vector<6x6x32xf32>
    %42 = arith.addf %39, %41 : vector<6x6x32xf32>
    %c0_11 = arith.constant 0 : index
    %c0_12 = arith.constant 0 : index
    %c0_13 = arith.constant 0 : index
    %c0_14 = arith.constant 0 : index
    %43 = vector.load %arg2[%c0_11, %c0_12, %c0_13, %c0_14] : memref<2x14x14x4xf32, #tpu.memory_space<vmem>>, vector<1x14x14x4xf32>
    %44 = vector.shape_cast %43 : vector<1x14x14x4xf32> to vector<14x14x4xf32>
    %45 = vector.extract_strided_slice %44 {offsets = [0, 0, 0], sizes = [14, 14, 1], strides = [1, 1, 1]} : vector<14x14x4xf32> to vector<14x14x1xf32>
    %46 = vector.extract_strided_slice %0 {offsets = [0, 0], sizes = [1, 32], strides = [1, 1]} : vector<4x32xf32> to vector<1x32xf32>
    %47 = vector.shape_cast %46 : vector<1x32xf32> to vector<32xf32>
    %48 = vector.shape_cast %47 : vector<32xf32> to vector<1x1x32xf32>
    %49 = vector.broadcast %45 : vector<14x14x1xf32> to vector<14x14x32xf32>
    %50 = vector.broadcast %48 : vector<1x1x32xf32> to vector<14x14x32xf32>
    %51 = arith.mulf %49, %50 : vector<14x14x32xf32>
    %52 = vector.extract_strided_slice %44 {offsets = [0, 0, 1], sizes = [14, 14, 1], strides = [1, 1, 1]} : vector<14x14x4xf32> to vector<14x14x1xf32>
    %53 = vector.extract_strided_slice %0 {offsets = [1, 0], sizes = [1, 32], strides = [1, 1]} : vector<4x32xf32> to vector<1x32xf32>
    %54 = vector.shape_cast %53 : vector<1x32xf32> to vector<32xf32>
    %55 = vector.shape_cast %54 : vector<32xf32> to vector<1x1x32xf32>
    %56 = vector.broadcast %52 : vector<14x14x1xf32> to vector<14x14x32xf32>
    %57 = vector.broadcast %55 : vector<1x1x32xf32> to vector<14x14x32xf32>
    %58 = arith.mulf %56, %57 : vector<14x14x32xf32>
    %59 = arith.addf %51, %58 : vector<14x14x32xf32>
    %60 = vector.extract_strided_slice %44 {offsets = [0, 0, 2], sizes = [14, 14, 1], strides = [1, 1, 1]} : vector<14x14x4xf32> to vector<14x14x1xf32>
    %61 = vector.extract_strided_slice %0 {offsets = [2, 0], sizes = [1, 32], strides = [1, 1]} : vector<4x32xf32> to vector<1x32xf32>
    %62 = vector.shape_cast %61 : vector<1x32xf32> to vector<32xf32>
    %63 = vector.shape_cast %62 : vector<32xf32> to vector<1x1x32xf32>
    %64 = vector.broadcast %60 : vector<14x14x1xf32> to vector<14x14x32xf32>
    %65 = vector.broadcast %63 : vector<1x1x32xf32> to vector<14x14x32xf32>
    %66 = arith.mulf %64, %65 : vector<14x14x32xf32>
    %67 = arith.addf %59, %66 : vector<14x14x32xf32>
    %68 = vector.extract_strided_slice %44 {offsets = [0, 0, 3], sizes = [14, 14, 1], strides = [1, 1, 1]} : vector<14x14x4xf32> to vector<14x14x1xf32>
    %69 = vector.extract_strided_slice %0 {offsets = [3, 0], sizes = [1, 32], strides = [1, 1]} : vector<4x32xf32> to vector<1x32xf32>
    %70 = vector.shape_cast %69 : vector<1x32xf32> to vector<32xf32>
    %71 = vector.shape_cast %70 : vector<32xf32> to vector<1x1x32xf32>
    %72 = vector.broadcast %68 : vector<14x14x1xf32> to vector<14x14x32xf32>
    %73 = vector.broadcast %71 : vector<1x1x32xf32> to vector<14x14x32xf32>
    %74 = arith.mulf %72, %73 : vector<14x14x32xf32>
    %75 = arith.addf %67, %74 : vector<14x14x32xf32>
    %76 = vector.shape_cast %2 : vector<32xf32> to vector<1x1x32xf32>
    %77 = vector.broadcast %76 : vector<1x1x32xf32> to vector<14x14x32xf32>
    %78 = arith.addf %75, %77 : vector<14x14x32xf32>
    %cst = arith.constant 0.000000e+00 : f32
    %79 = vector.broadcast %cst : f32 to vector<9x9x32xf32>
    %80 = vector.extract_strided_slice %78 {offsets = [0, 0, 0], sizes = [14, 9, 32], strides = [1, 1, 1]} : vector<14x14x32xf32> to vector<14x9x32xf32>
    %81 = vector.extract_strided_slice %80 {offsets = [0, 0, 0], sizes = [9, 9, 32], strides = [1, 1, 1]} : vector<14x9x32xf32> to vector<9x9x32xf32>
    %82 = vector.extract_strided_slice %42 {offsets = [0, 0, 0], sizes = [1, 1, 32], strides = [1, 1, 1]} : vector<6x6x32xf32> to vector<1x1x32xf32>
    %83 = vector.shape_cast %82 : vector<1x1x32xf32> to vector<32xf32>
    %84 = vector.shape_cast %83 : vector<32xf32> to vector<1x1x32xf32>
    %85 = vector.broadcast %84 : vector<1x1x32xf32> to vector<9x9x32xf32>
    %86 = arith.mulf %81, %85 : vector<9x9x32xf32>
    %87 = arith.addf %79, %86 : vector<9x9x32xf32>
    %88 = vector.extract_strided_slice %80 {offsets = [1, 0, 0], sizes = [9, 9, 32], strides = [1, 1, 1]} : vector<14x9x32xf32> to vector<9x9x32xf32>
    %89 = vector.extract_strided_slice %42 {offsets = [1, 0, 0], sizes = [1, 1, 32], strides = [1, 1, 1]} : vector<6x6x32xf32> to vector<1x1x32xf32>
    %90 = vector.shape_cast %89 : vector<1x1x32xf32> to vector<32xf32>
    %91 = vector.shape_cast %90 : vector<32xf32> to vector<1x1x32xf32>
    %92 = vector.broadcast %91 : vector<1x1x32xf32> to vector<9x9x32xf32>
    %93 = arith.mulf %88, %92 : vector<9x9x32xf32>
    %94 = arith.addf %87, %93 : vector<9x9x32xf32>
    %95 = vector.extract_strided_slice %80 {offsets = [2, 0, 0], sizes = [9, 9, 32], strides = [1, 1, 1]} : vector<14x9x32xf32> to vector<9x9x32xf32>
    %96 = vector.extract_strided_slice %42 {offsets = [2, 0, 0], sizes = [1, 1, 32], strides = [1, 1, 1]} : vector<6x6x32xf32> to vector<1x1x32xf32>
    %97 = vector.shape_cast %96 : vector<1x1x32xf32> to vector<32xf32>
    %98 = vector.shape_cast %97 : vector<32xf32> to vector<1x1x32xf32>
    %99 = vector.broadcast %98 : vector<1x1x32xf32> to vector<9x9x32xf32>
    %100 = arith.mulf %95, %99 : vector<9x9x32xf32>
    %101 = arith.addf %94, %100 : vector<9x9x32xf32>
    %102 = vector.extract_strided_slice %80 {offsets = [3, 0, 0], sizes = [9, 9, 32], strides = [1, 1, 1]} : vector<14x9x32xf32> to vector<9x9x32xf32>
    %103 = vector.extract_strided_slice %42 {offsets = [3, 0, 0], sizes = [1, 1, 32], strides = [1, 1, 1]} : vector<6x6x32xf32> to vector<1x1x32xf32>
    %104 = vector.shape_cast %103 : vector<1x1x32xf32> to vector<32xf32>
    %105 = vector.shape_cast %104 : vector<32xf32> to vector<1x1x32xf32>
    %106 = vector.broadcast %105 : vector<1x1x32xf32> to vector<9x9x32xf32>
    %107 = arith.mulf %102, %106 : vector<9x9x32xf32>
    %108 = arith.addf %101, %107 : vector<9x9x32xf32>
    %109 = vector.extract_strided_slice %80 {offsets = [4, 0, 0], sizes = [9, 9, 32], strides = [1, 1, 1]} : vector<14x9x32xf32> to vector<9x9x32xf32>
    %110 = vector.extract_strided_slice %42 {offsets = [4, 0, 0], sizes = [1, 1, 32], strides = [1, 1, 1]} : vector<6x6x32xf32> to vector<1x1x32xf32>
    %111 = vector.shape_cast %110 : vector<1x1x32xf32> to vector<32xf32>
    %112 = vector.shape_cast %111 : vector<32xf32> to vector<1x1x32xf32>
    %113 = vector.broadcast %112 : vector<1x1x32xf32> to vector<9x9x32xf32>
    %114 = arith.mulf %109, %113 : vector<9x9x32xf32>
    %115 = arith.addf %108, %114 : vector<9x9x32xf32>
    %116 = vector.extract_strided_slice %80 {offsets = [5, 0, 0], sizes = [9, 9, 32], strides = [1, 1, 1]} : vector<14x9x32xf32> to vector<9x9x32xf32>
    %117 = vector.extract_strided_slice %42 {offsets = [5, 0, 0], sizes = [1, 1, 32], strides = [1, 1, 1]} : vector<6x6x32xf32> to vector<1x1x32xf32>
    %118 = vector.shape_cast %117 : vector<1x1x32xf32> to vector<32xf32>
    %119 = vector.shape_cast %118 : vector<32xf32> to vector<1x1x32xf32>
    %120 = vector.broadcast %119 : vector<1x1x32xf32> to vector<9x9x32xf32>
    %121 = arith.mulf %116, %120 : vector<9x9x32xf32>
    %122 = arith.addf %115, %121 : vector<9x9x32xf32>
    %123 = vector.extract_strided_slice %78 {offsets = [0, 1, 0], sizes = [14, 9, 32], strides = [1, 1, 1]} : vector<14x14x32xf32> to vector<14x9x32xf32>
    %124 = vector.extract_strided_slice %123 {offsets = [0, 0, 0], sizes = [9, 9, 32], strides = [1, 1, 1]} : vector<14x9x32xf32> to vector<9x9x32xf32>
    %125 = vector.extract_strided_slice %42 {offsets = [0, 1, 0], sizes = [1, 1, 32], strides = [1, 1, 1]} : vector<6x6x32xf32> to vector<1x1x32xf32>
    %126 = vector.shape_cast %125 : vector<1x1x32xf32> to vector<32xf32>
    %127 = vector.shape_cast %126 : vector<32xf32> to vector<1x1x32xf32>
    %128 = vector.broadcast %127 : vector<1x1x32xf32> to vector<9x9x32xf32>
    %129 = arith.mulf %124, %128 : vector<9x9x32xf32>
    %130 = arith.addf %122, %129 : vector<9x9x32xf32>
    %131 = vector.extract_strided_slice %123 {offsets = [1, 0, 0], sizes = [9, 9, 32], strides = [1, 1, 1]} : vector<14x9x32xf32> to vector<9x9x32xf32>
    %132 = vector.extract_strided_slice %42 {offsets = [1, 1, 0], sizes = [1, 1, 32], strides = [1, 1, 1]} : vector<6x6x32xf32> to vector<1x1x32xf32>
    %133 = vector.shape_cast %132 : vector<1x1x32xf32> to vector<32xf32>
    %134 = vector.shape_cast %133 : vector<32xf32> to vector<1x1x32xf32>
    %135 = vector.broadcast %134 : vector<1x1x32xf32> to vector<9x9x32xf32>
    %136 = arith.mulf %131, %135 : vector<9x9x32xf32>
    %137 = arith.addf %130, %136 : vector<9x9x32xf32>
    %138 = vector.extract_strided_slice %123 {offsets = [2, 0, 0], sizes = [9, 9, 32], strides = [1, 1, 1]} : vector<14x9x32xf32> to vector<9x9x32xf32>
    %139 = vector.extract_strided_slice %42 {offsets = [2, 1, 0], sizes = [1, 1, 32], strides = [1, 1, 1]} : vector<6x6x32xf32> to vector<1x1x32xf32>
    %140 = vector.shape_cast %139 : vector<1x1x32xf32> to vector<32xf32>
    %141 = vector.shape_cast %140 : vector<32xf32> to vector<1x1x32xf32>
    %142 = vector.broadcast %141 : vector<1x1x32xf32> to vector<9x9x32xf32>
    %143 = arith.mulf %138, %142 : vector<9x9x32xf32>
    %144 = arith.addf %137, %143 : vector<9x9x32xf32>
    %145 = vector.extract_strided_slice %123 {offsets = [3, 0, 0], sizes = [9, 9, 32], strides = [1, 1, 1]} : vector<14x9x32xf32> to vector<9x9x32xf32>
    %146 = vector.extract_strided_slice %42 {offsets = [3, 1, 0], sizes = [1, 1, 32], strides = [1, 1, 1]} : vector<6x6x32xf32> to vector<1x1x32xf32>
    %147 = vector.shape_cast %146 : vector<1x1x32xf32> to vector<32xf32>
    %148 = vector.shape_cast %147 : vector<32xf32> to vector<1x1x32xf32>
    %149 = vector.broadcast %148 : vector<1x1x32xf32> to vector<9x9x32xf32>
    %150 = arith.mulf %145, %149 : vector<9x9x32xf32>
    %151 = arith.addf %144, %150 : vector<9x9x32xf32>
    %152 = vector.extract_strided_slice %123 {offsets = [4, 0, 0], sizes = [9, 9, 32], strides = [1, 1, 1]} : vector<14x9x32xf32> to vector<9x9x32xf32>
    %153 = vector.extract_strided_slice %42 {offsets = [4, 1, 0], sizes = [1, 1, 32], strides = [1, 1, 1]} : vector<6x6x32xf32> to vector<1x1x32xf32>
    %154 = vector.shape_cast %153 : vector<1x1x32xf32> to vector<32xf32>
    %155 = vector.shape_cast %154 : vector<32xf32> to vector<1x1x32xf32>
    %156 = vector.broadcast %155 : vector<1x1x32xf32> to vector<9x9x32xf32>
    %157 = arith.mulf %152, %156 : vector<9x9x32xf32>
    %158 = arith.addf %151, %157 : vector<9x9x32xf32>
    %159 = vector.extract_strided_slice %123 {offsets = [5, 0, 0], sizes = [9, 9, 32], strides = [1, 1, 1]} : vector<14x9x32xf32> to vector<9x9x32xf32>
    %160 = vector.extract_strided_slice %42 {offsets = [5, 1, 0], sizes = [1, 1, 32], strides = [1, 1, 1]} : vector<6x6x32xf32> to vector<1x1x32xf32>
    %161 = vector.shape_cast %160 : vector<1x1x32xf32> to vector<32xf32>
    %162 = vector.shape_cast %161 : vector<32xf32> to vector<1x1x32xf32>
    %163 = vector.broadcast %162 : vector<1x1x32xf32> to vector<9x9x32xf32>
    %164 = arith.mulf %159, %163 : vector<9x9x32xf32>
    %165 = arith.addf %158, %164 : vector<9x9x32xf32>
    %166 = vector.extract_strided_slice %78 {offsets = [0, 2, 0], sizes = [14, 9, 32], strides = [1, 1, 1]} : vector<14x14x32xf32> to vector<14x9x32xf32>
    %167 = vector.extract_strided_slice %166 {offsets = [0, 0, 0], sizes = [9, 9, 32], strides = [1, 1, 1]} : vector<14x9x32xf32> to vector<9x9x32xf32>
    %168 = vector.extract_strided_slice %42 {offsets = [0, 2, 0], sizes = [1, 1, 32], strides = [1, 1, 1]} : vector<6x6x32xf32> to vector<1x1x32xf32>
    %169 = vector.shape_cast %168 : vector<1x1x32xf32> to vector<32xf32>
    %170 = vector.shape_cast %169 : vector<32xf32> to vector<1x1x32xf32>
    %171 = vector.broadcast %170 : vector<1x1x32xf32> to vector<9x9x32xf32>
    %172 = arith.mulf %167, %171 : vector<9x9x32xf32>
    %173 = arith.addf %165, %172 : vector<9x9x32xf32>
    %174 = vector.extract_strided_slice %166 {offsets = [1, 0, 0], sizes = [9, 9, 32], strides = [1, 1, 1]} : vector<14x9x32xf32> to vector<9x9x32xf32>
    %175 = vector.extract_strided_slice %42 {offsets = [1, 2, 0], sizes = [1, 1, 32], strides = [1, 1, 1]} : vector<6x6x32xf32> to vector<1x1x32xf32>
    %176 = vector.shape_cast %175 : vector<1x1x32xf32> to vector<32xf32>
    %177 = vector.shape_cast %176 : vector<32xf32> to vector<1x1x32xf32>
    %178 = vector.broadcast %177 : vector<1x1x32xf32> to vector<9x9x32xf32>
    %179 = arith.mulf %174, %178 : vector<9x9x32xf32>
    %180 = arith.addf %173, %179 : vector<9x9x32xf32>
    %181 = vector.extract_strided_slice %166 {offsets = [2, 0, 0], sizes = [9, 9, 32], strides = [1, 1, 1]} : vector<14x9x32xf32> to vector<9x9x32xf32>
    %182 = vector.extract_strided_slice %42 {offsets = [2, 2, 0], sizes = [1, 1, 32], strides = [1, 1, 1]} : vector<6x6x32xf32> to vector<1x1x32xf32>
    %183 = vector.shape_cast %182 : vector<1x1x32xf32> to vector<32xf32>
    %184 = vector.shape_cast %183 : vector<32xf32> to vector<1x1x32xf32>
    %185 = vector.broadcast %184 : vector<1x1x32xf32> to vector<9x9x32xf32>
    %186 = arith.mulf %181, %185 : vector<9x9x32xf32>
    %187 = arith.addf %180, %186 : vector<9x9x32xf32>
    %188 = vector.extract_strided_slice %166 {offsets = [3, 0, 0], sizes = [9, 9, 32], strides = [1, 1, 1]} : vector<14x9x32xf32> to vector<9x9x32xf32>
    %189 = vector.extract_strided_slice %42 {offsets = [3, 2, 0], sizes = [1, 1, 32], strides = [1, 1, 1]} : vector<6x6x32xf32> to vector<1x1x32xf32>
    %190 = vector.shape_cast %189 : vector<1x1x32xf32> to vector<32xf32>
    %191 = vector.shape_cast %190 : vector<32xf32> to vector<1x1x32xf32>
    %192 = vector.broadcast %191 : vector<1x1x32xf32> to vector<9x9x32xf32>
    %193 = arith.mulf %188, %192 : vector<9x9x32xf32>
    %194 = arith.addf %187, %193 : vector<9x9x32xf32>
    %195 = vector.extract_strided_slice %166 {offsets = [4, 0, 0], sizes = [9, 9, 32], strides = [1, 1, 1]} : vector<14x9x32xf32> to vector<9x9x32xf32>
    %196 = vector.extract_strided_slice %42 {offsets = [4, 2, 0], sizes = [1, 1, 32], strides = [1, 1, 1]} : vector<6x6x32xf32> to vector<1x1x32xf32>
    %197 = vector.shape_cast %196 : vector<1x1x32xf32> to vector<32xf32>
    %198 = vector.shape_cast %197 : vector<32xf32> to vector<1x1x32xf32>
    %199 = vector.broadcast %198 : vector<1x1x32xf32> to vector<9x9x32xf32>
    %200 = arith.mulf %195, %199 : vector<9x9x32xf32>
    %201 = arith.addf %194, %200 : vector<9x9x32xf32>
    %202 = vector.extract_strided_slice %166 {offsets = [5, 0, 0], sizes = [9, 9, 32], strides = [1, 1, 1]} : vector<14x9x32xf32> to vector<9x9x32xf32>
    %203 = vector.extract_strided_slice %42 {offsets = [5, 2, 0], sizes = [1, 1, 32], strides = [1, 1, 1]} : vector<6x6x32xf32> to vector<1x1x32xf32>
    %204 = vector.shape_cast %203 : vector<1x1x32xf32> to vector<32xf32>
    %205 = vector.shape_cast %204 : vector<32xf32> to vector<1x1x32xf32>
    %206 = vector.broadcast %205 : vector<1x1x32xf32> to vector<9x9x32xf32>
    %207 = arith.mulf %202, %206 : vector<9x9x32xf32>
    %208 = arith.addf %201, %207 : vector<9x9x32xf32>
    %209 = vector.extract_strided_slice %78 {offsets = [0, 3, 0], sizes = [14, 9, 32], strides = [1, 1, 1]} : vector<14x14x32xf32> to vector<14x9x32xf32>
    %210 = vector.extract_strided_slice %209 {offsets = [0, 0, 0], sizes = [9, 9, 32], strides = [1, 1, 1]} : vector<14x9x32xf32> to vector<9x9x32xf32>
    %211 = vector.extract_strided_slice %42 {offsets = [0, 3, 0], sizes = [1, 1, 32], strides = [1, 1, 1]} : vector<6x6x32xf32> to vector<1x1x32xf32>
    %212 = vector.shape_cast %211 : vector<1x1x32xf32> to vector<32xf32>
    %213 = vector.shape_cast %212 : vector<32xf32> to vector<1x1x32xf32>
    %214 = vector.broadcast %213 : vector<1x1x32xf32> to vector<9x9x32xf32>
    %215 = arith.mulf %210, %214 : vector<9x9x32xf32>
    %216 = arith.addf %208, %215 : vector<9x9x32xf32>
    %217 = vector.extract_strided_slice %209 {offsets = [1, 0, 0], sizes = [9, 9, 32], strides = [1, 1, 1]} : vector<14x9x32xf32> to vector<9x9x32xf32>
    %218 = vector.extract_strided_slice %42 {offsets = [1, 3, 0], sizes = [1, 1, 32], strides = [1, 1, 1]} : vector<6x6x32xf32> to vector<1x1x32xf32>
    %219 = vector.shape_cast %218 : vector<1x1x32xf32> to vector<32xf32>
    %220 = vector.shape_cast %219 : vector<32xf32> to vector<1x1x32xf32>
    %221 = vector.broadcast %220 : vector<1x1x32xf32> to vector<9x9x32xf32>
    %222 = arith.mulf %217, %221 : vector<9x9x32xf32>
    %223 = arith.addf %216, %222 : vector<9x9x32xf32>
    %224 = vector.extract_strided_slice %209 {offsets = [2, 0, 0], sizes = [9, 9, 32], strides = [1, 1, 1]} : vector<14x9x32xf32> to vector<9x9x32xf32>
    %225 = vector.extract_strided_slice %42 {offsets = [2, 3, 0], sizes = [1, 1, 32], strides = [1, 1, 1]} : vector<6x6x32xf32> to vector<1x1x32xf32>
    %226 = vector.shape_cast %225 : vector<1x1x32xf32> to vector<32xf32>
    %227 = vector.shape_cast %226 : vector<32xf32> to vector<1x1x32xf32>
    %228 = vector.broadcast %227 : vector<1x1x32xf32> to vector<9x9x32xf32>
    %229 = arith.mulf %224, %228 : vector<9x9x32xf32>
    %230 = arith.addf %223, %229 : vector<9x9x32xf32>
    %231 = vector.extract_strided_slice %209 {offsets = [3, 0, 0], sizes = [9, 9, 32], strides = [1, 1, 1]} : vector<14x9x32xf32> to vector<9x9x32xf32>
    %232 = vector.extract_strided_slice %42 {offsets = [3, 3, 0], sizes = [1, 1, 32], strides = [1, 1, 1]} : vector<6x6x32xf32> to vector<1x1x32xf32>
    %233 = vector.shape_cast %232 : vector<1x1x32xf32> to vector<32xf32>
    %234 = vector.shape_cast %233 : vector<32xf32> to vector<1x1x32xf32>
    %235 = vector.broadcast %234 : vector<1x1x32xf32> to vector<9x9x32xf32>
    %236 = arith.mulf %231, %235 : vector<9x9x32xf32>
    %237 = arith.addf %230, %236 : vector<9x9x32xf32>
    %238 = vector.extract_strided_slice %209 {offsets = [4, 0, 0], sizes = [9, 9, 32], strides = [1, 1, 1]} : vector<14x9x32xf32> to vector<9x9x32xf32>
    %239 = vector.extract_strided_slice %42 {offsets = [4, 3, 0], sizes = [1, 1, 32], strides = [1, 1, 1]} : vector<6x6x32xf32> to vector<1x1x32xf32>
    %240 = vector.shape_cast %239 : vector<1x1x32xf32> to vector<32xf32>
    %241 = vector.shape_cast %240 : vector<32xf32> to vector<1x1x32xf32>
    %242 = vector.broadcast %241 : vector<1x1x32xf32> to vector<9x9x32xf32>
    %243 = arith.mulf %238, %242 : vector<9x9x32xf32>
    %244 = arith.addf %237, %243 : vector<9x9x32xf32>
    %245 = vector.extract_strided_slice %209 {offsets = [5, 0, 0], sizes = [9, 9, 32], strides = [1, 1, 1]} : vector<14x9x32xf32> to vector<9x9x32xf32>
    %246 = vector.extract_strided_slice %42 {offsets = [5, 3, 0], sizes = [1, 1, 32], strides = [1, 1, 1]} : vector<6x6x32xf32> to vector<1x1x32xf32>
    %247 = vector.shape_cast %246 : vector<1x1x32xf32> to vector<32xf32>
    %248 = vector.shape_cast %247 : vector<32xf32> to vector<1x1x32xf32>
    %249 = vector.broadcast %248 : vector<1x1x32xf32> to vector<9x9x32xf32>
    %250 = arith.mulf %245, %249 : vector<9x9x32xf32>
    %251 = arith.addf %244, %250 : vector<9x9x32xf32>
    %252 = vector.extract_strided_slice %78 {offsets = [0, 4, 0], sizes = [14, 9, 32], strides = [1, 1, 1]} : vector<14x14x32xf32> to vector<14x9x32xf32>
    %253 = vector.extract_strided_slice %252 {offsets = [0, 0, 0], sizes = [9, 9, 32], strides = [1, 1, 1]} : vector<14x9x32xf32> to vector<9x9x32xf32>
    %254 = vector.extract_strided_slice %42 {offsets = [0, 4, 0], sizes = [1, 1, 32], strides = [1, 1, 1]} : vector<6x6x32xf32> to vector<1x1x32xf32>
    %255 = vector.shape_cast %254 : vector<1x1x32xf32> to vector<32xf32>
    %256 = vector.shape_cast %255 : vector<32xf32> to vector<1x1x32xf32>
    %257 = vector.broadcast %256 : vector<1x1x32xf32> to vector<9x9x32xf32>
    %258 = arith.mulf %253, %257 : vector<9x9x32xf32>
    %259 = arith.addf %251, %258 : vector<9x9x32xf32>
    %260 = vector.extract_strided_slice %252 {offsets = [1, 0, 0], sizes = [9, 9, 32], strides = [1, 1, 1]} : vector<14x9x32xf32> to vector<9x9x32xf32>
    %261 = vector.extract_strided_slice %42 {offsets = [1, 4, 0], sizes = [1, 1, 32], strides = [1, 1, 1]} : vector<6x6x32xf32> to vector<1x1x32xf32>
    %262 = vector.shape_cast %261 : vector<1x1x32xf32> to vector<32xf32>
    %263 = vector.shape_cast %262 : vector<32xf32> to vector<1x1x32xf32>
    %264 = vector.broadcast %263 : vector<1x1x32xf32> to vector<9x9x32xf32>
    %265 = arith.mulf %260, %264 : vector<9x9x32xf32>
    %266 = arith.addf %259, %265 : vector<9x9x32xf32>
    %267 = vector.extract_strided_slice %252 {offsets = [2, 0, 0], sizes = [9, 9, 32], strides = [1, 1, 1]} : vector<14x9x32xf32> to vector<9x9x32xf32>
    %268 = vector.extract_strided_slice %42 {offsets = [2, 4, 0], sizes = [1, 1, 32], strides = [1, 1, 1]} : vector<6x6x32xf32> to vector<1x1x32xf32>
    %269 = vector.shape_cast %268 : vector<1x1x32xf32> to vector<32xf32>
    %270 = vector.shape_cast %269 : vector<32xf32> to vector<1x1x32xf32>
    %271 = vector.broadcast %270 : vector<1x1x32xf32> to vector<9x9x32xf32>
    %272 = arith.mulf %267, %271 : vector<9x9x32xf32>
    %273 = arith.addf %266, %272 : vector<9x9x32xf32>
    %274 = vector.extract_strided_slice %252 {offsets = [3, 0, 0], sizes = [9, 9, 32], strides = [1, 1, 1]} : vector<14x9x32xf32> to vector<9x9x32xf32>
    %275 = vector.extract_strided_slice %42 {offsets = [3, 4, 0], sizes = [1, 1, 32], strides = [1, 1, 1]} : vector<6x6x32xf32> to vector<1x1x32xf32>
    %276 = vector.shape_cast %275 : vector<1x1x32xf32> to vector<32xf32>
    %277 = vector.shape_cast %276 : vector<32xf32> to vector<1x1x32xf32>
    %278 = vector.broadcast %277 : vector<1x1x32xf32> to vector<9x9x32xf32>
    %279 = arith.mulf %274, %278 : vector<9x9x32xf32>
    %280 = arith.addf %273, %279 : vector<9x9x32xf32>
    %281 = vector.extract_strided_slice %252 {offsets = [4, 0, 0], sizes = [9, 9, 32], strides = [1, 1, 1]} : vector<14x9x32xf32> to vector<9x9x32xf32>
    %282 = vector.extract_strided_slice %42 {offsets = [4, 4, 0], sizes = [1, 1, 32], strides = [1, 1, 1]} : vector<6x6x32xf32> to vector<1x1x32xf32>
    %283 = vector.shape_cast %282 : vector<1x1x32xf32> to vector<32xf32>
    %284 = vector.shape_cast %283 : vector<32xf32> to vector<1x1x32xf32>
    %285 = vector.broadcast %284 : vector<1x1x32xf32> to vector<9x9x32xf32>
    %286 = arith.mulf %281, %285 : vector<9x9x32xf32>
    %287 = arith.addf %280, %286 : vector<9x9x32xf32>
    %288 = vector.extract_strided_slice %252 {offsets = [5, 0, 0], sizes = [9, 9, 32], strides = [1, 1, 1]} : vector<14x9x32xf32> to vector<9x9x32xf32>
    %289 = vector.extract_strided_slice %42 {offsets = [5, 4, 0], sizes = [1, 1, 32], strides = [1, 1, 1]} : vector<6x6x32xf32> to vector<1x1x32xf32>
    %290 = vector.shape_cast %289 : vector<1x1x32xf32> to vector<32xf32>
    %291 = vector.shape_cast %290 : vector<32xf32> to vector<1x1x32xf32>
    %292 = vector.broadcast %291 : vector<1x1x32xf32> to vector<9x9x32xf32>
    %293 = arith.mulf %288, %292 : vector<9x9x32xf32>
    %294 = arith.addf %287, %293 : vector<9x9x32xf32>
    %295 = vector.extract_strided_slice %78 {offsets = [0, 5, 0], sizes = [14, 9, 32], strides = [1, 1, 1]} : vector<14x14x32xf32> to vector<14x9x32xf32>
    %296 = vector.extract_strided_slice %295 {offsets = [0, 0, 0], sizes = [9, 9, 32], strides = [1, 1, 1]} : vector<14x9x32xf32> to vector<9x9x32xf32>
    %297 = vector.extract_strided_slice %42 {offsets = [0, 5, 0], sizes = [1, 1, 32], strides = [1, 1, 1]} : vector<6x6x32xf32> to vector<1x1x32xf32>
    %298 = vector.shape_cast %297 : vector<1x1x32xf32> to vector<32xf32>
    %299 = vector.shape_cast %298 : vector<32xf32> to vector<1x1x32xf32>
    %300 = vector.broadcast %299 : vector<1x1x32xf32> to vector<9x9x32xf32>
    %301 = arith.mulf %296, %300 : vector<9x9x32xf32>
    %302 = arith.addf %294, %301 : vector<9x9x32xf32>
    %303 = vector.extract_strided_slice %295 {offsets = [1, 0, 0], sizes = [9, 9, 32], strides = [1, 1, 1]} : vector<14x9x32xf32> to vector<9x9x32xf32>
    %304 = vector.extract_strided_slice %42 {offsets = [1, 5, 0], sizes = [1, 1, 32], strides = [1, 1, 1]} : vector<6x6x32xf32> to vector<1x1x32xf32>
    %305 = vector.shape_cast %304 : vector<1x1x32xf32> to vector<32xf32>
    %306 = vector.shape_cast %305 : vector<32xf32> to vector<1x1x32xf32>
    %307 = vector.broadcast %306 : vector<1x1x32xf32> to vector<9x9x32xf32>
    %308 = arith.mulf %303, %307 : vector<9x9x32xf32>
    %309 = arith.addf %302, %308 : vector<9x9x32xf32>
    %310 = vector.extract_strided_slice %295 {offsets = [2, 0, 0], sizes = [9, 9, 32], strides = [1, 1, 1]} : vector<14x9x32xf32> to vector<9x9x32xf32>
    %311 = vector.extract_strided_slice %42 {offsets = [2, 5, 0], sizes = [1, 1, 32], strides = [1, 1, 1]} : vector<6x6x32xf32> to vector<1x1x32xf32>
    %312 = vector.shape_cast %311 : vector<1x1x32xf32> to vector<32xf32>
    %313 = vector.shape_cast %312 : vector<32xf32> to vector<1x1x32xf32>
    %314 = vector.broadcast %313 : vector<1x1x32xf32> to vector<9x9x32xf32>
    %315 = arith.mulf %310, %314 : vector<9x9x32xf32>
    %316 = arith.addf %309, %315 : vector<9x9x32xf32>
    %317 = vector.extract_strided_slice %295 {offsets = [3, 0, 0], sizes = [9, 9, 32], strides = [1, 1, 1]} : vector<14x9x32xf32> to vector<9x9x32xf32>
    %318 = vector.extract_strided_slice %42 {offsets = [3, 5, 0], sizes = [1, 1, 32], strides = [1, 1, 1]} : vector<6x6x32xf32> to vector<1x1x32xf32>
    %319 = vector.shape_cast %318 : vector<1x1x32xf32> to vector<32xf32>
    %320 = vector.shape_cast %319 : vector<32xf32> to vector<1x1x32xf32>
    %321 = vector.broadcast %320 : vector<1x1x32xf32> to vector<9x9x32xf32>
    %322 = arith.mulf %317, %321 : vector<9x9x32xf32>
    %323 = arith.addf %316, %322 : vector<9x9x32xf32>
    %324 = vector.extract_strided_slice %295 {offsets = [4, 0, 0], sizes = [9, 9, 32], strides = [1, 1, 1]} : vector<14x9x32xf32> to vector<9x9x32xf32>
    %325 = vector.extract_strided_slice %42 {offsets = [4, 5, 0], sizes = [1, 1, 32], strides = [1, 1, 1]} : vector<6x6x32xf32> to vector<1x1x32xf32>
    %326 = vector.shape_cast %325 : vector<1x1x32xf32> to vector<32xf32>
    %327 = vector.shape_cast %326 : vector<32xf32> to vector<1x1x32xf32>
    %328 = vector.broadcast %327 : vector<1x1x32xf32> to vector<9x9x32xf32>
    %329 = arith.mulf %324, %328 : vector<9x9x32xf32>
    %330 = arith.addf %323, %329 : vector<9x9x32xf32>
    %331 = vector.extract_strided_slice %295 {offsets = [5, 0, 0], sizes = [9, 9, 32], strides = [1, 1, 1]} : vector<14x9x32xf32> to vector<9x9x32xf32>
    %332 = vector.extract_strided_slice %42 {offsets = [5, 5, 0], sizes = [1, 1, 32], strides = [1, 1, 1]} : vector<6x6x32xf32> to vector<1x1x32xf32>
    %333 = vector.shape_cast %332 : vector<1x1x32xf32> to vector<32xf32>
    %334 = vector.shape_cast %333 : vector<32xf32> to vector<1x1x32xf32>
    %335 = vector.broadcast %334 : vector<1x1x32xf32> to vector<9x9x32xf32>
    %336 = arith.mulf %331, %335 : vector<9x9x32xf32>
    %337 = arith.addf %330, %336 : vector<9x9x32xf32>
    %338 = vector.shape_cast %4 : vector<32xf32> to vector<1x1x32xf32>
    %339 = vector.broadcast %338 : vector<1x1x32xf32> to vector<9x9x32xf32>
    %340 = arith.mulf %337, %339 : vector<9x9x32xf32>
    %341 = vector.shape_cast %6 : vector<32xf32> to vector<1x1x32xf32>
    %342 = vector.broadcast %341 : vector<1x1x32xf32> to vector<9x9x32xf32>
    %343 = arith.addf %340, %342 : vector<9x9x32xf32>
    %c0_15 = arith.constant 0 : index
    %c0_16 = arith.constant 0 : index
    %c0_17 = arith.constant 0 : index
    %c0_18 = arith.constant 0 : index
    %344 = vector.load %arg7[%c0_15, %c0_16, %c0_17, %c0_18] : memref<2x9x9x32xf32, #tpu.memory_space<vmem>>, vector<1x9x9x32xf32>
    %345 = vector.shape_cast %344 : vector<1x9x9x32xf32> to vector<9x9x32xf32>
    %346 = vector.shape_cast %343 : vector<9x9x32xf32> to vector<1x9x9x32xf32>
    tpu.vector_store %arg7[%c0_15, %c0_16, %c0_17, %c0_18], %346 {strides = array<i32>} : memref<2x9x9x32xf32, #tpu.memory_space<vmem>>, vector<1x9x9x32xf32>,
    %c1 = arith.constant 1 : index
    %c0_19 = arith.constant 0 : index
    %c0_20 = arith.constant 0 : index
    %c0_21 = arith.constant 0 : index
    %347 = vector.load %arg1[%c1, %c0_19, %c0_20, %c0_21] : memref<2x6x6x4xf32, #tpu.memory_space<vmem>>, vector<1x6x6x4xf32>
    %348 = vector.shape_cast %347 : vector<1x6x6x4xf32> to vector<6x6x4xf32>
    %349 = vector.extract_strided_slice %348 {offsets = [0, 0, 0], sizes = [6, 6, 1], strides = [1, 1, 1]} : vector<6x6x4xf32> to vector<6x6x1xf32>
    %350 = vector.extract_strided_slice %0 {offsets = [0, 0], sizes = [1, 32], strides = [1, 1]} : vector<4x32xf32> to vector<1x32xf32>
    %351 = vector.shape_cast %350 : vector<1x32xf32> to vector<32xf32>
    %352 = vector.shape_cast %351 : vector<32xf32> to vector<1x1x32xf32>
    %353 = vector.broadcast %349 : vector<6x6x1xf32> to vector<6x6x32xf32>
    %354 = vector.broadcast %352 : vector<1x1x32xf32> to vector<6x6x32xf32>
    %355 = arith.mulf %353, %354 : vector<6x6x32xf32>
    %356 = vector.extract_strided_slice %348 {offsets = [0, 0, 1], sizes = [6, 6, 1], strides = [1, 1, 1]} : vector<6x6x4xf32> to vector<6x6x1xf32>
    %357 = vector.extract_strided_slice %0 {offsets = [1, 0], sizes = [1, 32], strides = [1, 1]} : vector<4x32xf32> to vector<1x32xf32>
    %358 = vector.shape_cast %357 : vector<1x32xf32> to vector<32xf32>
    %359 = vector.shape_cast %358 : vector<32xf32> to vector<1x1x32xf32>
    %360 = vector.broadcast %356 : vector<6x6x1xf32> to vector<6x6x32xf32>
    %361 = vector.broadcast %359 : vector<1x1x32xf32> to vector<6x6x32xf32>
    %362 = arith.mulf %360, %361 : vector<6x6x32xf32>
    %363 = arith.addf %355, %362 : vector<6x6x32xf32>
    %364 = vector.extract_strided_slice %348 {offsets = [0, 0, 2], sizes = [6, 6, 1], strides = [1, 1, 1]} : vector<6x6x4xf32> to vector<6x6x1xf32>
    %365 = vector.extract_strided_slice %0 {offsets = [2, 0], sizes = [1, 32], strides = [1, 1]} : vector<4x32xf32> to vector<1x32xf32>
    %366 = vector.shape_cast %365 : vector<1x32xf32> to vector<32xf32>
    %367 = vector.shape_cast %366 : vector<32xf32> to vector<1x1x32xf32>
    %368 = vector.broadcast %364 : vector<6x6x1xf32> to vector<6x6x32xf32>
    %369 = vector.broadcast %367 : vector<1x1x32xf32> to vector<6x6x32xf32>
    %370 = arith.mulf %368, %369 : vector<6x6x32xf32>
    %371 = arith.addf %363, %370 : vector<6x6x32xf32>
    %372 = vector.extract_strided_slice %348 {offsets = [0, 0, 3], sizes = [6, 6, 1], strides = [1, 1, 1]} : vector<6x6x4xf32> to vector<6x6x1xf32>
    %373 = vector.extract_strided_slice %0 {offsets = [3, 0], sizes = [1, 32], strides = [1, 1]} : vector<4x32xf32> to vector<1x32xf32>
    %374 = vector.shape_cast %373 : vector<1x32xf32> to vector<32xf32>
    %375 = vector.shape_cast %374 : vector<32xf32> to vector<1x1x32xf32>
    %376 = vector.broadcast %372 : vector<6x6x1xf32> to vector<6x6x32xf32>
    %377 = vector.broadcast %375 : vector<1x1x32xf32> to vector<6x6x32xf32>
    %378 = arith.mulf %376, %377 : vector<6x6x32xf32>
    %379 = arith.addf %371, %378 : vector<6x6x32xf32>
    %380 = vector.shape_cast %2 : vector<32xf32> to vector<1x1x32xf32>
    %381 = vector.broadcast %380 : vector<1x1x32xf32> to vector<6x6x32xf32>
    %382 = arith.addf %379, %381 : vector<6x6x32xf32>
    %c1_22 = arith.constant 1 : index
    %c0_23 = arith.constant 0 : index
    %c0_24 = arith.constant 0 : index
    %c0_25 = arith.constant 0 : index
    %383 = vector.load %arg2[%c1_22, %c0_23, %c0_24, %c0_25] : memref<2x14x14x4xf32, #tpu.memory_space<vmem>>, vector<1x14x14x4xf32>
    %384 = vector.shape_cast %383 : vector<1x14x14x4xf32> to vector<14x14x4xf32>
    %385 = vector.extract_strided_slice %384 {offsets = [0, 0, 0], sizes = [14, 14, 1], strides = [1, 1, 1]} : vector<14x14x4xf32> to vector<14x14x1xf32>
    %386 = vector.extract_strided_slice %0 {offsets = [0, 0], sizes = [1, 32], strides = [1, 1]} : vector<4x32xf32> to vector<1x32xf32>
    %387 = vector.shape_cast %386 : vector<1x32xf32> to vector<32xf32>
    %388 = vector.shape_cast %387 : vector<32xf32> to vector<1x1x32xf32>
    %389 = vector.broadcast %385 : vector<14x14x1xf32> to vector<14x14x32xf32>
    %390 = vector.broadcast %388 : vector<1x1x32xf32> to vector<14x14x32xf32>
    %391 = arith.mulf %389, %390 : vector<14x14x32xf32>
    %392 = vector.extract_strided_slice %384 {offsets = [0, 0, 1], sizes = [14, 14, 1], strides = [1, 1, 1]} : vector<14x14x4xf32> to vector<14x14x1xf32>
    %393 = vector.extract_strided_slice %0 {offsets = [1, 0], sizes = [1, 32], strides = [1, 1]} : vector<4x32xf32> to vector<1x32xf32>
    %394 = vector.shape_cast %393 : vector<1x32xf32> to vector<32xf32>
    %395 = vector.shape_cast %394 : vector<32xf32> to vector<1x1x32xf32>
    %396 = vector.broadcast %392 : vector<14x14x1xf32> to vector<14x14x32xf32>
    %397 = vector.broadcast %395 : vector<1x1x32xf32> to vector<14x14x32xf32>
    %398 = arith.mulf %396, %397 : vector<14x14x32xf32>
    %399 = arith.addf %391, %398 : vector<14x14x32xf32>
    %400 = vector.extract_strided_slice %384 {offsets = [0, 0, 2], sizes = [14, 14, 1], strides = [1, 1, 1]} : vector<14x14x4xf32> to vector<14x14x1xf32>
    %401 = vector.extract_strided_slice %0 {offsets = [2, 0], sizes = [1, 32], strides = [1, 1]} : vector<4x32xf32> to vector<1x32xf32>
    %402 = vector.shape_cast %401 : vector<1x32xf32> to vector<32xf32>
    %403 = vector.shape_cast %402 : vector<32xf32> to vector<1x1x32xf32>
    %404 = vector.broadcast %400 : vector<14x14x1xf32> to vector<14x14x32xf32>
    %405 = vector.broadcast %403 : vector<1x1x32xf32> to vector<14x14x32xf32>
    %406 = arith.mulf %404, %405 : vector<14x14x32xf32>
    %407 = arith.addf %399, %406 : vector<14x14x32xf32>
    %408 = vector.extract_strided_slice %384 {offsets = [0, 0, 3], sizes = [14, 14, 1], strides = [1, 1, 1]} : vector<14x14x4xf32> to vector<14x14x1xf32>
    %409 = vector.extract_strided_slice %0 {offsets = [3, 0], sizes = [1, 32], strides = [1, 1]} : vector<4x32xf32> to vector<1x32xf32>
    %410 = vector.shape_cast %409 : vector<1x32xf32> to vector<32xf32>
    %411 = vector.shape_cast %410 : vector<32xf32> to vector<1x1x32xf32>
    %412 = vector.broadcast %408 : vector<14x14x1xf32> to vector<14x14x32xf32>
    %413 = vector.broadcast %411 : vector<1x1x32xf32> to vector<14x14x32xf32>
    %414 = arith.mulf %412, %413 : vector<14x14x32xf32>
    %415 = arith.addf %407, %414 : vector<14x14x32xf32>
    %416 = vector.shape_cast %2 : vector<32xf32> to vector<1x1x32xf32>
    %417 = vector.broadcast %416 : vector<1x1x32xf32> to vector<14x14x32xf32>
    %418 = arith.addf %415, %417 : vector<14x14x32xf32>
    %cst_26 = arith.constant 0.000000e+00 : f32
    %419 = vector.broadcast %cst_26 : f32 to vector<9x9x32xf32>
    %420 = vector.extract_strided_slice %418 {offsets = [0, 0, 0], sizes = [14, 9, 32], strides = [1, 1, 1]} : vector<14x14x32xf32> to vector<14x9x32xf32>
    %421 = vector.extract_strided_slice %420 {offsets = [0, 0, 0], sizes = [9, 9, 32], strides = [1, 1, 1]} : vector<14x9x32xf32> to vector<9x9x32xf32>
    %422 = vector.extract_strided_slice %382 {offsets = [0, 0, 0], sizes = [1, 1, 32], strides = [1, 1, 1]} : vector<6x6x32xf32> to vector<1x1x32xf32>
    %423 = vector.shape_cast %422 : vector<1x1x32xf32> to vector<32xf32>
    %424 = vector.shape_cast %423 : vector<32xf32> to vector<1x1x32xf32>
    %425 = vector.broadcast %424 : vector<1x1x32xf32> to vector<9x9x32xf32>
    %426 = arith.mulf %421, %425 : vector<9x9x32xf32>
    %427 = arith.addf %419, %426 : vector<9x9x32xf32>
    %428 = vector.extract_strided_slice %420 {offsets = [1, 0, 0], sizes = [9, 9, 32], strides = [1, 1, 1]} : vector<14x9x32xf32> to vector<9x9x32xf32>
    %429 = vector.extract_strided_slice %382 {offsets = [1, 0, 0], sizes = [1, 1, 32], strides = [1, 1, 1]} : vector<6x6x32xf32> to vector<1x1x32xf32>
    %430 = vector.shape_cast %429 : vector<1x1x32xf32> to vector<32xf32>
    %431 = vector.shape_cast %430 : vector<32xf32> to vector<1x1x32xf32>
    %432 = vector.broadcast %431 : vector<1x1x32xf32> to vector<9x9x32xf32>
    %433 = arith.mulf %428, %432 : vector<9x9x32xf32>
    %434 = arith.addf %427, %433 : vector<9x9x32xf32>
    %435 = vector.extract_strided_slice %420 {offsets = [2, 0, 0], sizes = [9, 9, 32], strides = [1, 1, 1]} : vector<14x9x32xf32> to vector<9x9x32xf32>
    %436 = vector.extract_strided_slice %382 {offsets = [2, 0, 0], sizes = [1, 1, 32], strides = [1, 1, 1]} : vector<6x6x32xf32> to vector<1x1x32xf32>
    %437 = vector.shape_cast %436 : vector<1x1x32xf32> to vector<32xf32>
    %438 = vector.shape_cast %437 : vector<32xf32> to vector<1x1x32xf32>
    %439 = vector.broadcast %438 : vector<1x1x32xf32> to vector<9x9x32xf32>
    %440 = arith.mulf %435, %439 : vector<9x9x32xf32>
    %441 = arith.addf %434, %440 : vector<9x9x32xf32>
    %442 = vector.extract_strided_slice %420 {offsets = [3, 0, 0], sizes = [9, 9, 32], strides = [1, 1, 1]} : vector<14x9x32xf32> to vector<9x9x32xf32>
    %443 = vector.extract_strided_slice %382 {offsets = [3, 0, 0], sizes = [1, 1, 32], strides = [1, 1, 1]} : vector<6x6x32xf32> to vector<1x1x32xf32>
    %444 = vector.shape_cast %443 : vector<1x1x32xf32> to vector<32xf32>
    %445 = vector.shape_cast %444 : vector<32xf32> to vector<1x1x32xf32>
    %446 = vector.broadcast %445 : vector<1x1x32xf32> to vector<9x9x32xf32>
    %447 = arith.mulf %442, %446 : vector<9x9x32xf32>
    %448 = arith.addf %441, %447 : vector<9x9x32xf32>
    %449 = vector.extract_strided_slice %420 {offsets = [4, 0, 0], sizes = [9, 9, 32], strides = [1, 1, 1]} : vector<14x9x32xf32> to vector<9x9x32xf32>
    %450 = vector.extract_strided_slice %382 {offsets = [4, 0, 0], sizes = [1, 1, 32], strides = [1, 1, 1]} : vector<6x6x32xf32> to vector<1x1x32xf32>
    %451 = vector.shape_cast %450 : vector<1x1x32xf32> to vector<32xf32>
    %452 = vector.shape_cast %451 : vector<32xf32> to vector<1x1x32xf32>
    %453 = vector.broadcast %452 : vector<1x1x32xf32> to vector<9x9x32xf32>
    %454 = arith.mulf %449, %453 : vector<9x9x32xf32>
    %455 = arith.addf %448, %454 : vector<9x9x32xf32>
    %456 = vector.extract_strided_slice %420 {offsets = [5, 0, 0], sizes = [9, 9, 32], strides = [1, 1, 1]} : vector<14x9x32xf32> to vector<9x9x32xf32>
    %457 = vector.extract_strided_slice %382 {offsets = [5, 0, 0], sizes = [1, 1, 32], strides = [1, 1, 1]} : vector<6x6x32xf32> to vector<1x1x32xf32>
    %458 = vector.shape_cast %457 : vector<1x1x32xf32> to vector<32xf32>
    %459 = vector.shape_cast %458 : vector<32xf32> to vector<1x1x32xf32>
    %460 = vector.broadcast %459 : vector<1x1x32xf32> to vector<9x9x32xf32>
    %461 = arith.mulf %456, %460 : vector<9x9x32xf32>
    %462 = arith.addf %455, %461 : vector<9x9x32xf32>
    %463 = vector.extract_strided_slice %418 {offsets = [0, 1, 0], sizes = [14, 9, 32], strides = [1, 1, 1]} : vector<14x14x32xf32> to vector<14x9x32xf32>
    %464 = vector.extract_strided_slice %463 {offsets = [0, 0, 0], sizes = [9, 9, 32], strides = [1, 1, 1]} : vector<14x9x32xf32> to vector<9x9x32xf32>
    %465 = vector.extract_strided_slice %382 {offsets = [0, 1, 0], sizes = [1, 1, 32], strides = [1, 1, 1]} : vector<6x6x32xf32> to vector<1x1x32xf32>
    %466 = vector.shape_cast %465 : vector<1x1x32xf32> to vector<32xf32>
    %467 = vector.shape_cast %466 : vector<32xf32> to vector<1x1x32xf32>
    %468 = vector.broadcast %467 : vector<1x1x32xf32> to vector<9x9x32xf32>
    %469 = arith.mulf %464, %468 : vector<9x9x32xf32>
    %470 = arith.addf %462, %469 : vector<9x9x32xf32>
    %471 = vector.extract_strided_slice %463 {offsets = [1, 0, 0], sizes = [9, 9, 32], strides = [1, 1, 1]} : vector<14x9x32xf32> to vector<9x9x32xf32>
    %472 = vector.extract_strided_slice %382 {offsets = [1, 1, 0], sizes = [1, 1, 32], strides = [1, 1, 1]} : vector<6x6x32xf32> to vector<1x1x32xf32>
    %473 = vector.shape_cast %472 : vector<1x1x32xf32> to vector<32xf32>
    %474 = vector.shape_cast %473 : vector<32xf32> to vector<1x1x32xf32>
    %475 = vector.broadcast %474 : vector<1x1x32xf32> to vector<9x9x32xf32>
    %476 = arith.mulf %471, %475 : vector<9x9x32xf32>
    %477 = arith.addf %470, %476 : vector<9x9x32xf32>
    %478 = vector.extract_strided_slice %463 {offsets = [2, 0, 0], sizes = [9, 9, 32], strides = [1, 1, 1]} : vector<14x9x32xf32> to vector<9x9x32xf32>
    %479 = vector.extract_strided_slice %382 {offsets = [2, 1, 0], sizes = [1, 1, 32], strides = [1, 1, 1]} : vector<6x6x32xf32> to vector<1x1x32xf32>
    %480 = vector.shape_cast %479 : vector<1x1x32xf32> to vector<32xf32>
    %481 = vector.shape_cast %480 : vector<32xf32> to vector<1x1x32xf32>
    %482 = vector.broadcast %481 : vector<1x1x32xf32> to vector<9x9x32xf32>
    %483 = arith.mulf %478, %482 : vector<9x9x32xf32>
    %484 = arith.addf %477, %483 : vector<9x9x32xf32>
    %485 = vector.extract_strided_slice %463 {offsets = [3, 0, 0], sizes = [9, 9, 32], strides = [1, 1, 1]} : vector<14x9x32xf32> to vector<9x9x32xf32>
    %486 = vector.extract_strided_slice %382 {offsets = [3, 1, 0], sizes = [1, 1, 32], strides = [1, 1, 1]} : vector<6x6x32xf32> to vector<1x1x32xf32>
    %487 = vector.shape_cast %486 : vector<1x1x32xf32> to vector<32xf32>
    %488 = vector.shape_cast %487 : vector<32xf32> to vector<1x1x32xf32>
    %489 = vector.broadcast %488 : vector<1x1x32xf32> to vector<9x9x32xf32>
    %490 = arith.mulf %485, %489 : vector<9x9x32xf32>
    %491 = arith.addf %484, %490 : vector<9x9x32xf32>
    %492 = vector.extract_strided_slice %463 {offsets = [4, 0, 0], sizes = [9, 9, 32], strides = [1, 1, 1]} : vector<14x9x32xf32> to vector<9x9x32xf32>
    %493 = vector.extract_strided_slice %382 {offsets = [4, 1, 0], sizes = [1, 1, 32], strides = [1, 1, 1]} : vector<6x6x32xf32> to vector<1x1x32xf32>
    %494 = vector.shape_cast %493 : vector<1x1x32xf32> to vector<32xf32>
    %495 = vector.shape_cast %494 : vector<32xf32> to vector<1x1x32xf32>
    %496 = vector.broadcast %495 : vector<1x1x32xf32> to vector<9x9x32xf32>
    %497 = arith.mulf %492, %496 : vector<9x9x32xf32>
    %498 = arith.addf %491, %497 : vector<9x9x32xf32>
    %499 = vector.extract_strided_slice %463 {offsets = [5, 0, 0], sizes = [9, 9, 32], strides = [1, 1, 1]} : vector<14x9x32xf32> to vector<9x9x32xf32>
    %500 = vector.extract_strided_slice %382 {offsets = [5, 1, 0], sizes = [1, 1, 32], strides = [1, 1, 1]} : vector<6x6x32xf32> to vector<1x1x32xf32>
    %501 = vector.shape_cast %500 : vector<1x1x32xf32> to vector<32xf32>
    %502 = vector.shape_cast %501 : vector<32xf32> to vector<1x1x32xf32>
    %503 = vector.broadcast %502 : vector<1x1x32xf32> to vector<9x9x32xf32>
    %504 = arith.mulf %499, %503 : vector<9x9x32xf32>
    %505 = arith.addf %498, %504 : vector<9x9x32xf32>
    %506 = vector.extract_strided_slice %418 {offsets = [0, 2, 0], sizes = [14, 9, 32], strides = [1, 1, 1]} : vector<14x14x32xf32> to vector<14x9x32xf32>
    %507 = vector.extract_strided_slice %506 {offsets = [0, 0, 0], sizes = [9, 9, 32], strides = [1, 1, 1]} : vector<14x9x32xf32> to vector<9x9x32xf32>
    %508 = vector.extract_strided_slice %382 {offsets = [0, 2, 0], sizes = [1, 1, 32], strides = [1, 1, 1]} : vector<6x6x32xf32> to vector<1x1x32xf32>
    %509 = vector.shape_cast %508 : vector<1x1x32xf32> to vector<32xf32>
    %510 = vector.shape_cast %509 : vector<32xf32> to vector<1x1x32xf32>
    %511 = vector.broadcast %510 : vector<1x1x32xf32> to vector<9x9x32xf32>
    %512 = arith.mulf %507, %511 : vector<9x9x32xf32>
    %513 = arith.addf %505, %512 : vector<9x9x32xf32>
    %514 = vector.extract_strided_slice %506 {offsets = [1, 0, 0], sizes = [9, 9, 32], strides = [1, 1, 1]} : vector<14x9x32xf32> to vector<9x9x32xf32>
    %515 = vector.extract_strided_slice %382 {offsets = [1, 2, 0], sizes = [1, 1, 32], strides = [1, 1, 1]} : vector<6x6x32xf32> to vector<1x1x32xf32>
    %516 = vector.shape_cast %515 : vector<1x1x32xf32> to vector<32xf32>
    %517 = vector.shape_cast %516 : vector<32xf32> to vector<1x1x32xf32>
    %518 = vector.broadcast %517 : vector<1x1x32xf32> to vector<9x9x32xf32>
    %519 = arith.mulf %514, %518 : vector<9x9x32xf32>
    %520 = arith.addf %513, %519 : vector<9x9x32xf32>
    %521 = vector.extract_strided_slice %506 {offsets = [2, 0, 0], sizes = [9, 9, 32], strides = [1, 1, 1]} : vector<14x9x32xf32> to vector<9x9x32xf32>
    %522 = vector.extract_strided_slice %382 {offsets = [2, 2, 0], sizes = [1, 1, 32], strides = [1, 1, 1]} : vector<6x6x32xf32> to vector<1x1x32xf32>
    %523 = vector.shape_cast %522 : vector<1x1x32xf32> to vector<32xf32>
    %524 = vector.shape_cast %523 : vector<32xf32> to vector<1x1x32xf32>
    %525 = vector.broadcast %524 : vector<1x1x32xf32> to vector<9x9x32xf32>
    %526 = arith.mulf %521, %525 : vector<9x9x32xf32>
    %527 = arith.addf %520, %526 : vector<9x9x32xf32>
    %528 = vector.extract_strided_slice %506 {offsets = [3, 0, 0], sizes = [9, 9, 32], strides = [1, 1, 1]} : vector<14x9x32xf32> to vector<9x9x32xf32>
    %529 = vector.extract_strided_slice %382 {offsets = [3, 2, 0], sizes = [1, 1, 32], strides = [1, 1, 1]} : vector<6x6x32xf32> to vector<1x1x32xf32>
    %530 = vector.shape_cast %529 : vector<1x1x32xf32> to vector<32xf32>
    %531 = vector.shape_cast %530 : vector<32xf32> to vector<1x1x32xf32>
    %532 = vector.broadcast %531 : vector<1x1x32xf32> to vector<9x9x32xf32>
    %533 = arith.mulf %528, %532 : vector<9x9x32xf32>
    %534 = arith.addf %527, %533 : vector<9x9x32xf32>
    %535 = vector.extract_strided_slice %506 {offsets = [4, 0, 0], sizes = [9, 9, 32], strides = [1, 1, 1]} : vector<14x9x32xf32> to vector<9x9x32xf32>
    %536 = vector.extract_strided_slice %382 {offsets = [4, 2, 0], sizes = [1, 1, 32], strides = [1, 1, 1]} : vector<6x6x32xf32> to vector<1x1x32xf32>
    %537 = vector.shape_cast %536 : vector<1x1x32xf32> to vector<32xf32>
    %538 = vector.shape_cast %537 : vector<32xf32> to vector<1x1x32xf32>
    %539 = vector.broadcast %538 : vector<1x1x32xf32> to vector<9x9x32xf32>
    %540 = arith.mulf %535, %539 : vector<9x9x32xf32>
    %541 = arith.addf %534, %540 : vector<9x9x32xf32>
    %542 = vector.extract_strided_slice %506 {offsets = [5, 0, 0], sizes = [9, 9, 32], strides = [1, 1, 1]} : vector<14x9x32xf32> to vector<9x9x32xf32>
    %543 = vector.extract_strided_slice %382 {offsets = [5, 2, 0], sizes = [1, 1, 32], strides = [1, 1, 1]} : vector<6x6x32xf32> to vector<1x1x32xf32>
    %544 = vector.shape_cast %543 : vector<1x1x32xf32> to vector<32xf32>
    %545 = vector.shape_cast %544 : vector<32xf32> to vector<1x1x32xf32>
    %546 = vector.broadcast %545 : vector<1x1x32xf32> to vector<9x9x32xf32>
    %547 = arith.mulf %542, %546 : vector<9x9x32xf32>
    %548 = arith.addf %541, %547 : vector<9x9x32xf32>
    %549 = vector.extract_strided_slice %418 {offsets = [0, 3, 0], sizes = [14, 9, 32], strides = [1, 1, 1]} : vector<14x14x32xf32> to vector<14x9x32xf32>
    %550 = vector.extract_strided_slice %549 {offsets = [0, 0, 0], sizes = [9, 9, 32], strides = [1, 1, 1]} : vector<14x9x32xf32> to vector<9x9x32xf32>
    %551 = vector.extract_strided_slice %382 {offsets = [0, 3, 0], sizes = [1, 1, 32], strides = [1, 1, 1]} : vector<6x6x32xf32> to vector<1x1x32xf32>
    %552 = vector.shape_cast %551 : vector<1x1x32xf32> to vector<32xf32>
    %553 = vector.shape_cast %552 : vector<32xf32> to vector<1x1x32xf32>
    %554 = vector.broadcast %553 : vector<1x1x32xf32> to vector<9x9x32xf32>
    %555 = arith.mulf %550, %554 : vector<9x9x32xf32>
    %556 = arith.addf %548, %555 : vector<9x9x32xf32>
    %557 = vector.extract_strided_slice %549 {offsets = [1, 0, 0], sizes = [9, 9, 32], strides = [1, 1, 1]} : vector<14x9x32xf32> to vector<9x9x32xf32>
    %558 = vector.extract_strided_slice %382 {offsets = [1, 3, 0], sizes = [1, 1, 32], strides = [1, 1, 1]} : vector<6x6x32xf32> to vector<1x1x32xf32>
    %559 = vector.shape_cast %558 : vector<1x1x32xf32> to vector<32xf32>
    %560 = vector.shape_cast %559 : vector<32xf32> to vector<1x1x32xf32>
    %561 = vector.broadcast %560 : vector<1x1x32xf32> to vector<9x9x32xf32>
    %562 = arith.mulf %557, %561 : vector<9x9x32xf32>
    %563 = arith.addf %556, %562 : vector<9x9x32xf32>
    %564 = vector.extract_strided_slice %549 {offsets = [2, 0, 0], sizes = [9, 9, 32], strides = [1, 1, 1]} : vector<14x9x32xf32> to vector<9x9x32xf32>
    %565 = vector.extract_strided_slice %382 {offsets = [2, 3, 0], sizes = [1, 1, 32], strides = [1, 1, 1]} : vector<6x6x32xf32> to vector<1x1x32xf32>
    %566 = vector.shape_cast %565 : vector<1x1x32xf32> to vector<32xf32>
    %567 = vector.shape_cast %566 : vector<32xf32> to vector<1x1x32xf32>
    %568 = vector.broadcast %567 : vector<1x1x32xf32> to vector<9x9x32xf32>
    %569 = arith.mulf %564, %568 : vector<9x9x32xf32>
    %570 = arith.addf %563, %569 : vector<9x9x32xf32>
    %571 = vector.extract_strided_slice %549 {offsets = [3, 0, 0], sizes = [9, 9, 32], strides = [1, 1, 1]} : vector<14x9x32xf32> to vector<9x9x32xf32>
    %572 = vector.extract_strided_slice %382 {offsets = [3, 3, 0], sizes = [1, 1, 32], strides = [1, 1, 1]} : vector<6x6x32xf32> to vector<1x1x32xf32>
    %573 = vector.shape_cast %572 : vector<1x1x32xf32> to vector<32xf32>
    %574 = vector.shape_cast %573 : vector<32xf32> to vector<1x1x32xf32>
    %575 = vector.broadcast %574 : vector<1x1x32xf32> to vector<9x9x32xf32>
    %576 = arith.mulf %571, %575 : vector<9x9x32xf32>
    %577 = arith.addf %570, %576 : vector<9x9x32xf32>
    %578 = vector.extract_strided_slice %549 {offsets = [4, 0, 0], sizes = [9, 9, 32], strides = [1, 1, 1]} : vector<14x9x32xf32> to vector<9x9x32xf32>
    %579 = vector.extract_strided_slice %382 {offsets = [4, 3, 0], sizes = [1, 1, 32], strides = [1, 1, 1]} : vector<6x6x32xf32> to vector<1x1x32xf32>
    %580 = vector.shape_cast %579 : vector<1x1x32xf32> to vector<32xf32>
    %581 = vector.shape_cast %580 : vector<32xf32> to vector<1x1x32xf32>
    %582 = vector.broadcast %581 : vector<1x1x32xf32> to vector<9x9x32xf32>
    %583 = arith.mulf %578, %582 : vector<9x9x32xf32>
    %584 = arith.addf %577, %583 : vector<9x9x32xf32>
    %585 = vector.extract_strided_slice %549 {offsets = [5, 0, 0], sizes = [9, 9, 32], strides = [1, 1, 1]} : vector<14x9x32xf32> to vector<9x9x32xf32>
    %586 = vector.extract_strided_slice %382 {offsets = [5, 3, 0], sizes = [1, 1, 32], strides = [1, 1, 1]} : vector<6x6x32xf32> to vector<1x1x32xf32>
    %587 = vector.shape_cast %586 : vector<1x1x32xf32> to vector<32xf32>
    %588 = vector.shape_cast %587 : vector<32xf32> to vector<1x1x32xf32>
    %589 = vector.broadcast %588 : vector<1x1x32xf32> to vector<9x9x32xf32>
    %590 = arith.mulf %585, %589 : vector<9x9x32xf32>
    %591 = arith.addf %584, %590 : vector<9x9x32xf32>
    %592 = vector.extract_strided_slice %418 {offsets = [0, 4, 0], sizes = [14, 9, 32], strides = [1, 1, 1]} : vector<14x14x32xf32> to vector<14x9x32xf32>
    %593 = vector.extract_strided_slice %592 {offsets = [0, 0, 0], sizes = [9, 9, 32], strides = [1, 1, 1]} : vector<14x9x32xf32> to vector<9x9x32xf32>
    %594 = vector.extract_strided_slice %382 {offsets = [0, 4, 0], sizes = [1, 1, 32], strides = [1, 1, 1]} : vector<6x6x32xf32> to vector<1x1x32xf32>
    %595 = vector.shape_cast %594 : vector<1x1x32xf32> to vector<32xf32>
    %596 = vector.shape_cast %595 : vector<32xf32> to vector<1x1x32xf32>
    %597 = vector.broadcast %596 : vector<1x1x32xf32> to vector<9x9x32xf32>
    %598 = arith.mulf %593, %597 : vector<9x9x32xf32>
    %599 = arith.addf %591, %598 : vector<9x9x32xf32>
    %600 = vector.extract_strided_slice %592 {offsets = [1, 0, 0], sizes = [9, 9, 32], strides = [1, 1, 1]} : vector<14x9x32xf32> to vector<9x9x32xf32>
    %601 = vector.extract_strided_slice %382 {offsets = [1, 4, 0], sizes = [1, 1, 32], strides = [1, 1, 1]} : vector<6x6x32xf32> to vector<1x1x32xf32>
    %602 = vector.shape_cast %601 : vector<1x1x32xf32> to vector<32xf32>
    %603 = vector.shape_cast %602 : vector<32xf32> to vector<1x1x32xf32>
    %604 = vector.broadcast %603 : vector<1x1x32xf32> to vector<9x9x32xf32>
    %605 = arith.mulf %600, %604 : vector<9x9x32xf32>
    %606 = arith.addf %599, %605 : vector<9x9x32xf32>
    %607 = vector.extract_strided_slice %592 {offsets = [2, 0, 0], sizes = [9, 9, 32], strides = [1, 1, 1]} : vector<14x9x32xf32> to vector<9x9x32xf32>
    %608 = vector.extract_strided_slice %382 {offsets = [2, 4, 0], sizes = [1, 1, 32], strides = [1, 1, 1]} : vector<6x6x32xf32> to vector<1x1x32xf32>
    %609 = vector.shape_cast %608 : vector<1x1x32xf32> to vector<32xf32>
    %610 = vector.shape_cast %609 : vector<32xf32> to vector<1x1x32xf32>
    %611 = vector.broadcast %610 : vector<1x1x32xf32> to vector<9x9x32xf32>
    %612 = arith.mulf %607, %611 : vector<9x9x32xf32>
    %613 = arith.addf %606, %612 : vector<9x9x32xf32>
    %614 = vector.extract_strided_slice %592 {offsets = [3, 0, 0], sizes = [9, 9, 32], strides = [1, 1, 1]} : vector<14x9x32xf32> to vector<9x9x32xf32>
    %615 = vector.extract_strided_slice %382 {offsets = [3, 4, 0], sizes = [1, 1, 32], strides = [1, 1, 1]} : vector<6x6x32xf32> to vector<1x1x32xf32>
    %616 = vector.shape_cast %615 : vector<1x1x32xf32> to vector<32xf32>
    %617 = vector.shape_cast %616 : vector<32xf32> to vector<1x1x32xf32>
    %618 = vector.broadcast %617 : vector<1x1x32xf32> to vector<9x9x32xf32>
    %619 = arith.mulf %614, %618 : vector<9x9x32xf32>
    %620 = arith.addf %613, %619 : vector<9x9x32xf32>
    %621 = vector.extract_strided_slice %592 {offsets = [4, 0, 0], sizes = [9, 9, 32], strides = [1, 1, 1]} : vector<14x9x32xf32> to vector<9x9x32xf32>
    %622 = vector.extract_strided_slice %382 {offsets = [4, 4, 0], sizes = [1, 1, 32], strides = [1, 1, 1]} : vector<6x6x32xf32> to vector<1x1x32xf32>
    %623 = vector.shape_cast %622 : vector<1x1x32xf32> to vector<32xf32>
    %624 = vector.shape_cast %623 : vector<32xf32> to vector<1x1x32xf32>
    %625 = vector.broadcast %624 : vector<1x1x32xf32> to vector<9x9x32xf32>
    %626 = arith.mulf %621, %625 : vector<9x9x32xf32>
    %627 = arith.addf %620, %626 : vector<9x9x32xf32>
    %628 = vector.extract_strided_slice %592 {offsets = [5, 0, 0], sizes = [9, 9, 32], strides = [1, 1, 1]} : vector<14x9x32xf32> to vector<9x9x32xf32>
    %629 = vector.extract_strided_slice %382 {offsets = [5, 4, 0], sizes = [1, 1, 32], strides = [1, 1, 1]} : vector<6x6x32xf32> to vector<1x1x32xf32>
    %630 = vector.shape_cast %629 : vector<1x1x32xf32> to vector<32xf32>
    %631 = vector.shape_cast %630 : vector<32xf32> to vector<1x1x32xf32>
    %632 = vector.broadcast %631 : vector<1x1x32xf32> to vector<9x9x32xf32>
    %633 = arith.mulf %628, %632 : vector<9x9x32xf32>
    %634 = arith.addf %627, %633 : vector<9x9x32xf32>
    %635 = vector.extract_strided_slice %418 {offsets = [0, 5, 0], sizes = [14, 9, 32], strides = [1, 1, 1]} : vector<14x14x32xf32> to vector<14x9x32xf32>
    %636 = vector.extract_strided_slice %635 {offsets = [0, 0, 0], sizes = [9, 9, 32], strides = [1, 1, 1]} : vector<14x9x32xf32> to vector<9x9x32xf32>
    %637 = vector.extract_strided_slice %382 {offsets = [0, 5, 0], sizes = [1, 1, 32], strides = [1, 1, 1]} : vector<6x6x32xf32> to vector<1x1x32xf32>
    %638 = vector.shape_cast %637 : vector<1x1x32xf32> to vector<32xf32>
    %639 = vector.shape_cast %638 : vector<32xf32> to vector<1x1x32xf32>
    %640 = vector.broadcast %639 : vector<1x1x32xf32> to vector<9x9x32xf32>
    %641 = arith.mulf %636, %640 : vector<9x9x32xf32>
    %642 = arith.addf %634, %641 : vector<9x9x32xf32>
    %643 = vector.extract_strided_slice %635 {offsets = [1, 0, 0], sizes = [9, 9, 32], strides = [1, 1, 1]} : vector<14x9x32xf32> to vector<9x9x32xf32>
    %644 = vector.extract_strided_slice %382 {offsets = [1, 5, 0], sizes = [1, 1, 32], strides = [1, 1, 1]} : vector<6x6x32xf32> to vector<1x1x32xf32>
    %645 = vector.shape_cast %644 : vector<1x1x32xf32> to vector<32xf32>
    %646 = vector.shape_cast %645 : vector<32xf32> to vector<1x1x32xf32>
    %647 = vector.broadcast %646 : vector<1x1x32xf32> to vector<9x9x32xf32>
    %648 = arith.mulf %643, %647 : vector<9x9x32xf32>
    %649 = arith.addf %642, %648 : vector<9x9x32xf32>
    %650 = vector.extract_strided_slice %635 {offsets = [2, 0, 0], sizes = [9, 9, 32], strides = [1, 1, 1]} : vector<14x9x32xf32> to vector<9x9x32xf32>
    %651 = vector.extract_strided_slice %382 {offsets = [2, 5, 0], sizes = [1, 1, 32], strides = [1, 1, 1]} : vector<6x6x32xf32> to vector<1x1x32xf32>
    %652 = vector.shape_cast %651 : vector<1x1x32xf32> to vector<32xf32>
    %653 = vector.shape_cast %652 : vector<32xf32> to vector<1x1x32xf32>
    %654 = vector.broadcast %653 : vector<1x1x32xf32> to vector<9x9x32xf32>
    %655 = arith.mulf %650, %654 : vector<9x9x32xf32>
    %656 = arith.addf %649, %655 : vector<9x9x32xf32>
    %657 = vector.extract_strided_slice %635 {offsets = [3, 0, 0], sizes = [9, 9, 32], strides = [1, 1, 1]} : vector<14x9x32xf32> to vector<9x9x32xf32>
    %658 = vector.extract_strided_slice %382 {offsets = [3, 5, 0], sizes = [1, 1, 32], strides = [1, 1, 1]} : vector<6x6x32xf32> to vector<1x1x32xf32>
    %659 = vector.shape_cast %658 : vector<1x1x32xf32> to vector<32xf32>
    %660 = vector.shape_cast %659 : vector<32xf32> to vector<1x1x32xf32>
    %661 = vector.broadcast %660 : vector<1x1x32xf32> to vector<9x9x32xf32>
    %662 = arith.mulf %657, %661 : vector<9x9x32xf32>
    %663 = arith.addf %656, %662 : vector<9x9x32xf32>
    %664 = vector.extract_strided_slice %635 {offsets = [4, 0, 0], sizes = [9, 9, 32], strides = [1, 1, 1]} : vector<14x9x32xf32> to vector<9x9x32xf32>
    %665 = vector.extract_strided_slice %382 {offsets = [4, 5, 0], sizes = [1, 1, 32], strides = [1, 1, 1]} : vector<6x6x32xf32> to vector<1x1x32xf32>
    %666 = vector.shape_cast %665 : vector<1x1x32xf32> to vector<32xf32>
    %667 = vector.shape_cast %666 : vector<32xf32> to vector<1x1x32xf32>
    %668 = vector.broadcast %667 : vector<1x1x32xf32> to vector<9x9x32xf32>
    %669 = arith.mulf %664, %668 : vector<9x9x32xf32>
    %670 = arith.addf %663, %669 : vector<9x9x32xf32>
    %671 = vector.extract_strided_slice %635 {offsets = [5, 0, 0], sizes = [9, 9, 32], strides = [1, 1, 1]} : vector<14x9x32xf32> to vector<9x9x32xf32>
    %672 = vector.extract_strided_slice %382 {offsets = [5, 5, 0], sizes = [1, 1, 32], strides = [1, 1, 1]} : vector<6x6x32xf32> to vector<1x1x32xf32>
    %673 = vector.shape_cast %672 : vector<1x1x32xf32> to vector<32xf32>
    %674 = vector.shape_cast %673 : vector<32xf32> to vector<1x1x32xf32>
    %675 = vector.broadcast %674 : vector<1x1x32xf32> to vector<9x9x32xf32>
    %676 = arith.mulf %671, %675 : vector<9x9x32xf32>
    %677 = arith.addf %670, %676 : vector<9x9x32xf32>
    %678 = vector.shape_cast %4 : vector<32xf32> to vector<1x1x32xf32>
    %679 = vector.broadcast %678 : vector<1x1x32xf32> to vector<9x9x32xf32>
    %680 = arith.mulf %677, %679 : vector<9x9x32xf32>
    %681 = vector.shape_cast %6 : vector<32xf32> to vector<1x1x32xf32>
    %682 = vector.broadcast %681 : vector<1x1x32xf32> to vector<9x9x32xf32>
    %683 = arith.addf %680, %682 : vector<9x9x32xf32>
    %c1_27 = arith.constant 1 : index
    %c0_28 = arith.constant 0 : index
    %c0_29 = arith.constant 0 : index
    %c0_30 = arith.constant 0 : index
    %684 = vector.load %arg7[%c1_27, %c0_28, %c0_29, %c0_30] : memref<2x9x9x32xf32, #tpu.memory_space<vmem>>, vector<1x9x9x32xf32>
    %685 = vector.shape_cast %684 : vector<1x9x9x32xf32> to vector<9x9x32xf32>
    %686 = vector.shape_cast %683 : vector<9x9x32xf32> to vector<1x9x9x32xf32>
    tpu.vector_store %arg7[%c1_27, %c0_28, %c0_29, %c0_30], %686 {strides = array<i32>} : memref<2x9x9x32xf32, #tpu.memory_space<vmem>>, vector<1x9x9x32xf32>,
    return
  }
  func.func @transform_0(%arg0: i32) -> (i32, i32, i32, i32) {
    %c0_i32 = arith.constant 0 : i32
    %c0_i32_0 = arith.constant 0 : i32
    %c0_i32_1 = arith.constant 0 : i32
    %c0_i32_2 = arith.constant 0 : i32
    %c0_i32_3 = arith.constant 0 : i32
    return %c0_i32, %c0_i32_0, %c0_i32_1, %c0_i32_2 : i32, i32, i32, i32
  }
  func.func @transform_1(%arg0: i32) -> (i32, i32, i32, i32) {
    %c0_i32 = arith.constant 0 : i32
    %c0_i32_0 = arith.constant 0 : i32
    %c0_i32_1 = arith.constant 0 : i32
    %c0_i32_2 = arith.constant 0 : i32
    %c0_i32_3 = arith.constant 0 : i32
    return %c0_i32, %c0_i32_0, %c0_i32_1, %c0_i32_2 : i32, i32, i32, i32
  }
  func.func @transform_2(%arg0: i32) -> (i32, i32) {
    %c0_i32 = arith.constant 0 : i32
    %c0_i32_0 = arith.constant 0 : i32
    %c0_i32_1 = arith.constant 0 : i32
    return %c0_i32, %c0_i32_0 : i32, i32
  }
  func.func @transform_3(%arg0: i32) -> (i32, i32) {
    %c0_i32 = arith.constant 0 : i32
    %c0_i32_0 = arith.constant 0 : i32
    %c0_i32_1 = arith.constant 0 : i32
    return %c0_i32, %c0_i32_0 : i32, i32
  }
  func.func @transform_4(%arg0: i32) -> (i32, i32) {
    %c0_i32 = arith.constant 0 : i32
    %c0_i32_0 = arith.constant 0 : i32
    %c0_i32_1 = arith.constant 0 : i32
    return %c0_i32, %c0_i32_0 : i32, i32
  }
  func.func @transform_5(%arg0: i32) -> (i32, i32) {
    %c0_i32 = arith.constant 0 : i32
    %c0_i32_0 = arith.constant 0 : i32
    %c0_i32_1 = arith.constant 0 : i32
    return %c0_i32, %c0_i32_0 : i32, i32
  }
  func.func @transform_6(%arg0: i32) -> (i32, i32, i32, i32) {
    %c0_i32 = arith.constant 0 : i32
    %c0_i32_0 = arith.constant 0 : i32
    %c0_i32_1 = arith.constant 0 : i32
    %c0_i32_2 = arith.constant 0 : i32
    %c0_i32_3 = arith.constant 0 : i32
    return %c0_i32, %c0_i32_0, %c0_i32_1, %c0_i32_2 : i32, i32, i32, i32
  }
}

</mosaic_0001>

<llo_original>
// kernel: detr_siamfc_wrapper.1
$region0: #{detr_siamfc_wrapper.1}
  #allocation0 [shape = 'u32[]', space=smem, size = 0x4, offset = 0x4, fixed_abs, tag = 'smem constant byte address 0x4 - core index']
  #allocation1 [shape = 'u32[144,128]{1,0:T(1,128)}', space=vmem, size = 0x12000, scoped, tag = 'internal scratch']
  %s0 = inlined_call_operand.vmem [shape: f32[2,6,6,4], index: 0, kind: input, shape index: {}]
  %s1 = inlined_call_operand.vmem [shape: f32[2,14,14,4], index: 1, kind: input, shape index: {}]
  %s2 = inlined_call_operand.vmem [shape: f32[4,32], index: 2, kind: input, shape index: {}]
  %s3 = inlined_call_operand.vmem [shape: f32[1,32], index: 3, kind: input, shape index: {}]
  %s4 = inlined_call_operand.vmem [shape: f32[1,32], index: 4, kind: input, shape index: {}]
  %s5 = inlined_call_operand.vmem [shape: f32[1,32], index: 5, kind: input, shape index: {}]
  %s6 = inlined_call_operand.vmem [shape: f32[2,9,9,32], index: 6, kind: output, shape index: {}]
  %s7 = sld [smem:[#allocation0]]
  $region34: #{detr_siamfc_wrapper.1} parent=0
    _
  %s9 = ssub.s32 1, %s7
  %s10 = scalar_select 0, %s9, %s7
  // Predicated region
  $region2: #{detr_siamfc_wrapper.1} parent=0 // pred_check
    _
  $region3: #{detr_siamfc_wrapper.1} parent=0 // pred_check_branch
    %12 = sbr.rel (0) target = $region5
  $region4: #{detr_siamfc_wrapper.1} parent=0 // pred_region
    _
  $region5: #{detr_siamfc_wrapper.1} parent=0 // pred_fallthru
    _
  // Predicated region
  $region6: #{detr_siamfc_wrapper.1} parent=0 // pred_check
    _
  $region7: #{detr_siamfc_wrapper.1} parent=0 // pred_check_branch
    %14 = sbr.rel (0) target = $region9
  $region8: #{detr_siamfc_wrapper.1} parent=0 // pred_region
    _
  $region9: #{detr_siamfc_wrapper.1} parent=0 // pred_fallthru
    _
  // Predicated region
  $region10: #{detr_siamfc_wrapper.1} parent=0 // pred_check
    _
  $region11: #{detr_siamfc_wrapper.1} parent=0 // pred_check_branch
    %16 = sbr.rel (0) target = $region13
  $region12: #{detr_siamfc_wrapper.1} parent=0 // pred_region
    _
  $region13: #{detr_siamfc_wrapper.1} parent=0 // pred_fallthru
    _
  // Predicated region
  $region14: #{detr_siamfc_wrapper.1} parent=0 // pred_check
    _
  $region15: #{detr_siamfc_wrapper.1} parent=0 // pred_check_branch
    %18 = sbr.rel (0) target = $region17
  $region16: #{detr_siamfc_wrapper.1} parent=0 // pred_region
    _
  $region17: #{detr_siamfc_wrapper.1} parent=0 // pred_fallthru
    _
  // Predicated region
  $region18: #{detr_siamfc_wrapper.1} parent=0 // pred_check
    _
  $region19: #{detr_siamfc_wrapper.1} parent=0 // pred_check_branch
    %20 = sbr.rel (0) target = $region21
  $region20: #{detr_siamfc_wrapper.1} parent=0 // pred_region
    _
  $region21: #{detr_siamfc_wrapper.1} parent=0 // pred_fallthru
    _
  // Predicated region
  $region22: #{detr_siamfc_wrapper.1} parent=0 // pred_check
    _
  $region23: #{detr_siamfc_wrapper.1} parent=0 // pred_check_branch
    %22 = sbr.rel (0) target = $region25
  $region24: #{detr_siamfc_wrapper.1} parent=0 // pred_region
    _
  $region25: #{detr_siamfc_wrapper.1} parent=0 // pred_fallthru
    _
  %v23 = vld [vmem:[%s2] sm:$0xf]
  %v24 = vld [vmem:[%s3] sm:$0x1]
  %v25 = vld [vmem:[%s4] sm:$0x1]
  %v26 = vld [vmem:[%s5] sm:$0x1]
  %v27 = vld [vmem:[%s0] sm:$0x3f]
  %v28 = vld [vmem:[%s0 + $0x8] sm:$0x3f]
  %v29 = vld [vmem:[%s0 + $0x10] sm:$0x3f]
  %v30 = vld [vmem:[%s0 + $0x18] sm:$0x3f]
  %v31 = vld [vmem:[%s0 + $0x20] sm:$0x3f]
  %v32 = vld [vmem:[%s0 + $0x28] sm:$0x3f]
  %34 = vset.pattern.permute.xlu0 0
  %35 = vperm.xlu0 %34, %v27
  %v36 = vpop.permute.xlu0 %35
  %39 = vset.pattern.permute.xlu0 0
  %40 = vperm.xlu0 %39, %v28
  %v41 = vpop.permute.xlu0 %40
  %44 = vset.pattern.permute.xlu0 0
  %45 = vperm.xlu0 %44, %v29
  %v46 = vpop.permute.xlu0 %45
  %49 = vset.pattern.permute.xlu0 0
  %50 = vperm.xlu0 %49, %v30
  %v51 = vpop.permute.xlu0 %50
  %54 = vset.pattern.permute.xlu0 0
  %55 = vperm.xlu0 %54, %v31
  %v56 = vpop.permute.xlu0 %55
  %59 = vset.pattern.permute.xlu0 0
  %60 = vperm.xlu0 %59, %v32
  %v61 = vpop.permute.xlu0 %60
  %v63 = vlaneseq
  %v64 = vshrl.u32 %v63, 7
  %v65 = vsub.s32 0, %v64
  %v66 = vrot.slane %v23, %v65
  %v67 = vmul.f32 %v36, %v66
  %v68 = vmul.f32 %v41, %v66
  %v69 = vmul.f32 %v46, %v66
  %v70 = vmul.f32 %v51, %v66
  %v71 = vmul.f32 %v56, %v66
  %v72 = vmul.f32 %v61, %v66
  %73 = vset.pattern.permute.xlu0 1
  %74 = vperm.xlu0 %73, %v27
  %v75 = vpop.permute.xlu0 %74
  %77 = vset.pattern.permute.xlu0 1
  %78 = vperm.xlu0 %77, %v28
  %v79 = vpop.permute.xlu0 %78
  %81 = vset.pattern.permute.xlu0 1
  %82 = vperm.xlu0 %81, %v29
  %v83 = vpop.permute.xlu0 %82
  %85 = vset.pattern.permute.xlu0 1
  %86 = vperm.xlu0 %85, %v30
  %v87 = vpop.permute.xlu0 %86
  %89 = vset.pattern.permute.xlu0 1
  %90 = vperm.xlu0 %89, %v31
  %v91 = vpop.permute.xlu0 %90
  %93 = vset.pattern.permute.xlu0 1
  %94 = vperm.xlu0 %93, %v32
  %v95 = vpop.permute.xlu0 %94
  %v97 = vlaneseq
  %v98 = vshrl.u32 %v97, 7
  %v99 = vsub.s32 1, %v98
  %v100 = vrot.slane %v23, %v99
  %v101 = vmul.f32 %v75, %v100
  %v102 = vmul.f32 %v79, %v100
  %v103 = vmul.f32 %v83, %v100
  %v104 = vmul.f32 %v87, %v100
  %v105 = vmul.f32 %v91, %v100
  %v106 = vmul.f32 %v95, %v100
  %v107 = vadd.f32 %v67, %v101
  %v108 = vadd.f32 %v68, %v102
  %v109 = vadd.f32 %v69, %v103
  %v110 = vadd.f32 %v70, %v104
  %v111 = vadd.f32 %v71, %v105
  %v112 = vadd.f32 %v72, %v106
  %113 = vset.pattern.permute.xlu0 2
  %114 = vperm.xlu0 %113, %v27
  %v115 = vpop.permute.xlu0 %114
  %117 = vset.pattern.permute.xlu0 2
  %118 = vperm.xlu0 %117, %v28
  %v119 = vpop.permute.xlu0 %118
  %121 = vset.pattern.permute.xlu0 2
  %122 = vperm.xlu0 %121, %v29
  %v123 = vpop.permute.xlu0 %122
  %125 = vset.pattern.permute.xlu0 2
  %126 = vperm.xlu0 %125, %v30
  %v127 = vpop.permute.xlu0 %126
  %129 = vset.pattern.permute.xlu0 2
  %130 = vperm.xlu0 %129, %v31
  %v131 = vpop.permute.xlu0 %130
  %133 = vset.pattern.permute.xlu0 2
  %134 = vperm.xlu0 %133, %v32
  %v135 = vpop.permute.xlu0 %134
  %v137 = vlaneseq
  %v138 = vshrl.u32 %v137, 7
  %v139 = vsub.s32 2, %v138
  %v140 = vrot.slane %v23, %v139
  %v141 = vmul.f32 %v115, %v140
  %v142 = vmul.f32 %v119, %v140
  %v143 = vmul.f32 %v123, %v140
  %v144 = vmul.f32 %v127, %v140
  %v145 = vmul.f32 %v131, %v140
  %v146 = vmul.f32 %v135, %v140
  %v147 = vadd.f32 %v107, %v141
  %v148 = vadd.f32 %v108, %v142
  %v149 = vadd.f32 %v109, %v143
  %v150 = vadd.f32 %v110, %v144
  %v151 = vadd.f32 %v111, %v145
  %v152 = vadd.f32 %v112, %v146
  %153 = vset.pattern.permute.xlu0 3
  %154 = vperm.xlu0 %153, %v27
  %v155 = vpop.permute.xlu0 %154
  %157 = vset.pattern.permute.xlu0 3
  %158 = vperm.xlu0 %157, %v28
  %v159 = vpop.permute.xlu0 %158
  %161 = vset.pattern.permute.xlu0 3
  %162 = vperm.xlu0 %161, %v29
  %v163 = vpop.permute.xlu0 %162
  %165 = vset.pattern.permute.xlu0 3
  %166 = vperm.xlu0 %165, %v30
  %v167 = vpop.permute.xlu0 %166
  %169 = vset.pattern.permute.xlu0 3
  %170 = vperm.xlu0 %169, %v31
  %v171 = vpop.permute.xlu0 %170
  %173 = vset.pattern.permute.xlu0 3
  %174 = vperm.xlu0 %173, %v32
  %v175 = vpop.permute.xlu0 %174
  %v177 = vlaneseq
  %v178 = vshrl.u32 %v177, 7
  %v179 = vsub.s32 3, %v178
  %v180 = vrot.slane %v23, %v179
  %v181 = vmul.f32 %v155, %v180
  %v182 = vmul.f32 %v159, %v180
  %v183 = vmul.f32 %v163, %v180
  %v184 = vmul.f32 %v167, %v180
  %v185 = vmul.f32 %v171, %v180
  %v186 = vmul.f32 %v175, %v180
  %v187 = vadd.f32 %v147, %v181
  %v188 = vadd.f32 %v148, %v182
  %v189 = vadd.f32 %v149, %v183
  %v190 = vadd.f32 %v150, %v184
  %v191 = vadd.f32 %v151, %v185
  %v192 = vadd.f32 %v152, %v186
  %v194 = vlaneseq
  %v195 = vshrl.u32 %v194, 7
  %v196 = vsub.s32 0, %v195
  %v197 = vrot.slane %v24, %v196
  %v199 = vadd.f32 %v187, %v197
  %v200 = vadd.f32 %v188, %v197
  %v201 = vadd.f32 %v189, %v197
  %v202 = vadd.f32 %v190, %v197
  %v203 = vadd.f32 %v191, %v197
  %v204 = vadd.f32 %v192, %v197
  %v205 = vld [vmem:[%s1] sm:$0xff]
  %v206 = vld [vmem:[%s1 + $0x8] sm:$0x3f]
  %v207 = vld [vmem:[%s1 + $0x10] sm:$0xff]
  %v208 = vld [vmem:[%s1 + $0x18] sm:$0x3f]
  %v209 = vld [vmem:[%s1 + $0x20] sm:$0xff]
  %v210 = vld [vmem:[%s1 + $0x28] sm:$0x3f]
  %v211 = vld [vmem:[%s1 + $0x30] sm:$0xff]
  %v212 = vld [vmem:[%s1 + $0x38] sm:$0x3f]
  %v213 = vld [vmem:[%s1 + $0x40] sm:$0xff]
  %v214 = vld [vmem:[%s1 + $0x48] sm:$0x3f]
  %v215 = vld [vmem:[%s1 + $0x50] sm:$0xff]
  %v216 = vld [vmem:[%s1 + $0x58] sm:$0x3f]
  %v217 = vld [vmem:[%s1 + $0x60] sm:$0xff]
  %v218 = vld [vmem:[%s1 + $0x68] sm:$0x3f]
  %v219 = vld [vmem:[%s1 + $0x70] sm:$0xff]
  %v220 = vld [vmem:[%s1 + $0x78] sm:$0x3f]
  %v221 = vld [vmem:[%s1 + $0x80] sm:$0xff]
  %v222 = vld [vmem:[%s1 + $0x88] sm:$0x3f]
  %v223 = vld [vmem:[%s1 + $0x90] sm:$0xff]
  %v224 = vld [vmem:[%s1 + $0x98] sm:$0x3f]
  %v225 = vld [vmem:[%s1 + $0xa0] sm:$0xff]
  %v226 = vld [vmem:[%s1 + $0xa8] sm:$0x3f]
  %v227 = vld [vmem:[%s1 + $0xb0] sm:$0xff]
  %v228 = vld [vmem:[%s1 + $0xb8] sm:$0x3f]
  %v229 = vld [vmem:[%s1 + $0xc0] sm:$0xff]
  %v230 = vld [vmem:[%s1 + $0xc8] sm:$0x3f]
  %v231 = vld [vmem:[%s1 + $0xd0] sm:$0xff]
  %v232 = vld [vmem:[%s1 + $0xd8] sm:$0x3f]
  %234 = vset.pattern.permute.xlu0 0
  %235 = vperm.xlu0 %234, %v205
  %v236 = vpop.permute.xlu0 %235
  %239 = vset.pattern.permute.xlu0 0
  %240 = vperm.xlu0 %239, %v206
  %v241 = vpop.permute.xlu0 %240
  %244 = vset.pattern.permute.xlu0 0
  %245 = vperm.xlu0 %244, %v207
  %v246 = vpop.permute.xlu0 %245
  %249 = vset.pattern.permute.xlu0 0
  %250 = vperm.xlu0 %249, %v208
  %v251 = vpop.permute.xlu0 %250
  %254 = vset.pattern.permute.xlu0 0
  %255 = vperm.xlu0 %254, %v209
  %v256 = vpop.permute.xlu0 %255
  %259 = vset.pattern.permute.xlu0 0
  %260 = vperm.xlu0 %259, %v210
  %v261 = vpop.permute.xlu0 %260
  %264 = vset.pattern.permute.xlu0 0
  %265 = vperm.xlu0 %264, %v211
  %v266 = vpop.permute.xlu0 %265
  %269 = vset.pattern.permute.xlu0 0
  %270 = vperm.xlu0 %269, %v212
  %v271 = vpop.permute.xlu0 %270
  %274 = vset.pattern.permute.xlu0 0
  %275 = vperm.xlu0 %274, %v213
  %v276 = vpop.permute.xlu0 %275
  %279 = vset.pattern.permute.xlu0 0
  %280 = vperm.xlu0 %279, %v214
  %v281 = vpop.permute.xlu0 %280
  %284 = vset.pattern.permute.xlu0 0
  %285 = vperm.xlu0 %284, %v215
  %v286 = vpop.permute.xlu0 %285
  %289 = vset.pattern.permute.xlu0 0
  %290 = vperm.xlu0 %289, %v216
  %v291 = vpop.permute.xlu0 %290
  %294 = vset.pattern.permute.xlu0 0
  %295 = vperm.xlu0 %294, %v217
  %v296 = vpop.permute.xlu0 %295
  %299 = vset.pattern.permute.xlu0 0
  %300 = vperm.xlu0 %299, %v218
  %v301 = vpop.permute.xlu0 %300
  %304 = vset.pattern.permute.xlu0 0
  %305 = vperm.xlu0 %304, %v219
  %v306 = vpop.permute.xlu0 %305
  %309 = vset.pattern.permute.xlu0 0
  %310 = vperm.xlu0 %309, %v220
  %v311 = vpop.permute.xlu0 %310
  %314 = vset.pattern.permute.xlu0 0
  %315 = vperm.xlu0 %314, %v221
  %v316 = vpop.permute.xlu0 %315
  %319 = vset.pattern.permute.xlu0 0
  %320 = vperm.xlu0 %319, %v222
  %v321 = vpop.permute.xlu0 %320
  %324 = vset.pattern.permute.xlu0 0
  %325 = vperm.xlu0 %324, %v223
  %v326 = vpop.permute.xlu0 %325
  %329 = vset.pattern.permute.xlu0 0
  %330 = vperm.xlu0 %329, %v224
  %v331 = vpop.permute.xlu0 %330
  %334 = vset.pattern.permute.xlu0 0
  %335 = vperm.xlu0 %334, %v225
  %v336 = vpop.permute.xlu0 %335
  %339 = vset.pattern.permute.xlu0 0
  %340 = vperm.xlu0 %339, %v226
  %v341 = vpop.permute.xlu0 %340
  %344 = vset.pattern.permute.xlu0 0
  %345 = vperm.xlu0 %344, %v227
  %v346 = vpop.permute.xlu0 %345
  %349 = vset.pattern.permute.xlu0 0
  %350 = vperm.xlu0 %349, %v228
  %v351 = vpop.permute.xlu0 %350
  %354 = vset.pattern.permute.xlu0 0
  %355 = vperm.xlu0 %354, %v229
  %v356 = vpop.permute.xlu0 %355
  %359 = vset.pattern.permute.xlu0 0
  %360 = vperm.xlu0 %359, %v230
  %v361 = vpop.permute.xlu0 %360
  %364 = vset.pattern.permute.xlu0 0
  %365 = vperm.xlu0 %364, %v231
  %v366 = vpop.permute.xlu0 %365
  %369 = vset.pattern.permute.xlu0 0
  %370 = vperm.xlu0 %369, %v232
  %v371 = vpop.permute.xlu0 %370
  %v373 = vmul.f32 %v236, %v66
  %v374 = vmul.f32 %v241, %v66
  %v375 = vmul.f32 %v246, %v66
  %v376 = vmul.f32 %v251, %v66
  %v377 = vmul.f32 %v256, %v66
  %v378 = vmul.f32 %v261, %v66
  %v379 = vmul.f32 %v266, %v66
  %v380 = vmul.f32 %v271, %v66
  %v381 = vmul.f32 %v276, %v66
  %v382 = vmul.f32 %v281, %v66
  %v383 = vmul.f32 %v286, %v66
  %v384 = vmul.f32 %v291, %v66
  %v385 = vmul.f32 %v296, %v66
  %v386 = vmul.f32 %v301, %v66
  %v387 = vmul.f32 %v306, %v66
  %v388 = vmul.f32 %v311, %v66
  %v389 = vmul.f32 %v316, %v66
  %v390 = vmul.f32 %v321, %v66
  %v391 = vmul.f32 %v326, %v66
  %v392 = vmul.f32 %v331, %v66
  %v393 = vmul.f32 %v336, %v66
  %v394 = vmul.f32 %v341, %v66
  %v395 = vmul.f32 %v346, %v66
  %v396 = vmul.f32 %v351, %v66
  %v397 = vmul.f32 %v356, %v66
  %v398 = vmul.f32 %v361, %v66
  %v399 = vmul.f32 %v366, %v66
  %v400 = vmul.f32 %v371, %v66
  %401 = vset.pattern.permute.xlu0 1
  %402 = vperm.xlu0 %401, %v205
  %v403 = vpop.permute.xlu0 %402
  %405 = vset.pattern.permute.xlu0 1
  %406 = vperm.xlu0 %405, %v206
  %v407 = vpop.permute.xlu0 %406
  %409 = vset.pattern.permute.xlu0 1
  %410 = vperm.xlu0 %409, %v207
  %v411 = vpop.permute.xlu0 %410
  %413 = vset.pattern.permute.xlu0 1
  %414 = vperm.xlu0 %413, %v208
  %v415 = vpop.permute.xlu0 %414
  %417 = vset.pattern.permute.xlu0 1
  %418 = vperm.xlu0 %417, %v209
  %v419 = vpop.permute.xlu0 %418
  %421 = vset.pattern.permute.xlu0 1
  %422 = vperm.xlu0 %421, %v210
  %v423 = vpop.permute.xlu0 %422
  %425 = vset.pattern.permute.xlu0 1
  %426 = vperm.xlu0 %425, %v211
  %v427 = vpop.permute.xlu0 %426
  %429 = vset.pattern.permute.xlu0 1
  %430 = vperm.xlu0 %429, %v212
  %v431 = vpop.permute.xlu0 %430
  %433 = vset.pattern.permute.xlu0 1
  %434 = vperm.xlu0 %433, %v213
  %v435 = vpop.permute.xlu0 %434
  %437 = vset.pattern.permute.xlu0 1
  %438 = vperm.xlu0 %437, %v214
  %v439 = vpop.permute.xlu0 %438
  %441 = vset.pattern.permute.xlu0 1
  %442 = vperm.xlu0 %441, %v215
  %v443 = vpop.permute.xlu0 %442
  %445 = vset.pattern.permute.xlu0 1
  %446 = vperm.xlu0 %445, %v216
  %v447 = vpop.permute.xlu0 %446
  %449 = vset.pattern.permute.xlu0 1
  %450 = vperm.xlu0 %449, %v217
  %v451 = vpop.permute.xlu0 %450
  %453 = vset.pattern.permute.xlu0 1
  %454 = vperm.xlu0 %453, %v218
  %v455 = vpop.permute.xlu0 %454
  %457 = vset.pattern.permute.xlu0 1
  %458 = vperm.xlu0 %457, %v219
  %v459 = vpop.permute.xlu0 %458
  %461 = vset.pattern.permute.xlu0 1
  %462 = vperm.xlu0 %461, %v220
  %v463 = vpop.permute.xlu0 %462
  %465 = vset.pattern.permute.xlu0 1
  %466 = vperm.xlu0 %465, %v221
  %v467 = vpop.permute.xlu0 %466
  %469 = vset.pattern.permute.xlu0 1
  %470 = vperm.xlu0 %469, %v222
  %v471 = vpop.permute.xlu0 %470
  %473 = vset.pattern.permute.xlu0 1
  %474 = vperm.xlu0 %473, %v223
  %v475 = vpop.permute.xlu0 %474
  %477 = vset.pattern.permute.xlu0 1
  %478 = vperm.xlu0 %477, %v224
  %v479 = vpop.permute.xlu0 %478
  %481 = vset.pattern.permute.xlu0 1
  %482 = vperm.xlu0 %481, %v225
  %v483 = vpop.permute.xlu0 %482
  %485 = vset.pattern.permute.xlu0 1
  %486 = vperm.xlu0 %485, %v226
  %v487 = vpop.permute.xlu0 %486
  %489 = vset.pattern.permute.xlu0 1
  %490 = vperm.xlu0 %489, %v227
  %v491 = vpop.permute.xlu0 %490
  %493 = vset.pattern.permute.xlu0 1
  %494 = vperm.xlu0 %493, %v228
  %v495 = vpop.permute.xlu0 %494
  %497 = vset.pattern.permute.xlu0 1
  %498 = vperm.xlu0 %497, %v229
  %v499 = vpop.permute.xlu0 %498
  %501 = vset.pattern.permute.xlu0 1
  %502 = vperm.xlu0 %501, %v230
  %v503 = vpop.permute.xlu0 %502
  %505 = vset.pattern.permute.xlu0 1
  %506 = vperm.xlu0 %505, %v231
  %v507 = vpop.permute.xlu0 %506
  %509 = vset.pattern.permute.xlu0 1
  %510 = vperm.xlu0 %509, %v232
  %v511 = vpop.permute.xlu0 %510
  %v513 = vmul.f32 %v403, %v100
  %v514 = vmul.f32 %v407, %v100
  %v515 = vmul.f32 %v411, %v100
  %v516 = vmul.f32 %v415, %v100
  %v517 = vmul.f32 %v419, %v100
  %v518 = vmul.f32 %v423, %v100
  %v519 = vmul.f32 %v427, %v100
  %v520 = vmul.f32 %v431, %v100
  %v521 = vmul.f32 %v435, %v100
  %v522 = vmul.f32 %v439, %v100
  %v523 = vmul.f32 %v443, %v100
  %v524 = vmul.f32 %v447, %v100
  %v525 = vmul.f32 %v451, %v100
  %v526 = vmul.f32 %v455, %v100
  %v527 = vmul.f32 %v459, %v100
  %v528 = vmul.f32 %v463, %v100
  %v529 = vmul.f32 %v467, %v100
  %v530 = vmul.f32 %v471, %v100
  %v531 = vmul.f32 %v475, %v100
  %v532 = vmul.f32 %v479, %v100
  %v533 = vmul.f32 %v483, %v100
  %v534 = vmul.f32 %v487, %v100
  %v535 = vmul.f32 %v491, %v100
  %v536 = vmul.f32 %v495, %v100
  %v537 = vmul.f32 %v499, %v100
  %v538 = vmul.f32 %v503, %v100
  %v539 = vmul.f32 %v507, %v100
  %v540 = vmul.f32 %v511, %v100
  %v541 = vadd.f32 %v373, %v513
  %v542 = vadd.f32 %v374, %v514
  %v543 = vadd.f32 %v375, %v515
  %v544 = vadd.f32 %v376, %v516
  %v545 = vadd.f32 %v377, %v517
  %v546 = vadd.f32 %v378, %v518
  %v547 = vadd.f32 %v379, %v519
  %v548 = vadd.f32 %v380, %v520
  %v549 = vadd.f32 %v381, %v521
  %v550 = vadd.f32 %v382, %v522
  %v551 = vadd.f32 %v383, %v523
  %v552 = vadd.f32 %v384, %v524
  %v553 = vadd.f32 %v385, %v525
  %v554 = vadd.f32 %v386, %v526
  %v555 = vadd.f32 %v387, %v527
  %v556 = vadd.f32 %v388, %v528
  %v557 = vadd.f32 %v389, %v529
  %v558 = vadd.f32 %v390, %v530
  %v559 = vadd.f32 %v391, %v531
  %v560 = vadd.f32 %v392, %v532
  %v561 = vadd.f32 %v393, %v533
  %v562 = vadd.f32 %v394, %v534
  %v563 = vadd.f32 %v395, %v535
  %v564 = vadd.f32 %v396, %v536
  %v565 = vadd.f32 %v397, %v537
  %v566 = vadd.f32 %v398, %v538
  %v567 = vadd.f32 %v399, %v539
  %v568 = vadd.f32 %v400, %v540
  %569 = vset.pattern.permute.xlu0 2
  %570 = vperm.xlu0 %569, %v205
  %v571 = vpop.permute.xlu0 %570
  %573 = vset.pattern.permute.xlu0 2
  %574 = vperm.xlu0 %573, %v206
  %v575 = vpop.permute.xlu0 %574
  %577 = vset.pattern.permute.xlu0 2
  %578 = vperm.xlu0 %577, %v207
  %v579 = vpop.permute.xlu0 %578
  %581 = vset.pattern.permute.xlu0 2
  %582 = vperm.xlu0 %581, %v208
  %v583 = vpop.permute.xlu0 %582
  %585 = vset.pattern.permute.xlu0 2
  %586 = vperm.xlu0 %585, %v209
  %v587 = vpop.permute.xlu0 %586
  %589 = vset.pattern.permute.xlu0 2
  %590 = vperm.xlu0 %589, %v210
  %v591 = vpop.permute.xlu0 %590
  %593 = vset.pattern.permute.xlu0 2
  %594 = vperm.xlu0 %593, %v211
  %v595 = vpop.permute.xlu0 %594
  %597 = vset.pattern.permute.xlu0 2
  %598 = vperm.xlu0 %597, %v212
  %v599 = vpop.permute.xlu0 %598
  %601 = vset.pattern.permute.xlu0 2
  %602 = vperm.xlu0 %601, %v213
  %v603 = vpop.permute.xlu0 %602
  %605 = vset.pattern.permute.xlu0 2
  %606 = vperm.xlu0 %605, %v214
  %v607 = vpop.permute.xlu0 %606
  %609 = vset.pattern.permute.xlu0 2
  %610 = vperm.xlu0 %609, %v215
  %v611 = vpop.permute.xlu0 %610
  %613 = vset.pattern.permute.xlu0 2
  %614 = vperm.xlu0 %613, %v216
  %v615 = vpop.permute.xlu0 %614
  %617 = vset.pattern.permute.xlu0 2
  %618 = vperm.xlu0 %617, %v217
  %v619 = vpop.permute.xlu0 %618
  %621 = vset.pattern.permute.xlu0 2
  %622 = vperm.xlu0 %621, %v218
  %v623 = vpop.permute.xlu0 %622
  %625 = vset.pattern.permute.xlu0 2
  %626 = vperm.xlu0 %625, %v219
  %v627 = vpop.permute.xlu0 %626
  %629 = vset.pattern.permute.xlu0 2
  %630 = vperm.xlu0 %629, %v220
  %v631 = vpop.permute.xlu0 %630
  %633 = vset.pattern.permute.xlu0 2
  %634 = vperm.xlu0 %633, %v221
  %v635 = vpop.permute.xlu0 %634
  %637 = vset.pattern.permute.xlu0 2
  %638 = vperm.xlu0 %637, %v222
  %v639 = vpop.permute.xlu0 %638
  %641 = vset.pattern.permute.xlu0 2
  %642 = vperm.xlu0 %641, %v223
  %v643 = vpop.permute.xlu0 %642
  %645 = vset.pattern.permute.xlu0 2
  %646 = vperm.xlu0 %645, %v224
  %v647 = vpop.permute.xlu0 %646
  %649 = vset.pattern.permute.xlu0 2
  %650 = vperm.xlu0 %649, %v225
  %v651 = vpop.permute.xlu0 %650
  %653 = vset.pattern.permute.xlu0 2
  %654 = vperm.xlu0 %653, %v226
  %v655 = vpop.permute.xlu0 %654
  %657 = vset.pattern.permute.xlu0 2
  %658 = vperm.xlu0 %657, %v227
  %v659 = vpop.permute.xlu0 %658
  %661 = vset.pattern.permute.xlu0 2
  %662 = vperm.xlu0 %661, %v228
  %v663 = vpop.permute.xlu0 %662
  %665 = vset.pattern.permute.xlu0 2
  %666 = vperm.xlu0 %665, %v229
  %v667 = vpop.permute.xlu0 %666
  %669 = vset.pattern.permute.xlu0 2
  %670 = vperm.xlu0 %669, %v230
  %v671 = vpop.permute.xlu0 %670
  %673 = vset.pattern.permute.xlu0 2
  %674 = vperm.xlu0 %673, %v231
  %v675 = vpop.permute.xlu0 %674
  %677 = vset.pattern.permute.xlu0 2
  %678 = vperm.xlu0 %677, %v232
  %v679 = vpop.permute.xlu0 %678
  %v681 = vmul.f32 %v571, %v140
  %v682 = vmul.f32 %v575, %v140
  %v683 = vmul.f32 %v579, %v140
  %v684 = vmul.f32 %v583, %v140
  %v685 = vmul.f32 %v587, %v140
  %v686 = vmul.f32 %v591, %v140
  %v687 = vmul.f32 %v595, %v140
  %v688 = vmul.f32 %v599, %v140
  %v689 = vmul.f32 %v603, %v140
  %v690 = vmul.f32 %v607, %v140
  %v691 = vmul.f32 %v611, %v140
  %v692 = vmul.f32 %v615, %v140
  %v693 = vmul.f32 %v619, %v140
  %v694 = vmul.f32 %v623, %v140
  %v695 = vmul.f32 %v627, %v140
  %v696 = vmul.f32 %v631, %v140
  %v697 = vmul.f32 %v635, %v140
  %v698 = vmul.f32 %v639, %v140
  %v699 = vmul.f32 %v643, %v140
  %v700 = vmul.f32 %v647, %v140
  %v701 = vmul.f32 %v651, %v140
  %v702 = vmul.f32 %v655, %v140
  %v703 = vmul.f32 %v659, %v140
  %v704 = vmul.f32 %v663, %v140
  %v705 = vmul.f32 %v667, %v140
  %v706 = vmul.f32 %v671, %v140
  %v707 = vmul.f32 %v675, %v140
  %v708 = vmul.f32 %v679, %v140
  %v709 = vadd.f32 %v541, %v681
  %v710 = vadd.f32 %v542, %v682
  %v711 = vadd.f32 %v543, %v683
  %v712 = vadd.f32 %v544, %v684
  %v713 = vadd.f32 %v545, %v685
  %v714 = vadd.f32 %v546, %v686
  %v715 = vadd.f32 %v547, %v687
  %v716 = vadd.f32 %v548, %v688
  %v717 = vadd.f32 %v549, %v689
  %v718 = vadd.f32 %v550, %v690
  %v719 = vadd.f32 %v551, %v691
  %v720 = vadd.f32 %v552, %v692
  %v721 = vadd.f32 %v553, %v693
  %v722 = vadd.f32 %v554, %v694
  %v723 = vadd.f32 %v555, %v695
  %v724 = vadd.f32 %v556, %v696
  %v725 = vadd.f32 %v557, %v697
  %v726 = vadd.f32 %v558, %v698
  %v727 = vadd.f32 %v559, %v699
  %v728 = vadd.f32 %v560, %v700
  %v729 = vadd.f32 %v561, %v701
  %v730 = vadd.f32 %v562, %v702
  %v731 = vadd.f32 %v563, %v703
  %v732 = vadd.f32 %v564, %v704
  %v733 = vadd.f32 %v565, %v705
  %v734 = vadd.f32 %v566, %v706
  %v735 = vadd.f32 %v567, %v707
  %v736 = vadd.f32 %v568, %v708
  %737 = vset.pattern.permute.xlu0 3
  %738 = vperm.xlu0 %737, %v205
  %v739 = vpop.permute.xlu0 %738
  %741 = vset.pattern.permute.xlu0 3
  %742 = vperm.xlu0 %741, %v206
  %v743 = vpop.permute.xlu0 %742
  %745 = vset.pattern.permute.xlu0 3
  %746 = vperm.xlu0 %745, %v207
  %v747 = vpop.permute.xlu0 %746
  %749 = vset.pattern.permute.xlu0 3
  %750 = vperm.xlu0 %749, %v208
  %v751 = vpop.permute.xlu0 %750
  %753 = vset.pattern.permute.xlu0 3
  %754 = vperm.xlu0 %753, %v209
  %v755 = vpop.permute.xlu0 %754
  %757 = vset.pattern.permute.xlu0 3
  %758 = vperm.xlu0 %757, %v210
  %v759 = vpop.permute.xlu0 %758
  %761 = vset.pattern.permute.xlu0 3
  %762 = vperm.xlu0 %761, %v211
  %v763 = vpop.permute.xlu0 %762
  %765 = vset.pattern.permute.xlu0 3
  %766 = vperm.xlu0 %765, %v212
  %v767 = vpop.permute.xlu0 %766
  %769 = vset.pattern.permute.xlu0 3
  %770 = vperm.xlu0 %769, %v213
  %v771 = vpop.permute.xlu0 %770
  %773 = vset.pattern.permute.xlu0 3
  %774 = vperm.xlu0 %773, %v214
  %v775 = vpop.permute.xlu0 %774
  %777 = vset.pattern.permute.xlu0 3
  %778 = vperm.xlu0 %777, %v215
  %v779 = vpop.permute.xlu0 %778
  %781 = vset.pattern.permute.xlu0 3
  %782 = vperm.xlu0 %781, %v216
  %v783 = vpop.permute.xlu0 %782
  %785 = vset.pattern.permute.xlu0 3
  %786 = vperm.xlu0 %785, %v217
  %v787 = vpop.permute.xlu0 %786
  %789 = vset.pattern.permute.xlu0 3
  %790 = vperm.xlu0 %789, %v218
  %v791 = vpop.permute.xlu0 %790
  %793 = vset.pattern.permute.xlu0 3
  %794 = vperm.xlu0 %793, %v219
  %v795 = vpop.permute.xlu0 %794
  %797 = vset.pattern.permute.xlu0 3
  %798 = vperm.xlu0 %797, %v220
  %v799 = vpop.permute.xlu0 %798
  %801 = vset.pattern.permute.xlu0 3
  %802 = vperm.xlu0 %801, %v221
  %v803 = vpop.permute.xlu0 %802
  %805 = vset.pattern.permute.xlu0 3
  %806 = vperm.xlu0 %805, %v222
  %v807 = vpop.permute.xlu0 %806
  %809 = vset.pattern.permute.xlu0 3
  %810 = vperm.xlu0 %809, %v223
  %v811 = vpop.permute.xlu0 %810
  %813 = vset.pattern.permute.xlu0 3
  %814 = vperm.xlu0 %813, %v224
  %v815 = vpop.permute.xlu0 %814
  %817 = vset.pattern.permute.xlu0 3
  %818 = vperm.xlu0 %817, %v225
  %v819 = vpop.permute.xlu0 %818
  %821 = vset.pattern.permute.xlu0 3
  %822 = vperm.xlu0 %821, %v226
  %v823 = vpop.permute.xlu0 %822
  %825 = vset.pattern.permute.xlu0 3
  %826 = vperm.xlu0 %825, %v227
  %v827 = vpop.permute.xlu0 %826
  %829 = vset.pattern.permute.xlu0 3
  %830 = vperm.xlu0 %829, %v228
  %v831 = vpop.permute.xlu0 %830
  %833 = vset.pattern.permute.xlu0 3
  %834 = vperm.xlu0 %833, %v229
  %v835 = vpop.permute.xlu0 %834
  %837 = vset.pattern.permute.xlu0 3
  %838 = vperm.xlu0 %837, %v230
  %v839 = vpop.permute.xlu0 %838
  %841 = vset.pattern.permute.xlu0 3
  %842 = vperm.xlu0 %841, %v231
  %v843 = vpop.permute.xlu0 %842
  %845 = vset.pattern.permute.xlu0 3
  %846 = vperm.xlu0 %845, %v232
  %v847 = vpop.permute.xlu0 %846
  %v849 = vmul.f32 %v739, %v180
  %v850 = vmul.f32 %v743, %v180
  %v851 = vmul.f32 %v747, %v180
  %v852 = vmul.f32 %v751, %v180
  %v853 = vmul.f32 %v755, %v180
  %v854 = vmul.f32 %v759, %v180
  %v855 = vmul.f32 %v763, %v180
  %v856 = vmul.f32 %v767, %v180
  %v857 = vmul.f32 %v771, %v180
  %v858 = vmul.f32 %v775, %v180
  %v859 = vmul.f32 %v779, %v180
  %v860 = vmul.f32 %v783, %v180
  %v861 = vmul.f32 %v787, %v180
  %v862 = vmul.f32 %v791, %v180
  %v863 = vmul.f32 %v795, %v180
  %v864 = vmul.f32 %v799, %v180
  %v865 = vmul.f32 %v803, %v180
  %v866 = vmul.f32 %v807, %v180
  %v867 = vmul.f32 %v811, %v180
  %v868 = vmul.f32 %v815, %v180
  %v869 = vmul.f32 %v819, %v180
  %v870 = vmul.f32 %v823, %v180
  %v871 = vmul.f32 %v827, %v180
  %v872 = vmul.f32 %v831, %v180
  %v873 = vmul.f32 %v835, %v180
  %v874 = vmul.f32 %v839, %v180
  %v875 = vmul.f32 %v843, %v180
  %v876 = vmul.f32 %v847, %v180
  %v877 = vadd.f32 %v709, %v849
  %v878 = vadd.f32 %v710, %v850
  %v879 = vadd.f32 %v711, %v851
  %v880 = vadd.f32 %v712, %v852
  %v881 = vadd.f32 %v713, %v853
  %v882 = vadd.f32 %v714, %v854
  %v883 = vadd.f32 %v715, %v855
  %v884 = vadd.f32 %v716, %v856
  %v885 = vadd.f32 %v717, %v857
  %v886 = vadd.f32 %v718, %v858
  %v887 = vadd.f32 %v719, %v859
  %v888 = vadd.f32 %v720, %v860
  %v889 = vadd.f32 %v721, %v861
  %v890 = vadd.f32 %v722, %v862
  %v891 = vadd.f32 %v723, %v863
  %v892 = vadd.f32 %v724, %v864
  %v893 = vadd.f32 %v725, %v865
  %v894 = vadd.f32 %v726, %v866
  %v895 = vadd.f32 %v727, %v867
  %v896 = vadd.f32 %v728, %v868
  %v897 = vadd.f32 %v729, %v869
  %v898 = vadd.f32 %v730, %v870
  %v899 = vadd.f32 %v731, %v871
  %v900 = vadd.f32 %v732, %v872
  %v901 = vadd.f32 %v733, %v873
  %v902 = vadd.f32 %v734, %v874
  %v903 = vadd.f32 %v735, %v875
  %v904 = vadd.f32 %v736, %v876
  %v905 = vadd.f32 %v877, %v197
  %v906 = vadd.f32 %v878, %v197
  %v907 = vadd.f32 %v879, %v197
  %v908 = vadd.f32 %v880, %v197
  %v909 = vadd.f32 %v881, %v197
  %v910 = vadd.f32 %v882, %v197
  %v911 = vadd.f32 %v883, %v197
  %v912 = vadd.f32 %v884, %v197
  %v913 = vadd.f32 %v885, %v197
  %v914 = vadd.f32 %v886, %v197
  %v915 = vadd.f32 %v887, %v197
  %v916 = vadd.f32 %v888, %v197
  %v917 = vadd.f32 %v889, %v197
  %v918 = vadd.f32 %v890, %v197
  %v919 = vadd.f32 %v891, %v197
  %v920 = vadd.f32 %v892, %v197
  %v921 = vadd.f32 %v893, %v197
  %v922 = vadd.f32 %v894, %v197
  %v923 = vadd.f32 %v895, %v197
  %v924 = vadd.f32 %v896, %v197
  %v925 = vadd.f32 %v897, %v197
  %v926 = vadd.f32 %v898, %v197
  %v927 = vadd.f32 %v899, %v197
  %v928 = vadd.f32 %v900, %v197
  %v929 = vadd.f32 %v901, %v197
  %v930 = vadd.f32 %v902, %v197
  %v931 = vadd.f32 %v903, %v197
  %v932 = vadd.f32 %v904, %v197
  %v933 = vlaneseq
  %v934 = vshrl.u32 %v933, 7
  %v935 = vsub.s32 0, %v934
  %v936 = vrot.slane %v199, %v935
  %v937 = vmul.f32 %v905, %v936
  %v938 = vmul.f32 %v906, %v936
  %v939 = vmul.f32 %v907, %v936
  %v940 = vmul.f32 %v908, %v936
  %v941 = vmul.f32 %v909, %v936
  %v942 = vmul.f32 %v910, %v936
  %v943 = vmul.f32 %v911, %v936
  %v944 = vmul.f32 %v912, %v936
  %v945 = vmul.f32 %v913, %v936
  %v946 = vmul.f32 %v914, %v936
  %v947 = vmul.f32 %v915, %v936
  %v948 = vmul.f32 %v916, %v936
  %v949 = vmul.f32 %v917, %v936
  %v950 = vmul.f32 %v918, %v936
  %v951 = vmul.f32 %v919, %v936
  %v952 = vmul.f32 %v920, %v936
  %v953 = vmul.f32 %v921, %v936
  %v954 = vmul.f32 %v922, %v936
  %v955 = vadd.f32 %v937, 0.0
  %v956 = vadd.f32 %v938, 0.0
  %v957 = vadd.f32 %v939, 0.0
  %v958 = vadd.f32 %v940, 0.0
  %v959 = vadd.f32 %v941, 0.0
  %v960 = vadd.f32 %v942, 0.0
  %v961 = vadd.f32 %v943, 0.0
  %v962 = vadd.f32 %v944, 0.0
  %v963 = vadd.f32 %v945, 0.0
  %v964 = vadd.f32 %v946, 0.0
  %v965 = vadd.f32 %v947, 0.0
  %v966 = vadd.f32 %v948, 0.0
  %v967 = vadd.f32 %v949, 0.0
  %v968 = vadd.f32 %v950, 0.0
  %v969 = vadd.f32 %v951, 0.0
  %v970 = vadd.f32 %v952, 0.0
  %v971 = vadd.f32 %v953, 0.0
  %v972 = vadd.f32 %v954, 0.0
  %v973 = vlaneseq
  %v974 = vshrl.u32 %v973, 7
  %v975 = vsub.s32 0, %v974
  %v976 = vrot.slane %v200, %v975
  %v977 = vmul.f32 %v907, %v976
  %v978 = vmul.f32 %v908, %v976
  %v979 = vmul.f32 %v909, %v976
  %v980 = vmul.f32 %v910, %v976
  %v981 = vmul.f32 %v911, %v976
  %v982 = vmul.f32 %v912, %v976
  %v983 = vmul.f32 %v913, %v976
  %v984 = vmul.f32 %v914, %v976
  %v985 = vmul.f32 %v915, %v976
  %v986 = vmul.f32 %v916, %v976
  %v987 = vmul.f32 %v917, %v976
  %v988 = vmul.f32 %v918, %v976
  %v989 = vmul.f32 %v919, %v976
  %v990 = vmul.f32 %v920, %v976
  %v991 = vmul.f32 %v921, %v976
  %v992 = vmul.f32 %v922, %v976
  %v993 = vmul.f32 %v923, %v976
  %v994 = vmul.f32 %v924, %v976
  %v995 = vadd.f32 %v955, %v977
  %v996 = vadd.f32 %v956, %v978
  %v997 = vadd.f32 %v957, %v979
  %v998 = vadd.f32 %v958, %v980
  %v999 = vadd.f32 %v959, %v981
  %v1000 = vadd.f32 %v960, %v982
  %v1001 = vadd.f32 %v961, %v983
  %v1002 = vadd.f32 %v962, %v984
  %v1003 = vadd.f32 %v963, %v985
  %v1004 = vadd.f32 %v964, %v986
  %v1005 = vadd.f32 %v965, %v987
  %v1006 = vadd.f32 %v966, %v988
  %v1007 = vadd.f32 %v967, %v989
  %v1008 = vadd.f32 %v968, %v990
  %v1009 = vadd.f32 %v969, %v991
  %v1010 = vadd.f32 %v970, %v992
  %v1011 = vadd.f32 %v971, %v993
  %v1012 = vadd.f32 %v972, %v994
  %v1013 = vlaneseq
  %v1014 = vshrl.u32 %v1013, 7
  %v1015 = vsub.s32 0, %v1014
  %v1016 = vrot.slane %v201, %v1015
  %v1017 = vmul.f32 %v909, %v1016
  %v1018 = vmul.f32 %v910, %v1016
  %v1019 = vmul.f32 %v911, %v1016
  %v1020 = vmul.f32 %v912, %v1016
  %v1021 = vmul.f32 %v913, %v1016
  %v1022 = vmul.f32 %v914, %v1016
  %v1023 = vmul.f32 %v915, %v1016
  %v1024 = vmul.f32 %v916, %v1016
  %v1025 = vmul.f32 %v917, %v1016
  %v1026 = vmul.f32 %v918, %v1016
  %v1027 = vmul.f32 %v919, %v1016
  %v1028 = vmul.f32 %v920, %v1016
  %v1029 = vmul.f32 %v921, %v1016
  %v1030 = vmul.f32 %v922, %v1016
  %v1031 = vmul.f32 %v923, %v1016
  %v1032 = vmul.f32 %v924, %v1016
  %v1033 = vmul.f32 %v925, %v1016
  %v1034 = vmul.f32 %v926, %v1016
  %v1035 = vadd.f32 %v995, %v1017
  %v1036 = vadd.f32 %v996, %v1018
  %v1037 = vadd.f32 %v997, %v1019
  %v1038 = vadd.f32 %v998, %v1020
  %v1039 = vadd.f32 %v999, %v1021
  %v1040 = vadd.f32 %v1000, %v1022
  %v1041 = vadd.f32 %v1001, %v1023
  %v1042 = vadd.f32 %v1002, %v1024
  %v1043 = vadd.f32 %v1003, %v1025
  %v1044 = vadd.f32 %v1004, %v1026
  %v1045 = vadd.f32 %v1005, %v1027
  %v1046 = vadd.f32 %v1006, %v1028
  %v1047 = vadd.f32 %v1007, %v1029
  %v1048 = vadd.f32 %v1008, %v1030
  %v1049 = vadd.f32 %v1009, %v1031
  %v1050 = vadd.f32 %v1010, %v1032
  %v1051 = vadd.f32 %v1011, %v1033
  %v1052 = vadd.f32 %v1012, %v1034
  %v1053 = vlaneseq
  %v1054 = vshrl.u32 %v1053, 7
  %v1055 = vsub.s32 0, %v1054
  %v1056 = vrot.slane %v202, %v1055
  %v1057 = vmul.f32 %v911, %v1056
  %v1058 = vmul.f32 %v912, %v1056
  %v1059 = vmul.f32 %v913, %v1056
  %v1060 = vmul.f32 %v914, %v1056
  %v1061 = vmul.f32 %v915, %v1056
  %v1062 = vmul.f32 %v916, %v1056
  %v1063 = vmul.f32 %v917, %v1056
  %v1064 = vmul.f32 %v918, %v1056
  %v1065 = vmul.f32 %v919, %v1056
  %v1066 = vmul.f32 %v920, %v1056
  %v1067 = vmul.f32 %v921, %v1056
  %v1068 = vmul.f32 %v922, %v1056
  %v1069 = vmul.f32 %v923, %v1056
  %v1070 = vmul.f32 %v924, %v1056
  %v1071 = vmul.f32 %v925, %v1056
  %v1072 = vmul.f32 %v926, %v1056
  %v1073 = vmul.f32 %v927, %v1056
  %v1074 = vmul.f32 %v928, %v1056
  %v1075 = vadd.f32 %v1035, %v1057
  %v1076 = vadd.f32 %v1036, %v1058
  %v1077 = vadd.f32 %v1037, %v1059
  %v1078 = vadd.f32 %v1038, %v1060
  %v1079 = vadd.f32 %v1039, %v1061
  %v1080 = vadd.f32 %v1040, %v1062
  %v1081 = vadd.f32 %v1041, %v1063
  %v1082 = vadd.f32 %v1042, %v1064
  %v1083 = vadd.f32 %v1043, %v1065
  %v1084 = vadd.f32 %v1044, %v1066
  %v1085 = vadd.f32 %v1045, %v1067
  %v1086 = vadd.f32 %v1046, %v1068
  %v1087 = vadd.f32 %v1047, %v1069
  %v1088 = vadd.f32 %v1048, %v1070
  %v1089 = vadd.f32 %v1049, %v1071
  %v1090 = vadd.f32 %v1050, %v1072
  %v1091 = vadd.f32 %v1051, %v1073
  %v1092 = vadd.f32 %v1052, %v1074
  %v1093 = vlaneseq
  %v1094 = vshrl.u32 %v1093, 7
  %v1095 = vsub.s32 0, %v1094
  %v1096 = vrot.slane %v203, %v1095
  %v1097 = vmul.f32 %v913, %v1096
  %v1098 = vmul.f32 %v914, %v1096
  %v1099 = vmul.f32 %v915, %v1096
  %v1100 = vmul.f32 %v916, %v1096
  %v1101 = vmul.f32 %v917, %v1096
  %v1102 = vmul.f32 %v918, %v1096
  %v1103 = vmul.f32 %v919, %v1096
  %v1104 = vmul.f32 %v920, %v1096
  %v1105 = vmul.f32 %v921, %v1096
  %v1106 = vmul.f32 %v922, %v1096
  %v1107 = vmul.f32 %v923, %v1096
  %v1108 = vmul.f32 %v924, %v1096
  %v1109 = vmul.f32 %v925, %v1096
  %v1110 = vmul.f32 %v926, %v1096
  %v1111 = vmul.f32 %v927, %v1096
  %v1112 = vmul.f32 %v928, %v1096
  %v1113 = vmul.f32 %v929, %v1096
  %v1114 = vmul.f32 %v930, %v1096
  %v1115 = vadd.f32 %v1075, %v1097
  %v1116 = vadd.f32 %v1076, %v1098
  %v1117 = vadd.f32 %v1077, %v1099
  %v1118 = vadd.f32 %v1078, %v1100
  %v1119 = vadd.f32 %v1079, %v1101
  %v1120 = vadd.f32 %v1080, %v1102
  %v1121 = vadd.f32 %v1081, %v1103
  %v1122 = vadd.f32 %v1082, %v1104
  %v1123 = vadd.f32 %v1083, %v1105
  %v1124 = vadd.f32 %v1084, %v1106
  %v1125 = vadd.f32 %v1085, %v1107
  %v1126 = vadd.f32 %v1086, %v1108
  %v1127 = vadd.f32 %v1087, %v1109
  %v1128 = vadd.f32 %v1088, %v1110
  %v1129 = vadd.f32 %v1089, %v1111
  %v1130 = vadd.f32 %v1090, %v1112
  %v1131 = vadd.f32 %v1091, %v1113
  %v1132 = vadd.f32 %v1092, %v1114
  %v1133 = vlaneseq
  %v1134 = vshrl.u32 %v1133, 7
  %v1135 = vsub.s32 0, %v1134
  %v1136 = vrot.slane %v204, %v1135
  %v1137 = vmul.f32 %v915, %v1136
  %v1138 = vmul.f32 %v916, %v1136
  %v1139 = vmul.f32 %v917, %v1136
  %v1140 = vmul.f32 %v918, %v1136
  %v1141 = vmul.f32 %v919, %v1136
  %v1142 = vmul.f32 %v920, %v1136
  %v1143 = vmul.f32 %v921, %v1136
  %v1144 = vmul.f32 %v922, %v1136
  %v1145 = vmul.f32 %v923, %v1136
  %v1146 = vmul.f32 %v924, %v1136
  %v1147 = vmul.f32 %v925, %v1136
  %v1148 = vmul.f32 %v926, %v1136
  %v1149 = vmul.f32 %v927, %v1136
  %v1150 = vmul.f32 %v928, %v1136
  %v1151 = vmul.f32 %v929, %v1136
  %v1152 = vmul.f32 %v930, %v1136
  %v1153 = vmul.f32 %v931, %v1136
  %v1154 = vmul.f32 %v932, %v1136
  %v1155 = vadd.f32 %v1115, %v1137
  %v1156 = vadd.f32 %v1116, %v1138
  %v1157 = vadd.f32 %v1117, %v1139
  %v1158 = vadd.f32 %v1118, %v1140
  %v1159 = vadd.f32 %v1119, %v1141
  %v1160 = vadd.f32 %v1120, %v1142
  %v1161 = vadd.f32 %v1121, %v1143
  %v1162 = vadd.f32 %v1122, %v1144
  %v1163 = vadd.f32 %v1123, %v1145
  %v1164 = vadd.f32 %v1124, %v1146
  %v1165 = vadd.f32 %v1125, %v1147
  %v1166 = vadd.f32 %v1126, %v1148
  %v1167 = vadd.f32 %v1127, %v1149
  %v1168 = vadd.f32 %v1128, %v1150
  %v1169 = vadd.f32 %v1129, %v1151
  %v1170 = vadd.f32 %v1130, %v1152
  %v1171 = vadd.f32 %v1131, %v1153
  %v1172 = vadd.f32 %v1132, %v1154
  %v1173 = vlaneseq
  %v1174 = vshrl.u32 %v1173, 7
  %v1175 = vsub.s32 1, %v1174
  %v1176 = vrot.slane %v199, %v1175
  %v1177 = vmul.f32 %v905, %v1176
  %v1178 = vmul.f32 %v906, %v1176
  %v1179 = vmul.f32 %v907, %v1176
  %v1180 = vmul.f32 %v908, %v1176
  %v1181 = vmul.f32 %v909, %v1176
  %v1182 = vmul.f32 %v910, %v1176
  %v1183 = vmul.f32 %v911, %v1176
  %v1184 = vmul.f32 %v912, %v1176
  %v1185 = vmul.f32 %v913, %v1176
  %v1186 = vmul.f32 %v914, %v1176
  %v1187 = vmul.f32 %v915, %v1176
  %v1188 = vmul.f32 %v916, %v1176
  %v1189 = vmul.f32 %v917, %v1176
  %v1190 = vmul.f32 %v918, %v1176
  %v1191 = vmul.f32 %v919, %v1176
  %v1192 = vmul.f32 %v920, %v1176
  %v1193 = vmul.f32 %v921, %v1176
  %v1194 = vmul.f32 %v922, %v1176
  %vm1213 = vcmask 1046528
  %v1214 = vrot.slane %v1177, 1
  %v1215 = vrot.slane %v1178, 1
  %v1216 = vsel %vm1213, %v1214, %v1215
  %v1217 = vrot.slane %v1179, 1
  %v1218 = vrot.slane %v1180, 1
  %v1219 = vsel %vm1213, %v1217, %v1218
  %v1220 = vrot.slane %v1181, 1
  %v1221 = vrot.slane %v1182, 1
  %v1222 = vsel %vm1213, %v1220, %v1221
  %v1223 = vrot.slane %v1183, 1
  %v1224 = vrot.slane %v1184, 1
  %v1225 = vsel %vm1213, %v1223, %v1224
  %v1226 = vrot.slane %v1185, 1
  %v1227 = vrot.slane %v1186, 1
  %v1228 = vsel %vm1213, %v1226, %v1227
  %v1229 = vrot.slane %v1187, 1
  %v1230 = vrot.slane %v1188, 1
  %v1231 = vsel %vm1213, %v1229, %v1230
  %v1232 = vrot.slane %v1189, 1
  %v1233 = vrot.slane %v1190, 1
  %v1234 = vsel %vm1213, %v1232, %v1233
  %v1235 = vrot.slane %v1191, 1
  %v1236 = vrot.slane %v1192, 1
  %v1237 = vsel %vm1213, %v1235, %v1236
  %v1238 = vrot.slane %v1193, 1
  %v1239 = vrot.slane %v1194, 1
  %v1240 = vsel %vm1213, %v1238, %v1239
  %v1259 = vadd.f32 %v1155, %v1216
  %v1260 = vadd.f32 %v1156, %v1215
  %v1261 = vadd.f32 %v1157, %v1219
  %v1262 = vadd.f32 %v1158, %v1218
  %v1263 = vadd.f32 %v1159, %v1222
  %v1264 = vadd.f32 %v1160, %v1221
  %v1265 = vadd.f32 %v1161, %v1225
  %v1266 = vadd.f32 %v1162, %v1224
  %v1267 = vadd.f32 %v1163, %v1228
  %v1268 = vadd.f32 %v1164, %v1227
  %v1269 = vadd.f32 %v1165, %v1231
  %v1270 = vadd.f32 %v1166, %v1230
  %v1271 = vadd.f32 %v1167, %v1234
  %v1272 = vadd.f32 %v1168, %v1233
  %v1273 = vadd.f32 %v1169, %v1237
  %v1274 = vadd.f32 %v1170, %v1236
  %v1275 = vadd.f32 %v1171, %v1240
  %v1276 = vadd.f32 %v1172, %v1239
  %v1277 = vlaneseq
  %v1278 = vshrl.u32 %v1277, 7
  %v1279 = vsub.s32 1, %v1278
  %v1280 = vrot.slane %v200, %v1279
  %v1281 = vmul.f32 %v907, %v1280
  %v1282 = vmul.f32 %v908, %v1280
  %v1283 = vmul.f32 %v909, %v1280
  %v1284 = vmul.f32 %v910, %v1280
  %v1285 = vmul.f32 %v911, %v1280
  %v1286 = vmul.f32 %v912, %v1280
  %v1287 = vmul.f32 %v913, %v1280
  %v1288 = vmul.f32 %v914, %v1280
  %v1289 = vmul.f32 %v915, %v1280
  %v1290 = vmul.f32 %v916, %v1280
  %v1291 = vmul.f32 %v917, %v1280
  %v1292 = vmul.f32 %v918, %v1280
  %v1293 = vmul.f32 %v919, %v1280
  %v1294 = vmul.f32 %v920, %v1280
  %v1295 = vmul.f32 %v921, %v1280
  %v1296 = vmul.f32 %v922, %v1280
  %v1297 = vmul.f32 %v923, %v1280
  %v1298 = vmul.f32 %v924, %v1280
  %v1317 = vrot.slane %v1281, 1
  %v1318 = vrot.slane %v1282, 1
  %v1319 = vsel %vm1213, %v1317, %v1318
  %v1320 = vrot.slane %v1283, 1
  %v1321 = vrot.slane %v1284, 1
  %v1322 = vsel %vm1213, %v1320, %v1321
  %v1323 = vrot.slane %v1285, 1
  %v1324 = vrot.slane %v1286, 1
  %v1325 = vsel %vm1213, %v1323, %v1324
  %v1326 = vrot.slane %v1287, 1
  %v1327 = vrot.slane %v1288, 1
  %v1328 = vsel %vm1213, %v1326, %v1327
  %v1329 = vrot.slane %v1289, 1
  %v1330 = vrot.slane %v1290, 1
  %v1331 = vsel %vm1213, %v1329, %v1330
  %v1332 = vrot.slane %v1291, 1
  %v1333 = vrot.slane %v1292, 1
  %v1334 = vsel %vm1213, %v1332, %v1333
  %v1335 = vrot.slane %v1293, 1
  %v1336 = vrot.slane %v1294, 1
  %v1337 = vsel %vm1213, %v1335, %v1336
  %v1338 = vrot.slane %v1295, 1
  %v1339 = vrot.slane %v1296, 1
  %v1340 = vsel %vm1213, %v1338, %v1339
  %v1341 = vrot.slane %v1297, 1
  %v1342 = vrot.slane %v1298, 1
  %v1343 = vsel %vm1213, %v1341, %v1342
  %v1362 = vadd.f32 %v1259, %v1319
  %v1363 = vadd.f32 %v1260, %v1318
  %v1364 = vadd.f32 %v1261, %v1322
  %v1365 = vadd.f32 %v1262, %v1321
  %v1366 = vadd.f32 %v1263, %v1325
  %v1367 = vadd.f32 %v1264, %v1324
  %v1368 = vadd.f32 %v1265, %v1328
  %v1369 = vadd.f32 %v1266, %v1327
  %v1370 = vadd.f32 %v1267, %v1331
  %v1371 = vadd.f32 %v1268, %v1330
  %v1372 = vadd.f32 %v1269, %v1334
  %v1373 = vadd.f32 %v1270, %v1333
  %v1374 = vadd.f32 %v1271, %v1337
  %v1375 = vadd.f32 %v1272, %v1336
  %v1376 = vadd.f32 %v1273, %v1340
  %v1377 = vadd.f32 %v1274, %v1339
  %v1378 = vadd.f32 %v1275, %v1343
  %v1379 = vadd.f32 %v1276, %v1342
  %v1380 = vlaneseq
  %v1381 = vshrl.u32 %v1380, 7
  %v1382 = vsub.s32 1, %v1381
  %v1383 = vrot.slane %v201, %v1382
  %v1384 = vmul.f32 %v909, %v1383
  %v1385 = vmul.f32 %v910, %v1383
  %v1386 = vmul.f32 %v911, %v1383
  %v1387 = vmul.f32 %v912, %v1383
  %v1388 = vmul.f32 %v913, %v1383
  %v1389 = vmul.f32 %v914, %v1383
  %v1390 = vmul.f32 %v915, %v1383
  %v1391 = vmul.f32 %v916, %v1383
  %v1392 = vmul.f32 %v917, %v1383
  %v1393 = vmul.f32 %v918, %v1383
  %v1394 = vmul.f32 %v919, %v1383
  %v1395 = vmul.f32 %v920, %v1383
  %v1396 = vmul.f32 %v921, %v1383
  %v1397 = vmul.f32 %v922, %v1383
  %v1398 = vmul.f32 %v923, %v1383
  %v1399 = vmul.f32 %v924, %v1383
  %v1400 = vmul.f32 %v925, %v1383
  %v1401 = vmul.f32 %v926, %v1383
  %v1420 = vrot.slane %v1384, 1
  %v1421 = vrot.slane %v1385, 1
  %v1422 = vsel %vm1213, %v1420, %v1421
  %v1423 = vrot.slane %v1386, 1
  %v1424 = vrot.slane %v1387, 1
  %v1425 = vsel %vm1213, %v1423, %v1424
  %v1426 = vrot.slane %v1388, 1
  %v1427 = vrot.slane %v1389, 1
  %v1428 = vsel %vm1213, %v1426, %v1427
  %v1429 = vrot.slane %v1390, 1
  %v1430 = vrot.slane %v1391, 1
  %v1431 = vsel %vm1213, %v1429, %v1430
  %v1432 = vrot.slane %v1392, 1
  %v1433 = vrot.slane %v1393, 1
  %v1434 = vsel %vm1213, %v1432, %v1433
  %v1435 = vrot.slane %v1394, 1
  %v1436 = vrot.slane %v1395, 1
  %v1437 = vsel %vm1213, %v1435, %v1436
  %v1438 = vrot.slane %v1396, 1
  %v1439 = vrot.slane %v1397, 1
  %v1440 = vsel %vm1213, %v1438, %v1439
  %v1441 = vrot.slane %v1398, 1
  %v1442 = vrot.slane %v1399, 1
  %v1443 = vsel %vm1213, %v1441, %v1442
  %v1444 = vrot.slane %v1400, 1
  %v1445 = vrot.slane %v1401, 1
  %v1446 = vsel %vm1213, %v1444, %v1445
  %v1465 = vadd.f32 %v1362, %v1422
  %v1466 = vadd.f32 %v1363, %v1421
  %v1467 = vadd.f32 %v1364, %v1425
  %v1468 = vadd.f32 %v1365, %v1424
  %v1469 = vadd.f32 %v1366, %v1428
  %v1470 = vadd.f32 %v1367, %v1427
  %v1471 = vadd.f32 %v1368, %v1431
  %v1472 = vadd.f32 %v1369, %v1430
  %v1473 = vadd.f32 %v1370, %v1434
  %v1474 = vadd.f32 %v1371, %v1433
  %v1475 = vadd.f32 %v1372, %v1437
  %v1476 = vadd.f32 %v1373, %v1436
  %v1477 = vadd.f32 %v1374, %v1440
  %v1478 = vadd.f32 %v1375, %v1439
  %v1479 = vadd.f32 %v1376, %v1443
  %v1480 = vadd.f32 %v1377, %v1442
  %v1481 = vadd.f32 %v1378, %v1446
  %v1482 = vadd.f32 %v1379, %v1445
  %v1483 = vlaneseq
  %v1484 = vshrl.u32 %v1483, 7
  %v1485 = vsub.s32 1, %v1484
  %v1486 = vrot.slane %v202, %v1485
  %v1487 = vmul.f32 %v911, %v1486
  %v1488 = vmul.f32 %v912, %v1486
  %v1489 = vmul.f32 %v913, %v1486
  %v1490 = vmul.f32 %v914, %v1486
  %v1491 = vmul.f32 %v915, %v1486
  %v1492 = vmul.f32 %v916, %v1486
  %v1493 = vmul.f32 %v917, %v1486
  %v1494 = vmul.f32 %v918, %v1486
  %v1495 = vmul.f32 %v919, %v1486
  %v1496 = vmul.f32 %v920, %v1486
  %v1497 = vmul.f32 %v921, %v1486
  %v1498 = vmul.f32 %v922, %v1486
  %v1499 = vmul.f32 %v923, %v1486
  %v1500 = vmul.f32 %v924, %v1486
  %v1501 = vmul.f32 %v925, %v1486
  %v1502 = vmul.f32 %v926, %v1486
  %v1503 = vmul.f32 %v927, %v1486
  %v1504 = vmul.f32 %v928, %v1486
  %v1523 = vrot.slane %v1487, 1
  %v1524 = vrot.slane %v1488, 1
  %v1525 = vsel %vm1213, %v1523, %v1524
  %v1526 = vrot.slane %v1489, 1
  %v1527 = vrot.slane %v1490, 1
  %v1528 = vsel %vm1213, %v1526, %v1527
  %v1529 = vrot.slane %v1491, 1
  %v1530 = vrot.slane %v1492, 1
  %v1531 = vsel %vm1213, %v1529, %v1530
  %v1532 = vrot.slane %v1493, 1
  %v1533 = vrot.slane %v1494, 1
  %v1534 = vsel %vm1213, %v1532, %v1533
  %v1535 = vrot.slane %v1495, 1
  %v1536 = vrot.slane %v1496, 1
  %v1537 = vsel %vm1213, %v1535, %v1536
  %v1538 = vrot.slane %v1497, 1
  %v1539 = vrot.slane %v1498, 1
  %v1540 = vsel %vm1213, %v1538, %v1539
  %v1541 = vrot.slane %v1499, 1
  %v1542 = vrot.slane %v1500, 1
  %v1543 = vsel %vm1213, %v1541, %v1542
  %v1544 = vrot.slane %v1501, 1
  %v1545 = vrot.slane %v1502, 1
  %v1546 = vsel %vm1213, %v1544, %v1545
  %v1547 = vrot.slane %v1503, 1
  %v1548 = vrot.slane %v1504, 1
  %v1549 = vsel %vm1213, %v1547, %v1548
  %v1568 = vadd.f32 %v1465, %v1525
  %v1569 = vadd.f32 %v1466, %v1524
  %v1570 = vadd.f32 %v1467, %v1528
  %v1571 = vadd.f32 %v1468, %v1527
  %v1572 = vadd.f32 %v1469, %v1531
  %v1573 = vadd.f32 %v1470, %v1530
  %v1574 = vadd.f32 %v1471, %v1534
  %v1575 = vadd.f32 %v1472, %v1533
  %v1576 = vadd.f32 %v1473, %v1537
  %v1577 = vadd.f32 %v1474, %v1536
  %v1578 = vadd.f32 %v1475, %v1540
  %v1579 = vadd.f32 %v1476, %v1539
  %v1580 = vadd.f32 %v1477, %v1543
  %v1581 = vadd.f32 %v1478, %v1542
  %v1582 = vadd.f32 %v1479, %v1546
  %v1583 = vadd.f32 %v1480, %v1545
  %v1584 = vadd.f32 %v1481, %v1549
  %v1585 = vadd.f32 %v1482, %v1548
  %v1586 = vlaneseq
  %v1587 = vshrl.u32 %v1586, 7
  %v1588 = vsub.s32 1, %v1587
  %v1589 = vrot.slane %v203, %v1588
  %v1590 = vmul.f32 %v913, %v1589
  %v1591 = vmul.f32 %v914, %v1589
  %v1592 = vmul.f32 %v915, %v1589
  %v1593 = vmul.f32 %v916, %v1589
  %v1594 = vmul.f32 %v917, %v1589
  %v1595 = vmul.f32 %v918, %v1589
  %v1596 = vmul.f32 %v919, %v1589
  %v1597 = vmul.f32 %v920, %v1589
  %v1598 = vmul.f32 %v921, %v1589
  %v1599 = vmul.f32 %v922, %v1589
  %v1600 = vmul.f32 %v923, %v1589
  %v1601 = vmul.f32 %v924, %v1589
  %v1602 = vmul.f32 %v925, %v1589
  %v1603 = vmul.f32 %v926, %v1589
  %v1604 = vmul.f32 %v927, %v1589
  %v1605 = vmul.f32 %v928, %v1589
  %v1606 = vmul.f32 %v929, %v1589
  %v1607 = vmul.f32 %v930, %v1589
  %v1626 = vrot.slane %v1590, 1
  %v1627 = vrot.slane %v1591, 1
  %v1628 = vsel %vm1213, %v1626, %v1627
  %v1629 = vrot.slane %v1592, 1
  %v1630 = vrot.slane %v1593, 1
  %v1631 = vsel %vm1213, %v1629, %v1630
  %v1632 = vrot.slane %v1594, 1
  %v1633 = vrot.slane %v1595, 1
  %v1634 = vsel %vm1213, %v1632, %v1633
  %v1635 = vrot.slane %v1596, 1
  %v1636 = vrot.slane %v1597, 1
  %v1637 = vsel %vm1213, %v1635, %v1636
  %v1638 = vrot.slane %v1598, 1
  %v1639 = vrot.slane %v1599, 1
  %v1640 = vsel %vm1213, %v1638, %v1639
  %v1641 = vrot.slane %v1600, 1
  %v1642 = vrot.slane %v1601, 1
  %v1643 = vsel %vm1213, %v1641, %v1642
  %v1644 = vrot.slane %v1602, 1
  %v1645 = vrot.slane %v1603, 1
  %v1646 = vsel %vm1213, %v1644, %v1645
  %v1647 = vrot.slane %v1604, 1
  %v1648 = vrot.slane %v1605, 1
  %v1649 = vsel %vm1213, %v1647, %v1648
  %v1650 = vrot.slane %v1606, 1
  %v1651 = vrot.slane %v1607, 1
  %v1652 = vsel %vm1213, %v1650, %v1651
  %v1671 = vadd.f32 %v1568, %v1628
  %v1672 = vadd.f32 %v1569, %v1627
  %v1673 = vadd.f32 %v1570, %v1631
  %v1674 = vadd.f32 %v1571, %v1630
  %v1675 = vadd.f32 %v1572, %v1634
  %v1676 = vadd.f32 %v1573, %v1633
  %v1677 = vadd.f32 %v1574, %v1637
  %v1678 = vadd.f32 %v1575, %v1636
  %v1679 = vadd.f32 %v1576, %v1640
  %v1680 = vadd.f32 %v1577, %v1639
  %v1681 = vadd.f32 %v1578, %v1643
  %v1682 = vadd.f32 %v1579, %v1642
  %v1683 = vadd.f32 %v1580, %v1646
  %v1684 = vadd.f32 %v1581, %v1645
  %v1685 = vadd.f32 %v1582, %v1649
  %v1686 = vadd.f32 %v1583, %v1648
  %v1687 = vadd.f32 %v1584, %v1652
  %v1688 = vadd.f32 %v1585, %v1651
  %v1689 = vlaneseq
  %v1690 = vshrl.u32 %v1689, 7
  %v1691 = vsub.s32 1, %v1690
  %v1692 = vrot.slane %v204, %v1691
  %v1693 = vmul.f32 %v915, %v1692
  %v1694 = vmul.f32 %v916, %v1692
  %v1695 = vmul.f32 %v917, %v1692
  %v1696 = vmul.f32 %v918, %v1692
  %v1697 = vmul.f32 %v919, %v1692
  %v1698 = vmul.f32 %v920, %v1692
  %v1699 = vmul.f32 %v921, %v1692
  %v1700 = vmul.f32 %v922, %v1692
  %v1701 = vmul.f32 %v923, %v1692
  %v1702 = vmul.f32 %v924, %v1692
  %v1703 = vmul.f32 %v925, %v1692
  %v1704 = vmul.f32 %v926, %v1692
  %v1705 = vmul.f32 %v927, %v1692
  %v1706 = vmul.f32 %v928, %v1692
  %v1707 = vmul.f32 %v929, %v1692
  %v1708 = vmul.f32 %v930, %v1692
  %v1709 = vmul.f32 %v931, %v1692
  %v1710 = vmul.f32 %v932, %v1692
  %v1729 = vrot.slane %v1693, 1
  %v1730 = vrot.slane %v1694, 1
  %v1731 = vsel %vm1213, %v1729, %v1730
  %v1732 = vrot.slane %v1695, 1
  %v1733 = vrot.slane %v1696, 1
  %v1734 = vsel %vm1213, %v1732, %v1733
  %v1735 = vrot.slane %v1697, 1
  %v1736 = vrot.slane %v1698, 1
  %v1737 = vsel %vm1213, %v1735, %v1736
  %v1738 = vrot.slane %v1699, 1
  %v1739 = vrot.slane %v1700, 1
  %v1740 = vsel %vm1213, %v1738, %v1739
  %v1741 = vrot.slane %v1701, 1
  %v1742 = vrot.slane %v1702, 1
  %v1743 = vsel %vm1213, %v1741, %v1742
  %v1744 = vrot.slane %v1703, 1
  %v1745 = vrot.slane %v1704, 1
  %v1746 = vsel %vm1213, %v1744, %v1745
  %v1747 = vrot.slane %v1705, 1
  %v1748 = vrot.slane %v1706, 1
  %v1749 = vsel %vm1213, %v1747, %v1748
  %v1750 = vrot.slane %v1707, 1
  %v1751 = vrot.slane %v1708, 1
  %v1752 = vsel %vm1213, %v1750, %v1751
  %v1753 = vrot.slane %v1709, 1
  %v1754 = vrot.slane %v1710, 1
  %v1755 = vsel %vm1213, %v1753, %v1754
  %v1774 = vadd.f32 %v1671, %v1731
  %v1775 = vadd.f32 %v1672, %v1730
  %v1776 = vadd.f32 %v1673, %v1734
  %v1777 = vadd.f32 %v1674, %v1733
  %v1778 = vadd.f32 %v1675, %v1737
  %v1779 = vadd.f32 %v1676, %v1736
  %v1780 = vadd.f32 %v1677, %v1740
  %v1781 = vadd.f32 %v1678, %v1739
  %v1782 = vadd.f32 %v1679, %v1743
  %v1783 = vadd.f32 %v1680, %v1742
  %v1784 = vadd.f32 %v1681, %v1746
  %v1785 = vadd.f32 %v1682, %v1745
  %v1786 = vadd.f32 %v1683, %v1749
  %v1787 = vadd.f32 %v1684, %v1748
  %v1788 = vadd.f32 %v1685, %v1752
  %v1789 = vadd.f32 %v1686, %v1751
  %v1790 = vadd.f32 %v1687, %v1755
  %v1791 = vadd.f32 %v1688, %v1754
  %v1792 = vlaneseq
  %v1793 = vshrl.u32 %v1792, 7
  %v1794 = vsub.s32 2, %v1793
  %v1795 = vrot.slane %v199, %v1794
  %v1796 = vmul.f32 %v905, %v1795
  %v1797 = vmul.f32 %v906, %v1795
  %v1798 = vmul.f32 %v907, %v1795
  %v1799 = vmul.f32 %v908, %v1795
  %v1800 = vmul.f32 %v909, %v1795
  %v1801 = vmul.f32 %v910, %v1795
  %v1802 = vmul.f32 %v911, %v1795
  %v1803 = vmul.f32 %v912, %v1795
  %v1804 = vmul.f32 %v913, %v1795
  %v1805 = vmul.f32 %v914, %v1795
  %v1806 = vmul.f32 %v915, %v1795
  %v1807 = vmul.f32 %v916, %v1795
  %v1808 = vmul.f32 %v917, %v1795
  %v1809 = vmul.f32 %v918, %v1795
  %v1810 = vmul.f32 %v919, %v1795
  %v1811 = vmul.f32 %v920, %v1795
  %v1812 = vmul.f32 %v921, %v1795
  %v1813 = vmul.f32 %v922, %v1795
  %vm1832 = vcmask 1045504
  %v1833 = vrot.slane %v1796, 2
  %v1834 = vrot.slane %v1797, 2
  %v1835 = vsel %vm1832, %v1833, %v1834
  %v1836 = vrot.slane %v1798, 2
  %v1837 = vrot.slane %v1799, 2
  %v1838 = vsel %vm1832, %v1836, %v1837
  %v1839 = vrot.slane %v1800, 2
  %v1840 = vrot.slane %v1801, 2
  %v1841 = vsel %vm1832, %v1839, %v1840
  %v1842 = vrot.slane %v1802, 2
  %v1843 = vrot.slane %v1803, 2
  %v1844 = vsel %vm1832, %v1842, %v1843
  %v1845 = vrot.slane %v1804, 2
  %v1846 = vrot.slane %v1805, 2
  %v1847 = vsel %vm1832, %v1845, %v1846
  %v1848 = vrot.slane %v1806, 2
  %v1849 = vrot.slane %v1807, 2
  %v1850 = vsel %vm1832, %v1848, %v1849
  %v1851 = vrot.slane %v1808, 2
  %v1852 = vrot.slane %v1809, 2
  %v1853 = vsel %vm1832, %v1851, %v1852
  %v1854 = vrot.slane %v1810, 2
  %v1855 = vrot.slane %v1811, 2
  %v1856 = vsel %vm1832, %v1854, %v1855
  %v1857 = vrot.slane %v1812, 2
  %v1858 = vrot.slane %v1813, 2
  %v1859 = vsel %vm1832, %v1857, %v1858
  %v1878 = vadd.f32 %v1774, %v1835
  %v1879 = vadd.f32 %v1775, %v1834
  %v1880 = vadd.f32 %v1776, %v1838
  %v1881 = vadd.f32 %v1777, %v1837
  %v1882 = vadd.f32 %v1778, %v1841
  %v1883 = vadd.f32 %v1779, %v1840
  %v1884 = vadd.f32 %v1780, %v1844
  %v1885 = vadd.f32 %v1781, %v1843
  %v1886 = vadd.f32 %v1782, %v1847
  %v1887 = vadd.f32 %v1783, %v1846
  %v1888 = vadd.f32 %v1784, %v1850
  %v1889 = vadd.f32 %v1785, %v1849
  %v1890 = vadd.f32 %v1786, %v1853
  %v1891 = vadd.f32 %v1787, %v1852
  %v1892 = vadd.f32 %v1788, %v1856
  %v1893 = vadd.f32 %v1789, %v1855
  %v1894 = vadd.f32 %v1790, %v1859
  %v1895 = vadd.f32 %v1791, %v1858
  %v1896 = vlaneseq
  %v1897 = vshrl.u32 %v1896, 7
  %v1898 = vsub.s32 2, %v1897
  %v1899 = vrot.slane %v200, %v1898
  %v1900 = vmul.f32 %v907, %v1899
  %v1901 = vmul.f32 %v908, %v1899
  %v1902 = vmul.f32 %v909, %v1899
  %v1903 = vmul.f32 %v910, %v1899
  %v1904 = vmul.f32 %v911, %v1899
  %v1905 = vmul.f32 %v912, %v1899
  %v1906 = vmul.f32 %v913, %v1899
  %v1907 = vmul.f32 %v914, %v1899
  %v1908 = vmul.f32 %v915, %v1899
  %v1909 = vmul.f32 %v916, %v1899
  %v1910 = vmul.f32 %v917, %v1899
  %v1911 = vmul.f32 %v918, %v1899
  %v1912 = vmul.f32 %v919, %v1899
  %v1913 = vmul.f32 %v920, %v1899
  %v1914 = vmul.f32 %v921, %v1899
  %v1915 = vmul.f32 %v922, %v1899
  %v1916 = vmul.f32 %v923, %v1899
  %v1917 = vmul.f32 %v924, %v1899
  %v1936 = vrot.slane %v1900, 2
  %v1937 = vrot.slane %v1901, 2
  %v1938 = vsel %vm1832, %v1936, %v1937
  %v1939 = vrot.slane %v1902, 2
  %v1940 = vrot.slane %v1903, 2
  %v1941 = vsel %vm1832, %v1939, %v1940
  %v1942 = vrot.slane %v1904, 2
  %v1943 = vrot.slane %v1905, 2
  %v1944 = vsel %vm1832, %v1942, %v1943
  %v1945 = vrot.slane %v1906, 2
  %v1946 = vrot.slane %v1907, 2
  %v1947 = vsel %vm1832, %v1945, %v1946
  %v1948 = vrot.slane %v1908, 2
  %v1949 = vrot.slane %v1909, 2
  %v1950 = vsel %vm1832, %v1948, %v1949
  %v1951 = vrot.slane %v1910, 2
  %v1952 = vrot.slane %v1911, 2
  %v1953 = vsel %vm1832, %v1951, %v1952
  %v1954 = vrot.slane %v1912, 2
  %v1955 = vrot.slane %v1913, 2
  %v1956 = vsel %vm1832, %v1954, %v1955
  %v1957 = vrot.slane %v1914, 2
  %v1958 = vrot.slane %v1915, 2
  %v1959 = vsel %vm1832, %v1957, %v1958
  %v1960 = vrot.slane %v1916, 2
  %v1961 = vrot.slane %v1917, 2
  %v1962 = vsel %vm1832, %v1960, %v1961
  %v1981 = vadd.f32 %v1878, %v1938
  %v1982 = vadd.f32 %v1879, %v1937
  %v1983 = vadd.f32 %v1880, %v1941
  %v1984 = vadd.f32 %v1881, %v1940
  %v1985 = vadd.f32 %v1882, %v1944
  %v1986 = vadd.f32 %v1883, %v1943
  %v1987 = vadd.f32 %v1884, %v1947
  %v1988 = vadd.f32 %v1885, %v1946
  %v1989 = vadd.f32 %v1886, %v1950
  %v1990 = vadd.f32 %v1887, %v1949
  %v1991 = vadd.f32 %v1888, %v1953
  %v1992 = vadd.f32 %v1889, %v1952
  %v1993 = vadd.f32 %v1890, %v1956
  %v1994 = vadd.f32 %v1891, %v1955
  %v1995 = vadd.f32 %v1892, %v1959
  %v1996 = vadd.f32 %v1893, %v1958
  %v1997 = vadd.f32 %v1894, %v1962
  %v1998 = vadd.f32 %v1895, %v1961
  %v1999 = vlaneseq
  %v2000 = vshrl.u32 %v1999, 7
  %v2001 = vsub.s32 2, %v2000
  %v2002 = vrot.slane %v201, %v2001
  %v2003 = vmul.f32 %v909, %v2002
  %v2004 = vmul.f32 %v910, %v2002
  %v2005 = vmul.f32 %v911, %v2002
  %v2006 = vmul.f32 %v912, %v2002
  %v2007 = vmul.f32 %v913, %v2002
  %v2008 = vmul.f32 %v914, %v2002
  %v2009 = vmul.f32 %v915, %v2002
  %v2010 = vmul.f32 %v916, %v2002
  %v2011 = vmul.f32 %v917, %v2002
  %v2012 = vmul.f32 %v918, %v2002
  %v2013 = vmul.f32 %v919, %v2002
  %v2014 = vmul.f32 %v920, %v2002
  %v2015 = vmul.f32 %v921, %v2002
  %v2016 = vmul.f32 %v922, %v2002
  %v2017 = vmul.f32 %v923, %v2002
  %v2018 = vmul.f32 %v924, %v2002
  %v2019 = vmul.f32 %v925, %v2002
  %v2020 = vmul.f32 %v926, %v2002
  %v2039 = vrot.slane %v2003, 2
  %v2040 = vrot.slane %v2004, 2
  %v2041 = vsel %vm1832, %v2039, %v2040
  %v2042 = vrot.slane %v2005, 2
  %v2043 = vrot.slane %v2006, 2
  %v2044 = vsel %vm1832, %v2042, %v2043
  %v2045 = vrot.slane %v2007, 2
  %v2046 = vrot.slane %v2008, 2
  %v2047 = vsel %vm1832, %v2045, %v2046
  %v2048 = vrot.slane %v2009, 2
  %v2049 = vrot.slane %v2010, 2
  %v2050 = vsel %vm1832, %v2048, %v2049
  %v2051 = vrot.slane %v2011, 2
  %v2052 = vrot.slane %v2012, 2
  %v2053 = vsel %vm1832, %v2051, %v2052
  %v2054 = vrot.slane %v2013, 2
  %v2055 = vrot.slane %v2014, 2
  %v2056 = vsel %vm1832, %v2054, %v2055
  %v2057 = vrot.slane %v2015, 2
  %v2058 = vrot.slane %v2016, 2
  %v2059 = vsel %vm1832, %v2057, %v2058
  %v2060 = vrot.slane %v2017, 2
  %v2061 = vrot.slane %v2018, 2
  %v2062 = vsel %vm1832, %v2060, %v2061
  %v2063 = vrot.slane %v2019, 2
  %v2064 = vrot.slane %v2020, 2
  %v2065 = vsel %vm1832, %v2063, %v2064
  %v2084 = vadd.f32 %v1981, %v2041
  %v2085 = vadd.f32 %v1982, %v2040
  %v2086 = vadd.f32 %v1983, %v2044
  %v2087 = vadd.f32 %v1984, %v2043
  %v2088 = vadd.f32 %v1985, %v2047
  %v2089 = vadd.f32 %v1986, %v2046
  %v2090 = vadd.f32 %v1987, %v2050
  %v2091 = vadd.f32 %v1988, %v2049
  %v2092 = vadd.f32 %v1989, %v2053
  %v2093 = vadd.f32 %v1990, %v2052
  %v2094 = vadd.f32 %v1991, %v2056
  %v2095 = vadd.f32 %v1992, %v2055
  %v2096 = vadd.f32 %v1993, %v2059
  %v2097 = vadd.f32 %v1994, %v2058
  %v2098 = vadd.f32 %v1995, %v2062
  %v2099 = vadd.f32 %v1996, %v2061
  %v2100 = vadd.f32 %v1997, %v2065
  %v2101 = vadd.f32 %v1998, %v2064
  %v2102 = vlaneseq
  %v2103 = vshrl.u32 %v2102, 7
  %v2104 = vsub.s32 2, %v2103
  %v2105 = vrot.slane %v202, %v2104
  %v2106 = vmul.f32 %v911, %v2105
  %v2107 = vmul.f32 %v912, %v2105
  %v2108 = vmul.f32 %v913, %v2105
  %v2109 = vmul.f32 %v914, %v2105
  %v2110 = vmul.f32 %v915, %v2105
  %v2111 = vmul.f32 %v916, %v2105
  %v2112 = vmul.f32 %v917, %v2105
  %v2113 = vmul.f32 %v918, %v2105
  %v2114 = vmul.f32 %v919, %v2105
  %v2115 = vmul.f32 %v920, %v2105
  %v2116 = vmul.f32 %v921, %v2105
  %v2117 = vmul.f32 %v922, %v2105
  %v2118 = vmul.f32 %v923, %v2105
  %v2119 = vmul.f32 %v924, %v2105
  %v2120 = vmul.f32 %v925, %v2105
  %v2121 = vmul.f32 %v926, %v2105
  %v2122 = vmul.f32 %v927, %v2105
  %v2123 = vmul.f32 %v928, %v2105
  %v2142 = vrot.slane %v2106, 2
  %v2143 = vrot.slane %v2107, 2
  %v2144 = vsel %vm1832, %v2142, %v2143
  %v2145 = vrot.slane %v2108, 2
  %v2146 = vrot.slane %v2109, 2
  %v2147 = vsel %vm1832, %v2145, %v2146
  %v2148 = vrot.slane %v2110, 2
  %v2149 = vrot.slane %v2111, 2
  %v2150 = vsel %vm1832, %v2148, %v2149
  %v2151 = vrot.slane %v2112, 2
  %v2152 = vrot.slane %v2113, 2
  %v2153 = vsel %vm1832, %v2151, %v2152
  %v2154 = vrot.slane %v2114, 2
  %v2155 = vrot.slane %v2115, 2
  %v2156 = vsel %vm1832, %v2154, %v2155
  %v2157 = vrot.slane %v2116, 2
  %v2158 = vrot.slane %v2117, 2
  %v2159 = vsel %vm1832, %v2157, %v2158
  %v2160 = vrot.slane %v2118, 2
  %v2161 = vrot.slane %v2119, 2
  %v2162 = vsel %vm1832, %v2160, %v2161
  %v2163 = vrot.slane %v2120, 2
  %v2164 = vrot.slane %v2121, 2
  %v2165 = vsel %vm1832, %v2163, %v2164
  %v2166 = vrot.slane %v2122, 2
  %v2167 = vrot.slane %v2123, 2
  %v2168 = vsel %vm1832, %v2166, %v2167
  %v2187 = vadd.f32 %v2084, %v2144
  %v2188 = vadd.f32 %v2085, %v2143
  %v2189 = vadd.f32 %v2086, %v2147
  %v2190 = vadd.f32 %v2087, %v2146
  %v2191 = vadd.f32 %v2088, %v2150
  %v2192 = vadd.f32 %v2089, %v2149
  %v2193 = vadd.f32 %v2090, %v2153
  %v2194 = vadd.f32 %v2091, %v2152
  %v2195 = vadd.f32 %v2092, %v2156
  %v2196 = vadd.f32 %v2093, %v2155
  %v2197 = vadd.f32 %v2094, %v2159
  %v2198 = vadd.f32 %v2095, %v2158
  %v2199 = vadd.f32 %v2096, %v2162
  %v2200 = vadd.f32 %v2097, %v2161
  %v2201 = vadd.f32 %v2098, %v2165
  %v2202 = vadd.f32 %v2099, %v2164
  %v2203 = vadd.f32 %v2100, %v2168
  %v2204 = vadd.f32 %v2101, %v2167
  %v2205 = vlaneseq
  %v2206 = vshrl.u32 %v2205, 7
  %v2207 = vsub.s32 2, %v2206
  %v2208 = vrot.slane %v203, %v2207
  %v2209 = vmul.f32 %v913, %v2208
  %v2210 = vmul.f32 %v914, %v2208
  %v2211 = vmul.f32 %v915, %v2208
  %v2212 = vmul.f32 %v916, %v2208
  %v2213 = vmul.f32 %v917, %v2208
  %v2214 = vmul.f32 %v918, %v2208
  %v2215 = vmul.f32 %v919, %v2208
  %v2216 = vmul.f32 %v920, %v2208
  %v2217 = vmul.f32 %v921, %v2208
  %v2218 = vmul.f32 %v922, %v2208
  %v2219 = vmul.f32 %v923, %v2208
  %v2220 = vmul.f32 %v924, %v2208
  %v2221 = vmul.f32 %v925, %v2208
  %v2222 = vmul.f32 %v926, %v2208
  %v2223 = vmul.f32 %v927, %v2208
  %v2224 = vmul.f32 %v928, %v2208
  %v2225 = vmul.f32 %v929, %v2208
  %v2226 = vmul.f32 %v930, %v2208
  %v2245 = vrot.slane %v2209, 2
  %v2246 = vrot.slane %v2210, 2
  %v2247 = vsel %vm1832, %v2245, %v2246
  %v2248 = vrot.slane %v2211, 2
  %v2249 = vrot.slane %v2212, 2
  %v2250 = vsel %vm1832, %v2248, %v2249
  %v2251 = vrot.slane %v2213, 2
  %v2252 = vrot.slane %v2214, 2
  %v2253 = vsel %vm1832, %v2251, %v2252
  %v2254 = vrot.slane %v2215, 2
  %v2255 = vrot.slane %v2216, 2
  %v2256 = vsel %vm1832, %v2254, %v2255
  %v2257 = vrot.slane %v2217, 2
  %v2258 = vrot.slane %v2218, 2
  %v2259 = vsel %vm1832, %v2257, %v2258
  %v2260 = vrot.slane %v2219, 2
  %v2261 = vrot.slane %v2220, 2
  %v2262 = vsel %vm1832, %v2260, %v2261
  %v2263 = vrot.slane %v2221, 2
  %v2264 = vrot.slane %v2222, 2
  %v2265 = vsel %vm1832, %v2263, %v2264
  %v2266 = vrot.slane %v2223, 2
  %v2267 = vrot.slane %v2224, 2
  %v2268 = vsel %vm1832, %v2266, %v2267
  %v2269 = vrot.slane %v2225, 2
  %v2270 = vrot.slane %v2226, 2
  %v2271 = vsel %vm1832, %v2269, %v2270
  %v2290 = vadd.f32 %v2187, %v2247
  %v2291 = vadd.f32 %v2188, %v2246
  %v2292 = vadd.f32 %v2189, %v2250
  %v2293 = vadd.f32 %v2190, %v2249
  %v2294 = vadd.f32 %v2191, %v2253
  %v2295 = vadd.f32 %v2192, %v2252
  %v2296 = vadd.f32 %v2193, %v2256
  %v2297 = vadd.f32 %v2194, %v2255
  %v2298 = vadd.f32 %v2195, %v2259
  %v2299 = vadd.f32 %v2196, %v2258
  %v2300 = vadd.f32 %v2197, %v2262
  %v2301 = vadd.f32 %v2198, %v2261
  %v2302 = vadd.f32 %v2199, %v2265
  %v2303 = vadd.f32 %v2200, %v2264
  %v2304 = vadd.f32 %v2201, %v2268
  %v2305 = vadd.f32 %v2202, %v2267
  %v2306 = vadd.f32 %v2203, %v2271
  %v2307 = vadd.f32 %v2204, %v2270
  %v2308 = vlaneseq
  %v2309 = vshrl.u32 %v2308, 7
  %v2310 = vsub.s32 2, %v2309
  %v2311 = vrot.slane %v204, %v2310
  %v2312 = vmul.f32 %v915, %v2311
  %v2313 = vmul.f32 %v916, %v2311
  %v2314 = vmul.f32 %v917, %v2311
  %v2315 = vmul.f32 %v918, %v2311
  %v2316 = vmul.f32 %v919, %v2311
  %v2317 = vmul.f32 %v920, %v2311
  %v2318 = vmul.f32 %v921, %v2311
  %v2319 = vmul.f32 %v922, %v2311
  %v2320 = vmul.f32 %v923, %v2311
  %v2321 = vmul.f32 %v924, %v2311
  %v2322 = vmul.f32 %v925, %v2311
  %v2323 = vmul.f32 %v926, %v2311
  %v2324 = vmul.f32 %v927, %v2311
  %v2325 = vmul.f32 %v928, %v2311
  %v2326 = vmul.f32 %v929, %v2311
  %v2327 = vmul.f32 %v930, %v2311
  %v2328 = vmul.f32 %v931, %v2311
  %v2329 = vmul.f32 %v932, %v2311
  %v2348 = vrot.slane %v2312, 2
  %v2349 = vrot.slane %v2313, 2
  %v2350 = vsel %vm1832, %v2348, %v2349
  %v2351 = vrot.slane %v2314, 2
  %v2352 = vrot.slane %v2315, 2
  %v2353 = vsel %vm1832, %v2351, %v2352
  %v2354 = vrot.slane %v2316, 2
  %v2355 = vrot.slane %v2317, 2
  %v2356 = vsel %vm1832, %v2354, %v2355
  %v2357 = vrot.slane %v2318, 2
  %v2358 = vrot.slane %v2319, 2
  %v2359 = vsel %vm1832, %v2357, %v2358
  %v2360 = vrot.slane %v2320, 2
  %v2361 = vrot.slane %v2321, 2
  %v2362 = vsel %vm1832, %v2360, %v2361
  %v2363 = vrot.slane %v2322, 2
  %v2364 = vrot.slane %v2323, 2
  %v2365 = vsel %vm1832, %v2363, %v2364
  %v2366 = vrot.slane %v2324, 2
  %v2367 = vrot.slane %v2325, 2
  %v2368 = vsel %vm1832, %v2366, %v2367
  %v2369 = vrot.slane %v2326, 2
  %v2370 = vrot.slane %v2327, 2
  %v2371 = vsel %vm1832, %v2369, %v2370
  %v2372 = vrot.slane %v2328, 2
  %v2373 = vrot.slane %v2329, 2
  %v2374 = vsel %vm1832, %v2372, %v2373
  %v2393 = vadd.f32 %v2290, %v2350
  %v2394 = vadd.f32 %v2291, %v2349
  %v2395 = vadd.f32 %v2292, %v2353
  %v2396 = vadd.f32 %v2293, %v2352
  %v2397 = vadd.f32 %v2294, %v2356
  %v2398 = vadd.f32 %v2295, %v2355
  %v2399 = vadd.f32 %v2296, %v2359
  %v2400 = vadd.f32 %v2297, %v2358
  %v2401 = vadd.f32 %v2298, %v2362
  %v2402 = vadd.f32 %v2299, %v2361
  %v2403 = vadd.f32 %v2300, %v2365
  %v2404 = vadd.f32 %v2301, %v2364
  %v2405 = vadd.f32 %v2302, %v2368
  %v2406 = vadd.f32 %v2303, %v2367
  %v2407 = vadd.f32 %v2304, %v2371
  %v2408 = vadd.f32 %v2305, %v2370
  %v2409 = vadd.f32 %v2306, %v2374
  %v2410 = vadd.f32 %v2307, %v2373
  %v2411 = vlaneseq
  %v2412 = vshrl.u32 %v2411, 7
  %v2413 = vsub.s32 3, %v2412
  %v2414 = vrot.slane %v199, %v2413
  %v2415 = vmul.f32 %v905, %v2414
  %v2416 = vmul.f32 %v906, %v2414
  %v2417 = vmul.f32 %v907, %v2414
  %v2418 = vmul.f32 %v908, %v2414
  %v2419 = vmul.f32 %v909, %v2414
  %v2420 = vmul.f32 %v910, %v2414
  %v2421 = vmul.f32 %v911, %v2414
  %v2422 = vmul.f32 %v912, %v2414
  %v2423 = vmul.f32 %v913, %v2414
  %v2424 = vmul.f32 %v914, %v2414
  %v2425 = vmul.f32 %v915, %v2414
  %v2426 = vmul.f32 %v916, %v2414
  %v2427 = vmul.f32 %v917, %v2414
  %v2428 = vmul.f32 %v918, %v2414
  %v2429 = vmul.f32 %v919, %v2414
  %v2430 = vmul.f32 %v920, %v2414
  %v2431 = vmul.f32 %v921, %v2414
  %v2432 = vmul.f32 %v922, %v2414
  %vm2451 = vcmask 1044480
  %v2452 = vrot.slane %v2415, 3
  %v2453 = vrot.slane %v2416, 3
  %v2454 = vsel %vm2451, %v2452, %v2453
  %v2455 = vrot.slane %v2417, 3
  %v2456 = vrot.slane %v2418, 3
  %v2457 = vsel %vm2451, %v2455, %v2456
  %v2458 = vrot.slane %v2419, 3
  %v2459 = vrot.slane %v2420, 3
  %v2460 = vsel %vm2451, %v2458, %v2459
  %v2461 = vrot.slane %v2421, 3
  %v2462 = vrot.slane %v2422, 3
  %v2463 = vsel %vm2451, %v2461, %v2462
  %v2464 = vrot.slane %v2423, 3
  %v2465 = vrot.slane %v2424, 3
  %v2466 = vsel %vm2451, %v2464, %v2465
  %v2467 = vrot.slane %v2425, 3
  %v2468 = vrot.slane %v2426, 3
  %v2469 = vsel %vm2451, %v2467, %v2468
  %v2470 = vrot.slane %v2427, 3
  %v2471 = vrot.slane %v2428, 3
  %v2472 = vsel %vm2451, %v2470, %v2471
  %v2473 = vrot.slane %v2429, 3
  %v2474 = vrot.slane %v2430, 3
  %v2475 = vsel %vm2451, %v2473, %v2474
  %v2476 = vrot.slane %v2431, 3
  %v2477 = vrot.slane %v2432, 3
  %v2478 = vsel %vm2451, %v2476, %v2477
  %v2497 = vadd.f32 %v2393, %v2454
  %v2498 = vadd.f32 %v2394, %v2453
  %v2499 = vadd.f32 %v2395, %v2457
  %v2500 = vadd.f32 %v2396, %v2456
  %v2501 = vadd.f32 %v2397, %v2460
  %v2502 = vadd.f32 %v2398, %v2459
  %v2503 = vadd.f32 %v2399, %v2463
  %v2504 = vadd.f32 %v2400, %v2462
  %v2505 = vadd.f32 %v2401, %v2466
  %v2506 = vadd.f32 %v2402, %v2465
  %v2507 = vadd.f32 %v2403, %v2469
  %v2508 = vadd.f32 %v2404, %v2468
  %v2509 = vadd.f32 %v2405, %v2472
  %v2510 = vadd.f32 %v2406, %v2471
  %v2511 = vadd.f32 %v2407, %v2475
  %v2512 = vadd.f32 %v2408, %v2474
  %v2513 = vadd.f32 %v2409, %v2478
  %v2514 = vadd.f32 %v2410, %v2477
  %v2515 = vlaneseq
  %v2516 = vshrl.u32 %v2515, 7
  %v2517 = vsub.s32 3, %v2516
  %v2518 = vrot.slane %v200, %v2517
  %v2519 = vmul.f32 %v907, %v2518
  %v2520 = vmul.f32 %v908, %v2518
  %v2521 = vmul.f32 %v909, %v2518
  %v2522 = vmul.f32 %v910, %v2518
  %v2523 = vmul.f32 %v911, %v2518
  %v2524 = vmul.f32 %v912, %v2518
  %v2525 = vmul.f32 %v913, %v2518
  %v2526 = vmul.f32 %v914, %v2518
  %v2527 = vmul.f32 %v915, %v2518
  %v2528 = vmul.f32 %v916, %v2518
  %v2529 = vmul.f32 %v917, %v2518
  %v2530 = vmul.f32 %v918, %v2518
  %v2531 = vmul.f32 %v919, %v2518
  %v2532 = vmul.f32 %v920, %v2518
  %v2533 = vmul.f32 %v921, %v2518
  %v2534 = vmul.f32 %v922, %v2518
  %v2535 = vmul.f32 %v923, %v2518
  %v2536 = vmul.f32 %v924, %v2518
  %v2555 = vrot.slane %v2519, 3
  %v2556 = vrot.slane %v2520, 3
  %v2557 = vsel %vm2451, %v2555, %v2556
  %v2558 = vrot.slane %v2521, 3
  %v2559 = vrot.slane %v2522, 3
  %v2560 = vsel %vm2451, %v2558, %v2559
  %v2561 = vrot.slane %v2523, 3
  %v2562 = vrot.slane %v2524, 3
  %v2563 = vsel %vm2451, %v2561, %v2562
  %v2564 = vrot.slane %v2525, 3
  %v2565 = vrot.slane %v2526, 3
  %v2566 = vsel %vm2451, %v2564, %v2565
  %v2567 = vrot.slane %v2527, 3
  %v2568 = vrot.slane %v2528, 3
  %v2569 = vsel %vm2451, %v2567, %v2568
  %v2570 = vrot.slane %v2529, 3
  %v2571 = vrot.slane %v2530, 3
  %v2572 = vsel %vm2451, %v2570, %v2571
  %v2573 = vrot.slane %v2531, 3
  %v2574 = vrot.slane %v2532, 3
  %v2575 = vsel %vm2451, %v2573, %v2574
  %v2576 = vrot.slane %v2533, 3
  %v2577 = vrot.slane %v2534, 3
  %v2578 = vsel %vm2451, %v2576, %v2577
  %v2579 = vrot.slane %v2535, 3
  %v2580 = vrot.slane %v2536, 3
  %v2581 = vsel %vm2451, %v2579, %v2580
  %v2600 = vadd.f32 %v2497, %v2557
  %v2601 = vadd.f32 %v2498, %v2556
  %v2602 = vadd.f32 %v2499, %v2560
  %v2603 = vadd.f32 %v2500, %v2559
  %v2604 = vadd.f32 %v2501, %v2563
  %v2605 = vadd.f32 %v2502, %v2562
  %v2606 = vadd.f32 %v2503, %v2566
  %v2607 = vadd.f32 %v2504, %v2565
  %v2608 = vadd.f32 %v2505, %v2569
  %v2609 = vadd.f32 %v2506, %v2568
  %v2610 = vadd.f32 %v2507, %v2572
  %v2611 = vadd.f32 %v2508, %v2571
  %v2612 = vadd.f32 %v2509, %v2575
  %v2613 = vadd.f32 %v2510, %v2574
  %v2614 = vadd.f32 %v2511, %v2578
  %v2615 = vadd.f32 %v2512, %v2577
  %v2616 = vadd.f32 %v2513, %v2581
  %v2617 = vadd.f32 %v2514, %v2580
  %v2618 = vlaneseq
  %v2619 = vshrl.u32 %v2618, 7
  %v2620 = vsub.s32 3, %v2619
  %v2621 = vrot.slane %v201, %v2620
  %v2622 = vmul.f32 %v909, %v2621
  %v2623 = vmul.f32 %v910, %v2621
  %v2624 = vmul.f32 %v911, %v2621
  %v2625 = vmul.f32 %v912, %v2621
  %v2626 = vmul.f32 %v913, %v2621
  %v2627 = vmul.f32 %v914, %v2621
  %v2628 = vmul.f32 %v915, %v2621
  %v2629 = vmul.f32 %v916, %v2621
  %v2630 = vmul.f32 %v917, %v2621
  %v2631 = vmul.f32 %v918, %v2621
  %v2632 = vmul.f32 %v919, %v2621
  %v2633 = vmul.f32 %v920, %v2621
  %v2634 = vmul.f32 %v921, %v2621
  %v2635 = vmul.f32 %v922, %v2621
  %v2636 = vmul.f32 %v923, %v2621
  %v2637 = vmul.f32 %v924, %v2621
  %v2638 = vmul.f32 %v925, %v2621
  %v2639 = vmul.f32 %v926, %v2621
  %v2658 = vrot.slane %v2622, 3
  %v2659 = vrot.slane %v2623, 3
  %v2660 = vsel %vm2451, %v2658, %v2659
  %v2661 = vrot.slane %v2624, 3
  %v2662 = vrot.slane %v2625, 3
  %v2663 = vsel %vm2451, %v2661, %v2662
  %v2664 = vrot.slane %v2626, 3
  %v2665 = vrot.slane %v2627, 3
  %v2666 = vsel %vm2451, %v2664, %v2665
  %v2667 = vrot.slane %v2628, 3
  %v2668 = vrot.slane %v2629, 3
  %v2669 = vsel %vm2451, %v2667, %v2668
  %v2670 = vrot.slane %v2630, 3
  %v2671 = vrot.slane %v2631, 3
  %v2672 = vsel %vm2451, %v2670, %v2671
  %v2673 = vrot.slane %v2632, 3
  %v2674 = vrot.slane %v2633, 3
  %v2675 = vsel %vm2451, %v2673, %v2674
  %v2676 = vrot.slane %v2634, 3
  %v2677 = vrot.slane %v2635, 3
  %v2678 = vsel %vm2451, %v2676, %v2677
  %v2679 = vrot.slane %v2636, 3
  %v2680 = vrot.slane %v2637, 3
  %v2681 = vsel %vm2451, %v2679, %v2680
  %v2682 = vrot.slane %v2638, 3
  %v2683 = vrot.slane %v2639, 3
  %v2684 = vsel %vm2451, %v2682, %v2683
  %v2703 = vadd.f32 %v2600, %v2660
  %v2704 = vadd.f32 %v2601, %v2659
  %v2705 = vadd.f32 %v2602, %v2663
  %v2706 = vadd.f32 %v2603, %v2662
  %v2707 = vadd.f32 %v2604, %v2666
  %v2708 = vadd.f32 %v2605, %v2665
  %v2709 = vadd.f32 %v2606, %v2669
  %v2710 = vadd.f32 %v2607, %v2668
  %v2711 = vadd.f32 %v2608, %v2672
  %v2712 = vadd.f32 %v2609, %v2671
  %v2713 = vadd.f32 %v2610, %v2675
  %v2714 = vadd.f32 %v2611, %v2674
  %v2715 = vadd.f32 %v2612, %v2678
  %v2716 = vadd.f32 %v2613, %v2677
  %v2717 = vadd.f32 %v2614, %v2681
  %v2718 = vadd.f32 %v2615, %v2680
  %v2719 = vadd.f32 %v2616, %v2684
  %v2720 = vadd.f32 %v2617, %v2683
  %v2721 = vlaneseq
  %v2722 = vshrl.u32 %v2721, 7
  %v2723 = vsub.s32 3, %v2722
  %v2724 = vrot.slane %v202, %v2723
  %v2725 = vmul.f32 %v911, %v2724
  %v2726 = vmul.f32 %v912, %v2724
  %v2727 = vmul.f32 %v913, %v2724
  %v2728 = vmul.f32 %v914, %v2724
  %v2729 = vmul.f32 %v915, %v2724
  %v2730 = vmul.f32 %v916, %v2724
  %v2731 = vmul.f32 %v917, %v2724
  %v2732 = vmul.f32 %v918, %v2724
  %v2733 = vmul.f32 %v919, %v2724
  %v2734 = vmul.f32 %v920, %v2724
  %v2735 = vmul.f32 %v921, %v2724
  %v2736 = vmul.f32 %v922, %v2724
  %v2737 = vmul.f32 %v923, %v2724
  %v2738 = vmul.f32 %v924, %v2724
  %v2739 = vmul.f32 %v925, %v2724
  %v2740 = vmul.f32 %v926, %v2724
  %v2741 = vmul.f32 %v927, %v2724
  %v2742 = vmul.f32 %v928, %v2724
  %v2761 = vrot.slane %v2725, 3
  %v2762 = vrot.slane %v2726, 3
  %v2763 = vsel %vm2451, %v2761, %v2762
  %v2764 = vrot.slane %v2727, 3
  %v2765 = vrot.slane %v2728, 3
  %v2766 = vsel %vm2451, %v2764, %v2765
  %v2767 = vrot.slane %v2729, 3
  %v2768 = vrot.slane %v2730, 3
  %v2769 = vsel %vm2451, %v2767, %v2768
  %v2770 = vrot.slane %v2731, 3
  %v2771 = vrot.slane %v2732, 3
  %v2772 = vsel %vm2451, %v2770, %v2771
  %v2773 = vrot.slane %v2733, 3
  %v2774 = vrot.slane %v2734, 3
  %v2775 = vsel %vm2451, %v2773, %v2774
  %v2776 = vrot.slane %v2735, 3
  %v2777 = vrot.slane %v2736, 3
  %v2778 = vsel %vm2451, %v2776, %v2777
  %v2779 = vrot.slane %v2737, 3
  %v2780 = vrot.slane %v2738, 3
  %v2781 = vsel %vm2451, %v2779, %v2780
  %v2782 = vrot.slane %v2739, 3
  %v2783 = vrot.slane %v2740, 3
  %v2784 = vsel %vm2451, %v2782, %v2783
  %v2785 = vrot.slane %v2741, 3
  %v2786 = vrot.slane %v2742, 3
  %v2787 = vsel %vm2451, %v2785, %v2786
  %v2806 = vadd.f32 %v2703, %v2763
  %v2807 = vadd.f32 %v2704, %v2762
  %v2808 = vadd.f32 %v2705, %v2766
  %v2809 = vadd.f32 %v2706, %v2765
  %v2810 = vadd.f32 %v2707, %v2769
  %v2811 = vadd.f32 %v2708, %v2768
  %v2812 = vadd.f32 %v2709, %v2772
  %v2813 = vadd.f32 %v2710, %v2771
  %v2814 = vadd.f32 %v2711, %v2775
  %v2815 = vadd.f32 %v2712, %v2774
  %v2816 = vadd.f32 %v2713, %v2778
  %v2817 = vadd.f32 %v2714, %v2777
  %v2818 = vadd.f32 %v2715, %v2781
  %v2819 = vadd.f32 %v2716, %v2780
  %v2820 = vadd.f32 %v2717, %v2784
  %v2821 = vadd.f32 %v2718, %v2783
  %v2822 = vadd.f32 %v2719, %v2787
  %v2823 = vadd.f32 %v2720, %v2786
  %v2824 = vlaneseq
  %v2825 = vshrl.u32 %v2824, 7
  %v2826 = vsub.s32 3, %v2825
  %v2827 = vrot.slane %v203, %v2826
  %v2828 = vmul.f32 %v913, %v2827
  %v2829 = vmul.f32 %v914, %v2827
  %v2830 = vmul.f32 %v915, %v2827
  %v2831 = vmul.f32 %v916, %v2827
  %v2832 = vmul.f32 %v917, %v2827
  %v2833 = vmul.f32 %v918, %v2827
  %v2834 = vmul.f32 %v919, %v2827
  %v2835 = vmul.f32 %v920, %v2827
  %v2836 = vmul.f32 %v921, %v2827
  %v2837 = vmul.f32 %v922, %v2827
  %v2838 = vmul.f32 %v923, %v2827
  %v2839 = vmul.f32 %v924, %v2827
  %v2840 = vmul.f32 %v925, %v2827
  %v2841 = vmul.f32 %v926, %v2827
  %v2842 = vmul.f32 %v927, %v2827
  %v2843 = vmul.f32 %v928, %v2827
  %v2844 = vmul.f32 %v929, %v2827
  %v2845 = vmul.f32 %v930, %v2827
  %v2864 = vrot.slane %v2828, 3
  %v2865 = vrot.slane %v2829, 3
  %v2866 = vsel %vm2451, %v2864, %v2865
  %v2867 = vrot.slane %v2830, 3
  %v2868 = vrot.slane %v2831, 3
  %v2869 = vsel %vm2451, %v2867, %v2868
  %v2870 = vrot.slane %v2832, 3
  %v2871 = vrot.slane %v2833, 3
  %v2872 = vsel %vm2451, %v2870, %v2871
  %v2873 = vrot.slane %v2834, 3
  %v2874 = vrot.slane %v2835, 3
  %v2875 = vsel %vm2451, %v2873, %v2874
  %v2876 = vrot.slane %v2836, 3
  %v2877 = vrot.slane %v2837, 3
  %v2878 = vsel %vm2451, %v2876, %v2877
  %v2879 = vrot.slane %v2838, 3
  %v2880 = vrot.slane %v2839, 3
  %v2881 = vsel %vm2451, %v2879, %v2880
  %v2882 = vrot.slane %v2840, 3
  %v2883 = vrot.slane %v2841, 3
  %v2884 = vsel %vm2451, %v2882, %v2883
  %v2885 = vrot.slane %v2842, 3
  %v2886 = vrot.slane %v2843, 3
  %v2887 = vsel %vm2451, %v2885, %v2886
  %v2888 = vrot.slane %v2844, 3
  %v2889 = vrot.slane %v2845, 3
  %v2890 = vsel %vm2451, %v2888, %v2889
  %v2909 = vadd.f32 %v2806, %v2866
  %v2910 = vadd.f32 %v2807, %v2865
  %v2911 = vadd.f32 %v2808, %v2869
  %v2912 = vadd.f32 %v2809, %v2868
  %v2913 = vadd.f32 %v2810, %v2872
  %v2914 = vadd.f32 %v2811, %v2871
  %v2915 = vadd.f32 %v2812, %v2875
  %v2916 = vadd.f32 %v2813, %v2874
  %v2917 = vadd.f32 %v2814, %v2878
  %v2918 = vadd.f32 %v2815, %v2877
  %v2919 = vadd.f32 %v2816, %v2881
  %v2920 = vadd.f32 %v2817, %v2880
  %v2921 = vadd.f32 %v2818, %v2884
  %v2922 = vadd.f32 %v2819, %v2883
  %v2923 = vadd.f32 %v2820, %v2887
  %v2924 = vadd.f32 %v2821, %v2886
  %v2925 = vadd.f32 %v2822, %v2890
  %v2926 = vadd.f32 %v2823, %v2889
  %v2927 = vlaneseq
  %v2928 = vshrl.u32 %v2927, 7
  %v2929 = vsub.s32 3, %v2928
  %v2930 = vrot.slane %v204, %v2929
  %v2931 = vmul.f32 %v915, %v2930
  %v2932 = vmul.f32 %v916, %v2930
  %v2933 = vmul.f32 %v917, %v2930
  %v2934 = vmul.f32 %v918, %v2930
  %v2935 = vmul.f32 %v919, %v2930
  %v2936 = vmul.f32 %v920, %v2930
  %v2937 = vmul.f32 %v921, %v2930
  %v2938 = vmul.f32 %v922, %v2930
  %v2939 = vmul.f32 %v923, %v2930
  %v2940 = vmul.f32 %v924, %v2930
  %v2941 = vmul.f32 %v925, %v2930
  %v2942 = vmul.f32 %v926, %v2930
  %v2943 = vmul.f32 %v927, %v2930
  %v2944 = vmul.f32 %v928, %v2930
  %v2945 = vmul.f32 %v929, %v2930
  %v2946 = vmul.f32 %v930, %v2930
  %v2947 = vmul.f32 %v931, %v2930
  %v2948 = vmul.f32 %v932, %v2930
  %v2967 = vrot.slane %v2931, 3
  %v2968 = vrot.slane %v2932, 3
  %v2969 = vsel %vm2451, %v2967, %v2968
  %v2970 = vrot.slane %v2933, 3
  %v2971 = vrot.slane %v2934, 3
  %v2972 = vsel %vm2451, %v2970, %v2971
  %v2973 = vrot.slane %v2935, 3
  %v2974 = vrot.slane %v2936, 3
  %v2975 = vsel %vm2451, %v2973, %v2974
  %v2976 = vrot.slane %v2937, 3
  %v2977 = vrot.slane %v2938, 3
  %v2978 = vsel %vm2451, %v2976, %v2977
  %v2979 = vrot.slane %v2939, 3
  %v2980 = vrot.slane %v2940, 3
  %v2981 = vsel %vm2451, %v2979, %v2980
  %v2982 = vrot.slane %v2941, 3
  %v2983 = vrot.slane %v2942, 3
  %v2984 = vsel %vm2451, %v2982, %v2983
  %v2985 = vrot.slane %v2943, 3
  %v2986 = vrot.slane %v2944, 3
  %v2987 = vsel %vm2451, %v2985, %v2986
  %v2988 = vrot.slane %v2945, 3
  %v2989 = vrot.slane %v2946, 3
  %v2990 = vsel %vm2451, %v2988, %v2989
  %v2991 = vrot.slane %v2947, 3
  %v2992 = vrot.slane %v2948, 3
  %v2993 = vsel %vm2451, %v2991, %v2992
  %v3012 = vadd.f32 %v2909, %v2969
  %v3013 = vadd.f32 %v2910, %v2968
  %v3014 = vadd.f32 %v2911, %v2972
  %v3015 = vadd.f32 %v2912, %v2971
  %v3016 = vadd.f32 %v2913, %v2975
  %v3017 = vadd.f32 %v2914, %v2974
  %v3018 = vadd.f32 %v2915, %v2978
  %v3019 = vadd.f32 %v2916, %v2977
  %v3020 = vadd.f32 %v2917, %v2981
  %v3021 = vadd.f32 %v2918, %v2980
  %v3022 = vadd.f32 %v2919, %v2984
  %v3023 = vadd.f32 %v2920, %v2983
  %v3024 = vadd.f32 %v2921, %v2987
  %v3025 = vadd.f32 %v2922, %v2986
  %v3026 = vadd.f32 %v2923, %v2990
  %v3027 = vadd.f32 %v2924, %v2989
  %v3028 = vadd.f32 %v2925, %v2993
  %v3029 = vadd.f32 %v2926, %v2992
  %v3030 = vlaneseq
  %v3031 = vshrl.u32 %v3030, 7
  %v3032 = vsub.s32 4, %v3031
  %v3033 = vrot.slane %v199, %v3032
  %v3034 = vmul.f32 %v905, %v3033
  %v3035 = vmul.f32 %v906, %v3033
  %v3036 = vmul.f32 %v907, %v3033
  %v3037 = vmul.f32 %v908, %v3033
  %v3038 = vmul.f32 %v909, %v3033
  %v3039 = vmul.f32 %v910, %v3033
  %v3040 = vmul.f32 %v911, %v3033
  %v3041 = vmul.f32 %v912, %v3033
  %v3042 = vmul.f32 %v913, %v3033
  %v3043 = vmul.f32 %v914, %v3033
  %v3044 = vmul.f32 %v915, %v3033
  %v3045 = vmul.f32 %v916, %v3033
  %v3046 = vmul.f32 %v917, %v3033
  %v3047 = vmul.f32 %v918, %v3033
  %v3048 = vmul.f32 %v919, %v3033
  %v3049 = vmul.f32 %v920, %v3033
  %v3050 = vmul.f32 %v921, %v3033
  %v3051 = vmul.f32 %v922, %v3033
  %vm3070 = vcmask 1043456
  %v3071 = vrot.slane %v3034, 4
  %v3072 = vrot.slane %v3035, 4
  %v3073 = vsel %vm3070, %v3071, %v3072
  %v3074 = vrot.slane %v3036, 4
  %v3075 = vrot.slane %v3037, 4
  %v3076 = vsel %vm3070, %v3074, %v3075
  %v3077 = vrot.slane %v3038, 4
  %v3078 = vrot.slane %v3039, 4
  %v3079 = vsel %vm3070, %v3077, %v3078
  %v3080 = vrot.slane %v3040, 4
  %v3081 = vrot.slane %v3041, 4
  %v3082 = vsel %vm3070, %v3080, %v3081
  %v3083 = vrot.slane %v3042, 4
  %v3084 = vrot.slane %v3043, 4
  %v3085 = vsel %vm3070, %v3083, %v3084
  %v3086 = vrot.slane %v3044, 4
  %v3087 = vrot.slane %v3045, 4
  %v3088 = vsel %vm3070, %v3086, %v3087
  %v3089 = vrot.slane %v3046, 4
  %v3090 = vrot.slane %v3047, 4
  %v3091 = vsel %vm3070, %v3089, %v3090
  %v3092 = vrot.slane %v3048, 4
  %v3093 = vrot.slane %v3049, 4
  %v3094 = vsel %vm3070, %v3092, %v3093
  %v3095 = vrot.slane %v3050, 4
  %v3096 = vrot.slane %v3051, 4
  %v3097 = vsel %vm3070, %v3095, %v3096
  %v3116 = vadd.f32 %v3012, %v3073
  %v3117 = vadd.f32 %v3013, %v3072
  %v3118 = vadd.f32 %v3014, %v3076
  %v3119 = vadd.f32 %v3015, %v3075
  %v3120 = vadd.f32 %v3016, %v3079
  %v3121 = vadd.f32 %v3017, %v3078
  %v3122 = vadd.f32 %v3018, %v3082
  %v3123 = vadd.f32 %v3019, %v3081
  %v3124 = vadd.f32 %v3020, %v3085
  %v3125 = vadd.f32 %v3021, %v3084
  %v3126 = vadd.f32 %v3022, %v3088
  %v3127 = vadd.f32 %v3023, %v3087
  %v3128 = vadd.f32 %v3024, %v3091
  %v3129 = vadd.f32 %v3025, %v3090
  %v3130 = vadd.f32 %v3026, %v3094
  %v3131 = vadd.f32 %v3027, %v3093
  %v3132 = vadd.f32 %v3028, %v3097
  %v3133 = vadd.f32 %v3029, %v3096
  %v3134 = vlaneseq
  %v3135 = vshrl.u32 %v3134, 7
  %v3136 = vsub.s32 4, %v3135
  %v3137 = vrot.slane %v200, %v3136
  %v3138 = vmul.f32 %v907, %v3137
  %v3139 = vmul.f32 %v908, %v3137
  %v3140 = vmul.f32 %v909, %v3137
  %v3141 = vmul.f32 %v910, %v3137
  %v3142 = vmul.f32 %v911, %v3137
  %v3143 = vmul.f32 %v912, %v3137
  %v3144 = vmul.f32 %v913, %v3137
  %v3145 = vmul.f32 %v914, %v3137
  %v3146 = vmul.f32 %v915, %v3137
  %v3147 = vmul.f32 %v916, %v3137
  %v3148 = vmul.f32 %v917, %v3137
  %v3149 = vmul.f32 %v918, %v3137
  %v3150 = vmul.f32 %v919, %v3137
  %v3151 = vmul.f32 %v920, %v3137
  %v3152 = vmul.f32 %v921, %v3137
  %v3153 = vmul.f32 %v922, %v3137
  %v3154 = vmul.f32 %v923, %v3137
  %v3155 = vmul.f32 %v924, %v3137
  %v3174 = vrot.slane %v3138, 4
  %v3175 = vrot.slane %v3139, 4
  %v3176 = vsel %vm3070, %v3174, %v3175
  %v3177 = vrot.slane %v3140, 4
  %v3178 = vrot.slane %v3141, 4
  %v3179 = vsel %vm3070, %v3177, %v3178
  %v3180 = vrot.slane %v3142, 4
  %v3181 = vrot.slane %v3143, 4
  %v3182 = vsel %vm3070, %v3180, %v3181
  %v3183 = vrot.slane %v3144, 4
  %v3184 = vrot.slane %v3145, 4
  %v3185 = vsel %vm3070, %v3183, %v3184
  %v3186 = vrot.slane %v3146, 4
  %v3187 = vrot.slane %v3147, 4
  %v3188 = vsel %vm3070, %v3186, %v3187
  %v3189 = vrot.slane %v3148, 4
  %v3190 = vrot.slane %v3149, 4
  %v3191 = vsel %vm3070, %v3189, %v3190
  %v3192 = vrot.slane %v3150, 4
  %v3193 = vrot.slane %v3151, 4
  %v3194 = vsel %vm3070, %v3192, %v3193
  %v3195 = vrot.slane %v3152, 4
  %v3196 = vrot.slane %v3153, 4
  %v3197 = vsel %vm3070, %v3195, %v3196
  %v3198 = vrot.slane %v3154, 4
  %v3199 = vrot.slane %v3155, 4
  %v3200 = vsel %vm3070, %v3198, %v3199
  %v3219 = vadd.f32 %v3116, %v3176
  %v3220 = vadd.f32 %v3117, %v3175
  %v3221 = vadd.f32 %v3118, %v3179
  %v3222 = vadd.f32 %v3119, %v3178
  %v3223 = vadd.f32 %v3120, %v3182
  %v3224 = vadd.f32 %v3121, %v3181
  %v3225 = vadd.f32 %v3122, %v3185
  %v3226 = vadd.f32 %v3123, %v3184
  %v3227 = vadd.f32 %v3124, %v3188
  %v3228 = vadd.f32 %v3125, %v3187
  %v3229 = vadd.f32 %v3126, %v3191
  %v3230 = vadd.f32 %v3127, %v3190
  %v3231 = vadd.f32 %v3128, %v3194
  %v3232 = vadd.f32 %v3129, %v3193
  %v3233 = vadd.f32 %v3130, %v3197
  %v3234 = vadd.f32 %v3131, %v3196
  %v3235 = vadd.f32 %v3132, %v3200
  %v3236 = vadd.f32 %v3133, %v3199
  %v3237 = vlaneseq
  %v3238 = vshrl.u32 %v3237, 7
  %v3239 = vsub.s32 4, %v3238
  %v3240 = vrot.slane %v201, %v3239
  %v3241 = vmul.f32 %v909, %v3240
  %v3242 = vmul.f32 %v910, %v3240
  %v3243 = vmul.f32 %v911, %v3240
  %v3244 = vmul.f32 %v912, %v3240
  %v3245 = vmul.f32 %v913, %v3240
  %v3246 = vmul.f32 %v914, %v3240
  %v3247 = vmul.f32 %v915, %v3240
  %v3248 = vmul.f32 %v916, %v3240
  %v3249 = vmul.f32 %v917, %v3240
  %v3250 = vmul.f32 %v918, %v3240
  %v3251 = vmul.f32 %v919, %v3240
  %v3252 = vmul.f32 %v920, %v3240
  %v3253 = vmul.f32 %v921, %v3240
  %v3254 = vmul.f32 %v922, %v3240
  %v3255 = vmul.f32 %v923, %v3240
  %v3256 = vmul.f32 %v924, %v3240
  %v3257 = vmul.f32 %v925, %v3240
  %v3258 = vmul.f32 %v926, %v3240
  %v3277 = vrot.slane %v3241, 4
  %v3278 = vrot.slane %v3242, 4
  %v3279 = vsel %vm3070, %v3277, %v3278
  %v3280 = vrot.slane %v3243, 4
  %v3281 = vrot.slane %v3244, 4
  %v3282 = vsel %vm3070, %v3280, %v3281
  %v3283 = vrot.slane %v3245, 4
  %v3284 = vrot.slane %v3246, 4
  %v3285 = vsel %vm3070, %v3283, %v3284
  %v3286 = vrot.slane %v3247, 4
  %v3287 = vrot.slane %v3248, 4
  %v3288 = vsel %vm3070, %v3286, %v3287
  %v3289 = vrot.slane %v3249, 4
  %v3290 = vrot.slane %v3250, 4
  %v3291 = vsel %vm3070, %v3289, %v3290
  %v3292 = vrot.slane %v3251, 4
  %v3293 = vrot.slane %v3252, 4
  %v3294 = vsel %vm3070, %v3292, %v3293
  %v3295 = vrot.slane %v3253, 4
  %v3296 = vrot.slane %v3254, 4
  %v3297 = vsel %vm3070, %v3295, %v3296
  %v3298 = vrot.slane %v3255, 4
  %v3299 = vrot.slane %v3256, 4
  %v3300 = vsel %vm3070, %v3298, %v3299
  %v3301 = vrot.slane %v3257, 4
  %v3302 = vrot.slane %v3258, 4
  %v3303 = vsel %vm3070, %v3301, %v3302
  %v3322 = vadd.f32 %v3219, %v3279
  %v3323 = vadd.f32 %v3220, %v3278
  %v3324 = vadd.f32 %v3221, %v3282
  %v3325 = vadd.f32 %v3222, %v3281
  %v3326 = vadd.f32 %v3223, %v3285
  %v3327 = vadd.f32 %v3224, %v3284
  %v3328 = vadd.f32 %v3225, %v3288
  %v3329 = vadd.f32 %v3226, %v3287
  %v3330 = vadd.f32 %v3227, %v3291
  %v3331 = vadd.f32 %v3228, %v3290
  %v3332 = vadd.f32 %v3229, %v3294
  %v3333 = vadd.f32 %v3230, %v3293
  %v3334 = vadd.f32 %v3231, %v3297
  %v3335 = vadd.f32 %v3232, %v3296
  %v3336 = vadd.f32 %v3233, %v3300
  %v3337 = vadd.f32 %v3234, %v3299
  %v3338 = vadd.f32 %v3235, %v3303
  %v3339 = vadd.f32 %v3236, %v3302
  %v3340 = vlaneseq
  %v3341 = vshrl.u32 %v3340, 7
  %v3342 = vsub.s32 4, %v3341
  %v3343 = vrot.slane %v202, %v3342
  %v3344 = vmul.f32 %v911, %v3343
  %v3345 = vmul.f32 %v912, %v3343
  %v3346 = vmul.f32 %v913, %v3343
  %v3347 = vmul.f32 %v914, %v3343
  %v3348 = vmul.f32 %v915, %v3343
  %v3349 = vmul.f32 %v916, %v3343
  %v3350 = vmul.f32 %v917, %v3343
  %v3351 = vmul.f32 %v918, %v3343
  %v3352 = vmul.f32 %v919, %v3343
  %v3353 = vmul.f32 %v920, %v3343
  %v3354 = vmul.f32 %v921, %v3343
  %v3355 = vmul.f32 %v922, %v3343
  %v3356 = vmul.f32 %v923, %v3343
  %v3357 = vmul.f32 %v924, %v3343
  %v3358 = vmul.f32 %v925, %v3343
  %v3359 = vmul.f32 %v926, %v3343
  %v3360 = vmul.f32 %v927, %v3343
  %v3361 = vmul.f32 %v928, %v3343
  %v3380 = vrot.slane %v3344, 4
  %v3381 = vrot.slane %v3345, 4
  %v3382 = vsel %vm3070, %v3380, %v3381
  %v3383 = vrot.slane %v3346, 4
  %v3384 = vrot.slane %v3347, 4
  %v3385 = vsel %vm3070, %v3383, %v3384
  %v3386 = vrot.slane %v3348, 4
  %v3387 = vrot.slane %v3349, 4
  %v3388 = vsel %vm3070, %v3386, %v3387
  %v3389 = vrot.slane %v3350, 4
  %v3390 = vrot.slane %v3351, 4
  %v3391 = vsel %vm3070, %v3389, %v3390
  %v3392 = vrot.slane %v3352, 4
  %v3393 = vrot.slane %v3353, 4
  %v3394 = vsel %vm3070, %v3392, %v3393
  %v3395 = vrot.slane %v3354, 4
  %v3396 = vrot.slane %v3355, 4
  %v3397 = vsel %vm3070, %v3395, %v3396
  %v3398 = vrot.slane %v3356, 4
  %v3399 = vrot.slane %v3357, 4
  %v3400 = vsel %vm3070, %v3398, %v3399
  %v3401 = vrot.slane %v3358, 4
  %v3402 = vrot.slane %v3359, 4
  %v3403 = vsel %vm3070, %v3401, %v3402
  %v3404 = vrot.slane %v3360, 4
  %v3405 = vrot.slane %v3361, 4
  %v3406 = vsel %vm3070, %v3404, %v3405
  %v3425 = vadd.f32 %v3322, %v3382
  %v3426 = vadd.f32 %v3323, %v3381
  %v3427 = vadd.f32 %v3324, %v3385
  %v3428 = vadd.f32 %v3325, %v3384
  %v3429 = vadd.f32 %v3326, %v3388
  %v3430 = vadd.f32 %v3327, %v3387
  %v3431 = vadd.f32 %v3328, %v3391
  %v3432 = vadd.f32 %v3329, %v3390
  %v3433 = vadd.f32 %v3330, %v3394
  %v3434 = vadd.f32 %v3331, %v3393
  %v3435 = vadd.f32 %v3332, %v3397
  %v3436 = vadd.f32 %v3333, %v3396
  %v3437 = vadd.f32 %v3334, %v3400
  %v3438 = vadd.f32 %v3335, %v3399
  %v3439 = vadd.f32 %v3336, %v3403
  %v3440 = vadd.f32 %v3337, %v3402
  %v3441 = vadd.f32 %v3338, %v3406
  %v3442 = vadd.f32 %v3339, %v3405
  %v3443 = vlaneseq
  %v3444 = vshrl.u32 %v3443, 7
  %v3445 = vsub.s32 4, %v3444
  %v3446 = vrot.slane %v203, %v3445
  %v3447 = vmul.f32 %v913, %v3446
  %v3448 = vmul.f32 %v914, %v3446
  %v3449 = vmul.f32 %v915, %v3446
  %v3450 = vmul.f32 %v916, %v3446
  %v3451 = vmul.f32 %v917, %v3446
  %v3452 = vmul.f32 %v918, %v3446
  %v3453 = vmul.f32 %v919, %v3446
  %v3454 = vmul.f32 %v920, %v3446
  %v3455 = vmul.f32 %v921, %v3446
  %v3456 = vmul.f32 %v922, %v3446
  %v3457 = vmul.f32 %v923, %v3446
  %v3458 = vmul.f32 %v924, %v3446
  %v3459 = vmul.f32 %v925, %v3446
  %v3460 = vmul.f32 %v926, %v3446
  %v3461 = vmul.f32 %v927, %v3446
  %v3462 = vmul.f32 %v928, %v3446
  %v3463 = vmul.f32 %v929, %v3446
  %v3464 = vmul.f32 %v930, %v3446
  %v3483 = vrot.slane %v3447, 4
  %v3484 = vrot.slane %v3448, 4
  %v3485 = vsel %vm3070, %v3483, %v3484
  %v3486 = vrot.slane %v3449, 4
  %v3487 = vrot.slane %v3450, 4
  %v3488 = vsel %vm3070, %v3486, %v3487
  %v3489 = vrot.slane %v3451, 4
  %v3490 = vrot.slane %v3452, 4
  %v3491 = vsel %vm3070, %v3489, %v3490
  %v3492 = vrot.slane %v3453, 4
  %v3493 = vrot.slane %v3454, 4
  %v3494 = vsel %vm3070, %v3492, %v3493
  %v3495 = vrot.slane %v3455, 4
  %v3496 = vrot.slane %v3456, 4
  %v3497 = vsel %vm3070, %v3495, %v3496
  %v3498 = vrot.slane %v3457, 4
  %v3499 = vrot.slane %v3458, 4
  %v3500 = vsel %vm3070, %v3498, %v3499
  %v3501 = vrot.slane %v3459, 4
  %v3502 = vrot.slane %v3460, 4
  %v3503 = vsel %vm3070, %v3501, %v3502
  %v3504 = vrot.slane %v3461, 4
  %v3505 = vrot.slane %v3462, 4
  %v3506 = vsel %vm3070, %v3504, %v3505
  %v3507 = vrot.slane %v3463, 4
  %v3508 = vrot.slane %v3464, 4
  %v3509 = vsel %vm3070, %v3507, %v3508
  %v3528 = vadd.f32 %v3425, %v3485
  %v3529 = vadd.f32 %v3426, %v3484
  %v3530 = vadd.f32 %v3427, %v3488
  %v3531 = vadd.f32 %v3428, %v3487
  %v3532 = vadd.f32 %v3429, %v3491
  %v3533 = vadd.f32 %v3430, %v3490
  %v3534 = vadd.f32 %v3431, %v3494
  %v3535 = vadd.f32 %v3432, %v3493
  %v3536 = vadd.f32 %v3433, %v3497
  %v3537 = vadd.f32 %v3434, %v3496
  %v3538 = vadd.f32 %v3435, %v3500
  %v3539 = vadd.f32 %v3436, %v3499
  %v3540 = vadd.f32 %v3437, %v3503
  %v3541 = vadd.f32 %v3438, %v3502
  %v3542 = vadd.f32 %v3439, %v3506
  %v3543 = vadd.f32 %v3440, %v3505
  %v3544 = vadd.f32 %v3441, %v3509
  %v3545 = vadd.f32 %v3442, %v3508
  %v3546 = vlaneseq
  %v3547 = vshrl.u32 %v3546, 7
  %v3548 = vsub.s32 4, %v3547
  %v3549 = vrot.slane %v204, %v3548
  %v3550 = vmul.f32 %v915, %v3549
  %v3551 = vmul.f32 %v916, %v3549
  %v3552 = vmul.f32 %v917, %v3549
  %v3553 = vmul.f32 %v918, %v3549
  %v3554 = vmul.f32 %v919, %v3549
  %v3555 = vmul.f32 %v920, %v3549
  %v3556 = vmul.f32 %v921, %v3549
  %v3557 = vmul.f32 %v922, %v3549
  %v3558 = vmul.f32 %v923, %v3549
  %v3559 = vmul.f32 %v924, %v3549
  %v3560 = vmul.f32 %v925, %v3549
  %v3561 = vmul.f32 %v926, %v3549
  %v3562 = vmul.f32 %v927, %v3549
  %v3563 = vmul.f32 %v928, %v3549
  %v3564 = vmul.f32 %v929, %v3549
  %v3565 = vmul.f32 %v930, %v3549
  %v3566 = vmul.f32 %v931, %v3549
  %v3567 = vmul.f32 %v932, %v3549
  %v3586 = vrot.slane %v3550, 4
  %v3587 = vrot.slane %v3551, 4
  %v3588 = vsel %vm3070, %v3586, %v3587
  %v3589 = vrot.slane %v3552, 4
  %v3590 = vrot.slane %v3553, 4
  %v3591 = vsel %vm3070, %v3589, %v3590
  %v3592 = vrot.slane %v3554, 4
  %v3593 = vrot.slane %v3555, 4
  %v3594 = vsel %vm3070, %v3592, %v3593
  %v3595 = vrot.slane %v3556, 4
  %v3596 = vrot.slane %v3557, 4
  %v3597 = vsel %vm3070, %v3595, %v3596
  %v3598 = vrot.slane %v3558, 4
  %v3599 = vrot.slane %v3559, 4
  %v3600 = vsel %vm3070, %v3598, %v3599
  %v3601 = vrot.slane %v3560, 4
  %v3602 = vrot.slane %v3561, 4
  %v3603 = vsel %vm3070, %v3601, %v3602
  %v3604 = vrot.slane %v3562, 4
  %v3605 = vrot.slane %v3563, 4
  %v3606 = vsel %vm3070, %v3604, %v3605
  %v3607 = vrot.slane %v3564, 4
  %v3608 = vrot.slane %v3565, 4
  %v3609 = vsel %vm3070, %v3607, %v3608
  %v3610 = vrot.slane %v3566, 4
  %v3611 = vrot.slane %v3567, 4
  %v3612 = vsel %vm3070, %v3610, %v3611
  %v3631 = vadd.f32 %v3528, %v3588
  %v3632 = vadd.f32 %v3529, %v3587
  %v3633 = vadd.f32 %v3530, %v3591
  %v3634 = vadd.f32 %v3531, %v3590
  %v3635 = vadd.f32 %v3532, %v3594
  %v3636 = vadd.f32 %v3533, %v3593
  %v3637 = vadd.f32 %v3534, %v3597
  %v3638 = vadd.f32 %v3535, %v3596
  %v3639 = vadd.f32 %v3536, %v3600
  %v3640 = vadd.f32 %v3537, %v3599
  %v3641 = vadd.f32 %v3538, %v3603
  %v3642 = vadd.f32 %v3539, %v3602
  %v3643 = vadd.f32 %v3540, %v3606
  %v3644 = vadd.f32 %v3541, %v3605
  %v3645 = vadd.f32 %v3542, %v3609
  %v3646 = vadd.f32 %v3543, %v3608
  %v3647 = vadd.f32 %v3544, %v3612
  %v3648 = vadd.f32 %v3545, %v3611
  %v3649 = vlaneseq
  %v3650 = vshrl.u32 %v3649, 7
  %v3651 = vsub.s32 5, %v3650
  %v3652 = vrot.slane %v199, %v3651
  %v3653 = vmul.f32 %v905, %v3652
  %v3654 = vmul.f32 %v906, %v3652
  %v3655 = vmul.f32 %v907, %v3652
  %v3656 = vmul.f32 %v908, %v3652
  %v3657 = vmul.f32 %v909, %v3652
  %v3658 = vmul.f32 %v910, %v3652
  %v3659 = vmul.f32 %v911, %v3652
  %v3660 = vmul.f32 %v912, %v3652
  %v3661 = vmul.f32 %v913, %v3652
  %v3662 = vmul.f32 %v914, %v3652
  %v3663 = vmul.f32 %v915, %v3652
  %v3664 = vmul.f32 %v916, %v3652
  %v3665 = vmul.f32 %v917, %v3652
  %v3666 = vmul.f32 %v918, %v3652
  %v3667 = vmul.f32 %v919, %v3652
  %v3668 = vmul.f32 %v920, %v3652
  %v3669 = vmul.f32 %v921, %v3652
  %v3670 = vmul.f32 %v922, %v3652
  %vm3689 = vcmask 1042432
  %v3690 = vrot.slane %v3653, 5
  %v3691 = vrot.slane %v3654, 5
  %v3692 = vsel %vm3689, %v3690, %v3691
  %v3693 = vrot.slane %v3655, 5
  %v3694 = vrot.slane %v3656, 5
  %v3695 = vsel %vm3689, %v3693, %v3694
  %v3696 = vrot.slane %v3657, 5
  %v3697 = vrot.slane %v3658, 5
  %v3698 = vsel %vm3689, %v3696, %v3697
  %v3699 = vrot.slane %v3659, 5
  %v3700 = vrot.slane %v3660, 5
  %v3701 = vsel %vm3689, %v3699, %v3700
  %v3702 = vrot.slane %v3661, 5
  %v3703 = vrot.slane %v3662, 5
  %v3704 = vsel %vm3689, %v3702, %v3703
  %v3705 = vrot.slane %v3663, 5
  %v3706 = vrot.slane %v3664, 5
  %v3707 = vsel %vm3689, %v3705, %v3706
  %v3708 = vrot.slane %v3665, 5
  %v3709 = vrot.slane %v3666, 5
  %v3710 = vsel %vm3689, %v3708, %v3709
  %v3711 = vrot.slane %v3667, 5
  %v3712 = vrot.slane %v3668, 5
  %v3713 = vsel %vm3689, %v3711, %v3712
  %v3714 = vrot.slane %v3669, 5
  %v3715 = vrot.slane %v3670, 5
  %v3716 = vsel %vm3689, %v3714, %v3715
  %v3735 = vadd.f32 %v3631, %v3692
  %v3736 = vadd.f32 %v3632, %v3691
  %v3737 = vadd.f32 %v3633, %v3695
  %v3738 = vadd.f32 %v3634, %v3694
  %v3739 = vadd.f32 %v3635, %v3698
  %v3740 = vadd.f32 %v3636, %v3697
  %v3741 = vadd.f32 %v3637, %v3701
  %v3742 = vadd.f32 %v3638, %v3700
  %v3743 = vadd.f32 %v3639, %v3704
  %v3744 = vadd.f32 %v3640, %v3703
  %v3745 = vadd.f32 %v3641, %v3707
  %v3746 = vadd.f32 %v3642, %v3706
  %v3747 = vadd.f32 %v3643, %v3710
  %v3748 = vadd.f32 %v3644, %v3709
  %v3749 = vadd.f32 %v3645, %v3713
  %v3750 = vadd.f32 %v3646, %v3712
  %v3751 = vadd.f32 %v3647, %v3716
  %v3752 = vadd.f32 %v3648, %v3715
  %v3753 = vlaneseq
  %v3754 = vshrl.u32 %v3753, 7
  %v3755 = vsub.s32 5, %v3754
  %v3756 = vrot.slane %v200, %v3755
  %v3757 = vmul.f32 %v907, %v3756
  %v3758 = vmul.f32 %v908, %v3756
  %v3759 = vmul.f32 %v909, %v3756
  %v3760 = vmul.f32 %v910, %v3756
  %v3761 = vmul.f32 %v911, %v3756
  %v3762 = vmul.f32 %v912, %v3756
  %v3763 = vmul.f32 %v913, %v3756
  %v3764 = vmul.f32 %v914, %v3756
  %v3765 = vmul.f32 %v915, %v3756
  %v3766 = vmul.f32 %v916, %v3756
  %v3767 = vmul.f32 %v917, %v3756
  %v3768 = vmul.f32 %v918, %v3756
  %v3769 = vmul.f32 %v919, %v3756
  %v3770 = vmul.f32 %v920, %v3756
  %v3771 = vmul.f32 %v921, %v3756
  %v3772 = vmul.f32 %v922, %v3756
  %v3773 = vmul.f32 %v923, %v3756
  %v3774 = vmul.f32 %v924, %v3756
  %v3793 = vrot.slane %v3757, 5
  %v3794 = vrot.slane %v3758, 5
  %v3795 = vsel %vm3689, %v3793, %v3794
  %v3796 = vrot.slane %v3759, 5
  %v3797 = vrot.slane %v3760, 5
  %v3798 = vsel %vm3689, %v3796, %v3797
  %v3799 = vrot.slane %v3761, 5
  %v3800 = vrot.slane %v3762, 5
  %v3801 = vsel %vm3689, %v3799, %v3800
  %v3802 = vrot.slane %v3763, 5
  %v3803 = vrot.slane %v3764, 5
  %v3804 = vsel %vm3689, %v3802, %v3803
  %v3805 = vrot.slane %v3765, 5
  %v3806 = vrot.slane %v3766, 5
  %v3807 = vsel %vm3689, %v3805, %v3806
  %v3808 = vrot.slane %v3767, 5
  %v3809 = vrot.slane %v3768, 5
  %v3810 = vsel %vm3689, %v3808, %v3809
  %v3811 = vrot.slane %v3769, 5
  %v3812 = vrot.slane %v3770, 5
  %v3813 = vsel %vm3689, %v3811, %v3812
  %v3814 = vrot.slane %v3771, 5
  %v3815 = vrot.slane %v3772, 5
  %v3816 = vsel %vm3689, %v3814, %v3815
  %v3817 = vrot.slane %v3773, 5
  %v3818 = vrot.slane %v3774, 5
  %v3819 = vsel %vm3689, %v3817, %v3818
  %v3838 = vadd.f32 %v3735, %v3795
  %v3839 = vadd.f32 %v3736, %v3794
  %v3840 = vadd.f32 %v3737, %v3798
  %v3841 = vadd.f32 %v3738, %v3797
  %v3842 = vadd.f32 %v3739, %v3801
  %v3843 = vadd.f32 %v3740, %v3800
  %v3844 = vadd.f32 %v3741, %v3804
  %v3845 = vadd.f32 %v3742, %v3803
  %v3846 = vadd.f32 %v3743, %v3807
  %v3847 = vadd.f32 %v3744, %v3806
  %v3848 = vadd.f32 %v3745, %v3810
  %v3849 = vadd.f32 %v3746, %v3809
  %v3850 = vadd.f32 %v3747, %v3813
  %v3851 = vadd.f32 %v3748, %v3812
  %v3852 = vadd.f32 %v3749, %v3816
  %v3853 = vadd.f32 %v3750, %v3815
  %v3854 = vadd.f32 %v3751, %v3819
  %v3855 = vadd.f32 %v3752, %v3818
  %v3856 = vlaneseq
  %v3857 = vshrl.u32 %v3856, 7
  %v3858 = vsub.s32 5, %v3857
  %v3859 = vrot.slane %v201, %v3858
  %v3860 = vmul.f32 %v909, %v3859
  %v3861 = vmul.f32 %v910, %v3859
  %v3862 = vmul.f32 %v911, %v3859
  %v3863 = vmul.f32 %v912, %v3859
  %v3864 = vmul.f32 %v913, %v3859
  %v3865 = vmul.f32 %v914, %v3859
  %v3866 = vmul.f32 %v915, %v3859
  %v3867 = vmul.f32 %v916, %v3859
  %v3868 = vmul.f32 %v917, %v3859
  %v3869 = vmul.f32 %v918, %v3859
  %v3870 = vmul.f32 %v919, %v3859
  %v3871 = vmul.f32 %v920, %v3859
  %v3872 = vmul.f32 %v921, %v3859
  %v3873 = vmul.f32 %v922, %v3859
  %v3874 = vmul.f32 %v923, %v3859
  %v3875 = vmul.f32 %v924, %v3859
  %v3876 = vmul.f32 %v925, %v3859
  %v3877 = vmul.f32 %v926, %v3859
  %v3896 = vrot.slane %v3860, 5
  %v3897 = vrot.slane %v3861, 5
  %v3898 = vsel %vm3689, %v3896, %v3897
  %v3899 = vrot.slane %v3862, 5
  %v3900 = vrot.slane %v3863, 5
  %v3901 = vsel %vm3689, %v3899, %v3900
  %v3902 = vrot.slane %v3864, 5
  %v3903 = vrot.slane %v3865, 5
  %v3904 = vsel %vm3689, %v3902, %v3903
  %v3905 = vrot.slane %v3866, 5
  %v3906 = vrot.slane %v3867, 5
  %v3907 = vsel %vm3689, %v3905, %v3906
  %v3908 = vrot.slane %v3868, 5
  %v3909 = vrot.slane %v3869, 5
  %v3910 = vsel %vm3689, %v3908, %v3909
  %v3911 = vrot.slane %v3870, 5
  %v3912 = vrot.slane %v3871, 5
  %v3913 = vsel %vm3689, %v3911, %v3912
  %v3914 = vrot.slane %v3872, 5
  %v3915 = vrot.slane %v3873, 5
  %v3916 = vsel %vm3689, %v3914, %v3915
  %v3917 = vrot.slane %v3874, 5
  %v3918 = vrot.slane %v3875, 5
  %v3919 = vsel %vm3689, %v3917, %v3918
  %v3920 = vrot.slane %v3876, 5
  %v3921 = vrot.slane %v3877, 5
  %v3922 = vsel %vm3689, %v3920, %v3921
  %v3941 = vadd.f32 %v3838, %v3898
  %v3942 = vadd.f32 %v3839, %v3897
  %v3943 = vadd.f32 %v3840, %v3901
  %v3944 = vadd.f32 %v3841, %v3900
  %v3945 = vadd.f32 %v3842, %v3904
  %v3946 = vadd.f32 %v3843, %v3903
  %v3947 = vadd.f32 %v3844, %v3907
  %v3948 = vadd.f32 %v3845, %v3906
  %v3949 = vadd.f32 %v3846, %v3910
  %v3950 = vadd.f32 %v3847, %v3909
  %v3951 = vadd.f32 %v3848, %v3913
  %v3952 = vadd.f32 %v3849, %v3912
  %v3953 = vadd.f32 %v3850, %v3916
  %v3954 = vadd.f32 %v3851, %v3915
  %v3955 = vadd.f32 %v3852, %v3919
  %v3956 = vadd.f32 %v3853, %v3918
  %v3957 = vadd.f32 %v3854, %v3922
  %v3958 = vadd.f32 %v3855, %v3921
  %v3959 = vlaneseq
  %v3960 = vshrl.u32 %v3959, 7
  %v3961 = vsub.s32 5, %v3960
  %v3962 = vrot.slane %v202, %v3961
  %v3963 = vmul.f32 %v911, %v3962
  %v3964 = vmul.f32 %v912, %v3962
  %v3965 = vmul.f32 %v913, %v3962
  %v3966 = vmul.f32 %v914, %v3962
  %v3967 = vmul.f32 %v915, %v3962
  %v3968 = vmul.f32 %v916, %v3962
  %v3969 = vmul.f32 %v917, %v3962
  %v3970 = vmul.f32 %v918, %v3962
  %v3971 = vmul.f32 %v919, %v3962
  %v3972 = vmul.f32 %v920, %v3962
  %v3973 = vmul.f32 %v921, %v3962
  %v3974 = vmul.f32 %v922, %v3962
  %v3975 = vmul.f32 %v923, %v3962
  %v3976 = vmul.f32 %v924, %v3962
  %v3977 = vmul.f32 %v925, %v3962
  %v3978 = vmul.f32 %v926, %v3962
  %v3979 = vmul.f32 %v927, %v3962
  %v3980 = vmul.f32 %v928, %v3962
  %v3999 = vrot.slane %v3963, 5
  %v4000 = vrot.slane %v3964, 5
  %v4001 = vsel %vm3689, %v3999, %v4000
  %v4002 = vrot.slane %v3965, 5
  %v4003 = vrot.slane %v3966, 5
  %v4004 = vsel %vm3689, %v4002, %v4003
  %v4005 = vrot.slane %v3967, 5
  %v4006 = vrot.slane %v3968, 5
  %v4007 = vsel %vm3689, %v4005, %v4006
  %v4008 = vrot.slane %v3969, 5
  %v4009 = vrot.slane %v3970, 5
  %v4010 = vsel %vm3689, %v4008, %v4009
  %v4011 = vrot.slane %v3971, 5
  %v4012 = vrot.slane %v3972, 5
  %v4013 = vsel %vm3689, %v4011, %v4012
  %v4014 = vrot.slane %v3973, 5
  %v4015 = vrot.slane %v3974, 5
  %v4016 = vsel %vm3689, %v4014, %v4015
  %v4017 = vrot.slane %v3975, 5
  %v4018 = vrot.slane %v3976, 5
  %v4019 = vsel %vm3689, %v4017, %v4018
  %v4020 = vrot.slane %v3977, 5
  %v4021 = vrot.slane %v3978, 5
  %v4022 = vsel %vm3689, %v4020, %v4021
  %v4023 = vrot.slane %v3979, 5
  %v4024 = vrot.slane %v3980, 5
  %v4025 = vsel %vm3689, %v4023, %v4024
  %v4044 = vadd.f32 %v3941, %v4001
  %v4045 = vadd.f32 %v3942, %v4000
  %v4046 = vadd.f32 %v3943, %v4004
  %v4047 = vadd.f32 %v3944, %v4003
  %v4048 = vadd.f32 %v3945, %v4007
  %v4049 = vadd.f32 %v3946, %v4006
  %v4050 = vadd.f32 %v3947, %v4010
  %v4051 = vadd.f32 %v3948, %v4009
  %v4052 = vadd.f32 %v3949, %v4013
  %v4053 = vadd.f32 %v3950, %v4012
  %v4054 = vadd.f32 %v3951, %v4016
  %v4055 = vadd.f32 %v3952, %v4015
  %v4056 = vadd.f32 %v3953, %v4019
  %v4057 = vadd.f32 %v3954, %v4018
  %v4058 = vadd.f32 %v3955, %v4022
  %v4059 = vadd.f32 %v3956, %v4021
  %v4060 = vadd.f32 %v3957, %v4025
  %v4061 = vadd.f32 %v3958, %v4024
  %v4062 = vlaneseq
  %v4063 = vshrl.u32 %v4062, 7
  %v4064 = vsub.s32 5, %v4063
  %v4065 = vrot.slane %v203, %v4064
  %v4066 = vmul.f32 %v913, %v4065
  %v4067 = vmul.f32 %v914, %v4065
  %v4068 = vmul.f32 %v915, %v4065
  %v4069 = vmul.f32 %v916, %v4065
  %v4070 = vmul.f32 %v917, %v4065
  %v4071 = vmul.f32 %v918, %v4065
  %v4072 = vmul.f32 %v919, %v4065
  %v4073 = vmul.f32 %v920, %v4065
  %v4074 = vmul.f32 %v921, %v4065
  %v4075 = vmul.f32 %v922, %v4065
  %v4076 = vmul.f32 %v923, %v4065
  %v4077 = vmul.f32 %v924, %v4065
  %v4078 = vmul.f32 %v925, %v4065
  %v4079 = vmul.f32 %v926, %v4065
  %v4080 = vmul.f32 %v927, %v4065
  %v4081 = vmul.f32 %v928, %v4065
  %v4082 = vmul.f32 %v929, %v4065
  %v4083 = vmul.f32 %v930, %v4065
  %v4102 = vrot.slane %v4066, 5
  %v4103 = vrot.slane %v4067, 5
  %v4104 = vsel %vm3689, %v4102, %v4103
  %v4105 = vrot.slane %v4068, 5
  %v4106 = vrot.slane %v4069, 5
  %v4107 = vsel %vm3689, %v4105, %v4106
  %v4108 = vrot.slane %v4070, 5
  %v4109 = vrot.slane %v4071, 5
  %v4110 = vsel %vm3689, %v4108, %v4109
  %v4111 = vrot.slane %v4072, 5
  %v4112 = vrot.slane %v4073, 5
  %v4113 = vsel %vm3689, %v4111, %v4112
  %v4114 = vrot.slane %v4074, 5
  %v4115 = vrot.slane %v4075, 5
  %v4116 = vsel %vm3689, %v4114, %v4115
  %v4117 = vrot.slane %v4076, 5
  %v4118 = vrot.slane %v4077, 5
  %v4119 = vsel %vm3689, %v4117, %v4118
  %v4120 = vrot.slane %v4078, 5
  %v4121 = vrot.slane %v4079, 5
  %v4122 = vsel %vm3689, %v4120, %v4121
  %v4123 = vrot.slane %v4080, 5
  %v4124 = vrot.slane %v4081, 5
  %v4125 = vsel %vm3689, %v4123, %v4124
  %v4126 = vrot.slane %v4082, 5
  %v4127 = vrot.slane %v4083, 5
  %v4128 = vsel %vm3689, %v4126, %v4127
  %v4147 = vadd.f32 %v4044, %v4104
  %v4148 = vadd.f32 %v4045, %v4103
  %v4149 = vadd.f32 %v4046, %v4107
  %v4150 = vadd.f32 %v4047, %v4106
  %v4151 = vadd.f32 %v4048, %v4110
  %v4152 = vadd.f32 %v4049, %v4109
  %v4153 = vadd.f32 %v4050, %v4113
  %v4154 = vadd.f32 %v4051, %v4112
  %v4155 = vadd.f32 %v4052, %v4116
  %v4156 = vadd.f32 %v4053, %v4115
  %v4157 = vadd.f32 %v4054, %v4119
  %v4158 = vadd.f32 %v4055, %v4118
  %v4159 = vadd.f32 %v4056, %v4122
  %v4160 = vadd.f32 %v4057, %v4121
  %v4161 = vadd.f32 %v4058, %v4125
  %v4162 = vadd.f32 %v4059, %v4124
  %v4163 = vadd.f32 %v4060, %v4128
  %v4164 = vadd.f32 %v4061, %v4127
  %v4165 = vlaneseq
  %v4166 = vshrl.u32 %v4165, 7
  %v4167 = vsub.s32 5, %v4166
  %v4168 = vrot.slane %v204, %v4167
  %v4169 = vmul.f32 %v915, %v4168
  %v4170 = vmul.f32 %v916, %v4168
  %v4171 = vmul.f32 %v917, %v4168
  %v4172 = vmul.f32 %v918, %v4168
  %v4173 = vmul.f32 %v919, %v4168
  %v4174 = vmul.f32 %v920, %v4168
  %v4175 = vmul.f32 %v921, %v4168
  %v4176 = vmul.f32 %v922, %v4168
  %v4177 = vmul.f32 %v923, %v4168
  %v4178 = vmul.f32 %v924, %v4168
  %v4179 = vmul.f32 %v925, %v4168
  %v4180 = vmul.f32 %v926, %v4168
  %v4181 = vmul.f32 %v927, %v4168
  %v4182 = vmul.f32 %v928, %v4168
  %v4183 = vmul.f32 %v929, %v4168
  %v4184 = vmul.f32 %v930, %v4168
  %v4185 = vmul.f32 %v931, %v4168
  %v4186 = vmul.f32 %v932, %v4168
  %v4205 = vrot.slane %v4169, 5
  %v4206 = vrot.slane %v4170, 5
  %v4207 = vsel %vm3689, %v4205, %v4206
  %v4208 = vrot.slane %v4171, 5
  %v4209 = vrot.slane %v4172, 5
  %v4210 = vsel %vm3689, %v4208, %v4209
  %v4211 = vrot.slane %v4173, 5
  %v4212 = vrot.slane %v4174, 5
  %v4213 = vsel %vm3689, %v4211, %v4212
  %v4214 = vrot.slane %v4175, 5
  %v4215 = vrot.slane %v4176, 5
  %v4216 = vsel %vm3689, %v4214, %v4215
  %v4217 = vrot.slane %v4177, 5
  %v4218 = vrot.slane %v4178, 5
  %v4219 = vsel %vm3689, %v4217, %v4218
  %v4220 = vrot.slane %v4179, 5
  %v4221 = vrot.slane %v4180, 5
  %v4222 = vsel %vm3689, %v4220, %v4221
  %v4223 = vrot.slane %v4181, 5
  %v4224 = vrot.slane %v4182, 5
  %v4225 = vsel %vm3689, %v4223, %v4224
  %v4226 = vrot.slane %v4183, 5
  %v4227 = vrot.slane %v4184, 5
  %v4228 = vsel %vm3689, %v4226, %v4227
  %v4229 = vrot.slane %v4185, 5
  %v4230 = vrot.slane %v4186, 5
  %v4231 = vsel %vm3689, %v4229, %v4230
  %v4250 = vadd.f32 %v4147, %v4207
  %v4251 = vadd.f32 %v4148, %v4206
  %v4252 = vadd.f32 %v4149, %v4210
  %v4253 = vadd.f32 %v4150, %v4209
  %v4254 = vadd.f32 %v4151, %v4213
  %v4255 = vadd.f32 %v4152, %v4212
  %v4256 = vadd.f32 %v4153, %v4216
  %v4257 = vadd.f32 %v4154, %v4215
  %v4258 = vadd.f32 %v4155, %v4219
  %v4259 = vadd.f32 %v4156, %v4218
  %v4260 = vadd.f32 %v4157, %v4222
  %v4261 = vadd.f32 %v4158, %v4221
  %v4262 = vadd.f32 %v4159, %v4225
  %v4263 = vadd.f32 %v4160, %v4224
  %v4264 = vadd.f32 %v4161, %v4228
  %v4265 = vadd.f32 %v4162, %v4227
  %v4266 = vadd.f32 %v4163, %v4231
  %v4267 = vadd.f32 %v4164, %v4230
  %v4269 = vlaneseq
  %v4270 = vshrl.u32 %v4269, 7
  %v4271 = vsub.s32 0, %v4270
  %v4272 = vrot.slane %v25, %v4271
  %v4274 = vmul.f32 %v4250, %v4272
  %v4275 = vmul.f32 %v4251, %v4272
  %v4276 = vmul.f32 %v4252, %v4272
  %v4277 = vmul.f32 %v4253, %v4272
  %v4278 = vmul.f32 %v4254, %v4272
  %v4279 = vmul.f32 %v4255, %v4272
  %v4280 = vmul.f32 %v4256, %v4272
  %v4281 = vmul.f32 %v4257, %v4272
  %v4282 = vmul.f32 %v4258, %v4272
  %v4283 = vmul.f32 %v4259, %v4272
  %v4284 = vmul.f32 %v4260, %v4272
  %v4285 = vmul.f32 %v4261, %v4272
  %v4286 = vmul.f32 %v4262, %v4272
  %v4287 = vmul.f32 %v4263, %v4272
  %v4288 = vmul.f32 %v4264, %v4272
  %v4289 = vmul.f32 %v4265, %v4272
  %v4290 = vmul.f32 %v4266, %v4272
  %v4291 = vmul.f32 %v4267, %v4272
  %v4293 = vlaneseq
  %v4294 = vshrl.u32 %v4293, 7
  %v4295 = vsub.s32 0, %v4294
  %v4296 = vrot.slane %v26, %v4295
  %v4298 = vadd.f32 %v4274, %v4296
  %v4299 = vadd.f32 %v4275, %v4296
  %v4300 = vadd.f32 %v4276, %v4296
  %v4301 = vadd.f32 %v4277, %v4296
  %v4302 = vadd.f32 %v4278, %v4296
  %v4303 = vadd.f32 %v4279, %v4296
  %v4304 = vadd.f32 %v4280, %v4296
  %v4305 = vadd.f32 %v4281, %v4296
  %v4306 = vadd.f32 %v4282, %v4296
  %v4307 = vadd.f32 %v4283, %v4296
  %v4308 = vadd.f32 %v4284, %v4296
  %v4309 = vadd.f32 %v4285, %v4296
  %v4310 = vadd.f32 %v4286, %v4296
  %v4311 = vadd.f32 %v4287, %v4296
  %v4312 = vadd.f32 %v4288, %v4296
  %v4313 = vadd.f32 %v4289, %v4296
  %v4314 = vadd.f32 %v4290, %v4296
  %v4315 = vadd.f32 %v4291, %v4296
  %vm4316 = vcmask 261120
  %4317 = vst.msk [vmem:[%s6] sm:$0xff] %vm4316, %v4298
  %vm4318 = vcmask 253952
  %4319 = vst.msk [vmem:[%s6 + $0x8] sm:$0x1] %vm4318, %v4299
  %4320 = vst.msk [vmem:[%s6 + $0x10] sm:$0xff] %vm4316, %v4300
  %4321 = vst.msk [vmem:[%s6 + $0x18] sm:$0x1] %vm4318, %v4301
  %4322 = vst.msk [vmem:[%s6 + $0x20] sm:$0xff] %vm4316, %v4302
  %4323 = vst.msk [vmem:[%s6 + $0x28] sm:$0x1] %vm4318, %v4303
  %4324 = vst.msk [vmem:[%s6 + $0x30] sm:$0xff] %vm4316, %v4304
  %4325 = vst.msk [vmem:[%s6 + $0x38] sm:$0x1] %vm4318, %v4305
  %4326 = vst.msk [vmem:[%s6 + $0x40] sm:$0xff] %vm4316, %v4306
  %4327 = vst.msk [vmem:[%s6 + $0x48] sm:$0x1] %vm4318, %v4307
  %4328 = vst.msk [vmem:[%s6 + $0x50] sm:$0xff] %vm4316, %v4308
  %4329 = vst.msk [vmem:[%s6 + $0x58] sm:$0x1] %vm4318, %v4309
  %4330 = vst.msk [vmem:[%s6 + $0x60] sm:$0xff] %vm4316, %v4310
  %4331 = vst.msk [vmem:[%s6 + $0x68] sm:$0x1] %vm4318, %v4311
  %4332 = vst.msk [vmem:[%s6 + $0x70] sm:$0xff] %vm4316, %v4312
  %4333 = vst.msk [vmem:[%s6 + $0x78] sm:$0x1] %vm4318, %v4313
  %4334 = vst.msk [vmem:[%s6 + $0x80] sm:$0xff] %vm4316, %v4314
  %4335 = vst.msk [vmem:[%s6 + $0x88] sm:$0x1] %vm4318, %v4315
  %s4336 = scalar_lea.vmem %s0, 48
  %v4337 = vld [vmem:[%s4336] sm:$0x3f]
  %v4338 = vld [vmem:[%s4336 + $0x8] sm:$0x3f]
  %v4339 = vld [vmem:[%s4336 + $0x10] sm:$0x3f]
  %v4340 = vld [vmem:[%s4336 + $0x18] sm:$0x3f]
  %v4341 = vld [vmem:[%s4336 + $0x20] sm:$0x3f]
  %v4342 = vld [vmem:[%s4336 + $0x28] sm:$0x3f]
  %4344 = vset.pattern.permute.xlu0 0
  %4345 = vperm.xlu0 %4344, %v4337
  %v4346 = vpop.permute.xlu0 %4345
  %4349 = vset.pattern.permute.xlu0 0
  %4350 = vperm.xlu0 %4349, %v4338
  %v4351 = vpop.permute.xlu0 %4350
  %4354 = vset.pattern.permute.xlu0 0
  %4355 = vperm.xlu0 %4354, %v4339
  %v4356 = vpop.permute.xlu0 %4355
  %4359 = vset.pattern.permute.xlu0 0
  %4360 = vperm.xlu0 %4359, %v4340
  %v4361 = vpop.permute.xlu0 %4360
  %4364 = vset.pattern.permute.xlu0 0
  %4365 = vperm.xlu0 %4364, %v4341
  %v4366 = vpop.permute.xlu0 %4365
  %4369 = vset.pattern.permute.xlu0 0
  %4370 = vperm.xlu0 %4369, %v4342
  %v4371 = vpop.permute.xlu0 %4370
  %v4373 = vmul.f32 %v4346, %v66
  %v4374 = vmul.f32 %v4351, %v66
  %v4375 = vmul.f32 %v4356, %v66
  %v4376 = vmul.f32 %v4361, %v66
  %v4377 = vmul.f32 %v4366, %v66
  %v4378 = vmul.f32 %v4371, %v66
  %4379 = vset.pattern.permute.xlu0 1
  %4380 = vperm.xlu0 %4379, %v4337
  %v4381 = vpop.permute.xlu0 %4380
  %4383 = vset.pattern.permute.xlu0 1
  %4384 = vperm.xlu0 %4383, %v4338
  %v4385 = vpop.permute.xlu0 %4384
  %4387 = vset.pattern.permute.xlu0 1
  %4388 = vperm.xlu0 %4387, %v4339
  %v4389 = vpop.permute.xlu0 %4388
  %4391 = vset.pattern.permute.xlu0 1
  %4392 = vperm.xlu0 %4391, %v4340
  %v4393 = vpop.permute.xlu0 %4392
  %4395 = vset.pattern.permute.xlu0 1
  %4396 = vperm.xlu0 %4395, %v4341
  %v4397 = vpop.permute.xlu0 %4396
  %4399 = vset.pattern.permute.xlu0 1
  %4400 = vperm.xlu0 %4399, %v4342
  %v4401 = vpop.permute.xlu0 %4400
  %v4403 = vmul.f32 %v4381, %v100
  %v4404 = vmul.f32 %v4385, %v100
  %v4405 = vmul.f32 %v4389, %v100
  %v4406 = vmul.f32 %v4393, %v100
  %v4407 = vmul.f32 %v4397, %v100
  %v4408 = vmul.f32 %v4401, %v100
  %v4409 = vadd.f32 %v4373, %v4403
  %v4410 = vadd.f32 %v4374, %v4404
  %v4411 = vadd.f32 %v4375, %v4405
  %v4412 = vadd.f32 %v4376, %v4406
  %v4413 = vadd.f32 %v4377, %v4407
  %v4414 = vadd.f32 %v4378, %v4408
  %4415 = vset.pattern.permute.xlu0 2
  %4416 = vperm.xlu0 %4415, %v4337
  %v4417 = vpop.permute.xlu0 %4416
  %4419 = vset.pattern.permute.xlu0 2
  %4420 = vperm.xlu0 %4419, %v4338
  %v4421 = vpop.permute.xlu0 %4420
  %4423 = vset.pattern.permute.xlu0 2
  %4424 = vperm.xlu0 %4423, %v4339
  %v4425 = vpop.permute.xlu0 %4424
  %4427 = vset.pattern.permute.xlu0 2
  %4428 = vperm.xlu0 %4427, %v4340
  %v4429 = vpop.permute.xlu0 %4428
  %4431 = vset.pattern.permute.xlu0 2
  %4432 = vperm.xlu0 %4431, %v4341
  %v4433 = vpop.permute.xlu0 %4432
  %4435 = vset.pattern.permute.xlu0 2
  %4436 = vperm.xlu0 %4435, %v4342
  %v4437 = vpop.permute.xlu0 %4436
  %v4439 = vmul.f32 %v4417, %v140
  %v4440 = vmul.f32 %v4421, %v140
  %v4441 = vmul.f32 %v4425, %v140
  %v4442 = vmul.f32 %v4429, %v140
  %v4443 = vmul.f32 %v4433, %v140
  %v4444 = vmul.f32 %v4437, %v140
  %v4445 = vadd.f32 %v4409, %v4439
  %v4446 = vadd.f32 %v4410, %v4440
  %v4447 = vadd.f32 %v4411, %v4441
  %v4448 = vadd.f32 %v4412, %v4442
  %v4449 = vadd.f32 %v4413, %v4443
  %v4450 = vadd.f32 %v4414, %v4444
  %4451 = vset.pattern.permute.xlu0 3
  %4452 = vperm.xlu0 %4451, %v4337
  %v4453 = vpop.permute.xlu0 %4452
  %4455 = vset.pattern.permute.xlu0 3
  %4456 = vperm.xlu0 %4455, %v4338
  %v4457 = vpop.permute.xlu0 %4456
  %4459 = vset.pattern.permute.xlu0 3
  %4460 = vperm.xlu0 %4459, %v4339
  %v4461 = vpop.permute.xlu0 %4460
  %4463 = vset.pattern.permute.xlu0 3
  %4464 = vperm.xlu0 %4463, %v4340
  %v4465 = vpop.permute.xlu0 %4464
  %4467 = vset.pattern.permute.xlu0 3
  %4468 = vperm.xlu0 %4467, %v4341
  %v4469 = vpop.permute.xlu0 %4468
  %4471 = vset.pattern.permute.xlu0 3
  %4472 = vperm.xlu0 %4471, %v4342
  %v4473 = vpop.permute.xlu0 %4472
  %v4475 = vmul.f32 %v4453, %v180
  %v4476 = vmul.f32 %v4457, %v180
  %v4477 = vmul.f32 %v4461, %v180
  %v4478 = vmul.f32 %v4465, %v180
  %v4479 = vmul.f32 %v4469, %v180
  %v4480 = vmul.f32 %v4473, %v180
  %v4481 = vadd.f32 %v4445, %v4475
  %v4482 = vadd.f32 %v4446, %v4476
  %v4483 = vadd.f32 %v4447, %v4477
  %v4484 = vadd.f32 %v4448, %v4478
  %v4485 = vadd.f32 %v4449, %v4479
  %v4486 = vadd.f32 %v4450, %v4480
  %v4487 = vadd.f32 %v4481, %v197
  %v4488 = vadd.f32 %v4482, %v197
  %v4489 = vadd.f32 %v4483, %v197
  %v4490 = vadd.f32 %v4484, %v197
  %v4491 = vadd.f32 %v4485, %v197
  %v4492 = vadd.f32 %v4486, %v197
  %s4493 = scalar_lea.vmem %s1, 224
  %v4494 = vld [vmem:[%s4493] sm:$0xff]
  %v4495 = vld [vmem:[%s4493 + $0x8] sm:$0x3f]
  %v4496 = vld [vmem:[%s4493 + $0x10] sm:$0xff]
  %v4497 = vld [vmem:[%s4493 + $0x18] sm:$0x3f]
  %v4498 = vld [vmem:[%s4493 + $0x20] sm:$0xff]
  %v4499 = vld [vmem:[%s4493 + $0x28] sm:$0x3f]
  %v4500 = vld [vmem:[%s4493 + $0x30] sm:$0xff]
  %v4501 = vld [vmem:[%s4493 + $0x38] sm:$0x3f]
  %v4502 = vld [vmem:[%s4493 + $0x40] sm:$0xff]
  %v4503 = vld [vmem:[%s4493 + $0x48] sm:$0x3f]
  %v4504 = vld [vmem:[%s4493 + $0x50] sm:$0xff]
  %v4505 = vld [vmem:[%s4493 + $0x58] sm:$0x3f]
  %v4506 = vld [vmem:[%s4493 + $0x60] sm:$0xff]
  %v4507 = vld [vmem:[%s4493 + $0x68] sm:$0x3f]
  %v4508 = vld [vmem:[%s4493 + $0x70] sm:$0xff]
  %v4509 = vld [vmem:[%s4493 + $0x78] sm:$0x3f]
  %v4510 = vld [vmem:[%s4493 + $0x80] sm:$0xff]
  %v4511 = vld [vmem:[%s4493 + $0x88] sm:$0x3f]
  %v4512 = vld [vmem:[%s4493 + $0x90] sm:$0xff]
  %v4513 = vld [vmem:[%s4493 + $0x98] sm:$0x3f]
  %v4514 = vld [vmem:[%s4493 + $0xa0] sm:$0xff]
  %v4515 = vld [vmem:[%s4493 + $0xa8] sm:$0x3f]
  %v4516 = vld [vmem:[%s4493 + $0xb0] sm:$0xff]
  %v4517 = vld [vmem:[%s4493 + $0xb8] sm:$0x3f]
  %v4518 = vld [vmem:[%s4493 + $0xc0] sm:$0xff]
  %v4519 = vld [vmem:[%s4493 + $0xc8] sm:$0x3f]
  %v4520 = vld [vmem:[%s4493 + $0xd0] sm:$0xff]
  %v4521 = vld [vmem:[%s4493 + $0xd8] sm:$0x3f]
  %4523 = vset.pattern.permute.xlu0 0
  %4524 = vperm.xlu0 %4523, %v4494
  %v4525 = vpop.permute.xlu0 %4524
  %4528 = vset.pattern.permute.xlu0 0
  %4529 = vperm.xlu0 %4528, %v4495
  %v4530 = vpop.permute.xlu0 %4529
  %4533 = vset.pattern.permute.xlu0 0
  %4534 = vperm.xlu0 %4533, %v4496
  %v4535 = vpop.permute.xlu0 %4534
  %4538 = vset.pattern.permute.xlu0 0
  %4539 = vperm.xlu0 %4538, %v4497
  %v4540 = vpop.permute.xlu0 %4539
  %4543 = vset.pattern.permute.xlu0 0
  %4544 = vperm.xlu0 %4543, %v4498
  %v4545 = vpop.permute.xlu0 %4544
  %4548 = vset.pattern.permute.xlu0 0
  %4549 = vperm.xlu0 %4548, %v4499
  %v4550 = vpop.permute.xlu0 %4549
  %4553 = vset.pattern.permute.xlu0 0
  %4554 = vperm.xlu0 %4553, %v4500
  %v4555 = vpop.permute.xlu0 %4554
  %4558 = vset.pattern.permute.xlu0 0
  %4559 = vperm.xlu0 %4558, %v4501
  %v4560 = vpop.permute.xlu0 %4559
  %4563 = vset.pattern.permute.xlu0 0
  %4564 = vperm.xlu0 %4563, %v4502
  %v4565 = vpop.permute.xlu0 %4564
  %4568 = vset.pattern.permute.xlu0 0
  %4569 = vperm.xlu0 %4568, %v4503
  %v4570 = vpop.permute.xlu0 %4569
  %4573 = vset.pattern.permute.xlu0 0
  %4574 = vperm.xlu0 %4573, %v4504
  %v4575 = vpop.permute.xlu0 %4574
  %4578 = vset.pattern.permute.xlu0 0
  %4579 = vperm.xlu0 %4578, %v4505
  %v4580 = vpop.permute.xlu0 %4579
  %4583 = vset.pattern.permute.xlu0 0
  %4584 = vperm.xlu0 %4583, %v4506
  %v4585 = vpop.permute.xlu0 %4584
  %4588 = vset.pattern.permute.xlu0 0
  %4589 = vperm.xlu0 %4588, %v4507
  %v4590 = vpop.permute.xlu0 %4589
  %4593 = vset.pattern.permute.xlu0 0
  %4594 = vperm.xlu0 %4593, %v4508
  %v4595 = vpop.permute.xlu0 %4594
  %4598 = vset.pattern.permute.xlu0 0
  %4599 = vperm.xlu0 %4598, %v4509
  %v4600 = vpop.permute.xlu0 %4599
  %4603 = vset.pattern.permute.xlu0 0
  %4604 = vperm.xlu0 %4603, %v4510
  %v4605 = vpop.permute.xlu0 %4604
  %4608 = vset.pattern.permute.xlu0 0
  %4609 = vperm.xlu0 %4608, %v4511
  %v4610 = vpop.permute.xlu0 %4609
  %4613 = vset.pattern.permute.xlu0 0
  %4614 = vperm.xlu0 %4613, %v4512
  %v4615 = vpop.permute.xlu0 %4614
  %4618 = vset.pattern.permute.xlu0 0
  %4619 = vperm.xlu0 %4618, %v4513
  %v4620 = vpop.permute.xlu0 %4619
  %4623 = vset.pattern.permute.xlu0 0
  %4624 = vperm.xlu0 %4623, %v4514
  %v4625 = vpop.permute.xlu0 %4624
  %4628 = vset.pattern.permute.xlu0 0
  %4629 = vperm.xlu0 %4628, %v4515
  %v4630 = vpop.permute.xlu0 %4629
  %4633 = vset.pattern.permute.xlu0 0
  %4634 = vperm.xlu0 %4633, %v4516
  %v4635 = vpop.permute.xlu0 %4634
  %4638 = vset.pattern.permute.xlu0 0
  %4639 = vperm.xlu0 %4638, %v4517
  %v4640 = vpop.permute.xlu0 %4639
  %4643 = vset.pattern.permute.xlu0 0
  %4644 = vperm.xlu0 %4643, %v4518
  %v4645 = vpop.permute.xlu0 %4644
  %4648 = vset.pattern.permute.xlu0 0
  %4649 = vperm.xlu0 %4648, %v4519
  %v4650 = vpop.permute.xlu0 %4649
  %4653 = vset.pattern.permute.xlu0 0
  %4654 = vperm.xlu0 %4653, %v4520
  %v4655 = vpop.permute.xlu0 %4654
  %4658 = vset.pattern.permute.xlu0 0
  %4659 = vperm.xlu0 %4658, %v4521
  %v4660 = vpop.permute.xlu0 %4659
  %v4662 = vmul.f32 %v4525, %v66
  %v4663 = vmul.f32 %v4530, %v66
  %v4664 = vmul.f32 %v4535, %v66
  %v4665 = vmul.f32 %v4540, %v66
  %v4666 = vmul.f32 %v4545, %v66
  %v4667 = vmul.f32 %v4550, %v66
  %v4668 = vmul.f32 %v4555, %v66
  %v4669 = vmul.f32 %v4560, %v66
  %v4670 = vmul.f32 %v4565, %v66
  %v4671 = vmul.f32 %v4570, %v66
  %v4672 = vmul.f32 %v4575, %v66
  %v4673 = vmul.f32 %v4580, %v66
  %v4674 = vmul.f32 %v4585, %v66
  %v4675 = vmul.f32 %v4590, %v66
  %v4676 = vmul.f32 %v4595, %v66
  %v4677 = vmul.f32 %v4600, %v66
  %v4678 = vmul.f32 %v4605, %v66
  %v4679 = vmul.f32 %v4610, %v66
  %v4680 = vmul.f32 %v4615, %v66
  %v4681 = vmul.f32 %v4620, %v66
  %v4682 = vmul.f32 %v4625, %v66
  %v4683 = vmul.f32 %v4630, %v66
  %v4684 = vmul.f32 %v4635, %v66
  %v4685 = vmul.f32 %v4640, %v66
  %v4686 = vmul.f32 %v4645, %v66
  %v4687 = vmul.f32 %v4650, %v66
  %v4688 = vmul.f32 %v4655, %v66
  %v4689 = vmul.f32 %v4660, %v66
  %4690 = vset.pattern.permute.xlu0 1
  %4691 = vperm.xlu0 %4690, %v4494
  %v4692 = vpop.permute.xlu0 %4691
  %4694 = vset.pattern.permute.xlu0 1
  %4695 = vperm.xlu0 %4694, %v4495
  %v4696 = vpop.permute.xlu0 %4695
  %4698 = vset.pattern.permute.xlu0 1
  %4699 = vperm.xlu0 %4698, %v4496
  %v4700 = vpop.permute.xlu0 %4699
  %4702 = vset.pattern.permute.xlu0 1
  %4703 = vperm.xlu0 %4702, %v4497
  %v4704 = vpop.permute.xlu0 %4703
  %4706 = vset.pattern.permute.xlu0 1
  %4707 = vperm.xlu0 %4706, %v4498
  %v4708 = vpop.permute.xlu0 %4707
  %4710 = vset.pattern.permute.xlu0 1
  %4711 = vperm.xlu0 %4710, %v4499
  %v4712 = vpop.permute.xlu0 %4711
  %4714 = vset.pattern.permute.xlu0 1
  %4715 = vperm.xlu0 %4714, %v4500
  %v4716 = vpop.permute.xlu0 %4715
  %4718 = vset.pattern.permute.xlu0 1
  %4719 = vperm.xlu0 %4718, %v4501
  %v4720 = vpop.permute.xlu0 %4719
  %4722 = vset.pattern.permute.xlu0 1
  %4723 = vperm.xlu0 %4722, %v4502
  %v4724 = vpop.permute.xlu0 %4723
  %4726 = vset.pattern.permute.xlu0 1
  %4727 = vperm.xlu0 %4726, %v4503
  %v4728 = vpop.permute.xlu0 %4727
  %4730 = vset.pattern.permute.xlu0 1
  %4731 = vperm.xlu0 %4730, %v4504
  %v4732 = vpop.permute.xlu0 %4731
  %4734 = vset.pattern.permute.xlu0 1
  %4735 = vperm.xlu0 %4734, %v4505
  %v4736 = vpop.permute.xlu0 %4735
  %4738 = vset.pattern.permute.xlu0 1
  %4739 = vperm.xlu0 %4738, %v4506
  %v4740 = vpop.permute.xlu0 %4739
  %4742 = vset.pattern.permute.xlu0 1
  %4743 = vperm.xlu0 %4742, %v4507
  %v4744 = vpop.permute.xlu0 %4743
  %4746 = vset.pattern.permute.xlu0 1
  %4747 = vperm.xlu0 %4746, %v4508
  %v4748 = vpop.permute.xlu0 %4747
  %4750 = vset.pattern.permute.xlu0 1
  %4751 = vperm.xlu0 %4750, %v4509
  %v4752 = vpop.permute.xlu0 %4751
  %4754 = vset.pattern.permute.xlu0 1
  %4755 = vperm.xlu0 %4754, %v4510
  %v4756 = vpop.permute.xlu0 %4755
  %4758 = vset.pattern.permute.xlu0 1
  %4759 = vperm.xlu0 %4758, %v4511
  %v4760 = vpop.permute.xlu0 %4759
  %4762 = vset.pattern.permute.xlu0 1
  %4763 = vperm.xlu0 %4762, %v4512
  %v4764 = vpop.permute.xlu0 %4763
  %4766 = vset.pattern.permute.xlu0 1
  %4767 = vperm.xlu0 %4766, %v4513
  %v4768 = vpop.permute.xlu0 %4767
  %4770 = vset.pattern.permute.xlu0 1
  %4771 = vperm.xlu0 %4770, %v4514
  %v4772 = vpop.permute.xlu0 %4771
  %4774 = vset.pattern.permute.xlu0 1
  %4775 = vperm.xlu0 %4774, %v4515
  %v4776 = vpop.permute.xlu0 %4775
  %4778 = vset.pattern.permute.xlu0 1
  %4779 = vperm.xlu0 %4778, %v4516
  %v4780 = vpop.permute.xlu0 %4779
  %4782 = vset.pattern.permute.xlu0 1
  %4783 = vperm.xlu0 %4782, %v4517
  %v4784 = vpop.permute.xlu0 %4783
  %4786 = vset.pattern.permute.xlu0 1
  %4787 = vperm.xlu0 %4786, %v4518
  %v4788 = vpop.permute.xlu0 %4787
  %4790 = vset.pattern.permute.xlu0 1
  %4791 = vperm.xlu0 %4790, %v4519
  %v4792 = vpop.permute.xlu0 %4791
  %4794 = vset.pattern.permute.xlu0 1
  %4795 = vperm.xlu0 %4794, %v4520
  %v4796 = vpop.permute.xlu0 %4795
  %4798 = vset.pattern.permute.xlu0 1
  %4799 = vperm.xlu0 %4798, %v4521
  %v4800 = vpop.permute.xlu0 %4799
  %v4802 = vmul.f32 %v4692, %v100
  %v4803 = vmul.f32 %v4696, %v100
  %v4804 = vmul.f32 %v4700, %v100
  %v4805 = vmul.f32 %v4704, %v100
  %v4806 = vmul.f32 %v4708, %v100
  %v4807 = vmul.f32 %v4712, %v100
  %v4808 = vmul.f32 %v4716, %v100
  %v4809 = vmul.f32 %v4720, %v100
  %v4810 = vmul.f32 %v4724, %v100
  %v4811 = vmul.f32 %v4728, %v100
  %v4812 = vmul.f32 %v4732, %v100
  %v4813 = vmul.f32 %v4736, %v100
  %v4814 = vmul.f32 %v4740, %v100
  %v4815 = vmul.f32 %v4744, %v100
  %v4816 = vmul.f32 %v4748, %v100
  %v4817 = vmul.f32 %v4752, %v100
  %v4818 = vmul.f32 %v4756, %v100
  %v4819 = vmul.f32 %v4760, %v100
  %v4820 = vmul.f32 %v4764, %v100
  %v4821 = vmul.f32 %v4768, %v100
  %v4822 = vmul.f32 %v4772, %v100
  %v4823 = vmul.f32 %v4776, %v100
  %v4824 = vmul.f32 %v4780, %v100
  %v4825 = vmul.f32 %v4784, %v100
  %v4826 = vmul.f32 %v4788, %v100
  %v4827 = vmul.f32 %v4792, %v100
  %v4828 = vmul.f32 %v4796, %v100
  %v4829 = vmul.f32 %v4800, %v100
  %v4830 = vadd.f32 %v4662, %v4802
  %v4831 = vadd.f32 %v4663, %v4803
  %v4832 = vadd.f32 %v4664, %v4804
  %v4833 = vadd.f32 %v4665, %v4805
  %v4834 = vadd.f32 %v4666, %v4806
  %v4835 = vadd.f32 %v4667, %v4807
  %v4836 = vadd.f32 %v4668, %v4808
  %v4837 = vadd.f32 %v4669, %v4809
  %v4838 = vadd.f32 %v4670, %v4810
  %v4839 = vadd.f32 %v4671, %v4811
  %v4840 = vadd.f32 %v4672, %v4812
  %v4841 = vadd.f32 %v4673, %v4813
  %v4842 = vadd.f32 %v4674, %v4814
  %v4843 = vadd.f32 %v4675, %v4815
  %v4844 = vadd.f32 %v4676, %v4816
  %v4845 = vadd.f32 %v4677, %v4817
  %v4846 = vadd.f32 %v4678, %v4818
  %v4847 = vadd.f32 %v4679, %v4819
  %v4848 = vadd.f32 %v4680, %v4820
  %v4849 = vadd.f32 %v4681, %v4821
  %v4850 = vadd.f32 %v4682, %v4822
  %v4851 = vadd.f32 %v4683, %v4823
  %v4852 = vadd.f32 %v4684, %v4824
  %v4853 = vadd.f32 %v4685, %v4825
  %v4854 = vadd.f32 %v4686, %v4826
  %v4855 = vadd.f32 %v4687, %v4827
  %v4856 = vadd.f32 %v4688, %v4828
  %v4857 = vadd.f32 %v4689, %v4829
  %4858 = vset.pattern.permute.xlu0 2
  %4859 = vperm.xlu0 %4858, %v4494
  %v4860 = vpop.permute.xlu0 %4859
  %4862 = vset.pattern.permute.xlu0 2
  %4863 = vperm.xlu0 %4862, %v4495
  %v4864 = vpop.permute.xlu0 %4863
  %4866 = vset.pattern.permute.xlu0 2
  %4867 = vperm.xlu0 %4866, %v4496
  %v4868 = vpop.permute.xlu0 %4867
  %4870 = vset.pattern.permute.xlu0 2
  %4871 = vperm.xlu0 %4870, %v4497
  %v4872 = vpop.permute.xlu0 %4871
  %4874 = vset.pattern.permute.xlu0 2
  %4875 = vperm.xlu0 %4874, %v4498
  %v4876 = vpop.permute.xlu0 %4875
  %4878 = vset.pattern.permute.xlu0 2
  %4879 = vperm.xlu0 %4878, %v4499
  %v4880 = vpop.permute.xlu0 %4879
  %4882 = vset.pattern.permute.xlu0 2
  %4883 = vperm.xlu0 %4882, %v4500
  %v4884 = vpop.permute.xlu0 %4883
  %4886 = vset.pattern.permute.xlu0 2
  %4887 = vperm.xlu0 %4886, %v4501
  %v4888 = vpop.permute.xlu0 %4887
  %4890 = vset.pattern.permute.xlu0 2
  %4891 = vperm.xlu0 %4890, %v4502
  %v4892 = vpop.permute.xlu0 %4891
  %4894 = vset.pattern.permute.xlu0 2
  %4895 = vperm.xlu0 %4894, %v4503
  %v4896 = vpop.permute.xlu0 %4895
  %4898 = vset.pattern.permute.xlu0 2
  %4899 = vperm.xlu0 %4898, %v4504
  %v4900 = vpop.permute.xlu0 %4899
  %4902 = vset.pattern.permute.xlu0 2
  %4903 = vperm.xlu0 %4902, %v4505
  %v4904 = vpop.permute.xlu0 %4903
  %4906 = vset.pattern.permute.xlu0 2
  %4907 = vperm.xlu0 %4906, %v4506
  %v4908 = vpop.permute.xlu0 %4907
  %4910 = vset.pattern.permute.xlu0 2
  %4911 = vperm.xlu0 %4910, %v4507
  %v4912 = vpop.permute.xlu0 %4911
  %4914 = vset.pattern.permute.xlu0 2
  %4915 = vperm.xlu0 %4914, %v4508
  %v4916 = vpop.permute.xlu0 %4915
  %4918 = vset.pattern.permute.xlu0 2
  %4919 = vperm.xlu0 %4918, %v4509
  %v4920 = vpop.permute.xlu0 %4919
  %4922 = vset.pattern.permute.xlu0 2
  %4923 = vperm.xlu0 %4922, %v4510
  %v4924 = vpop.permute.xlu0 %4923
  %4926 = vset.pattern.permute.xlu0 2
  %4927 = vperm.xlu0 %4926, %v4511
  %v4928 = vpop.permute.xlu0 %4927
  %4930 = vset.pattern.permute.xlu0 2
  %4931 = vperm.xlu0 %4930, %v4512
  %v4932 = vpop.permute.xlu0 %4931
  %4934 = vset.pattern.permute.xlu0 2
  %4935 = vperm.xlu0 %4934, %v4513
  %v4936 = vpop.permute.xlu0 %4935
  %4938 = vset.pattern.permute.xlu0 2
  %4939 = vperm.xlu0 %4938, %v4514
  %v4940 = vpop.permute.xlu0 %4939
  %4942 = vset.pattern.permute.xlu0 2
  %4943 = vperm.xlu0 %4942, %v4515
  %v4944 = vpop.permute.xlu0 %4943
  %4946 = vset.pattern.permute.xlu0 2
  %4947 = vperm.xlu0 %4946, %v4516
  %v4948 = vpop.permute.xlu0 %4947
  %4950 = vset.pattern.permute.xlu0 2
  %4951 = vperm.xlu0 %4950, %v4517
  %v4952 = vpop.permute.xlu0 %4951
  %4954 = vset.pattern.permute.xlu0 2
  %4955 = vperm.xlu0 %4954, %v4518
  %v4956 = vpop.permute.xlu0 %4955
  %4958 = vset.pattern.permute.xlu0 2
  %4959 = vperm.xlu0 %4958, %v4519
  %v4960 = vpop.permute.xlu0 %4959
  %4962 = vset.pattern.permute.xlu0 2
  %4963 = vperm.xlu0 %4962, %v4520
  %v4964 = vpop.permute.xlu0 %4963
  %4966 = vset.pattern.permute.xlu0 2
  %4967 = vperm.xlu0 %4966, %v4521
  %v4968 = vpop.permute.xlu0 %4967
  %v4970 = vmul.f32 %v4860, %v140
  %v4971 = vmul.f32 %v4864, %v140
  %v4972 = vmul.f32 %v4868, %v140
  %v4973 = vmul.f32 %v4872, %v140
  %v4974 = vmul.f32 %v4876, %v140
  %v4975 = vmul.f32 %v4880, %v140
  %v4976 = vmul.f32 %v4884, %v140
  %v4977 = vmul.f32 %v4888, %v140
  %v4978 = vmul.f32 %v4892, %v140
  %v4979 = vmul.f32 %v4896, %v140
  %v4980 = vmul.f32 %v4900, %v140
  %v4981 = vmul.f32 %v4904, %v140
  %v4982 = vmul.f32 %v4908, %v140
  %v4983 = vmul.f32 %v4912, %v140
  %v4984 = vmul.f32 %v4916, %v140
  %v4985 = vmul.f32 %v4920, %v140
  %v4986 = vmul.f32 %v4924, %v140
  %v4987 = vmul.f32 %v4928, %v140
  %v4988 = vmul.f32 %v4932, %v140
  %v4989 = vmul.f32 %v4936, %v140
  %v4990 = vmul.f32 %v4940, %v140
  %v4991 = vmul.f32 %v4944, %v140
  %v4992 = vmul.f32 %v4948, %v140
  %v4993 = vmul.f32 %v4952, %v140
  %v4994 = vmul.f32 %v4956, %v140
  %v4995 = vmul.f32 %v4960, %v140
  %v4996 = vmul.f32 %v4964, %v140
  %v4997 = vmul.f32 %v4968, %v140
  %v4998 = vadd.f32 %v4830, %v4970
  %v4999 = vadd.f32 %v4831, %v4971
  %v5000 = vadd.f32 %v4832, %v4972
  %v5001 = vadd.f32 %v4833, %v4973
  %v5002 = vadd.f32 %v4834, %v4974
  %v5003 = vadd.f32 %v4835, %v4975
  %v5004 = vadd.f32 %v4836, %v4976
  %v5005 = vadd.f32 %v4837, %v4977
  %v5006 = vadd.f32 %v4838, %v4978
  %v5007 = vadd.f32 %v4839, %v4979
  %v5008 = vadd.f32 %v4840, %v4980
  %v5009 = vadd.f32 %v4841, %v4981
  %v5010 = vadd.f32 %v4842, %v4982
  %v5011 = vadd.f32 %v4843, %v4983
  %v5012 = vadd.f32 %v4844, %v4984
  %v5013 = vadd.f32 %v4845, %v4985
  %v5014 = vadd.f32 %v4846, %v4986
  %v5015 = vadd.f32 %v4847, %v4987
  %v5016 = vadd.f32 %v4848, %v4988
  %v5017 = vadd.f32 %v4849, %v4989
  %v5018 = vadd.f32 %v4850, %v4990
  %v5019 = vadd.f32 %v4851, %v4991
  %v5020 = vadd.f32 %v4852, %v4992
  %v5021 = vadd.f32 %v4853, %v4993
  %v5022 = vadd.f32 %v4854, %v4994
  %v5023 = vadd.f32 %v4855, %v4995
  %v5024 = vadd.f32 %v4856, %v4996
  %v5025 = vadd.f32 %v4857, %v4997
  %5026 = vset.pattern.permute.xlu0 3
  %5027 = vperm.xlu0 %5026, %v4494
  %v5028 = vpop.permute.xlu0 %5027
  %5030 = vset.pattern.permute.xlu0 3
  %5031 = vperm.xlu0 %5030, %v4495
  %v5032 = vpop.permute.xlu0 %5031
  %5034 = vset.pattern.permute.xlu0 3
  %5035 = vperm.xlu0 %5034, %v4496
  %v5036 = vpop.permute.xlu0 %5035
  %5038 = vset.pattern.permute.xlu0 3
  %5039 = vperm.xlu0 %5038, %v4497
  %v5040 = vpop.permute.xlu0 %5039
  %5042 = vset.pattern.permute.xlu0 3
  %5043 = vperm.xlu0 %5042, %v4498
  %v5044 = vpop.permute.xlu0 %5043
  %5046 = vset.pattern.permute.xlu0 3
  %5047 = vperm.xlu0 %5046, %v4499
  %v5048 = vpop.permute.xlu0 %5047
  %5050 = vset.pattern.permute.xlu0 3
  %5051 = vperm.xlu0 %5050, %v4500
  %v5052 = vpop.permute.xlu0 %5051
  %5054 = vset.pattern.permute.xlu0 3
  %5055 = vperm.xlu0 %5054, %v4501
  %v5056 = vpop.permute.xlu0 %5055
  %5058 = vset.pattern.permute.xlu0 3
  %5059 = vperm.xlu0 %5058, %v4502
  %v5060 = vpop.permute.xlu0 %5059
  %5062 = vset.pattern.permute.xlu0 3
  %5063 = vperm.xlu0 %5062, %v4503
  %v5064 = vpop.permute.xlu0 %5063
  %5066 = vset.pattern.permute.xlu0 3
  %5067 = vperm.xlu0 %5066, %v4504
  %v5068 = vpop.permute.xlu0 %5067
  %5070 = vset.pattern.permute.xlu0 3
  %5071 = vperm.xlu0 %5070, %v4505
  %v5072 = vpop.permute.xlu0 %5071
  %5074 = vset.pattern.permute.xlu0 3
  %5075 = vperm.xlu0 %5074, %v4506
  %v5076 = vpop.permute.xlu0 %5075
  %5078 = vset.pattern.permute.xlu0 3
  %5079 = vperm.xlu0 %5078, %v4507
  %v5080 = vpop.permute.xlu0 %5079
  %5082 = vset.pattern.permute.xlu0 3
  %5083 = vperm.xlu0 %5082, %v4508
  %v5084 = vpop.permute.xlu0 %5083
  %5086 = vset.pattern.permute.xlu0 3
  %5087 = vperm.xlu0 %5086, %v4509
  %v5088 = vpop.permute.xlu0 %5087
  %5090 = vset.pattern.permute.xlu0 3
  %5091 = vperm.xlu0 %5090, %v4510
  %v5092 = vpop.permute.xlu0 %5091
  %5094 = vset.pattern.permute.xlu0 3
  %5095 = vperm.xlu0 %5094, %v4511
  %v5096 = vpop.permute.xlu0 %5095
  %5098 = vset.pattern.permute.xlu0 3
  %5099 = vperm.xlu0 %5098, %v4512
  %v5100 = vpop.permute.xlu0 %5099
  %5102 = vset.pattern.permute.xlu0 3
  %5103 = vperm.xlu0 %5102, %v4513
  %v5104 = vpop.permute.xlu0 %5103
  %5106 = vset.pattern.permute.xlu0 3
  %5107 = vperm.xlu0 %5106, %v4514
  %v5108 = vpop.permute.xlu0 %5107
  %5110 = vset.pattern.permute.xlu0 3
  %5111 = vperm.xlu0 %5110, %v4515
  %v5112 = vpop.permute.xlu0 %5111
  %5114 = vset.pattern.permute.xlu0 3
  %5115 = vperm.xlu0 %5114, %v4516
  %v5116 = vpop.permute.xlu0 %5115
  %5118 = vset.pattern.permute.xlu0 3
  %5119 = vperm.xlu0 %5118, %v4517
  %v5120 = vpop.permute.xlu0 %5119
  %5122 = vset.pattern.permute.xlu0 3
  %5123 = vperm.xlu0 %5122, %v4518
  %v5124 = vpop.permute.xlu0 %5123
  %5126 = vset.pattern.permute.xlu0 3
  %5127 = vperm.xlu0 %5126, %v4519
  %v5128 = vpop.permute.xlu0 %5127
  %5130 = vset.pattern.permute.xlu0 3
  %5131 = vperm.xlu0 %5130, %v4520
  %v5132 = vpop.permute.xlu0 %5131
  %5134 = vset.pattern.permute.xlu0 3
  %5135 = vperm.xlu0 %5134, %v4521
  %v5136 = vpop.permute.xlu0 %5135
  %v5138 = vmul.f32 %v5028, %v180
  %v5139 = vmul.f32 %v5032, %v180
  %v5140 = vmul.f32 %v5036, %v180
  %v5141 = vmul.f32 %v5040, %v180
  %v5142 = vmul.f32 %v5044, %v180
  %v5143 = vmul.f32 %v5048, %v180
  %v5144 = vmul.f32 %v5052, %v180
  %v5145 = vmul.f32 %v5056, %v180
  %v5146 = vmul.f32 %v5060, %v180
  %v5147 = vmul.f32 %v5064, %v180
  %v5148 = vmul.f32 %v5068, %v180
  %v5149 = vmul.f32 %v5072, %v180
  %v5150 = vmul.f32 %v5076, %v180
  %v5151 = vmul.f32 %v5080, %v180
  %v5152 = vmul.f32 %v5084, %v180
  %v5153 = vmul.f32 %v5088, %v180
  %v5154 = vmul.f32 %v5092, %v180
  %v5155 = vmul.f32 %v5096, %v180
  %v5156 = vmul.f32 %v5100, %v180
  %v5157 = vmul.f32 %v5104, %v180
  %v5158 = vmul.f32 %v5108, %v180
  %v5159 = vmul.f32 %v5112, %v180
  %v5160 = vmul.f32 %v5116, %v180
  %v5161 = vmul.f32 %v5120, %v180
  %v5162 = vmul.f32 %v5124, %v180
  %v5163 = vmul.f32 %v5128, %v180
  %v5164 = vmul.f32 %v5132, %v180
  %v5165 = vmul.f32 %v5136, %v180
  %v5166 = vadd.f32 %v4998, %v5138
  %v5167 = vadd.f32 %v4999, %v5139
  %v5168 = vadd.f32 %v5000, %v5140
  %v5169 = vadd.f32 %v5001, %v5141
  %v5170 = vadd.f32 %v5002, %v5142
  %v5171 = vadd.f32 %v5003, %v5143
  %v5172 = vadd.f32 %v5004, %v5144
  %v5173 = vadd.f32 %v5005, %v5145
  %v5174 = vadd.f32 %v5006, %v5146
  %v5175 = vadd.f32 %v5007, %v5147
  %v5176 = vadd.f32 %v5008, %v5148
  %v5177 = vadd.f32 %v5009, %v5149
  %v5178 = vadd.f32 %v5010, %v5150
  %v5179 = vadd.f32 %v5011, %v5151
  %v5180 = vadd.f32 %v5012, %v5152
  %v5181 = vadd.f32 %v5013, %v5153
  %v5182 = vadd.f32 %v5014, %v5154
  %v5183 = vadd.f32 %v5015, %v5155
  %v5184 = vadd.f32 %v5016, %v5156
  %v5185 = vadd.f32 %v5017, %v5157
  %v5186 = vadd.f32 %v5018, %v5158
  %v5187 = vadd.f32 %v5019, %v5159
  %v5188 = vadd.f32 %v5020, %v5160
  %v5189 = vadd.f32 %v5021, %v5161
  %v5190 = vadd.f32 %v5022, %v5162
  %v5191 = vadd.f32 %v5023, %v5163
  %v5192 = vadd.f32 %v5024, %v5164
  %v5193 = vadd.f32 %v5025, %v5165
  %v5194 = vadd.f32 %v5166, %v197
  %v5195 = vadd.f32 %v5167, %v197
  %v5196 = vadd.f32 %v5168, %v197
  %v5197 = vadd.f32 %v5169, %v197
  %v5198 = vadd.f32 %v5170, %v197
  %v5199 = vadd.f32 %v5171, %v197
  %v5200 = vadd.f32 %v5172, %v197
  %v5201 = vadd.f32 %v5173, %v197
  %v5202 = vadd.f32 %v5174, %v197
  %v5203 = vadd.f32 %v5175, %v197
  %v5204 = vadd.f32 %v5176, %v197
  %v5205 = vadd.f32 %v5177, %v197
  %v5206 = vadd.f32 %v5178, %v197
  %v5207 = vadd.f32 %v5179, %v197
  %v5208 = vadd.f32 %v5180, %v197
  %v5209 = vadd.f32 %v5181, %v197
  %v5210 = vadd.f32 %v5182, %v197
  %v5211 = vadd.f32 %v5183, %v197
  %v5212 = vadd.f32 %v5184, %v197
  %v5213 = vadd.f32 %v5185, %v197
  %v5214 = vadd.f32 %v5186, %v197
  %v5215 = vadd.f32 %v5187, %v197
  %v5216 = vadd.f32 %v5188, %v197
  %v5217 = vadd.f32 %v5189, %v197
  %v5218 = vadd.f32 %v5190, %v197
  %v5219 = vadd.f32 %v5191, %v197
  %v5220 = vadd.f32 %v5192, %v197
  %v5221 = vadd.f32 %v5193, %v197
  %v5222 = vlaneseq
  %v5223 = vshrl.u32 %v5222, 7
  %v5224 = vsub.s32 0, %v5223
  %v5225 = vrot.slane %v4487, %v5224
  %v5226 = vmul.f32 %v5194, %v5225
  %v5227 = vmul.f32 %v5195, %v5225
  %v5228 = vmul.f32 %v5196, %v5225
  %v5229 = vmul.f32 %v5197, %v5225
  %v5230 = vmul.f32 %v5198, %v5225
  %v5231 = vmul.f32 %v5199, %v5225
  %v5232 = vmul.f32 %v5200, %v5225
  %v5233 = vmul.f32 %v5201, %v5225
  %v5234 = vmul.f32 %v5202, %v5225
  %v5235 = vmul.f32 %v5203, %v5225
  %v5236 = vmul.f32 %v5204, %v5225
  %v5237 = vmul.f32 %v5205, %v5225
  %v5238 = vmul.f32 %v5206, %v5225
  %v5239 = vmul.f32 %v5207, %v5225
  %v5240 = vmul.f32 %v5208, %v5225
  %v5241 = vmul.f32 %v5209, %v5225
  %v5242 = vmul.f32 %v5210, %v5225
  %v5243 = vmul.f32 %v5211, %v5225
  %v5244 = vadd.f32 %v5226, 0.0
  %v5245 = vadd.f32 %v5227, 0.0
  %v5246 = vadd.f32 %v5228, 0.0
  %v5247 = vadd.f32 %v5229, 0.0
  %v5248 = vadd.f32 %v5230, 0.0
  %v5249 = vadd.f32 %v5231, 0.0
  %v5250 = vadd.f32 %v5232, 0.0
  %v5251 = vadd.f32 %v5233, 0.0
  %v5252 = vadd.f32 %v5234, 0.0
  %v5253 = vadd.f32 %v5235, 0.0
  %v5254 = vadd.f32 %v5236, 0.0
  %v5255 = vadd.f32 %v5237, 0.0
  %v5256 = vadd.f32 %v5238, 0.0
  %v5257 = vadd.f32 %v5239, 0.0
  %v5258 = vadd.f32 %v5240, 0.0
  %v5259 = vadd.f32 %v5241, 0.0
  %v5260 = vadd.f32 %v5242, 0.0
  %v5261 = vadd.f32 %v5243, 0.0
  %v5262 = vlaneseq
  %v5263 = vshrl.u32 %v5262, 7
  %v5264 = vsub.s32 0, %v5263
  %v5265 = vrot.slane %v4488, %v5264
  %v5266 = vmul.f32 %v5196, %v5265
  %v5267 = vmul.f32 %v5197, %v5265
  %v5268 = vmul.f32 %v5198, %v5265
  %v5269 = vmul.f32 %v5199, %v5265
  %v5270 = vmul.f32 %v5200, %v5265
  %v5271 = vmul.f32 %v5201, %v5265
  %v5272 = vmul.f32 %v5202, %v5265
  %v5273 = vmul.f32 %v5203, %v5265
  %v5274 = vmul.f32 %v5204, %v5265
  %v5275 = vmul.f32 %v5205, %v5265
  %v5276 = vmul.f32 %v5206, %v5265
  %v5277 = vmul.f32 %v5207, %v5265
  %v5278 = vmul.f32 %v5208, %v5265
  %v5279 = vmul.f32 %v5209, %v5265
  %v5280 = vmul.f32 %v5210, %v5265
  %v5281 = vmul.f32 %v5211, %v5265
  %v5282 = vmul.f32 %v5212, %v5265
  %v5283 = vmul.f32 %v5213, %v5265
  %v5284 = vadd.f32 %v5244, %v5266
  %v5285 = vadd.f32 %v5245, %v5267
  %v5286 = vadd.f32 %v5246, %v5268
  %v5287 = vadd.f32 %v5247, %v5269
  %v5288 = vadd.f32 %v5248, %v5270
  %v5289 = vadd.f32 %v5249, %v5271
  %v5290 = vadd.f32 %v5250, %v5272
  %v5291 = vadd.f32 %v5251, %v5273
  %v5292 = vadd.f32 %v5252, %v5274
  %v5293 = vadd.f32 %v5253, %v5275
  %v5294 = vadd.f32 %v5254, %v5276
  %v5295 = vadd.f32 %v5255, %v5277
  %v5296 = vadd.f32 %v5256, %v5278
  %v5297 = vadd.f32 %v5257, %v5279
  %v5298 = vadd.f32 %v5258, %v5280
  %v5299 = vadd.f32 %v5259, %v5281
  %v5300 = vadd.f32 %v5260, %v5282
  %v5301 = vadd.f32 %v5261, %v5283
  %v5302 = vlaneseq
  %v5303 = vshrl.u32 %v5302, 7
  %v5304 = vsub.s32 0, %v5303
  %v5305 = vrot.slane %v4489, %v5304
  %v5306 = vmul.f32 %v5198, %v5305
  %v5307 = vmul.f32 %v5199, %v5305
  %v5308 = vmul.f32 %v5200, %v5305
  %v5309 = vmul.f32 %v5201, %v5305
  %v5310 = vmul.f32 %v5202, %v5305
  %v5311 = vmul.f32 %v5203, %v5305
  %v5312 = vmul.f32 %v5204, %v5305
  %v5313 = vmul.f32 %v5205, %v5305
  %v5314 = vmul.f32 %v5206, %v5305
  %v5315 = vmul.f32 %v5207, %v5305
  %v5316 = vmul.f32 %v5208, %v5305
  %v5317 = vmul.f32 %v5209, %v5305
  %v5318 = vmul.f32 %v5210, %v5305
  %v5319 = vmul.f32 %v5211, %v5305
  %v5320 = vmul.f32 %v5212, %v5305
  %v5321 = vmul.f32 %v5213, %v5305
  %v5322 = vmul.f32 %v5214, %v5305
  %v5323 = vmul.f32 %v5215, %v5305
  %v5324 = vadd.f32 %v5284, %v5306
  %v5325 = vadd.f32 %v5285, %v5307
  %v5326 = vadd.f32 %v5286, %v5308
  %v5327 = vadd.f32 %v5287, %v5309
  %v5328 = vadd.f32 %v5288, %v5310
  %v5329 = vadd.f32 %v5289, %v5311
  %v5330 = vadd.f32 %v5290, %v5312
  %v5331 = vadd.f32 %v5291, %v5313
  %v5332 = vadd.f32 %v5292, %v5314
  %v5333 = vadd.f32 %v5293, %v5315
  %v5334 = vadd.f32 %v5294, %v5316
  %v5335 = vadd.f32 %v5295, %v5317
  %v5336 = vadd.f32 %v5296, %v5318
  %v5337 = vadd.f32 %v5297, %v5319
  %v5338 = vadd.f32 %v5298, %v5320
  %v5339 = vadd.f32 %v5299, %v5321
  %v5340 = vadd.f32 %v5300, %v5322
  %v5341 = vadd.f32 %v5301, %v5323
  %v5342 = vlaneseq
  %v5343 = vshrl.u32 %v5342, 7
  %v5344 = vsub.s32 0, %v5343
  %v5345 = vrot.slane %v4490, %v5344
  %v5346 = vmul.f32 %v5200, %v5345
  %v5347 = vmul.f32 %v5201, %v5345
  %v5348 = vmul.f32 %v5202, %v5345
  %v5349 = vmul.f32 %v5203, %v5345
  %v5350 = vmul.f32 %v5204, %v5345
  %v5351 = vmul.f32 %v5205, %v5345
  %v5352 = vmul.f32 %v5206, %v5345
  %v5353 = vmul.f32 %v5207, %v5345
  %v5354 = vmul.f32 %v5208, %v5345
  %v5355 = vmul.f32 %v5209, %v5345
  %v5356 = vmul.f32 %v5210, %v5345
  %v5357 = vmul.f32 %v5211, %v5345
  %v5358 = vmul.f32 %v5212, %v5345
  %v5359 = vmul.f32 %v5213, %v5345
  %v5360 = vmul.f32 %v5214, %v5345
  %v5361 = vmul.f32 %v5215, %v5345
  %v5362 = vmul.f32 %v5216, %v5345
  %v5363 = vmul.f32 %v5217, %v5345
  %v5364 = vadd.f32 %v5324, %v5346
  %v5365 = vadd.f32 %v5325, %v5347
  %v5366 = vadd.f32 %v5326, %v5348
  %v5367 = vadd.f32 %v5327, %v5349
  %v5368 = vadd.f32 %v5328, %v5350
  %v5369 = vadd.f32 %v5329, %v5351
  %v5370 = vadd.f32 %v5330, %v5352
  %v5371 = vadd.f32 %v5331, %v5353
  %v5372 = vadd.f32 %v5332, %v5354
  %v5373 = vadd.f32 %v5333, %v5355
  %v5374 = vadd.f32 %v5334, %v5356
  %v5375 = vadd.f32 %v5335, %v5357
  %v5376 = vadd.f32 %v5336, %v5358
  %v5377 = vadd.f32 %v5337, %v5359
  %v5378 = vadd.f32 %v5338, %v5360
  %v5379 = vadd.f32 %v5339, %v5361
  %v5380 = vadd.f32 %v5340, %v5362
  %v5381 = vadd.f32 %v5341, %v5363
  %v5382 = vlaneseq
  %v5383 = vshrl.u32 %v5382, 7
  %v5384 = vsub.s32 0, %v5383
  %v5385 = vrot.slane %v4491, %v5384
  %v5386 = vmul.f32 %v5202, %v5385
  %v5387 = vmul.f32 %v5203, %v5385
  %v5388 = vmul.f32 %v5204, %v5385
  %v5389 = vmul.f32 %v5205, %v5385
  %v5390 = vmul.f32 %v5206, %v5385
  %v5391 = vmul.f32 %v5207, %v5385
  %v5392 = vmul.f32 %v5208, %v5385
  %v5393 = vmul.f32 %v5209, %v5385
  %v5394 = vmul.f32 %v5210, %v5385
  %v5395 = vmul.f32 %v5211, %v5385
  %v5396 = vmul.f32 %v5212, %v5385
  %v5397 = vmul.f32 %v5213, %v5385
  %v5398 = vmul.f32 %v5214, %v5385
  %v5399 = vmul.f32 %v5215, %v5385
  %v5400 = vmul.f32 %v5216, %v5385
  %v5401 = vmul.f32 %v5217, %v5385
  %v5402 = vmul.f32 %v5218, %v5385
  %v5403 = vmul.f32 %v5219, %v5385
  %v5404 = vadd.f32 %v5364, %v5386
  %v5405 = vadd.f32 %v5365, %v5387
  %v5406 = vadd.f32 %v5366, %v5388
  %v5407 = vadd.f32 %v5367, %v5389
  %v5408 = vadd.f32 %v5368, %v5390
  %v5409 = vadd.f32 %v5369, %v5391
  %v5410 = vadd.f32 %v5370, %v5392
  %v5411 = vadd.f32 %v5371, %v5393
  %v5412 = vadd.f32 %v5372, %v5394
  %v5413 = vadd.f32 %v5373, %v5395
  %v5414 = vadd.f32 %v5374, %v5396
  %v5415 = vadd.f32 %v5375, %v5397
  %v5416 = vadd.f32 %v5376, %v5398
  %v5417 = vadd.f32 %v5377, %v5399
  %v5418 = vadd.f32 %v5378, %v5400
  %v5419 = vadd.f32 %v5379, %v5401
  %v5420 = vadd.f32 %v5380, %v5402
  %v5421 = vadd.f32 %v5381, %v5403
  %v5422 = vlaneseq
  %v5423 = vshrl.u32 %v5422, 7
  %v5424 = vsub.s32 0, %v5423
  %v5425 = vrot.slane %v4492, %v5424
  %v5426 = vmul.f32 %v5204, %v5425
  %v5427 = vmul.f32 %v5205, %v5425
  %v5428 = vmul.f32 %v5206, %v5425
  %v5429 = vmul.f32 %v5207, %v5425
  %v5430 = vmul.f32 %v5208, %v5425
  %v5431 = vmul.f32 %v5209, %v5425
  %v5432 = vmul.f32 %v5210, %v5425
  %v5433 = vmul.f32 %v5211, %v5425
  %v5434 = vmul.f32 %v5212, %v5425
  %v5435 = vmul.f32 %v5213, %v5425
  %v5436 = vmul.f32 %v5214, %v5425
  %v5437 = vmul.f32 %v5215, %v5425
  %v5438 = vmul.f32 %v5216, %v5425
  %v5439 = vmul.f32 %v5217, %v5425
  %v5440 = vmul.f32 %v5218, %v5425
  %v5441 = vmul.f32 %v5219, %v5425
  %v5442 = vmul.f32 %v5220, %v5425
  %v5443 = vmul.f32 %v5221, %v5425
  %v5444 = vadd.f32 %v5404, %v5426
  %v5445 = vadd.f32 %v5405, %v5427
  %v5446 = vadd.f32 %v5406, %v5428
  %v5447 = vadd.f32 %v5407, %v5429
  %v5448 = vadd.f32 %v5408, %v5430
  %v5449 = vadd.f32 %v5409, %v5431
  %v5450 = vadd.f32 %v5410, %v5432
  %v5451 = vadd.f32 %v5411, %v5433
  %v5452 = vadd.f32 %v5412, %v5434
  %v5453 = vadd.f32 %v5413, %v5435
  %v5454 = vadd.f32 %v5414, %v5436
  %v5455 = vadd.f32 %v5415, %v5437
  %v5456 = vadd.f32 %v5416, %v5438
  %v5457 = vadd.f32 %v5417, %v5439
  %v5458 = vadd.f32 %v5418, %v5440
  %v5459 = vadd.f32 %v5419, %v5441
  %v5460 = vadd.f32 %v5420, %v5442
  %v5461 = vadd.f32 %v5421, %v5443
  %v5462 = vlaneseq
  %v5463 = vshrl.u32 %v5462, 7
  %v5464 = vsub.s32 1, %v5463
  %v5465 = vrot.slane %v4487, %v5464
  %v5466 = vmul.f32 %v5194, %v5465
  %v5467 = vmul.f32 %v5195, %v5465
  %v5468 = vmul.f32 %v5196, %v5465
  %v5469 = vmul.f32 %v5197, %v5465
  %v5470 = vmul.f32 %v5198, %v5465
  %v5471 = vmul.f32 %v5199, %v5465
  %v5472 = vmul.f32 %v5200, %v5465
  %v5473 = vmul.f32 %v5201, %v5465
  %v5474 = vmul.f32 %v5202, %v5465
  %v5475 = vmul.f32 %v5203, %v5465
  %v5476 = vmul.f32 %v5204, %v5465
  %v5477 = vmul.f32 %v5205, %v5465
  %v5478 = vmul.f32 %v5206, %v5465
  %v5479 = vmul.f32 %v5207, %v5465
  %v5480 = vmul.f32 %v5208, %v5465
  %v5481 = vmul.f32 %v5209, %v5465
  %v5482 = vmul.f32 %v5210, %v5465
  %v5483 = vmul.f32 %v5211, %v5465
  %v5502 = vrot.slane %v5466, 1
  %v5503 = vrot.slane %v5467, 1
  %v5504 = vsel %vm1213, %v5502, %v5503
  %v5505 = vrot.slane %v5468, 1
  %v5506 = vrot.slane %v5469, 1
  %v5507 = vsel %vm1213, %v5505, %v5506
  %v5508 = vrot.slane %v5470, 1
  %v5509 = vrot.slane %v5471, 1
  %v5510 = vsel %vm1213, %v5508, %v5509
  %v5511 = vrot.slane %v5472, 1
  %v5512 = vrot.slane %v5473, 1
  %v5513 = vsel %vm1213, %v5511, %v5512
  %v5514 = vrot.slane %v5474, 1
  %v5515 = vrot.slane %v5475, 1
  %v5516 = vsel %vm1213, %v5514, %v5515
  %v5517 = vrot.slane %v5476, 1
  %v5518 = vrot.slane %v5477, 1
  %v5519 = vsel %vm1213, %v5517, %v5518
  %v5520 = vrot.slane %v5478, 1
  %v5521 = vrot.slane %v5479, 1
  %v5522 = vsel %vm1213, %v5520, %v5521
  %v5523 = vrot.slane %v5480, 1
  %v5524 = vrot.slane %v5481, 1
  %v5525 = vsel %vm1213, %v5523, %v5524
  %v5526 = vrot.slane %v5482, 1
  %v5527 = vrot.slane %v5483, 1
  %v5528 = vsel %vm1213, %v5526, %v5527
  %v5547 = vadd.f32 %v5444, %v5504
  %v5548 = vadd.f32 %v5445, %v5503
  %v5549 = vadd.f32 %v5446, %v5507
  %v5550 = vadd.f32 %v5447, %v5506
  %v5551 = vadd.f32 %v5448, %v5510
  %v5552 = vadd.f32 %v5449, %v5509
  %v5553 = vadd.f32 %v5450, %v5513
  %v5554 = vadd.f32 %v5451, %v5512
  %v5555 = vadd.f32 %v5452, %v5516
  %v5556 = vadd.f32 %v5453, %v5515
  %v5557 = vadd.f32 %v5454, %v5519
  %v5558 = vadd.f32 %v5455, %v5518
  %v5559 = vadd.f32 %v5456, %v5522
  %v5560 = vadd.f32 %v5457, %v5521
  %v5561 = vadd.f32 %v5458, %v5525
  %v5562 = vadd.f32 %v5459, %v5524
  %v5563 = vadd.f32 %v5460, %v5528
  %v5564 = vadd.f32 %v5461, %v5527
  %v5565 = vlaneseq
  %v5566 = vshrl.u32 %v5565, 7
  %v5567 = vsub.s32 1, %v5566
  %v5568 = vrot.slane %v4488, %v5567
  %v5569 = vmul.f32 %v5196, %v5568
  %v5570 = vmul.f32 %v5197, %v5568
  %v5571 = vmul.f32 %v5198, %v5568
  %v5572 = vmul.f32 %v5199, %v5568
  %v5573 = vmul.f32 %v5200, %v5568
  %v5574 = vmul.f32 %v5201, %v5568
  %v5575 = vmul.f32 %v5202, %v5568
  %v5576 = vmul.f32 %v5203, %v5568
  %v5577 = vmul.f32 %v5204, %v5568
  %v5578 = vmul.f32 %v5205, %v5568
  %v5579 = vmul.f32 %v5206, %v5568
  %v5580 = vmul.f32 %v5207, %v5568
  %v5581 = vmul.f32 %v5208, %v5568
  %v5582 = vmul.f32 %v5209, %v5568
  %v5583 = vmul.f32 %v5210, %v5568
  %v5584 = vmul.f32 %v5211, %v5568
  %v5585 = vmul.f32 %v5212, %v5568
  %v5586 = vmul.f32 %v5213, %v5568
  %v5605 = vrot.slane %v5569, 1
  %v5606 = vrot.slane %v5570, 1
  %v5607 = vsel %vm1213, %v5605, %v5606
  %v5608 = vrot.slane %v5571, 1
  %v5609 = vrot.slane %v5572, 1
  %v5610 = vsel %vm1213, %v5608, %v5609
  %v5611 = vrot.slane %v5573, 1
  %v5612 = vrot.slane %v5574, 1
  %v5613 = vsel %vm1213, %v5611, %v5612
  %v5614 = vrot.slane %v5575, 1
  %v5615 = vrot.slane %v5576, 1
  %v5616 = vsel %vm1213, %v5614, %v5615
  %v5617 = vrot.slane %v5577, 1
  %v5618 = vrot.slane %v5578, 1
  %v5619 = vsel %vm1213, %v5617, %v5618
  %v5620 = vrot.slane %v5579, 1
  %v5621 = vrot.slane %v5580, 1
  %v5622 = vsel %vm1213, %v5620, %v5621
  %v5623 = vrot.slane %v5581, 1
  %v5624 = vrot.slane %v5582, 1
  %v5625 = vsel %vm1213, %v5623, %v5624
  %v5626 = vrot.slane %v5583, 1
  %v5627 = vrot.slane %v5584, 1
  %v5628 = vsel %vm1213, %v5626, %v5627
  %v5629 = vrot.slane %v5585, 1
  %v5630 = vrot.slane %v5586, 1
  %v5631 = vsel %vm1213, %v5629, %v5630
  %v5650 = vadd.f32 %v5547, %v5607
  %v5651 = vadd.f32 %v5548, %v5606
  %v5652 = vadd.f32 %v5549, %v5610
  %v5653 = vadd.f32 %v5550, %v5609
  %v5654 = vadd.f32 %v5551, %v5613
  %v5655 = vadd.f32 %v5552, %v5612
  %v5656 = vadd.f32 %v5553, %v5616
  %v5657 = vadd.f32 %v5554, %v5615
  %v5658 = vadd.f32 %v5555, %v5619
  %v5659 = vadd.f32 %v5556, %v5618
  %v5660 = vadd.f32 %v5557, %v5622
  %v5661 = vadd.f32 %v5558, %v5621
  %v5662 = vadd.f32 %v5559, %v5625
  %v5663 = vadd.f32 %v5560, %v5624
  %v5664 = vadd.f32 %v5561, %v5628
  %v5665 = vadd.f32 %v5562, %v5627
  %v5666 = vadd.f32 %v5563, %v5631
  %v5667 = vadd.f32 %v5564, %v5630
  %v5668 = vlaneseq
  %v5669 = vshrl.u32 %v5668, 7
  %v5670 = vsub.s32 1, %v5669
  %v5671 = vrot.slane %v4489, %v5670
  %v5672 = vmul.f32 %v5198, %v5671
  %v5673 = vmul.f32 %v5199, %v5671
  %v5674 = vmul.f32 %v5200, %v5671
  %v5675 = vmul.f32 %v5201, %v5671
  %v5676 = vmul.f32 %v5202, %v5671
  %v5677 = vmul.f32 %v5203, %v5671
  %v5678 = vmul.f32 %v5204, %v5671
  %v5679 = vmul.f32 %v5205, %v5671
  %v5680 = vmul.f32 %v5206, %v5671
  %v5681 = vmul.f32 %v5207, %v5671
  %v5682 = vmul.f32 %v5208, %v5671
  %v5683 = vmul.f32 %v5209, %v5671
  %v5684 = vmul.f32 %v5210, %v5671
  %v5685 = vmul.f32 %v5211, %v5671
  %v5686 = vmul.f32 %v5212, %v5671
  %v5687 = vmul.f32 %v5213, %v5671
  %v5688 = vmul.f32 %v5214, %v5671
  %v5689 = vmul.f32 %v5215, %v5671
  %v5708 = vrot.slane %v5672, 1
  %v5709 = vrot.slane %v5673, 1
  %v5710 = vsel %vm1213, %v5708, %v5709
  %v5711 = vrot.slane %v5674, 1
  %v5712 = vrot.slane %v5675, 1
  %v5713 = vsel %vm1213, %v5711, %v5712
  %v5714 = vrot.slane %v5676, 1
  %v5715 = vrot.slane %v5677, 1
  %v5716 = vsel %vm1213, %v5714, %v5715
  %v5717 = vrot.slane %v5678, 1
  %v5718 = vrot.slane %v5679, 1
  %v5719 = vsel %vm1213, %v5717, %v5718
  %v5720 = vrot.slane %v5680, 1
  %v5721 = vrot.slane %v5681, 1
  %v5722 = vsel %vm1213, %v5720, %v5721
  %v5723 = vrot.slane %v5682, 1
  %v5724 = vrot.slane %v5683, 1
  %v5725 = vsel %vm1213, %v5723, %v5724
  %v5726 = vrot.slane %v5684, 1
  %v5727 = vrot.slane %v5685, 1
  %v5728 = vsel %vm1213, %v5726, %v5727
  %v5729 = vrot.slane %v5686, 1
  %v5730 = vrot.slane %v5687, 1
  %v5731 = vsel %vm1213, %v5729, %v5730
  %v5732 = vrot.slane %v5688, 1
  %v5733 = vrot.slane %v5689, 1
  %v5734 = vsel %vm1213, %v5732, %v5733
  %v5753 = vadd.f32 %v5650, %v5710
  %v5754 = vadd.f32 %v5651, %v5709
  %v5755 = vadd.f32 %v5652, %v5713
  %v5756 = vadd.f32 %v5653, %v5712
  %v5757 = vadd.f32 %v5654, %v5716
  %v5758 = vadd.f32 %v5655, %v5715
  %v5759 = vadd.f32 %v5656, %v5719
  %v5760 = vadd.f32 %v5657, %v5718
  %v5761 = vadd.f32 %v5658, %v5722
  %v5762 = vadd.f32 %v5659, %v5721
  %v5763 = vadd.f32 %v5660, %v5725
  %v5764 = vadd.f32 %v5661, %v5724
  %v5765 = vadd.f32 %v5662, %v5728
  %v5766 = vadd.f32 %v5663, %v5727
  %v5767 = vadd.f32 %v5664, %v5731
  %v5768 = vadd.f32 %v5665, %v5730
  %v5769 = vadd.f32 %v5666, %v5734
  %v5770 = vadd.f32 %v5667, %v5733
  %v5771 = vlaneseq
  %v5772 = vshrl.u32 %v5771, 7
  %v5773 = vsub.s32 1, %v5772
  %v5774 = vrot.slane %v4490, %v5773
  %v5775 = vmul.f32 %v5200, %v5774
  %v5776 = vmul.f32 %v5201, %v5774
  %v5777 = vmul.f32 %v5202, %v5774
  %v5778 = vmul.f32 %v5203, %v5774
  %v5779 = vmul.f32 %v5204, %v5774
  %v5780 = vmul.f32 %v5205, %v5774
  %v5781 = vmul.f32 %v5206, %v5774
  %v5782 = vmul.f32 %v5207, %v5774
  %v5783 = vmul.f32 %v5208, %v5774
  %v5784 = vmul.f32 %v5209, %v5774
  %v5785 = vmul.f32 %v5210, %v5774
  %v5786 = vmul.f32 %v5211, %v5774
  %v5787 = vmul.f32 %v5212, %v5774
  %v5788 = vmul.f32 %v5213, %v5774
  %v5789 = vmul.f32 %v5214, %v5774
  %v5790 = vmul.f32 %v5215, %v5774
  %v5791 = vmul.f32 %v5216, %v5774
  %v5792 = vmul.f32 %v5217, %v5774
  %v5811 = vrot.slane %v5775, 1
  %v5812 = vrot.slane %v5776, 1
  %v5813 = vsel %vm1213, %v5811, %v5812
  %v5814 = vrot.slane %v5777, 1
  %v5815 = vrot.slane %v5778, 1
  %v5816 = vsel %vm1213, %v5814, %v5815
  %v5817 = vrot.slane %v5779, 1
  %v5818 = vrot.slane %v5780, 1
  %v5819 = vsel %vm1213, %v5817, %v5818
  %v5820 = vrot.slane %v5781, 1
  %v5821 = vrot.slane %v5782, 1
  %v5822 = vsel %vm1213, %v5820, %v5821
  %v5823 = vrot.slane %v5783, 1
  %v5824 = vrot.slane %v5784, 1
  %v5825 = vsel %vm1213, %v5823, %v5824
  %v5826 = vrot.slane %v5785, 1
  %v5827 = vrot.slane %v5786, 1
  %v5828 = vsel %vm1213, %v5826, %v5827
  %v5829 = vrot.slane %v5787, 1
  %v5830 = vrot.slane %v5788, 1
  %v5831 = vsel %vm1213, %v5829, %v5830
  %v5832 = vrot.slane %v5789, 1
  %v5833 = vrot.slane %v5790, 1
  %v5834 = vsel %vm1213, %v5832, %v5833
  %v5835 = vrot.slane %v5791, 1
  %v5836 = vrot.slane %v5792, 1
  %v5837 = vsel %vm1213, %v5835, %v5836
  %v5856 = vadd.f32 %v5753, %v5813
  %v5857 = vadd.f32 %v5754, %v5812
  %v5858 = vadd.f32 %v5755, %v5816
  %v5859 = vadd.f32 %v5756, %v5815
  %v5860 = vadd.f32 %v5757, %v5819
  %v5861 = vadd.f32 %v5758, %v5818
  %v5862 = vadd.f32 %v5759, %v5822
  %v5863 = vadd.f32 %v5760, %v5821
  %v5864 = vadd.f32 %v5761, %v5825
  %v5865 = vadd.f32 %v5762, %v5824
  %v5866 = vadd.f32 %v5763, %v5828
  %v5867 = vadd.f32 %v5764, %v5827
  %v5868 = vadd.f32 %v5765, %v5831
  %v5869 = vadd.f32 %v5766, %v5830
  %v5870 = vadd.f32 %v5767, %v5834
  %v5871 = vadd.f32 %v5768, %v5833
  %v5872 = vadd.f32 %v5769, %v5837
  %v5873 = vadd.f32 %v5770, %v5836
  %v5874 = vlaneseq
  %v5875 = vshrl.u32 %v5874, 7
  %v5876 = vsub.s32 1, %v5875
  %v5877 = vrot.slane %v4491, %v5876
  %v5878 = vmul.f32 %v5202, %v5877
  %v5879 = vmul.f32 %v5203, %v5877
  %v5880 = vmul.f32 %v5204, %v5877
  %v5881 = vmul.f32 %v5205, %v5877
  %v5882 = vmul.f32 %v5206, %v5877
  %v5883 = vmul.f32 %v5207, %v5877
  %v5884 = vmul.f32 %v5208, %v5877
  %v5885 = vmul.f32 %v5209, %v5877
  %v5886 = vmul.f32 %v5210, %v5877
  %v5887 = vmul.f32 %v5211, %v5877
  %v5888 = vmul.f32 %v5212, %v5877
  %v5889 = vmul.f32 %v5213, %v5877
  %v5890 = vmul.f32 %v5214, %v5877
  %v5891 = vmul.f32 %v5215, %v5877
  %v5892 = vmul.f32 %v5216, %v5877
  %v5893 = vmul.f32 %v5217, %v5877
  %v5894 = vmul.f32 %v5218, %v5877
  %v5895 = vmul.f32 %v5219, %v5877
  %v5914 = vrot.slane %v5878, 1
  %v5915 = vrot.slane %v5879, 1
  %v5916 = vsel %vm1213, %v5914, %v5915
  %v5917 = vrot.slane %v5880, 1
  %v5918 = vrot.slane %v5881, 1
  %v5919 = vsel %vm1213, %v5917, %v5918
  %v5920 = vrot.slane %v5882, 1
  %v5921 = vrot.slane %v5883, 1
  %v5922 = vsel %vm1213, %v5920, %v5921
  %v5923 = vrot.slane %v5884, 1
  %v5924 = vrot.slane %v5885, 1
  %v5925 = vsel %vm1213, %v5923, %v5924
  %v5926 = vrot.slane %v5886, 1
  %v5927 = vrot.slane %v5887, 1
  %v5928 = vsel %vm1213, %v5926, %v5927
  %v5929 = vrot.slane %v5888, 1
  %v5930 = vrot.slane %v5889, 1
  %v5931 = vsel %vm1213, %v5929, %v5930
  %v5932 = vrot.slane %v5890, 1
  %v5933 = vrot.slane %v5891, 1
  %v5934 = vsel %vm1213, %v5932, %v5933
  %v5935 = vrot.slane %v5892, 1
  %v5936 = vrot.slane %v5893, 1
  %v5937 = vsel %vm1213, %v5935, %v5936
  %v5938 = vrot.slane %v5894, 1
  %v5939 = vrot.slane %v5895, 1
  %v5940 = vsel %vm1213, %v5938, %v5939
  %v5959 = vadd.f32 %v5856, %v5916
  %v5960 = vadd.f32 %v5857, %v5915
  %v5961 = vadd.f32 %v5858, %v5919
  %v5962 = vadd.f32 %v5859, %v5918
  %v5963 = vadd.f32 %v5860, %v5922
  %v5964 = vadd.f32 %v5861, %v5921
  %v5965 = vadd.f32 %v5862, %v5925
  %v5966 = vadd.f32 %v5863, %v5924
  %v5967 = vadd.f32 %v5864, %v5928
  %v5968 = vadd.f32 %v5865, %v5927
  %v5969 = vadd.f32 %v5866, %v5931
  %v5970 = vadd.f32 %v5867, %v5930
  %v5971 = vadd.f32 %v5868, %v5934
  %v5972 = vadd.f32 %v5869, %v5933
  %v5973 = vadd.f32 %v5870, %v5937
  %v5974 = vadd.f32 %v5871, %v5936
  %v5975 = vadd.f32 %v5872, %v5940
  %v5976 = vadd.f32 %v5873, %v5939
  %v5977 = vlaneseq
  %v5978 = vshrl.u32 %v5977, 7
  %v5979 = vsub.s32 1, %v5978
  %v5980 = vrot.slane %v4492, %v5979
  %v5981 = vmul.f32 %v5204, %v5980
  %v5982 = vmul.f32 %v5205, %v5980
  %v5983 = vmul.f32 %v5206, %v5980
  %v5984 = vmul.f32 %v5207, %v5980
  %v5985 = vmul.f32 %v5208, %v5980
  %v5986 = vmul.f32 %v5209, %v5980
  %v5987 = vmul.f32 %v5210, %v5980
  %v5988 = vmul.f32 %v5211, %v5980
  %v5989 = vmul.f32 %v5212, %v5980
  %v5990 = vmul.f32 %v5213, %v5980
  %v5991 = vmul.f32 %v5214, %v5980
  %v5992 = vmul.f32 %v5215, %v5980
  %v5993 = vmul.f32 %v5216, %v5980
  %v5994 = vmul.f32 %v5217, %v5980
  %v5995 = vmul.f32 %v5218, %v5980
  %v5996 = vmul.f32 %v5219, %v5980
  %v5997 = vmul.f32 %v5220, %v5980
  %v5998 = vmul.f32 %v5221, %v5980
  %v6017 = vrot.slane %v5981, 1
  %v6018 = vrot.slane %v5982, 1
  %v6019 = vsel %vm1213, %v6017, %v6018
  %v6020 = vrot.slane %v5983, 1
  %v6021 = vrot.slane %v5984, 1
  %v6022 = vsel %vm1213, %v6020, %v6021
  %v6023 = vrot.slane %v5985, 1
  %v6024 = vrot.slane %v5986, 1
  %v6025 = vsel %vm1213, %v6023, %v6024
  %v6026 = vrot.slane %v5987, 1
  %v6027 = vrot.slane %v5988, 1
  %v6028 = vsel %vm1213, %v6026, %v6027
  %v6029 = vrot.slane %v5989, 1
  %v6030 = vrot.slane %v5990, 1
  %v6031 = vsel %vm1213, %v6029, %v6030
  %v6032 = vrot.slane %v5991, 1
  %v6033 = vrot.slane %v5992, 1
  %v6034 = vsel %vm1213, %v6032, %v6033
  %v6035 = vrot.slane %v5993, 1
  %v6036 = vrot.slane %v5994, 1
  %v6037 = vsel %vm1213, %v6035, %v6036
  %v6038 = vrot.slane %v5995, 1
  %v6039 = vrot.slane %v5996, 1
  %v6040 = vsel %vm1213, %v6038, %v6039
  %v6041 = vrot.slane %v5997, 1
  %v6042 = vrot.slane %v5998, 1
  %v6043 = vsel %vm1213, %v6041, %v6042
  %v6062 = vadd.f32 %v5959, %v6019
  %v6063 = vadd.f32 %v5960, %v6018
  %v6064 = vadd.f32 %v5961, %v6022
  %v6065 = vadd.f32 %v5962, %v6021
  %v6066 = vadd.f32 %v5963, %v6025
  %v6067 = vadd.f32 %v5964, %v6024
  %v6068 = vadd.f32 %v5965, %v6028
  %v6069 = vadd.f32 %v5966, %v6027
  %v6070 = vadd.f32 %v5967, %v6031
  %v6071 = vadd.f32 %v5968, %v6030
  %v6072 = vadd.f32 %v5969, %v6034
  %v6073 = vadd.f32 %v5970, %v6033
  %v6074 = vadd.f32 %v5971, %v6037
  %v6075 = vadd.f32 %v5972, %v6036
  %v6076 = vadd.f32 %v5973, %v6040
  %v6077 = vadd.f32 %v5974, %v6039
  %v6078 = vadd.f32 %v5975, %v6043
  %v6079 = vadd.f32 %v5976, %v6042
  %v6080 = vlaneseq
  %v6081 = vshrl.u32 %v6080, 7
  %v6082 = vsub.s32 2, %v6081
  %v6083 = vrot.slane %v4487, %v6082
  %v6084 = vmul.f32 %v5194, %v6083
  %v6085 = vmul.f32 %v5195, %v6083
  %v6086 = vmul.f32 %v5196, %v6083
  %v6087 = vmul.f32 %v5197, %v6083
  %v6088 = vmul.f32 %v5198, %v6083
  %v6089 = vmul.f32 %v5199, %v6083
  %v6090 = vmul.f32 %v5200, %v6083
  %v6091 = vmul.f32 %v5201, %v6083
  %v6092 = vmul.f32 %v5202, %v6083
  %v6093 = vmul.f32 %v5203, %v6083
  %v6094 = vmul.f32 %v5204, %v6083
  %v6095 = vmul.f32 %v5205, %v6083
  %v6096 = vmul.f32 %v5206, %v6083
  %v6097 = vmul.f32 %v5207, %v6083
  %v6098 = vmul.f32 %v5208, %v6083
  %v6099 = vmul.f32 %v5209, %v6083
  %v6100 = vmul.f32 %v5210, %v6083
  %v6101 = vmul.f32 %v5211, %v6083
  %v6120 = vrot.slane %v6084, 2
  %v6121 = vrot.slane %v6085, 2
  %v6122 = vsel %vm1832, %v6120, %v6121
  %v6123 = vrot.slane %v6086, 2
  %v6124 = vrot.slane %v6087, 2
  %v6125 = vsel %vm1832, %v6123, %v6124
  %v6126 = vrot.slane %v6088, 2
  %v6127 = vrot.slane %v6089, 2
  %v6128 = vsel %vm1832, %v6126, %v6127
  %v6129 = vrot.slane %v6090, 2
  %v6130 = vrot.slane %v6091, 2
  %v6131 = vsel %vm1832, %v6129, %v6130
  %v6132 = vrot.slane %v6092, 2
  %v6133 = vrot.slane %v6093, 2
  %v6134 = vsel %vm1832, %v6132, %v6133
  %v6135 = vrot.slane %v6094, 2
  %v6136 = vrot.slane %v6095, 2
  %v6137 = vsel %vm1832, %v6135, %v6136
  %v6138 = vrot.slane %v6096, 2
  %v6139 = vrot.slane %v6097, 2
  %v6140 = vsel %vm1832, %v6138, %v6139
  %v6141 = vrot.slane %v6098, 2
  %v6142 = vrot.slane %v6099, 2
  %v6143 = vsel %vm1832, %v6141, %v6142
  %v6144 = vrot.slane %v6100, 2
  %v6145 = vrot.slane %v6101, 2
  %v6146 = vsel %vm1832, %v6144, %v6145
  %v6165 = vadd.f32 %v6062, %v6122
  %v6166 = vadd.f32 %v6063, %v6121
  %v6167 = vadd.f32 %v6064, %v6125
  %v6168 = vadd.f32 %v6065, %v6124
  %v6169 = vadd.f32 %v6066, %v6128
  %v6170 = vadd.f32 %v6067, %v6127
  %v6171 = vadd.f32 %v6068, %v6131
  %v6172 = vadd.f32 %v6069, %v6130
  %v6173 = vadd.f32 %v6070, %v6134
  %v6174 = vadd.f32 %v6071, %v6133
  %v6175 = vadd.f32 %v6072, %v6137
  %v6176 = vadd.f32 %v6073, %v6136
  %v6177 = vadd.f32 %v6074, %v6140
  %v6178 = vadd.f32 %v6075, %v6139
  %v6179 = vadd.f32 %v6076, %v6143
  %v6180 = vadd.f32 %v6077, %v6142
  %v6181 = vadd.f32 %v6078, %v6146
  %v6182 = vadd.f32 %v6079, %v6145
  %v6183 = vlaneseq
  %v6184 = vshrl.u32 %v6183, 7
  %v6185 = vsub.s32 2, %v6184
  %v6186 = vrot.slane %v4488, %v6185
  %v6187 = vmul.f32 %v5196, %v6186
  %v6188 = vmul.f32 %v5197, %v6186
  %v6189 = vmul.f32 %v5198, %v6186
  %v6190 = vmul.f32 %v5199, %v6186
  %v6191 = vmul.f32 %v5200, %v6186
  %v6192 = vmul.f32 %v5201, %v6186
  %v6193 = vmul.f32 %v5202, %v6186
  %v6194 = vmul.f32 %v5203, %v6186
  %v6195 = vmul.f32 %v5204, %v6186
  %v6196 = vmul.f32 %v5205, %v6186
  %v6197 = vmul.f32 %v5206, %v6186
  %v6198 = vmul.f32 %v5207, %v6186
  %v6199 = vmul.f32 %v5208, %v6186
  %v6200 = vmul.f32 %v5209, %v6186
  %v6201 = vmul.f32 %v5210, %v6186
  %v6202 = vmul.f32 %v5211, %v6186
  %v6203 = vmul.f32 %v5212, %v6186
  %v6204 = vmul.f32 %v5213, %v6186
  %v6223 = vrot.slane %v6187, 2
  %v6224 = vrot.slane %v6188, 2
  %v6225 = vsel %vm1832, %v6223, %v6224
  %v6226 = vrot.slane %v6189, 2
  %v6227 = vrot.slane %v6190, 2
  %v6228 = vsel %vm1832, %v6226, %v6227
  %v6229 = vrot.slane %v6191, 2
  %v6230 = vrot.slane %v6192, 2
  %v6231 = vsel %vm1832, %v6229, %v6230
  %v6232 = vrot.slane %v6193, 2
  %v6233 = vrot.slane %v6194, 2
  %v6234 = vsel %vm1832, %v6232, %v6233
  %v6235 = vrot.slane %v6195, 2
  %v6236 = vrot.slane %v6196, 2
  %v6237 = vsel %vm1832, %v6235, %v6236
  %v6238 = vrot.slane %v6197, 2
  %v6239 = vrot.slane %v6198, 2
  %v6240 = vsel %vm1832, %v6238, %v6239
  %v6241 = vrot.slane %v6199, 2
  %v6242 = vrot.slane %v6200, 2
  %v6243 = vsel %vm1832, %v6241, %v6242
  %v6244 = vrot.slane %v6201, 2
  %v6245 = vrot.slane %v6202, 2
  %v6246 = vsel %vm1832, %v6244, %v6245
  %v6247 = vrot.slane %v6203, 2
  %v6248 = vrot.slane %v6204, 2
  %v6249 = vsel %vm1832, %v6247, %v6248
  %v6268 = vadd.f32 %v6165, %v6225
  %v6269 = vadd.f32 %v6166, %v6224
  %v6270 = vadd.f32 %v6167, %v6228
  %v6271 = vadd.f32 %v6168, %v6227
  %v6272 = vadd.f32 %v6169, %v6231
  %v6273 = vadd.f32 %v6170, %v6230
  %v6274 = vadd.f32 %v6171, %v6234
  %v6275 = vadd.f32 %v6172, %v6233
  %v6276 = vadd.f32 %v6173, %v6237
  %v6277 = vadd.f32 %v6174, %v6236
  %v6278 = vadd.f32 %v6175, %v6240
  %v6279 = vadd.f32 %v6176, %v6239
  %v6280 = vadd.f32 %v6177, %v6243
  %v6281 = vadd.f32 %v6178, %v6242
  %v6282 = vadd.f32 %v6179, %v6246
  %v6283 = vadd.f32 %v6180, %v6245
  %v6284 = vadd.f32 %v6181, %v6249
  %v6285 = vadd.f32 %v6182, %v6248
  %v6286 = vlaneseq
  %v6287 = vshrl.u32 %v6286, 7
  %v6288 = vsub.s32 2, %v6287
  %v6289 = vrot.slane %v4489, %v6288
  %v6290 = vmul.f32 %v5198, %v6289
  %v6291 = vmul.f32 %v5199, %v6289
  %v6292 = vmul.f32 %v5200, %v6289
  %v6293 = vmul.f32 %v5201, %v6289
  %v6294 = vmul.f32 %v5202, %v6289
  %v6295 = vmul.f32 %v5203, %v6289
  %v6296 = vmul.f32 %v5204, %v6289
  %v6297 = vmul.f32 %v5205, %v6289
  %v6298 = vmul.f32 %v5206, %v6289
  %v6299 = vmul.f32 %v5207, %v6289
  %v6300 = vmul.f32 %v5208, %v6289
  %v6301 = vmul.f32 %v5209, %v6289
  %v6302 = vmul.f32 %v5210, %v6289
  %v6303 = vmul.f32 %v5211, %v6289
  %v6304 = vmul.f32 %v5212, %v6289
  %v6305 = vmul.f32 %v5213, %v6289
  %v6306 = vmul.f32 %v5214, %v6289
  %v6307 = vmul.f32 %v5215, %v6289
  %v6326 = vrot.slane %v6290, 2
  %v6327 = vrot.slane %v6291, 2
  %v6328 = vsel %vm1832, %v6326, %v6327
  %v6329 = vrot.slane %v6292, 2
  %v6330 = vrot.slane %v6293, 2
  %v6331 = vsel %vm1832, %v6329, %v6330
  %v6332 = vrot.slane %v6294, 2
  %v6333 = vrot.slane %v6295, 2
  %v6334 = vsel %vm1832, %v6332, %v6333
  %v6335 = vrot.slane %v6296, 2
  %v6336 = vrot.slane %v6297, 2
  %v6337 = vsel %vm1832, %v6335, %v6336
  %v6338 = vrot.slane %v6298, 2
  %v6339 = vrot.slane %v6299, 2
  %v6340 = vsel %vm1832, %v6338, %v6339
  %v6341 = vrot.slane %v6300, 2
  %v6342 = vrot.slane %v6301, 2
  %v6343 = vsel %vm1832, %v6341, %v6342
  %v6344 = vrot.slane %v6302, 2
  %v6345 = vrot.slane %v6303, 2
  %v6346 = vsel %vm1832, %v6344, %v6345
  %v6347 = vrot.slane %v6304, 2
  %v6348 = vrot.slane %v6305, 2
  %v6349 = vsel %vm1832, %v6347, %v6348
  %v6350 = vrot.slane %v6306, 2
  %v6351 = vrot.slane %v6307, 2
  %v6352 = vsel %vm1832, %v6350, %v6351
  %v6371 = vadd.f32 %v6268, %v6328
  %v6372 = vadd.f32 %v6269, %v6327
  %v6373 = vadd.f32 %v6270, %v6331
  %v6374 = vadd.f32 %v6271, %v6330
  %v6375 = vadd.f32 %v6272, %v6334
  %v6376 = vadd.f32 %v6273, %v6333
  %v6377 = vadd.f32 %v6274, %v6337
  %v6378 = vadd.f32 %v6275, %v6336
  %v6379 = vadd.f32 %v6276, %v6340
  %v6380 = vadd.f32 %v6277, %v6339
  %v6381 = vadd.f32 %v6278, %v6343
  %v6382 = vadd.f32 %v6279, %v6342
  %v6383 = vadd.f32 %v6280, %v6346
  %v6384 = vadd.f32 %v6281, %v6345
  %v6385 = vadd.f32 %v6282, %v6349
  %v6386 = vadd.f32 %v6283, %v6348
  %v6387 = vadd.f32 %v6284, %v6352
  %v6388 = vadd.f32 %v6285, %v6351
  %v6389 = vlaneseq
  %v6390 = vshrl.u32 %v6389, 7
  %v6391 = vsub.s32 2, %v6390
  %v6392 = vrot.slane %v4490, %v6391
  %v6393 = vmul.f32 %v5200, %v6392
  %v6394 = vmul.f32 %v5201, %v6392
  %v6395 = vmul.f32 %v5202, %v6392
  %v6396 = vmul.f32 %v5203, %v6392
  %v6397 = vmul.f32 %v5204, %v6392
  %v6398 = vmul.f32 %v5205, %v6392
  %v6399 = vmul.f32 %v5206, %v6392
  %v6400 = vmul.f32 %v5207, %v6392
  %v6401 = vmul.f32 %v5208, %v6392
  %v6402 = vmul.f32 %v5209, %v6392
  %v6403 = vmul.f32 %v5210, %v6392
  %v6404 = vmul.f32 %v5211, %v6392
  %v6405 = vmul.f32 %v5212, %v6392
  %v6406 = vmul.f32 %v5213, %v6392
  %v6407 = vmul.f32 %v5214, %v6392
  %v6408 = vmul.f32 %v5215, %v6392
  %v6409 = vmul.f32 %v5216, %v6392
  %v6410 = vmul.f32 %v5217, %v6392
  %v6429 = vrot.slane %v6393, 2
  %v6430 = vrot.slane %v6394, 2
  %v6431 = vsel %vm1832, %v6429, %v6430
  %v6432 = vrot.slane %v6395, 2
  %v6433 = vrot.slane %v6396, 2
  %v6434 = vsel %vm1832, %v6432, %v6433
  %v6435 = vrot.slane %v6397, 2
  %v6436 = vrot.slane %v6398, 2
  %v6437 = vsel %vm1832, %v6435, %v6436
  %v6438 = vrot.slane %v6399, 2
  %v6439 = vrot.slane %v6400, 2
  %v6440 = vsel %vm1832, %v6438, %v6439
  %v6441 = vrot.slane %v6401, 2
  %v6442 = vrot.slane %v6402, 2
  %v6443 = vsel %vm1832, %v6441, %v6442
  %v6444 = vrot.slane %v6403, 2
  %v6445 = vrot.slane %v6404, 2
  %v6446 = vsel %vm1832, %v6444, %v6445
  %v6447 = vrot.slane %v6405, 2
  %v6448 = vrot.slane %v6406, 2
  %v6449 = vsel %vm1832, %v6447, %v6448
  %v6450 = vrot.slane %v6407, 2
  %v6451 = vrot.slane %v6408, 2
  %v6452 = vsel %vm1832, %v6450, %v6451
  %v6453 = vrot.slane %v6409, 2
  %v6454 = vrot.slane %v6410, 2
  %v6455 = vsel %vm1832, %v6453, %v6454
  %v6474 = vadd.f32 %v6371, %v6431
  %v6475 = vadd.f32 %v6372, %v6430
  %v6476 = vadd.f32 %v6373, %v6434
  %v6477 = vadd.f32 %v6374, %v6433
  %v6478 = vadd.f32 %v6375, %v6437
  %v6479 = vadd.f32 %v6376, %v6436
  %v6480 = vadd.f32 %v6377, %v6440
  %v6481 = vadd.f32 %v6378, %v6439
  %v6482 = vadd.f32 %v6379, %v6443
  %v6483 = vadd.f32 %v6380, %v6442
  %v6484 = vadd.f32 %v6381, %v6446
  %v6485 = vadd.f32 %v6382, %v6445
  %v6486 = vadd.f32 %v6383, %v6449
  %v6487 = vadd.f32 %v6384, %v6448
  %v6488 = vadd.f32 %v6385, %v6452
  %v6489 = vadd.f32 %v6386, %v6451
  %v6490 = vadd.f32 %v6387, %v6455
  %v6491 = vadd.f32 %v6388, %v6454
  %v6492 = vlaneseq
  %v6493 = vshrl.u32 %v6492, 7
  %v6494 = vsub.s32 2, %v6493
  %v6495 = vrot.slane %v4491, %v6494
  %v6496 = vmul.f32 %v5202, %v6495
  %v6497 = vmul.f32 %v5203, %v6495
  %v6498 = vmul.f32 %v5204, %v6495
  %v6499 = vmul.f32 %v5205, %v6495
  %v6500 = vmul.f32 %v5206, %v6495
  %v6501 = vmul.f32 %v5207, %v6495
  %v6502 = vmul.f32 %v5208, %v6495
  %v6503 = vmul.f32 %v5209, %v6495
  %v6504 = vmul.f32 %v5210, %v6495
  %v6505 = vmul.f32 %v5211, %v6495
  %v6506 = vmul.f32 %v5212, %v6495
  %v6507 = vmul.f32 %v5213, %v6495
  %v6508 = vmul.f32 %v5214, %v6495
  %v6509 = vmul.f32 %v5215, %v6495
  %v6510 = vmul.f32 %v5216, %v6495
  %v6511 = vmul.f32 %v5217, %v6495
  %v6512 = vmul.f32 %v5218, %v6495
  %v6513 = vmul.f32 %v5219, %v6495
  %v6532 = vrot.slane %v6496, 2
  %v6533 = vrot.slane %v6497, 2
  %v6534 = vsel %vm1832, %v6532, %v6533
  %v6535 = vrot.slane %v6498, 2
  %v6536 = vrot.slane %v6499, 2
  %v6537 = vsel %vm1832, %v6535, %v6536
  %v6538 = vrot.slane %v6500, 2
  %v6539 = vrot.slane %v6501, 2
  %v6540 = vsel %vm1832, %v6538, %v6539
  %v6541 = vrot.slane %v6502, 2
  %v6542 = vrot.slane %v6503, 2
  %v6543 = vsel %vm1832, %v6541, %v6542
  %v6544 = vrot.slane %v6504, 2
  %v6545 = vrot.slane %v6505, 2
  %v6546 = vsel %vm1832, %v6544, %v6545
  %v6547 = vrot.slane %v6506, 2
  %v6548 = vrot.slane %v6507, 2
  %v6549 = vsel %vm1832, %v6547, %v6548
  %v6550 = vrot.slane %v6508, 2
  %v6551 = vrot.slane %v6509, 2
  %v6552 = vsel %vm1832, %v6550, %v6551
  %v6553 = vrot.slane %v6510, 2
  %v6554 = vrot.slane %v6511, 2
  %v6555 = vsel %vm1832, %v6553, %v6554
  %v6556 = vrot.slane %v6512, 2
  %v6557 = vrot.slane %v6513, 2
  %v6558 = vsel %vm1832, %v6556, %v6557
  %v6577 = vadd.f32 %v6474, %v6534
  %v6578 = vadd.f32 %v6475, %v6533
  %v6579 = vadd.f32 %v6476, %v6537
  %v6580 = vadd.f32 %v6477, %v6536
  %v6581 = vadd.f32 %v6478, %v6540
  %v6582 = vadd.f32 %v6479, %v6539
  %v6583 = vadd.f32 %v6480, %v6543
  %v6584 = vadd.f32 %v6481, %v6542
  %v6585 = vadd.f32 %v6482, %v6546
  %v6586 = vadd.f32 %v6483, %v6545
  %v6587 = vadd.f32 %v6484, %v6549
  %v6588 = vadd.f32 %v6485, %v6548
  %v6589 = vadd.f32 %v6486, %v6552
  %v6590 = vadd.f32 %v6487, %v6551
  %v6591 = vadd.f32 %v6488, %v6555
  %v6592 = vadd.f32 %v6489, %v6554
  %v6593 = vadd.f32 %v6490, %v6558
  %v6594 = vadd.f32 %v6491, %v6557
  %v6595 = vlaneseq
  %v6596 = vshrl.u32 %v6595, 7
  %v6597 = vsub.s32 2, %v6596
  %v6598 = vrot.slane %v4492, %v6597
  %v6599 = vmul.f32 %v5204, %v6598
  %v6600 = vmul.f32 %v5205, %v6598
  %v6601 = vmul.f32 %v5206, %v6598
  %v6602 = vmul.f32 %v5207, %v6598
  %v6603 = vmul.f32 %v5208, %v6598
  %v6604 = vmul.f32 %v5209, %v6598
  %v6605 = vmul.f32 %v5210, %v6598
  %v6606 = vmul.f32 %v5211, %v6598
  %v6607 = vmul.f32 %v5212, %v6598
  %v6608 = vmul.f32 %v5213, %v6598
  %v6609 = vmul.f32 %v5214, %v6598
  %v6610 = vmul.f32 %v5215, %v6598
  %v6611 = vmul.f32 %v5216, %v6598
  %v6612 = vmul.f32 %v5217, %v6598
  %v6613 = vmul.f32 %v5218, %v6598
  %v6614 = vmul.f32 %v5219, %v6598
  %v6615 = vmul.f32 %v5220, %v6598
  %v6616 = vmul.f32 %v5221, %v6598
  %v6635 = vrot.slane %v6599, 2
  %v6636 = vrot.slane %v6600, 2
  %v6637 = vsel %vm1832, %v6635, %v6636
  %v6638 = vrot.slane %v6601, 2
  %v6639 = vrot.slane %v6602, 2
  %v6640 = vsel %vm1832, %v6638, %v6639
  %v6641 = vrot.slane %v6603, 2
  %v6642 = vrot.slane %v6604, 2
  %v6643 = vsel %vm1832, %v6641, %v6642
  %v6644 = vrot.slane %v6605, 2
  %v6645 = vrot.slane %v6606, 2
  %v6646 = vsel %vm1832, %v6644, %v6645
  %v6647 = vrot.slane %v6607, 2
  %v6648 = vrot.slane %v6608, 2
  %v6649 = vsel %vm1832, %v6647, %v6648
  %v6650 = vrot.slane %v6609, 2
  %v6651 = vrot.slane %v6610, 2
  %v6652 = vsel %vm1832, %v6650, %v6651
  %v6653 = vrot.slane %v6611, 2
  %v6654 = vrot.slane %v6612, 2
  %v6655 = vsel %vm1832, %v6653, %v6654
  %v6656 = vrot.slane %v6613, 2
  %v6657 = vrot.slane %v6614, 2
  %v6658 = vsel %vm1832, %v6656, %v6657
  %v6659 = vrot.slane %v6615, 2
  %v6660 = vrot.slane %v6616, 2
  %v6661 = vsel %vm1832, %v6659, %v6660
  %v6680 = vadd.f32 %v6577, %v6637
  %v6681 = vadd.f32 %v6578, %v6636
  %v6682 = vadd.f32 %v6579, %v6640
  %v6683 = vadd.f32 %v6580, %v6639
  %v6684 = vadd.f32 %v6581, %v6643
  %v6685 = vadd.f32 %v6582, %v6642
  %v6686 = vadd.f32 %v6583, %v6646
  %v6687 = vadd.f32 %v6584, %v6645
  %v6688 = vadd.f32 %v6585, %v6649
  %v6689 = vadd.f32 %v6586, %v6648
  %v6690 = vadd.f32 %v6587, %v6652
  %v6691 = vadd.f32 %v6588, %v6651
  %v6692 = vadd.f32 %v6589, %v6655
  %v6693 = vadd.f32 %v6590, %v6654
  %v6694 = vadd.f32 %v6591, %v6658
  %v6695 = vadd.f32 %v6592, %v6657
  %v6696 = vadd.f32 %v6593, %v6661
  %v6697 = vadd.f32 %v6594, %v6660
  %v6698 = vlaneseq
  %v6699 = vshrl.u32 %v6698, 7
  %v6700 = vsub.s32 3, %v6699
  %v6701 = vrot.slane %v4487, %v6700
  %v6702 = vmul.f32 %v5194, %v6701
  %v6703 = vmul.f32 %v5195, %v6701
  %v6704 = vmul.f32 %v5196, %v6701
  %v6705 = vmul.f32 %v5197, %v6701
  %v6706 = vmul.f32 %v5198, %v6701
  %v6707 = vmul.f32 %v5199, %v6701
  %v6708 = vmul.f32 %v5200, %v6701
  %v6709 = vmul.f32 %v5201, %v6701
  %v6710 = vmul.f32 %v5202, %v6701
  %v6711 = vmul.f32 %v5203, %v6701
  %v6712 = vmul.f32 %v5204, %v6701
  %v6713 = vmul.f32 %v5205, %v6701
  %v6714 = vmul.f32 %v5206, %v6701
  %v6715 = vmul.f32 %v5207, %v6701
  %v6716 = vmul.f32 %v5208, %v6701
  %v6717 = vmul.f32 %v5209, %v6701
  %v6718 = vmul.f32 %v5210, %v6701
  %v6719 = vmul.f32 %v5211, %v6701
  %v6738 = vrot.slane %v6702, 3
  %v6739 = vrot.slane %v6703, 3
  %v6740 = vsel %vm2451, %v6738, %v6739
  %v6741 = vrot.slane %v6704, 3
  %v6742 = vrot.slane %v6705, 3
  %v6743 = vsel %vm2451, %v6741, %v6742
  %v6744 = vrot.slane %v6706, 3
  %v6745 = vrot.slane %v6707, 3
  %v6746 = vsel %vm2451, %v6744, %v6745
  %v6747 = vrot.slane %v6708, 3
  %v6748 = vrot.slane %v6709, 3
  %v6749 = vsel %vm2451, %v6747, %v6748
  %v6750 = vrot.slane %v6710, 3
  %v6751 = vrot.slane %v6711, 3
  %v6752 = vsel %vm2451, %v6750, %v6751
  %v6753 = vrot.slane %v6712, 3
  %v6754 = vrot.slane %v6713, 3
  %v6755 = vsel %vm2451, %v6753, %v6754
  %v6756 = vrot.slane %v6714, 3
  %v6757 = vrot.slane %v6715, 3
  %v6758 = vsel %vm2451, %v6756, %v6757
  %v6759 = vrot.slane %v6716, 3
  %v6760 = vrot.slane %v6717, 3
  %v6761 = vsel %vm2451, %v6759, %v6760
  %v6762 = vrot.slane %v6718, 3
  %v6763 = vrot.slane %v6719, 3
  %v6764 = vsel %vm2451, %v6762, %v6763
  %v6783 = vadd.f32 %v6680, %v6740
  %v6784 = vadd.f32 %v6681, %v6739
  %v6785 = vadd.f32 %v6682, %v6743
  %v6786 = vadd.f32 %v6683, %v6742
  %v6787 = vadd.f32 %v6684, %v6746
  %v6788 = vadd.f32 %v6685, %v6745
  %v6789 = vadd.f32 %v6686, %v6749
  %v6790 = vadd.f32 %v6687, %v6748
  %v6791 = vadd.f32 %v6688, %v6752
  %v6792 = vadd.f32 %v6689, %v6751
  %v6793 = vadd.f32 %v6690, %v6755
  %v6794 = vadd.f32 %v6691, %v6754
  %v6795 = vadd.f32 %v6692, %v6758
  %v6796 = vadd.f32 %v6693, %v6757
  %v6797 = vadd.f32 %v6694, %v6761
  %v6798 = vadd.f32 %v6695, %v6760
  %v6799 = vadd.f32 %v6696, %v6764
  %v6800 = vadd.f32 %v6697, %v6763
  %v6801 = vlaneseq
  %v6802 = vshrl.u32 %v6801, 7
  %v6803 = vsub.s32 3, %v6802
  %v6804 = vrot.slane %v4488, %v6803
  %v6805 = vmul.f32 %v5196, %v6804
  %v6806 = vmul.f32 %v5197, %v6804
  %v6807 = vmul.f32 %v5198, %v6804
  %v6808 = vmul.f32 %v5199, %v6804
  %v6809 = vmul.f32 %v5200, %v6804
  %v6810 = vmul.f32 %v5201, %v6804
  %v6811 = vmul.f32 %v5202, %v6804
  %v6812 = vmul.f32 %v5203, %v6804
  %v6813 = vmul.f32 %v5204, %v6804
  %v6814 = vmul.f32 %v5205, %v6804
  %v6815 = vmul.f32 %v5206, %v6804
  %v6816 = vmul.f32 %v5207, %v6804
  %v6817 = vmul.f32 %v5208, %v6804
  %v6818 = vmul.f32 %v5209, %v6804
  %v6819 = vmul.f32 %v5210, %v6804
  %v6820 = vmul.f32 %v5211, %v6804
  %v6821 = vmul.f32 %v5212, %v6804
  %v6822 = vmul.f32 %v5213, %v6804
  %v6841 = vrot.slane %v6805, 3
  %v6842 = vrot.slane %v6806, 3
  %v6843 = vsel %vm2451, %v6841, %v6842
  %v6844 = vrot.slane %v6807, 3
  %v6845 = vrot.slane %v6808, 3
  %v6846 = vsel %vm2451, %v6844, %v6845
  %v6847 = vrot.slane %v6809, 3
  %v6848 = vrot.slane %v6810, 3
  %v6849 = vsel %vm2451, %v6847, %v6848
  %v6850 = vrot.slane %v6811, 3
  %v6851 = vrot.slane %v6812, 3
  %v6852 = vsel %vm2451, %v6850, %v6851
  %v6853 = vrot.slane %v6813, 3
  %v6854 = vrot.slane %v6814, 3
  %v6855 = vsel %vm2451, %v6853, %v6854
  %v6856 = vrot.slane %v6815, 3
  %v6857 = vrot.slane %v6816, 3
  %v6858 = vsel %vm2451, %v6856, %v6857
  %v6859 = vrot.slane %v6817, 3
  %v6860 = vrot.slane %v6818, 3
  %v6861 = vsel %vm2451, %v6859, %v6860
  %v6862 = vrot.slane %v6819, 3
  %v6863 = vrot.slane %v6820, 3
  %v6864 = vsel %vm2451, %v6862, %v6863
  %v6865 = vrot.slane %v6821, 3
  %v6866 = vrot.slane %v6822, 3
  %v6867 = vsel %vm2451, %v6865, %v6866
  %v6886 = vadd.f32 %v6783, %v6843
  %v6887 = vadd.f32 %v6784, %v6842
  %v6888 = vadd.f32 %v6785, %v6846
  %v6889 = vadd.f32 %v6786, %v6845
  %v6890 = vadd.f32 %v6787, %v6849
  %v6891 = vadd.f32 %v6788, %v6848
  %v6892 = vadd.f32 %v6789, %v6852
  %v6893 = vadd.f32 %v6790, %v6851
  %v6894 = vadd.f32 %v6791, %v6855
  %v6895 = vadd.f32 %v6792, %v6854
  %v6896 = vadd.f32 %v6793, %v6858
  %v6897 = vadd.f32 %v6794, %v6857
  %v6898 = vadd.f32 %v6795, %v6861
  %v6899 = vadd.f32 %v6796, %v6860
  %v6900 = vadd.f32 %v6797, %v6864
  %v6901 = vadd.f32 %v6798, %v6863
  %v6902 = vadd.f32 %v6799, %v6867
  %v6903 = vadd.f32 %v6800, %v6866
  %v6904 = vlaneseq
  %v6905 = vshrl.u32 %v6904, 7
  %v6906 = vsub.s32 3, %v6905
  %v6907 = vrot.slane %v4489, %v6906
  %v6908 = vmul.f32 %v5198, %v6907
  %v6909 = vmul.f32 %v5199, %v6907
  %v6910 = vmul.f32 %v5200, %v6907
  %v6911 = vmul.f32 %v5201, %v6907
  %v6912 = vmul.f32 %v5202, %v6907
  %v6913 = vmul.f32 %v5203, %v6907
  %v6914 = vmul.f32 %v5204, %v6907
  %v6915 = vmul.f32 %v5205, %v6907
  %v6916 = vmul.f32 %v5206, %v6907
  %v6917 = vmul.f32 %v5207, %v6907
  %v6918 = vmul.f32 %v5208, %v6907
  %v6919 = vmul.f32 %v5209, %v6907
  %v6920 = vmul.f32 %v5210, %v6907
  %v6921 = vmul.f32 %v5211, %v6907
  %v6922 = vmul.f32 %v5212, %v6907
  %v6923 = vmul.f32 %v5213, %v6907
  %v6924 = vmul.f32 %v5214, %v6907
  %v6925 = vmul.f32 %v5215, %v6907
  %v6944 = vrot.slane %v6908, 3
  %v6945 = vrot.slane %v6909, 3
  %v6946 = vsel %vm2451, %v6944, %v6945
  %v6947 = vrot.slane %v6910, 3
  %v6948 = vrot.slane %v6911, 3
  %v6949 = vsel %vm2451, %v6947, %v6948
  %v6950 = vrot.slane %v6912, 3
  %v6951 = vrot.slane %v6913, 3
  %v6952 = vsel %vm2451, %v6950, %v6951
  %v6953 = vrot.slane %v6914, 3
  %v6954 = vrot.slane %v6915, 3
  %v6955 = vsel %vm2451, %v6953, %v6954
  %v6956 = vrot.slane %v6916, 3
  %v6957 = vrot.slane %v6917, 3
  %v6958 = vsel %vm2451, %v6956, %v6957
  %v6959 = vrot.slane %v6918, 3
  %v6960 = vrot.slane %v6919, 3
  %v6961 = vsel %vm2451, %v6959, %v6960
  %v6962 = vrot.slane %v6920, 3
  %v6963 = vrot.slane %v6921, 3
  %v6964 = vsel %vm2451, %v6962, %v6963
  %v6965 = vrot.slane %v6922, 3
  %v6966 = vrot.slane %v6923, 3
  %v6967 = vsel %vm2451, %v6965, %v6966
  %v6968 = vrot.slane %v6924, 3
  %v6969 = vrot.slane %v6925, 3
  %v6970 = vsel %vm2451, %v6968, %v6969
  %v6989 = vadd.f32 %v6886, %v6946
  %v6990 = vadd.f32 %v6887, %v6945
  %v6991 = vadd.f32 %v6888, %v6949
  %v6992 = vadd.f32 %v6889, %v6948
  %v6993 = vadd.f32 %v6890, %v6952
  %v6994 = vadd.f32 %v6891, %v6951
  %v6995 = vadd.f32 %v6892, %v6955
  %v6996 = vadd.f32 %v6893, %v6954
  %v6997 = vadd.f32 %v6894, %v6958
  %v6998 = vadd.f32 %v6895, %v6957
  %v6999 = vadd.f32 %v6896, %v6961
  %v7000 = vadd.f32 %v6897, %v6960
  %v7001 = vadd.f32 %v6898, %v6964
  %v7002 = vadd.f32 %v6899, %v6963
  %v7003 = vadd.f32 %v6900, %v6967
  %v7004 = vadd.f32 %v6901, %v6966
  %v7005 = vadd.f32 %v6902, %v6970
  %v7006 = vadd.f32 %v6903, %v6969
  %v7007 = vlaneseq
  %v7008 = vshrl.u32 %v7007, 7
  %v7009 = vsub.s32 3, %v7008
  %v7010 = vrot.slane %v4490, %v7009
  %v7011 = vmul.f32 %v5200, %v7010
  %v7012 = vmul.f32 %v5201, %v7010
  %v7013 = vmul.f32 %v5202, %v7010
  %v7014 = vmul.f32 %v5203, %v7010
  %v7015 = vmul.f32 %v5204, %v7010
  %v7016 = vmul.f32 %v5205, %v7010
  %v7017 = vmul.f32 %v5206, %v7010
  %v7018 = vmul.f32 %v5207, %v7010
  %v7019 = vmul.f32 %v5208, %v7010
  %v7020 = vmul.f32 %v5209, %v7010
  %v7021 = vmul.f32 %v5210, %v7010
  %v7022 = vmul.f32 %v5211, %v7010
  %v7023 = vmul.f32 %v5212, %v7010
  %v7024 = vmul.f32 %v5213, %v7010
  %v7025 = vmul.f32 %v5214, %v7010
  %v7026 = vmul.f32 %v5215, %v7010
  %v7027 = vmul.f32 %v5216, %v7010
  %v7028 = vmul.f32 %v5217, %v7010
  %v7047 = vrot.slane %v7011, 3
  %v7048 = vrot.slane %v7012, 3
  %v7049 = vsel %vm2451, %v7047, %v7048
  %v7050 = vrot.slane %v7013, 3
  %v7051 = vrot.slane %v7014, 3
  %v7052 = vsel %vm2451, %v7050, %v7051
  %v7053 = vrot.slane %v7015, 3
  %v7054 = vrot.slane %v7016, 3
  %v7055 = vsel %vm2451, %v7053, %v7054
  %v7056 = vrot.slane %v7017, 3
  %v7057 = vrot.slane %v7018, 3
  %v7058 = vsel %vm2451, %v7056, %v7057
  %v7059 = vrot.slane %v7019, 3
  %v7060 = vrot.slane %v7020, 3
  %v7061 = vsel %vm2451, %v7059, %v7060
  %v7062 = vrot.slane %v7021, 3
  %v7063 = vrot.slane %v7022, 3
  %v7064 = vsel %vm2451, %v7062, %v7063
  %v7065 = vrot.slane %v7023, 3
  %v7066 = vrot.slane %v7024, 3
  %v7067 = vsel %vm2451, %v7065, %v7066
  %v7068 = vrot.slane %v7025, 3
  %v7069 = vrot.slane %v7026, 3
  %v7070 = vsel %vm2451, %v7068, %v7069
  %v7071 = vrot.slane %v7027, 3
  %v7072 = vrot.slane %v7028, 3
  %v7073 = vsel %vm2451, %v7071, %v7072
  %v7092 = vadd.f32 %v6989, %v7049
  %v7093 = vadd.f32 %v6990, %v7048
  %v7094 = vadd.f32 %v6991, %v7052
  %v7095 = vadd.f32 %v6992, %v7051
  %v7096 = vadd.f32 %v6993, %v7055
  %v7097 = vadd.f32 %v6994, %v7054
  %v7098 = vadd.f32 %v6995, %v7058
  %v7099 = vadd.f32 %v6996, %v7057
  %v7100 = vadd.f32 %v6997, %v7061
  %v7101 = vadd.f32 %v6998, %v7060
  %v7102 = vadd.f32 %v6999, %v7064
  %v7103 = vadd.f32 %v7000, %v7063
  %v7104 = vadd.f32 %v7001, %v7067
  %v7105 = vadd.f32 %v7002, %v7066
  %v7106 = vadd.f32 %v7003, %v7070
  %v7107 = vadd.f32 %v7004, %v7069
  %v7108 = vadd.f32 %v7005, %v7073
  %v7109 = vadd.f32 %v7006, %v7072
  %v7110 = vlaneseq
  %v7111 = vshrl.u32 %v7110, 7
  %v7112 = vsub.s32 3, %v7111
  %v7113 = vrot.slane %v4491, %v7112
  %v7114 = vmul.f32 %v5202, %v7113
  %v7115 = vmul.f32 %v5203, %v7113
  %v7116 = vmul.f32 %v5204, %v7113
  %v7117 = vmul.f32 %v5205, %v7113
  %v7118 = vmul.f32 %v5206, %v7113
  %v7119 = vmul.f32 %v5207, %v7113
  %v7120 = vmul.f32 %v5208, %v7113
  %v7121 = vmul.f32 %v5209, %v7113
  %v7122 = vmul.f32 %v5210, %v7113
  %v7123 = vmul.f32 %v5211, %v7113
  %v7124 = vmul.f32 %v5212, %v7113
  %v7125 = vmul.f32 %v5213, %v7113
  %v7126 = vmul.f32 %v5214, %v7113
  %v7127 = vmul.f32 %v5215, %v7113
  %v7128 = vmul.f32 %v5216, %v7113
  %v7129 = vmul.f32 %v5217, %v7113
  %v7130 = vmul.f32 %v5218, %v7113
  %v7131 = vmul.f32 %v5219, %v7113
  %v7150 = vrot.slane %v7114, 3
  %v7151 = vrot.slane %v7115, 3
  %v7152 = vsel %vm2451, %v7150, %v7151
  %v7153 = vrot.slane %v7116, 3
  %v7154 = vrot.slane %v7117, 3
  %v7155 = vsel %vm2451, %v7153, %v7154
  %v7156 = vrot.slane %v7118, 3
  %v7157 = vrot.slane %v7119, 3
  %v7158 = vsel %vm2451, %v7156, %v7157
  %v7159 = vrot.slane %v7120, 3
  %v7160 = vrot.slane %v7121, 3
  %v7161 = vsel %vm2451, %v7159, %v7160
  %v7162 = vrot.slane %v7122, 3
  %v7163 = vrot.slane %v7123, 3
  %v7164 = vsel %vm2451, %v7162, %v7163
  %v7165 = vrot.slane %v7124, 3
  %v7166 = vrot.slane %v7125, 3
  %v7167 = vsel %vm2451, %v7165, %v7166
  %v7168 = vrot.slane %v7126, 3
  %v7169 = vrot.slane %v7127, 3
  %v7170 = vsel %vm2451, %v7168, %v7169
  %v7171 = vrot.slane %v7128, 3
  %v7172 = vrot.slane %v7129, 3
  %v7173 = vsel %vm2451, %v7171, %v7172
  %v7174 = vrot.slane %v7130, 3
  %v7175 = vrot.slane %v7131, 3
  %v7176 = vsel %vm2451, %v7174, %v7175
  %v7195 = vadd.f32 %v7092, %v7152
  %v7196 = vadd.f32 %v7093, %v7151
  %v7197 = vadd.f32 %v7094, %v7155
  %v7198 = vadd.f32 %v7095, %v7154
  %v7199 = vadd.f32 %v7096, %v7158
  %v7200 = vadd.f32 %v7097, %v7157
  %v7201 = vadd.f32 %v7098, %v7161
  %v7202 = vadd.f32 %v7099, %v7160
  %v7203 = vadd.f32 %v7100, %v7164
  %v7204 = vadd.f32 %v7101, %v7163
  %v7205 = vadd.f32 %v7102, %v7167
  %v7206 = vadd.f32 %v7103, %v7166
  %v7207 = vadd.f32 %v7104, %v7170
  %v7208 = vadd.f32 %v7105, %v7169
  %v7209 = vadd.f32 %v7106, %v7173
  %v7210 = vadd.f32 %v7107, %v7172
  %v7211 = vadd.f32 %v7108, %v7176
  %v7212 = vadd.f32 %v7109, %v7175
  %v7213 = vlaneseq
  %v7214 = vshrl.u32 %v7213, 7
  %v7215 = vsub.s32 3, %v7214
  %v7216 = vrot.slane %v4492, %v7215
  %v7217 = vmul.f32 %v5204, %v7216
  %v7218 = vmul.f32 %v5205, %v7216
  %v7219 = vmul.f32 %v5206, %v7216
  %v7220 = vmul.f32 %v5207, %v7216
  %v7221 = vmul.f32 %v5208, %v7216
  %v7222 = vmul.f32 %v5209, %v7216
  %v7223 = vmul.f32 %v5210, %v7216
  %v7224 = vmul.f32 %v5211, %v7216
  %v7225 = vmul.f32 %v5212, %v7216
  %v7226 = vmul.f32 %v5213, %v7216
  %v7227 = vmul.f32 %v5214, %v7216
  %v7228 = vmul.f32 %v5215, %v7216
  %v7229 = vmul.f32 %v5216, %v7216
  %v7230 = vmul.f32 %v5217, %v7216
  %v7231 = vmul.f32 %v5218, %v7216
  %v7232 = vmul.f32 %v5219, %v7216
  %v7233 = vmul.f32 %v5220, %v7216
  %v7234 = vmul.f32 %v5221, %v7216
  %v7253 = vrot.slane %v7217, 3
  %v7254 = vrot.slane %v7218, 3
  %v7255 = vsel %vm2451, %v7253, %v7254
  %v7256 = vrot.slane %v7219, 3
  %v7257 = vrot.slane %v7220, 3
  %v7258 = vsel %vm2451, %v7256, %v7257
  %v7259 = vrot.slane %v7221, 3
  %v7260 = vrot.slane %v7222, 3
  %v7261 = vsel %vm2451, %v7259, %v7260
  %v7262 = vrot.slane %v7223, 3
  %v7263 = vrot.slane %v7224, 3
  %v7264 = vsel %vm2451, %v7262, %v7263
  %v7265 = vrot.slane %v7225, 3
  %v7266 = vrot.slane %v7226, 3
  %v7267 = vsel %vm2451, %v7265, %v7266
  %v7268 = vrot.slane %v7227, 3
  %v7269 = vrot.slane %v7228, 3
  %v7270 = vsel %vm2451, %v7268, %v7269
  %v7271 = vrot.slane %v7229, 3
  %v7272 = vrot.slane %v7230, 3
  %v7273 = vsel %vm2451, %v7271, %v7272
  %v7274 = vrot.slane %v7231, 3
  %v7275 = vrot.slane %v7232, 3
  %v7276 = vsel %vm2451, %v7274, %v7275
  %v7277 = vrot.slane %v7233, 3
  %v7278 = vrot.slane %v7234, 3
  %v7279 = vsel %vm2451, %v7277, %v7278
  %v7298 = vadd.f32 %v7195, %v7255
  %v7299 = vadd.f32 %v7196, %v7254
  %v7300 = vadd.f32 %v7197, %v7258
  %v7301 = vadd.f32 %v7198, %v7257
  %v7302 = vadd.f32 %v7199, %v7261
  %v7303 = vadd.f32 %v7200, %v7260
  %v7304 = vadd.f32 %v7201, %v7264
  %v7305 = vadd.f32 %v7202, %v7263
  %v7306 = vadd.f32 %v7203, %v7267
  %v7307 = vadd.f32 %v7204, %v7266
  %v7308 = vadd.f32 %v7205, %v7270
  %v7309 = vadd.f32 %v7206, %v7269
  %v7310 = vadd.f32 %v7207, %v7273
  %v7311 = vadd.f32 %v7208, %v7272
  %v7312 = vadd.f32 %v7209, %v7276
  %v7313 = vadd.f32 %v7210, %v7275
  %v7314 = vadd.f32 %v7211, %v7279
  %v7315 = vadd.f32 %v7212, %v7278
  %v7316 = vlaneseq
  %v7317 = vshrl.u32 %v7316, 7
  %v7318 = vsub.s32 4, %v7317
  %v7319 = vrot.slane %v4487, %v7318
  %v7320 = vmul.f32 %v5194, %v7319
  %v7321 = vmul.f32 %v5195, %v7319
  %v7322 = vmul.f32 %v5196, %v7319
  %v7323 = vmul.f32 %v5197, %v7319
  %v7324 = vmul.f32 %v5198, %v7319
  %v7325 = vmul.f32 %v5199, %v7319
  %v7326 = vmul.f32 %v5200, %v7319
  %v7327 = vmul.f32 %v5201, %v7319
  %v7328 = vmul.f32 %v5202, %v7319
  %v7329 = vmul.f32 %v5203, %v7319
  %v7330 = vmul.f32 %v5204, %v7319
  %v7331 = vmul.f32 %v5205, %v7319
  %v7332 = vmul.f32 %v5206, %v7319
  %v7333 = vmul.f32 %v5207, %v7319
  %v7334 = vmul.f32 %v5208, %v7319
  %v7335 = vmul.f32 %v5209, %v7319
  %v7336 = vmul.f32 %v5210, %v7319
  %v7337 = vmul.f32 %v5211, %v7319
  %v7356 = vrot.slane %v7320, 4
  %v7357 = vrot.slane %v7321, 4
  %v7358 = vsel %vm3070, %v7356, %v7357
  %v7359 = vrot.slane %v7322, 4
  %v7360 = vrot.slane %v7323, 4
  %v7361 = vsel %vm3070, %v7359, %v7360
  %v7362 = vrot.slane %v7324, 4
  %v7363 = vrot.slane %v7325, 4
  %v7364 = vsel %vm3070, %v7362, %v7363
  %v7365 = vrot.slane %v7326, 4
  %v7366 = vrot.slane %v7327, 4
  %v7367 = vsel %vm3070, %v7365, %v7366
  %v7368 = vrot.slane %v7328, 4
  %v7369 = vrot.slane %v7329, 4
  %v7370 = vsel %vm3070, %v7368, %v7369
  %v7371 = vrot.slane %v7330, 4
  %v7372 = vrot.slane %v7331, 4
  %v7373 = vsel %vm3070, %v7371, %v7372
  %v7374 = vrot.slane %v7332, 4
  %v7375 = vrot.slane %v7333, 4
  %v7376 = vsel %vm3070, %v7374, %v7375
  %v7377 = vrot.slane %v7334, 4
  %v7378 = vrot.slane %v7335, 4
  %v7379 = vsel %vm3070, %v7377, %v7378
  %v7380 = vrot.slane %v7336, 4
  %v7381 = vrot.slane %v7337, 4
  %v7382 = vsel %vm3070, %v7380, %v7381
  %v7401 = vadd.f32 %v7298, %v7358
  %v7402 = vadd.f32 %v7299, %v7357
  %v7403 = vadd.f32 %v7300, %v7361
  %v7404 = vadd.f32 %v7301, %v7360
  %v7405 = vadd.f32 %v7302, %v7364
  %v7406 = vadd.f32 %v7303, %v7363
  %v7407 = vadd.f32 %v7304, %v7367
  %v7408 = vadd.f32 %v7305, %v7366
  %v7409 = vadd.f32 %v7306, %v7370
  %v7410 = vadd.f32 %v7307, %v7369
  %v7411 = vadd.f32 %v7308, %v7373
  %v7412 = vadd.f32 %v7309, %v7372
  %v7413 = vadd.f32 %v7310, %v7376
  %v7414 = vadd.f32 %v7311, %v7375
  %v7415 = vadd.f32 %v7312, %v7379
  %v7416 = vadd.f32 %v7313, %v7378
  %v7417 = vadd.f32 %v7314, %v7382
  %v7418 = vadd.f32 %v7315, %v7381
  %v7419 = vlaneseq
  %v7420 = vshrl.u32 %v7419, 7
  %v7421 = vsub.s32 4, %v7420
  %v7422 = vrot.slane %v4488, %v7421
  %v7423 = vmul.f32 %v5196, %v7422
  %v7424 = vmul.f32 %v5197, %v7422
  %v7425 = vmul.f32 %v5198, %v7422
  %v7426 = vmul.f32 %v5199, %v7422
  %v7427 = vmul.f32 %v5200, %v7422
  %v7428 = vmul.f32 %v5201, %v7422
  %v7429 = vmul.f32 %v5202, %v7422
  %v7430 = vmul.f32 %v5203, %v7422
  %v7431 = vmul.f32 %v5204, %v7422
  %v7432 = vmul.f32 %v5205, %v7422
  %v7433 = vmul.f32 %v5206, %v7422
  %v7434 = vmul.f32 %v5207, %v7422
  %v7435 = vmul.f32 %v5208, %v7422
  %v7436 = vmul.f32 %v5209, %v7422
  %v7437 = vmul.f32 %v5210, %v7422
  %v7438 = vmul.f32 %v5211, %v7422
  %v7439 = vmul.f32 %v5212, %v7422
  %v7440 = vmul.f32 %v5213, %v7422
  %v7459 = vrot.slane %v7423, 4
  %v7460 = vrot.slane %v7424, 4
  %v7461 = vsel %vm3070, %v7459, %v7460
  %v7462 = vrot.slane %v7425, 4
  %v7463 = vrot.slane %v7426, 4
  %v7464 = vsel %vm3070, %v7462, %v7463
  %v7465 = vrot.slane %v7427, 4
  %v7466 = vrot.slane %v7428, 4
  %v7467 = vsel %vm3070, %v7465, %v7466
  %v7468 = vrot.slane %v7429, 4
  %v7469 = vrot.slane %v7430, 4
  %v7470 = vsel %vm3070, %v7468, %v7469
  %v7471 = vrot.slane %v7431, 4
  %v7472 = vrot.slane %v7432, 4
  %v7473 = vsel %vm3070, %v7471, %v7472
  %v7474 = vrot.slane %v7433, 4
  %v7475 = vrot.slane %v7434, 4
  %v7476 = vsel %vm3070, %v7474, %v7475
  %v7477 = vrot.slane %v7435, 4
  %v7478 = vrot.slane %v7436, 4
  %v7479 = vsel %vm3070, %v7477, %v7478
  %v7480 = vrot.slane %v7437, 4
  %v7481 = vrot.slane %v7438, 4
  %v7482 = vsel %vm3070, %v7480, %v7481
  %v7483 = vrot.slane %v7439, 4
  %v7484 = vrot.slane %v7440, 4
  %v7485 = vsel %vm3070, %v7483, %v7484
  %v7504 = vadd.f32 %v7401, %v7461
  %v7505 = vadd.f32 %v7402, %v7460
  %v7506 = vadd.f32 %v7403, %v7464
  %v7507 = vadd.f32 %v7404, %v7463
  %v7508 = vadd.f32 %v7405, %v7467
  %v7509 = vadd.f32 %v7406, %v7466
  %v7510 = vadd.f32 %v7407, %v7470
  %v7511 = vadd.f32 %v7408, %v7469
  %v7512 = vadd.f32 %v7409, %v7473
  %v7513 = vadd.f32 %v7410, %v7472
  %v7514 = vadd.f32 %v7411, %v7476
  %v7515 = vadd.f32 %v7412, %v7475
  %v7516 = vadd.f32 %v7413, %v7479
  %v7517 = vadd.f32 %v7414, %v7478
  %v7518 = vadd.f32 %v7415, %v7482
  %v7519 = vadd.f32 %v7416, %v7481
  %v7520 = vadd.f32 %v7417, %v7485
  %v7521 = vadd.f32 %v7418, %v7484
  %v7522 = vlaneseq
  %v7523 = vshrl.u32 %v7522, 7
  %v7524 = vsub.s32 4, %v7523
  %v7525 = vrot.slane %v4489, %v7524
  %v7526 = vmul.f32 %v5198, %v7525
  %v7527 = vmul.f32 %v5199, %v7525
  %v7528 = vmul.f32 %v5200, %v7525
  %v7529 = vmul.f32 %v5201, %v7525
  %v7530 = vmul.f32 %v5202, %v7525
  %v7531 = vmul.f32 %v5203, %v7525
  %v7532 = vmul.f32 %v5204, %v7525
  %v7533 = vmul.f32 %v5205, %v7525
  %v7534 = vmul.f32 %v5206, %v7525
  %v7535 = vmul.f32 %v5207, %v7525
  %v7536 = vmul.f32 %v5208, %v7525
  %v7537 = vmul.f32 %v5209, %v7525
  %v7538 = vmul.f32 %v5210, %v7525
  %v7539 = vmul.f32 %v5211, %v7525
  %v7540 = vmul.f32 %v5212, %v7525
  %v7541 = vmul.f32 %v5213, %v7525
  %v7542 = vmul.f32 %v5214, %v7525
  %v7543 = vmul.f32 %v5215, %v7525
  %v7562 = vrot.slane %v7526, 4
  %v7563 = vrot.slane %v7527, 4
  %v7564 = vsel %vm3070, %v7562, %v7563
  %v7565 = vrot.slane %v7528, 4
  %v7566 = vrot.slane %v7529, 4
  %v7567 = vsel %vm3070, %v7565, %v7566
  %v7568 = vrot.slane %v7530, 4
  %v7569 = vrot.slane %v7531, 4
  %v7570 = vsel %vm3070, %v7568, %v7569
  %v7571 = vrot.slane %v7532, 4
  %v7572 = vrot.slane %v7533, 4
  %v7573 = vsel %vm3070, %v7571, %v7572
  %v7574 = vrot.slane %v7534, 4
  %v7575 = vrot.slane %v7535, 4
  %v7576 = vsel %vm3070, %v7574, %v7575
  %v7577 = vrot.slane %v7536, 4
  %v7578 = vrot.slane %v7537, 4
  %v7579 = vsel %vm3070, %v7577, %v7578
  %v7580 = vrot.slane %v7538, 4
  %v7581 = vrot.slane %v7539, 4
  %v7582 = vsel %vm3070, %v7580, %v7581
  %v7583 = vrot.slane %v7540, 4
  %v7584 = vrot.slane %v7541, 4
  %v7585 = vsel %vm3070, %v7583, %v7584
  %v7586 = vrot.slane %v7542, 4
  %v7587 = vrot.slane %v7543, 4
  %v7588 = vsel %vm3070, %v7586, %v7587
  %v7607 = vadd.f32 %v7504, %v7564
  %v7608 = vadd.f32 %v7505, %v7563
  %v7609 = vadd.f32 %v7506, %v7567
  %v7610 = vadd.f32 %v7507, %v7566
  %v7611 = vadd.f32 %v7508, %v7570
  %v7612 = vadd.f32 %v7509, %v7569
  %v7613 = vadd.f32 %v7510, %v7573
  %v7614 = vadd.f32 %v7511, %v7572
  %v7615 = vadd.f32 %v7512, %v7576
  %v7616 = vadd.f32 %v7513, %v7575
  %v7617 = vadd.f32 %v7514, %v7579
  %v7618 = vadd.f32 %v7515, %v7578
  %v7619 = vadd.f32 %v7516, %v7582
  %v7620 = vadd.f32 %v7517, %v7581
  %v7621 = vadd.f32 %v7518, %v7585
  %v7622 = vadd.f32 %v7519, %v7584
  %v7623 = vadd.f32 %v7520, %v7588
  %v7624 = vadd.f32 %v7521, %v7587
  %v7625 = vlaneseq
  %v7626 = vshrl.u32 %v7625, 7
  %v7627 = vsub.s32 4, %v7626
  %v7628 = vrot.slane %v4490, %v7627
  %v7629 = vmul.f32 %v5200, %v7628
  %v7630 = vmul.f32 %v5201, %v7628
  %v7631 = vmul.f32 %v5202, %v7628
  %v7632 = vmul.f32 %v5203, %v7628
  %v7633 = vmul.f32 %v5204, %v7628
  %v7634 = vmul.f32 %v5205, %v7628
  %v7635 = vmul.f32 %v5206, %v7628
  %v7636 = vmul.f32 %v5207, %v7628
  %v7637 = vmul.f32 %v5208, %v7628
  %v7638 = vmul.f32 %v5209, %v7628
  %v7639 = vmul.f32 %v5210, %v7628
  %v7640 = vmul.f32 %v5211, %v7628
  %v7641 = vmul.f32 %v5212, %v7628
  %v7642 = vmul.f32 %v5213, %v7628
  %v7643 = vmul.f32 %v5214, %v7628
  %v7644 = vmul.f32 %v5215, %v7628
  %v7645 = vmul.f32 %v5216, %v7628
  %v7646 = vmul.f32 %v5217, %v7628
  %v7665 = vrot.slane %v7629, 4
  %v7666 = vrot.slane %v7630, 4
  %v7667 = vsel %vm3070, %v7665, %v7666
  %v7668 = vrot.slane %v7631, 4
  %v7669 = vrot.slane %v7632, 4
  %v7670 = vsel %vm3070, %v7668, %v7669
  %v7671 = vrot.slane %v7633, 4
  %v7672 = vrot.slane %v7634, 4
  %v7673 = vsel %vm3070, %v7671, %v7672
  %v7674 = vrot.slane %v7635, 4
  %v7675 = vrot.slane %v7636, 4
  %v7676 = vsel %vm3070, %v7674, %v7675
  %v7677 = vrot.slane %v7637, 4
  %v7678 = vrot.slane %v7638, 4
  %v7679 = vsel %vm3070, %v7677, %v7678
  %v7680 = vrot.slane %v7639, 4
  %v7681 = vrot.slane %v7640, 4
  %v7682 = vsel %vm3070, %v7680, %v7681
  %v7683 = vrot.slane %v7641, 4
  %v7684 = vrot.slane %v7642, 4
  %v7685 = vsel %vm3070, %v7683, %v7684
  %v7686 = vrot.slane %v7643, 4
  %v7687 = vrot.slane %v7644, 4
  %v7688 = vsel %vm3070, %v7686, %v7687
  %v7689 = vrot.slane %v7645, 4
  %v7690 = vrot.slane %v7646, 4
  %v7691 = vsel %vm3070, %v7689, %v7690
  %v7710 = vadd.f32 %v7607, %v7667
  %v7711 = vadd.f32 %v7608, %v7666
  %v7712 = vadd.f32 %v7609, %v7670
  %v7713 = vadd.f32 %v7610, %v7669
  %v7714 = vadd.f32 %v7611, %v7673
  %v7715 = vadd.f32 %v7612, %v7672
  %v7716 = vadd.f32 %v7613, %v7676
  %v7717 = vadd.f32 %v7614, %v7675
  %v7718 = vadd.f32 %v7615, %v7679
  %v7719 = vadd.f32 %v7616, %v7678
  %v7720 = vadd.f32 %v7617, %v7682
  %v7721 = vadd.f32 %v7618, %v7681
  %v7722 = vadd.f32 %v7619, %v7685
  %v7723 = vadd.f32 %v7620, %v7684
  %v7724 = vadd.f32 %v7621, %v7688
  %v7725 = vadd.f32 %v7622, %v7687
  %v7726 = vadd.f32 %v7623, %v7691
  %v7727 = vadd.f32 %v7624, %v7690
  %v7728 = vlaneseq
  %v7729 = vshrl.u32 %v7728, 7
  %v7730 = vsub.s32 4, %v7729
  %v7731 = vrot.slane %v4491, %v7730
  %v7732 = vmul.f32 %v5202, %v7731
  %v7733 = vmul.f32 %v5203, %v7731
  %v7734 = vmul.f32 %v5204, %v7731
  %v7735 = vmul.f32 %v5205, %v7731
  %v7736 = vmul.f32 %v5206, %v7731
  %v7737 = vmul.f32 %v5207, %v7731
  %v7738 = vmul.f32 %v5208, %v7731
  %v7739 = vmul.f32 %v5209, %v7731
  %v7740 = vmul.f32 %v5210, %v7731
  %v7741 = vmul.f32 %v5211, %v7731
  %v7742 = vmul.f32 %v5212, %v7731
  %v7743 = vmul.f32 %v5213, %v7731
  %v7744 = vmul.f32 %v5214, %v7731
  %v7745 = vmul.f32 %v5215, %v7731
  %v7746 = vmul.f32 %v5216, %v7731
  %v7747 = vmul.f32 %v5217, %v7731
  %v7748 = vmul.f32 %v5218, %v7731
  %v7749 = vmul.f32 %v5219, %v7731
  %v7768 = vrot.slane %v7732, 4
  %v7769 = vrot.slane %v7733, 4
  %v7770 = vsel %vm3070, %v7768, %v7769
  %v7771 = vrot.slane %v7734, 4
  %v7772 = vrot.slane %v7735, 4
  %v7773 = vsel %vm3070, %v7771, %v7772
  %v7774 = vrot.slane %v7736, 4
  %v7775 = vrot.slane %v7737, 4
  %v7776 = vsel %vm3070, %v7774, %v7775
  %v7777 = vrot.slane %v7738, 4
  %v7778 = vrot.slane %v7739, 4
  %v7779 = vsel %vm3070, %v7777, %v7778
  %v7780 = vrot.slane %v7740, 4
  %v7781 = vrot.slane %v7741, 4
  %v7782 = vsel %vm3070, %v7780, %v7781
  %v7783 = vrot.slane %v7742, 4
  %v7784 = vrot.slane %v7743, 4
  %v7785 = vsel %vm3070, %v7783, %v7784
  %v7786 = vrot.slane %v7744, 4
  %v7787 = vrot.slane %v7745, 4
  %v7788 = vsel %vm3070, %v7786, %v7787
  %v7789 = vrot.slane %v7746, 4
  %v7790 = vrot.slane %v7747, 4
  %v7791 = vsel %vm3070, %v7789, %v7790
  %v7792 = vrot.slane %v7748, 4
  %v7793 = vrot.slane %v7749, 4
  %v7794 = vsel %vm3070, %v7792, %v7793
  %v7813 = vadd.f32 %v7710, %v7770
  %v7814 = vadd.f32 %v7711, %v7769
  %v7815 = vadd.f32 %v7712, %v7773
  %v7816 = vadd.f32 %v7713, %v7772
  %v7817 = vadd.f32 %v7714, %v7776
  %v7818 = vadd.f32 %v7715, %v7775
  %v7819 = vadd.f32 %v7716, %v7779
  %v7820 = vadd.f32 %v7717, %v7778
  %v7821 = vadd.f32 %v7718, %v7782
  %v7822 = vadd.f32 %v7719, %v7781
  %v7823 = vadd.f32 %v7720, %v7785
  %v7824 = vadd.f32 %v7721, %v7784
  %v7825 = vadd.f32 %v7722, %v7788
  %v7826 = vadd.f32 %v7723, %v7787
  %v7827 = vadd.f32 %v7724, %v7791
  %v7828 = vadd.f32 %v7725, %v7790
  %v7829 = vadd.f32 %v7726, %v7794
  %v7830 = vadd.f32 %v7727, %v7793
  %v7831 = vlaneseq
  %v7832 = vshrl.u32 %v7831, 7
  %v7833 = vsub.s32 4, %v7832
  %v7834 = vrot.slane %v4492, %v7833
  %v7835 = vmul.f32 %v5204, %v7834
  %v7836 = vmul.f32 %v5205, %v7834
  %v7837 = vmul.f32 %v5206, %v7834
  %v7838 = vmul.f32 %v5207, %v7834
  %v7839 = vmul.f32 %v5208, %v7834
  %v7840 = vmul.f32 %v5209, %v7834
  %v7841 = vmul.f32 %v5210, %v7834
  %v7842 = vmul.f32 %v5211, %v7834
  %v7843 = vmul.f32 %v5212, %v7834
  %v7844 = vmul.f32 %v5213, %v7834
  %v7845 = vmul.f32 %v5214, %v7834
  %v7846 = vmul.f32 %v5215, %v7834
  %v7847 = vmul.f32 %v5216, %v7834
  %v7848 = vmul.f32 %v5217, %v7834
  %v7849 = vmul.f32 %v5218, %v7834
  %v7850 = vmul.f32 %v5219, %v7834
  %v7851 = vmul.f32 %v5220, %v7834
  %v7852 = vmul.f32 %v5221, %v7834
  %v7871 = vrot.slane %v7835, 4
  %v7872 = vrot.slane %v7836, 4
  %v7873 = vsel %vm3070, %v7871, %v7872
  %v7874 = vrot.slane %v7837, 4
  %v7875 = vrot.slane %v7838, 4
  %v7876 = vsel %vm3070, %v7874, %v7875
  %v7877 = vrot.slane %v7839, 4
  %v7878 = vrot.slane %v7840, 4
  %v7879 = vsel %vm3070, %v7877, %v7878
  %v7880 = vrot.slane %v7841, 4
  %v7881 = vrot.slane %v7842, 4
  %v7882 = vsel %vm3070, %v7880, %v7881
  %v7883 = vrot.slane %v7843, 4
  %v7884 = vrot.slane %v7844, 4
  %v7885 = vsel %vm3070, %v7883, %v7884
  %v7886 = vrot.slane %v7845, 4
  %v7887 = vrot.slane %v7846, 4
  %v7888 = vsel %vm3070, %v7886, %v7887
  %v7889 = vrot.slane %v7847, 4
  %v7890 = vrot.slane %v7848, 4
  %v7891 = vsel %vm3070, %v7889, %v7890
  %v7892 = vrot.slane %v7849, 4
  %v7893 = vrot.slane %v7850, 4
  %v7894 = vsel %vm3070, %v7892, %v7893
  %v7895 = vrot.slane %v7851, 4
  %v7896 = vrot.slane %v7852, 4
  %v7897 = vsel %vm3070, %v7895, %v7896
  %v7916 = vadd.f32 %v7813, %v7873
  %v7917 = vadd.f32 %v7814, %v7872
  %v7918 = vadd.f32 %v7815, %v7876
  %v7919 = vadd.f32 %v7816, %v7875
  %v7920 = vadd.f32 %v7817, %v7879
  %v7921 = vadd.f32 %v7818, %v7878
  %v7922 = vadd.f32 %v7819, %v7882
  %v7923 = vadd.f32 %v7820, %v7881
  %v7924 = vadd.f32 %v7821, %v7885
  %v7925 = vadd.f32 %v7822, %v7884
  %v7926 = vadd.f32 %v7823, %v7888
  %v7927 = vadd.f32 %v7824, %v7887
  %v7928 = vadd.f32 %v7825, %v7891
  %v7929 = vadd.f32 %v7826, %v7890
  %v7930 = vadd.f32 %v7827, %v7894
  %v7931 = vadd.f32 %v7828, %v7893
  %v7932 = vadd.f32 %v7829, %v7897
  %v7933 = vadd.f32 %v7830, %v7896
  %v7934 = vlaneseq
  %v7935 = vshrl.u32 %v7934, 7
  %v7936 = vsub.s32 5, %v7935
  %v7937 = vrot.slane %v4487, %v7936
  %v7938 = vmul.f32 %v5194, %v7937
  %v7939 = vmul.f32 %v5195, %v7937
  %v7940 = vmul.f32 %v5196, %v7937
  %v7941 = vmul.f32 %v5197, %v7937
  %v7942 = vmul.f32 %v5198, %v7937
  %v7943 = vmul.f32 %v5199, %v7937
  %v7944 = vmul.f32 %v5200, %v7937
  %v7945 = vmul.f32 %v5201, %v7937
  %v7946 = vmul.f32 %v5202, %v7937
  %v7947 = vmul.f32 %v5203, %v7937
  %v7948 = vmul.f32 %v5204, %v7937
  %v7949 = vmul.f32 %v5205, %v7937
  %v7950 = vmul.f32 %v5206, %v7937
  %v7951 = vmul.f32 %v5207, %v7937
  %v7952 = vmul.f32 %v5208, %v7937
  %v7953 = vmul.f32 %v5209, %v7937
  %v7954 = vmul.f32 %v5210, %v7937
  %v7955 = vmul.f32 %v5211, %v7937
  %v7974 = vrot.slane %v7938, 5
  %v7975 = vrot.slane %v7939, 5
  %v7976 = vsel %vm3689, %v7974, %v7975
  %v7977 = vrot.slane %v7940, 5
  %v7978 = vrot.slane %v7941, 5
  %v7979 = vsel %vm3689, %v7977, %v7978
  %v7980 = vrot.slane %v7942, 5
  %v7981 = vrot.slane %v7943, 5
  %v7982 = vsel %vm3689, %v7980, %v7981
  %v7983 = vrot.slane %v7944, 5
  %v7984 = vrot.slane %v7945, 5
  %v7985 = vsel %vm3689, %v7983, %v7984
  %v7986 = vrot.slane %v7946, 5
  %v7987 = vrot.slane %v7947, 5
  %v7988 = vsel %vm3689, %v7986, %v7987
  %v7989 = vrot.slane %v7948, 5
  %v7990 = vrot.slane %v7949, 5
  %v7991 = vsel %vm3689, %v7989, %v7990
  %v7992 = vrot.slane %v7950, 5
  %v7993 = vrot.slane %v7951, 5
  %v7994 = vsel %vm3689, %v7992, %v7993
  %v7995 = vrot.slane %v7952, 5
  %v7996 = vrot.slane %v7953, 5
  %v7997 = vsel %vm3689, %v7995, %v7996
  %v7998 = vrot.slane %v7954, 5
  %v7999 = vrot.slane %v7955, 5
  %v8000 = vsel %vm3689, %v7998, %v7999
  %v8019 = vadd.f32 %v7916, %v7976
  %v8020 = vadd.f32 %v7917, %v7975
  %v8021 = vadd.f32 %v7918, %v7979
  %v8022 = vadd.f32 %v7919, %v7978
  %v8023 = vadd.f32 %v7920, %v7982
  %v8024 = vadd.f32 %v7921, %v7981
  %v8025 = vadd.f32 %v7922, %v7985
  %v8026 = vadd.f32 %v7923, %v7984
  %v8027 = vadd.f32 %v7924, %v7988
  %v8028 = vadd.f32 %v7925, %v7987
  %v8029 = vadd.f32 %v7926, %v7991
  %v8030 = vadd.f32 %v7927, %v7990
  %v8031 = vadd.f32 %v7928, %v7994
  %v8032 = vadd.f32 %v7929, %v7993
  %v8033 = vadd.f32 %v7930, %v7997
  %v8034 = vadd.f32 %v7931, %v7996
  %v8035 = vadd.f32 %v7932, %v8000
  %v8036 = vadd.f32 %v7933, %v7999
  %v8037 = vlaneseq
  %v8038 = vshrl.u32 %v8037, 7
  %v8039 = vsub.s32 5, %v8038
  %v8040 = vrot.slane %v4488, %v8039
  %v8041 = vmul.f32 %v5196, %v8040
  %v8042 = vmul.f32 %v5197, %v8040
  %v8043 = vmul.f32 %v5198, %v8040
  %v8044 = vmul.f32 %v5199, %v8040
  %v8045 = vmul.f32 %v5200, %v8040
  %v8046 = vmul.f32 %v5201, %v8040
  %v8047 = vmul.f32 %v5202, %v8040
  %v8048 = vmul.f32 %v5203, %v8040
  %v8049 = vmul.f32 %v5204, %v8040
  %v8050 = vmul.f32 %v5205, %v8040
  %v8051 = vmul.f32 %v5206, %v8040
  %v8052 = vmul.f32 %v5207, %v8040
  %v8053 = vmul.f32 %v5208, %v8040
  %v8054 = vmul.f32 %v5209, %v8040
  %v8055 = vmul.f32 %v5210, %v8040
  %v8056 = vmul.f32 %v5211, %v8040
  %v8057 = vmul.f32 %v5212, %v8040
  %v8058 = vmul.f32 %v5213, %v8040
  %v8077 = vrot.slane %v8041, 5
  %v8078 = vrot.slane %v8042, 5
  %v8079 = vsel %vm3689, %v8077, %v8078
  %v8080 = vrot.slane %v8043, 5
  %v8081 = vrot.slane %v8044, 5
  %v8082 = vsel %vm3689, %v8080, %v8081
  %v8083 = vrot.slane %v8045, 5
  %v8084 = vrot.slane %v8046, 5
  %v8085 = vsel %vm3689, %v8083, %v8084
  %v8086 = vrot.slane %v8047, 5
  %v8087 = vrot.slane %v8048, 5
  %v8088 = vsel %vm3689, %v8086, %v8087
  %v8089 = vrot.slane %v8049, 5
  %v8090 = vrot.slane %v8050, 5
  %v8091 = vsel %vm3689, %v8089, %v8090
  %v8092 = vrot.slane %v8051, 5
  %v8093 = vrot.slane %v8052, 5
  %v8094 = vsel %vm3689, %v8092, %v8093
  %v8095 = vrot.slane %v8053, 5
  %v8096 = vrot.slane %v8054, 5
  %v8097 = vsel %vm3689, %v8095, %v8096
  %v8098 = vrot.slane %v8055, 5
  %v8099 = vrot.slane %v8056, 5
  %v8100 = vsel %vm3689, %v8098, %v8099
  %v8101 = vrot.slane %v8057, 5
  %v8102 = vrot.slane %v8058, 5
  %v8103 = vsel %vm3689, %v8101, %v8102
  %v8122 = vadd.f32 %v8019, %v8079
  %v8123 = vadd.f32 %v8020, %v8078
  %v8124 = vadd.f32 %v8021, %v8082
  %v8125 = vadd.f32 %v8022, %v8081
  %v8126 = vadd.f32 %v8023, %v8085
  %v8127 = vadd.f32 %v8024, %v8084
  %v8128 = vadd.f32 %v8025, %v8088
  %v8129 = vadd.f32 %v8026, %v8087
  %v8130 = vadd.f32 %v8027, %v8091
  %v8131 = vadd.f32 %v8028, %v8090
  %v8132 = vadd.f32 %v8029, %v8094
  %v8133 = vadd.f32 %v8030, %v8093
  %v8134 = vadd.f32 %v8031, %v8097
  %v8135 = vadd.f32 %v8032, %v8096
  %v8136 = vadd.f32 %v8033, %v8100
  %v8137 = vadd.f32 %v8034, %v8099
  %v8138 = vadd.f32 %v8035, %v8103
  %v8139 = vadd.f32 %v8036, %v8102
  %v8140 = vlaneseq
  %v8141 = vshrl.u32 %v8140, 7
  %v8142 = vsub.s32 5, %v8141
  %v8143 = vrot.slane %v4489, %v8142
  %v8144 = vmul.f32 %v5198, %v8143
  %v8145 = vmul.f32 %v5199, %v8143
  %v8146 = vmul.f32 %v5200, %v8143
  %v8147 = vmul.f32 %v5201, %v8143
  %v8148 = vmul.f32 %v5202, %v8143
  %v8149 = vmul.f32 %v5203, %v8143
  %v8150 = vmul.f32 %v5204, %v8143
  %v8151 = vmul.f32 %v5205, %v8143
  %v8152 = vmul.f32 %v5206, %v8143
  %v8153 = vmul.f32 %v5207, %v8143
  %v8154 = vmul.f32 %v5208, %v8143
  %v8155 = vmul.f32 %v5209, %v8143
  %v8156 = vmul.f32 %v5210, %v8143
  %v8157 = vmul.f32 %v5211, %v8143
  %v8158 = vmul.f32 %v5212, %v8143
  %v8159 = vmul.f32 %v5213, %v8143
  %v8160 = vmul.f32 %v5214, %v8143
  %v8161 = vmul.f32 %v5215, %v8143
  %v8180 = vrot.slane %v8144, 5
  %v8181 = vrot.slane %v8145, 5
  %v8182 = vsel %vm3689, %v8180, %v8181
  %v8183 = vrot.slane %v8146, 5
  %v8184 = vrot.slane %v8147, 5
  %v8185 = vsel %vm3689, %v8183, %v8184
  %v8186 = vrot.slane %v8148, 5
  %v8187 = vrot.slane %v8149, 5
  %v8188 = vsel %vm3689, %v8186, %v8187
  %v8189 = vrot.slane %v8150, 5
  %v8190 = vrot.slane %v8151, 5
  %v8191 = vsel %vm3689, %v8189, %v8190
  %v8192 = vrot.slane %v8152, 5
  %v8193 = vrot.slane %v8153, 5
  %v8194 = vsel %vm3689, %v8192, %v8193
  %v8195 = vrot.slane %v8154, 5
  %v8196 = vrot.slane %v8155, 5
  %v8197 = vsel %vm3689, %v8195, %v8196
  %v8198 = vrot.slane %v8156, 5
  %v8199 = vrot.slane %v8157, 5
  %v8200 = vsel %vm3689, %v8198, %v8199
  %v8201 = vrot.slane %v8158, 5
  %v8202 = vrot.slane %v8159, 5
  %v8203 = vsel %vm3689, %v8201, %v8202
  %v8204 = vrot.slane %v8160, 5
  %v8205 = vrot.slane %v8161, 5
  %v8206 = vsel %vm3689, %v8204, %v8205
  %v8225 = vadd.f32 %v8122, %v8182
  %v8226 = vadd.f32 %v8123, %v8181
  %v8227 = vadd.f32 %v8124, %v8185
  %v8228 = vadd.f32 %v8125, %v8184
  %v8229 = vadd.f32 %v8126, %v8188
  %v8230 = vadd.f32 %v8127, %v8187
  %v8231 = vadd.f32 %v8128, %v8191
  %v8232 = vadd.f32 %v8129, %v8190
  %v8233 = vadd.f32 %v8130, %v8194
  %v8234 = vadd.f32 %v8131, %v8193
  %v8235 = vadd.f32 %v8132, %v8197
  %v8236 = vadd.f32 %v8133, %v8196
  %v8237 = vadd.f32 %v8134, %v8200
  %v8238 = vadd.f32 %v8135, %v8199
  %v8239 = vadd.f32 %v8136, %v8203
  %v8240 = vadd.f32 %v8137, %v8202
  %v8241 = vadd.f32 %v8138, %v8206
  %v8242 = vadd.f32 %v8139, %v8205
  %v8243 = vlaneseq
  %v8244 = vshrl.u32 %v8243, 7
  %v8245 = vsub.s32 5, %v8244
  %v8246 = vrot.slane %v4490, %v8245
  %v8247 = vmul.f32 %v5200, %v8246
  %v8248 = vmul.f32 %v5201, %v8246
  %v8249 = vmul.f32 %v5202, %v8246
  %v8250 = vmul.f32 %v5203, %v8246
  %v8251 = vmul.f32 %v5204, %v8246
  %v8252 = vmul.f32 %v5205, %v8246
  %v8253 = vmul.f32 %v5206, %v8246
  %v8254 = vmul.f32 %v5207, %v8246
  %v8255 = vmul.f32 %v5208, %v8246
  %v8256 = vmul.f32 %v5209, %v8246
  %v8257 = vmul.f32 %v5210, %v8246
  %v8258 = vmul.f32 %v5211, %v8246
  %v8259 = vmul.f32 %v5212, %v8246
  %v8260 = vmul.f32 %v5213, %v8246
  %v8261 = vmul.f32 %v5214, %v8246
  %v8262 = vmul.f32 %v5215, %v8246
  %v8263 = vmul.f32 %v5216, %v8246
  %v8264 = vmul.f32 %v5217, %v8246
  %v8283 = vrot.slane %v8247, 5
  %v8284 = vrot.slane %v8248, 5
  %v8285 = vsel %vm3689, %v8283, %v8284
  %v8286 = vrot.slane %v8249, 5
  %v8287 = vrot.slane %v8250, 5
  %v8288 = vsel %vm3689, %v8286, %v8287
  %v8289 = vrot.slane %v8251, 5
  %v8290 = vrot.slane %v8252, 5
  %v8291 = vsel %vm3689, %v8289, %v8290
  %v8292 = vrot.slane %v8253, 5
  %v8293 = vrot.slane %v8254, 5
  %v8294 = vsel %vm3689, %v8292, %v8293
  %v8295 = vrot.slane %v8255, 5
  %v8296 = vrot.slane %v8256, 5
  %v8297 = vsel %vm3689, %v8295, %v8296
  %v8298 = vrot.slane %v8257, 5
  %v8299 = vrot.slane %v8258, 5
  %v8300 = vsel %vm3689, %v8298, %v8299
  %v8301 = vrot.slane %v8259, 5
  %v8302 = vrot.slane %v8260, 5
  %v8303 = vsel %vm3689, %v8301, %v8302
  %v8304 = vrot.slane %v8261, 5
  %v8305 = vrot.slane %v8262, 5
  %v8306 = vsel %vm3689, %v8304, %v8305
  %v8307 = vrot.slane %v8263, 5
  %v8308 = vrot.slane %v8264, 5
  %v8309 = vsel %vm3689, %v8307, %v8308
  %v8328 = vadd.f32 %v8225, %v8285
  %v8329 = vadd.f32 %v8226, %v8284
  %v8330 = vadd.f32 %v8227, %v8288
  %v8331 = vadd.f32 %v8228, %v8287
  %v8332 = vadd.f32 %v8229, %v8291
  %v8333 = vadd.f32 %v8230, %v8290
  %v8334 = vadd.f32 %v8231, %v8294
  %v8335 = vadd.f32 %v8232, %v8293
  %v8336 = vadd.f32 %v8233, %v8297
  %v8337 = vadd.f32 %v8234, %v8296
  %v8338 = vadd.f32 %v8235, %v8300
  %v8339 = vadd.f32 %v8236, %v8299
  %v8340 = vadd.f32 %v8237, %v8303
  %v8341 = vadd.f32 %v8238, %v8302
  %v8342 = vadd.f32 %v8239, %v8306
  %v8343 = vadd.f32 %v8240, %v8305
  %v8344 = vadd.f32 %v8241, %v8309
  %v8345 = vadd.f32 %v8242, %v8308
  %v8346 = vlaneseq
  %v8347 = vshrl.u32 %v8346, 7
  %v8348 = vsub.s32 5, %v8347
  %v8349 = vrot.slane %v4491, %v8348
  %v8350 = vmul.f32 %v5202, %v8349
  %v8351 = vmul.f32 %v5203, %v8349
  %v8352 = vmul.f32 %v5204, %v8349
  %v8353 = vmul.f32 %v5205, %v8349
  %v8354 = vmul.f32 %v5206, %v8349
  %v8355 = vmul.f32 %v5207, %v8349
  %v8356 = vmul.f32 %v5208, %v8349
  %v8357 = vmul.f32 %v5209, %v8349
  %v8358 = vmul.f32 %v5210, %v8349
  %v8359 = vmul.f32 %v5211, %v8349
  %v8360 = vmul.f32 %v5212, %v8349
  %v8361 = vmul.f32 %v5213, %v8349
  %v8362 = vmul.f32 %v5214, %v8349
  %v8363 = vmul.f32 %v5215, %v8349
  %v8364 = vmul.f32 %v5216, %v8349
  %v8365 = vmul.f32 %v5217, %v8349
  %v8366 = vmul.f32 %v5218, %v8349
  %v8367 = vmul.f32 %v5219, %v8349
  %v8386 = vrot.slane %v8350, 5
  %v8387 = vrot.slane %v8351, 5
  %v8388 = vsel %vm3689, %v8386, %v8387
  %v8389 = vrot.slane %v8352, 5
  %v8390 = vrot.slane %v8353, 5
  %v8391 = vsel %vm3689, %v8389, %v8390
  %v8392 = vrot.slane %v8354, 5
  %v8393 = vrot.slane %v8355, 5
  %v8394 = vsel %vm3689, %v8392, %v8393
  %v8395 = vrot.slane %v8356, 5
  %v8396 = vrot.slane %v8357, 5
  %v8397 = vsel %vm3689, %v8395, %v8396
  %v8398 = vrot.slane %v8358, 5
  %v8399 = vrot.slane %v8359, 5
  %v8400 = vsel %vm3689, %v8398, %v8399
  %v8401 = vrot.slane %v8360, 5
  %v8402 = vrot.slane %v8361, 5
  %v8403 = vsel %vm3689, %v8401, %v8402
  %v8404 = vrot.slane %v8362, 5
  %v8405 = vrot.slane %v8363, 5
  %v8406 = vsel %vm3689, %v8404, %v8405
  %v8407 = vrot.slane %v8364, 5
  %v8408 = vrot.slane %v8365, 5
  %v8409 = vsel %vm3689, %v8407, %v8408
  %v8410 = vrot.slane %v8366, 5
  %v8411 = vrot.slane %v8367, 5
  %v8412 = vsel %vm3689, %v8410, %v8411
  %v8431 = vadd.f32 %v8328, %v8388
  %v8432 = vadd.f32 %v8329, %v8387
  %v8433 = vadd.f32 %v8330, %v8391
  %v8434 = vadd.f32 %v8331, %v8390
  %v8435 = vadd.f32 %v8332, %v8394
  %v8436 = vadd.f32 %v8333, %v8393
  %v8437 = vadd.f32 %v8334, %v8397
  %v8438 = vadd.f32 %v8335, %v8396
  %v8439 = vadd.f32 %v8336, %v8400
  %v8440 = vadd.f32 %v8337, %v8399
  %v8441 = vadd.f32 %v8338, %v8403
  %v8442 = vadd.f32 %v8339, %v8402
  %v8443 = vadd.f32 %v8340, %v8406
  %v8444 = vadd.f32 %v8341, %v8405
  %v8445 = vadd.f32 %v8342, %v8409
  %v8446 = vadd.f32 %v8343, %v8408
  %v8447 = vadd.f32 %v8344, %v8412
  %v8448 = vadd.f32 %v8345, %v8411
  %v8449 = vlaneseq
  %v8450 = vshrl.u32 %v8449, 7
  %v8451 = vsub.s32 5, %v8450
  %v8452 = vrot.slane %v4492, %v8451
  %v8453 = vmul.f32 %v5204, %v8452
  %v8454 = vmul.f32 %v5205, %v8452
  %v8455 = vmul.f32 %v5206, %v8452
  %v8456 = vmul.f32 %v5207, %v8452
  %v8457 = vmul.f32 %v5208, %v8452
  %v8458 = vmul.f32 %v5209, %v8452
  %v8459 = vmul.f32 %v5210, %v8452
  %v8460 = vmul.f32 %v5211, %v8452
  %v8461 = vmul.f32 %v5212, %v8452
  %v8462 = vmul.f32 %v5213, %v8452
  %v8463 = vmul.f32 %v5214, %v8452
  %v8464 = vmul.f32 %v5215, %v8452
  %v8465 = vmul.f32 %v5216, %v8452
  %v8466 = vmul.f32 %v5217, %v8452
  %v8467 = vmul.f32 %v5218, %v8452
  %v8468 = vmul.f32 %v5219, %v8452
  %v8469 = vmul.f32 %v5220, %v8452
  %v8470 = vmul.f32 %v5221, %v8452
  %v8489 = vrot.slane %v8453, 5
  %v8490 = vrot.slane %v8454, 5
  %v8491 = vsel %vm3689, %v8489, %v8490
  %v8492 = vrot.slane %v8455, 5
  %v8493 = vrot.slane %v8456, 5
  %v8494 = vsel %vm3689, %v8492, %v8493
  %v8495 = vrot.slane %v8457, 5
  %v8496 = vrot.slane %v8458, 5
  %v8497 = vsel %vm3689, %v8495, %v8496
  %v8498 = vrot.slane %v8459, 5
  %v8499 = vrot.slane %v8460, 5
  %v8500 = vsel %vm3689, %v8498, %v8499
  %v8501 = vrot.slane %v8461, 5
  %v8502 = vrot.slane %v8462, 5
  %v8503 = vsel %vm3689, %v8501, %v8502
  %v8504 = vrot.slane %v8463, 5
  %v8505 = vrot.slane %v8464, 5
  %v8506 = vsel %vm3689, %v8504, %v8505
  %v8507 = vrot.slane %v8465, 5
  %v8508 = vrot.slane %v8466, 5
  %v8509 = vsel %vm3689, %v8507, %v8508
  %v8510 = vrot.slane %v8467, 5
  %v8511 = vrot.slane %v8468, 5
  %v8512 = vsel %vm3689, %v8510, %v8511
  %v8513 = vrot.slane %v8469, 5
  %v8514 = vrot.slane %v8470, 5
  %v8515 = vsel %vm3689, %v8513, %v8514
  %v8534 = vadd.f32 %v8431, %v8491
  %v8535 = vadd.f32 %v8432, %v8490
  %v8536 = vadd.f32 %v8433, %v8494
  %v8537 = vadd.f32 %v8434, %v8493
  %v8538 = vadd.f32 %v8435, %v8497
  %v8539 = vadd.f32 %v8436, %v8496
  %v8540 = vadd.f32 %v8437, %v8500
  %v8541 = vadd.f32 %v8438, %v8499
  %v8542 = vadd.f32 %v8439, %v8503
  %v8543 = vadd.f32 %v8440, %v8502
  %v8544 = vadd.f32 %v8441, %v8506
  %v8545 = vadd.f32 %v8442, %v8505
  %v8546 = vadd.f32 %v8443, %v8509
  %v8547 = vadd.f32 %v8444, %v8508
  %v8548 = vadd.f32 %v8445, %v8512
  %v8549 = vadd.f32 %v8446, %v8511
  %v8550 = vadd.f32 %v8447, %v8515
  %v8551 = vadd.f32 %v8448, %v8514
  %v8552 = vmul.f32 %v8534, %v4272
  %v8553 = vmul.f32 %v8535, %v4272
  %v8554 = vmul.f32 %v8536, %v4272
  %v8555 = vmul.f32 %v8537, %v4272
  %v8556 = vmul.f32 %v8538, %v4272
  %v8557 = vmul.f32 %v8539, %v4272
  %v8558 = vmul.f32 %v8540, %v4272
  %v8559 = vmul.f32 %v8541, %v4272
  %v8560 = vmul.f32 %v8542, %v4272
  %v8561 = vmul.f32 %v8543, %v4272
  %v8562 = vmul.f32 %v8544, %v4272
  %v8563 = vmul.f32 %v8545, %v4272
  %v8564 = vmul.f32 %v8546, %v4272
  %v8565 = vmul.f32 %v8547, %v4272
  %v8566 = vmul.f32 %v8548, %v4272
  %v8567 = vmul.f32 %v8549, %v4272
  %v8568 = vmul.f32 %v8550, %v4272
  %v8569 = vmul.f32 %v8551, %v4272
  %v8570 = vadd.f32 %v8552, %v4296
  %v8571 = vadd.f32 %v8553, %v4296
  %v8572 = vadd.f32 %v8554, %v4296
  %v8573 = vadd.f32 %v8555, %v4296
  %v8574 = vadd.f32 %v8556, %v4296
  %v8575 = vadd.f32 %v8557, %v4296
  %v8576 = vadd.f32 %v8558, %v4296
  %v8577 = vadd.f32 %v8559, %v4296
  %v8578 = vadd.f32 %v8560, %v4296
  %v8579 = vadd.f32 %v8561, %v4296
  %v8580 = vadd.f32 %v8562, %v4296
  %v8581 = vadd.f32 %v8563, %v4296
  %v8582 = vadd.f32 %v8564, %v4296
  %v8583 = vadd.f32 %v8565, %v4296
  %v8584 = vadd.f32 %v8566, %v4296
  %v8585 = vadd.f32 %v8567, %v4296
  %v8586 = vadd.f32 %v8568, %v4296
  %v8587 = vadd.f32 %v8569, %v4296
  %s8588 = scalar_lea.vmem %s6, 144
  %8589 = vst.msk [vmem:[%s8588] sm:$0xff] %vm4316, %v8570
  %8590 = vst.msk [vmem:[%s8588 + $0x8] sm:$0x1] %vm4318, %v8571
  %8591 = vst.msk [vmem:[%s8588 + $0x10] sm:$0xff] %vm4316, %v8572
  %8592 = vst.msk [vmem:[%s8588 + $0x18] sm:$0x1] %vm4318, %v8573
  %8593 = vst.msk [vmem:[%s8588 + $0x20] sm:$0xff] %vm4316, %v8574
  %8594 = vst.msk [vmem:[%s8588 + $0x28] sm:$0x1] %vm4318, %v8575
  %8595 = vst.msk [vmem:[%s8588 + $0x30] sm:$0xff] %vm4316, %v8576
  %8596 = vst.msk [vmem:[%s8588 + $0x38] sm:$0x1] %vm4318, %v8577
  %8597 = vst.msk [vmem:[%s8588 + $0x40] sm:$0xff] %vm4316, %v8578
  %8598 = vst.msk [vmem:[%s8588 + $0x48] sm:$0x1] %vm4318, %v8579
  %8599 = vst.msk [vmem:[%s8588 + $0x50] sm:$0xff] %vm4316, %v8580
  %8600 = vst.msk [vmem:[%s8588 + $0x58] sm:$0x1] %vm4318, %v8581
  %8601 = vst.msk [vmem:[%s8588 + $0x60] sm:$0xff] %vm4316, %v8582
  %8602 = vst.msk [vmem:[%s8588 + $0x68] sm:$0x1] %vm4318, %v8583
  %8603 = vst.msk [vmem:[%s8588 + $0x70] sm:$0xff] %vm4316, %v8584
  %8604 = vst.msk [vmem:[%s8588 + $0x78] sm:$0x1] %vm4318, %v8585
  %8605 = vst.msk [vmem:[%s8588 + $0x80] sm:$0xff] %vm4316, %v8586
  %8606 = vst.msk [vmem:[%s8588 + $0x88] sm:$0x1] %vm4318, %v8587
  // Predicated region
  $region26: #{detr_siamfc_wrapper.1} parent=0 // pred_check
    _
  $region27: #{detr_siamfc_wrapper.1} parent=0 // pred_check_branch
    %8608 = sbr.rel (0) target = $region29
  $region28: #{detr_siamfc_wrapper.1} parent=0 // pred_region
    _
  $region29: #{detr_siamfc_wrapper.1} parent=0 // pred_fallthru
    _
  // Predicated region
  $region30: #{detr_siamfc_wrapper.1} parent=0 // pred_check
    _
  $region31: #{detr_siamfc_wrapper.1} parent=0 // pred_check_branch
    %8610 = sbr.rel (0) target = $region33
  $region32: #{detr_siamfc_wrapper.1} parent=0 // pred_region
    _
  $region33: #{detr_siamfc_wrapper.1} parent=0 // pred_fallthru
    _

</llo_original>
